<compile_context>
chip_gen: v7x
topology: tpu7x:2x2x1
jax: 0.10.0
libtpu: 0.0.40
codegen_flags: <defaults>
</compile_context>

<pallas_src>
import math
from functools import partial

import numpy as np
import jax
import jax.numpy as jnp
from jax.experimental import pallas as pl
from jax.experimental.pallas import tpu as pltpu

# ----------------------------- config (small) -----------------------------
B             = 2
IMG           = 16
PATCH         = 4
IN_CHANS      = 3
EMBED_DIM     = 32
DEPTH         = 2
NUM_HEADS     = 4
DEC_DIM       = 16
DEC_DEPTH     = 1
DEC_NUM_HEADS = 4
MLP_RATIO     = 4.0
TEMPERATURE   = 0.1
MASK_RATIO    = 0.5
PROJ_HIDDEN   = 64
PROJ_OUT      = 32
W_CONTRAST    = 0.03
W_RECON       = 0.97
NORM_PIX      = True
LN_EPS        = 1e-5
BN_EPS        = 1e-5

GRID = IMG // PATCH          # 4
NUM_PATCHES = GRID * GRID    # 16

_SQRT_HALF = 0.7071067811865476


# ----------------------------- in-kernel helpers -----------------------------
def _erf_approx(x):
    # Abramowitz & Stegun 7.1.26, |abs err| < 1.5e-7 (erf of the exact nn.GELU).
    # TODO(synk): uses a polynomial erf so the exact-GELU runs in-kernel (EUP exp);
    # Mosaic erf lowering availability varies across jax versions.
    a1, a2, a3, a4, a5 = (0.254829592, -0.284496736, 1.421413741,
                          -1.453152027, 1.061405429)
    pc = 0.3275911
    sgn = jnp.where(x >= 0.0, 1.0, -1.0)
    ax = jnp.abs(x)
    t = 1.0 / (1.0 + pc * ax)
    poly = ((((a5 * t + a4) * t + a3) * t + a2) * t + a1) * t
    return sgn * (1.0 - poly * jnp.exp(-(ax * ax)))


def _gelu_exact(x):
    return 0.5 * x * (1.0 + _erf_approx(x * _SQRT_HALF))


def _ln(x, g, b, eps):
    mean = jnp.mean(x, axis=-1, keepdims=True)
    xc = x - mean
    var = jnp.mean(xc * xc, axis=-1, keepdims=True)
    return xc * jax.lax.rsqrt(var + eps) * g + b


def _rep0(shape):
    """Full-array block replicated to every grid step (weights / biases)."""
    n = len(shape)
    return pl.BlockSpec(shape, lambda b, _n=n: (0,) * _n)


# ----------------------------- fused Pallas kernels -----------------------------
def _block_kernel(x_ref, n1g, n1b, qkvw, qkvb, pw, pb, n2g, n2b,
                  f1w, f1b, f2w, f2b, o_ref, attn_sc, *, num_heads, eps):
    """One full pre-LN transformer block for one batch element, fully in VMEM."""
    T, D = x_ref.shape[1], x_ref.shape[2]
    Dh = D // num_heads
    scale = Dh ** -0.5

    x = x_ref[0]                                                     # (T, D)

    # ---- LN1 + fused qkv projection ----
    h = _ln(x, n1g[...], n1b[...], eps)
    qkv = jnp.dot(h, qkvw[...], preferred_element_type=jnp.float32) + qkvb[...]   # (T, 3D)

    # ---- multi-head attention: all heads inside this single kernel ----
    for hd in range(num_heads):                                      # static unroll
        q = qkv[:, hd * Dh:(hd + 1) * Dh]                            # (T, Dh)
        k = qkv[:, D + hd * Dh:D + (hd + 1) * Dh]
        v = qkv[:, 2 * D + hd * Dh:2 * D + (hd + 1) * Dh]
        s = jax.lax.dot_general(q, k, (((1,), (1,)), ((), ())),
                                preferred_element_type=jnp.float32) * scale
        s = s - jnp.max(s, axis=-1, keepdims=True)
        e = jnp.exp(s)
        p = e * pl.reciprocal(jnp.sum(e, axis=-1, keepdims=True), approx=True)
        attn_sc[:, hd * Dh:(hd + 1) * Dh] = jnp.dot(
            p, v, preferred_element_type=jnp.float32)

    # ---- attention output projection + residual ----
    x = x + jnp.dot(attn_sc[...], pw[...],
                    preferred_element_type=jnp.float32) + pb[...]

    # ---- LN2 + MLP (GELU fused in-kernel) + residual ----
    h = _ln(x, n2g[...], n2b[...], eps)
    h = jnp.dot(h, f1w[...], preferred_element_type=jnp.float32) + f1b[...]
    h = _gelu_exact(h)
    x = x + jnp.dot(h, f2w[...], preferred_element_type=jnp.float32) + f2b[...]

    o_ref[0] = x


def pl_block(x, p, num_heads):
    Bx, T, D = x.shape
    hidden = p['fc1_w'].shape[1]
    return pl.pallas_call(
        partial(_block_kernel, num_heads=num_heads, eps=LN_EPS),
        grid=(Bx,),
        in_specs=[pl.BlockSpec((1, T, D), lambda b: (b, 0, 0)),
                  _rep0((1, D)), _rep0((1, D)),
                  _rep0((D, 3 * D)), _rep0((1, 3 * D)),
                  _rep0((D, D)), _rep0((1, D)),
                  _rep0((1, D)), _rep0((1, D)),
                  _rep0((D, hidden)), _rep0((1, hidden)),
                  _rep0((hidden, D)), _rep0((1, D))],
        out_specs=pl.BlockSpec((1, T, D), lambda b: (b, 0, 0)),
        out_shape=jax.ShapeDtypeStruct((Bx, T, D), jnp.float32),
        scratch_shapes=[pltpu.VMEM((T, D), jnp.float32)],
        compiler_params=pltpu.CompilerParams(dimension_semantics=("parallel",)),
    )(x,
      p['n1_g'].reshape(1, D), p['n1_b'].reshape(1, D),
      p['qkv_w'], p['qkv_b'].reshape(1, 3 * D),
      p['proj_w'], p['proj_b'].reshape(1, D),
      p['n2_g'].reshape(1, D), p['n2_b'].reshape(1, D),
      p['fc1_w'], p['fc1_b'].reshape(1, hidden),
      p['fc2_w'], p['fc2_b'].reshape(1, D))


def _patch_embed_kernel(x_ref, w_ref, b_ref, pos_ref, o_ref):
    # PatchEmbed conv == matmul; bias and positional embedding fused in.
    o_ref[0] = (jnp.dot(x_ref[0], w_ref[...],
                        preferred_element_type=jnp.float32)
                + b_ref[...] + pos_ref[...])


def pl_patch_embed(patches, w, b, pos):
    Bx, L, K = patches.shape
    D = w.shape[1]
    return pl.pallas_call(
        _patch_embed_kernel,
        grid=(Bx,),
        in_specs=[pl.BlockSpec((1, L, K), lambda i: (i, 0, 0)),
                  _rep0((K, D)), _rep0((1, D)), _rep0((L, D))],
        out_specs=pl.BlockSpec((1, L, D), lambda i: (i, 0, 0)),
        out_shape=jax.ShapeDtypeStruct((Bx, L, D), jnp.float32),
        compiler_params=pltpu.CompilerParams(dimension_semantics=("parallel",)),
    )(patches, w, b.reshape(1, D), pos)


def _encoder_tail_kernel(x_ref, ng, nb, dw, db, dec_ref, pool_ref, *, eps):
    # Final encoder LN + decoder_embed + mean-pool over non-cls tokens, one pass.
    z = _ln(x_ref[0], ng[...], nb[...], eps)                         # (T, D)
    dec_ref[0] = jnp.dot(z, dw[...], preferred_element_type=jnp.float32) + db[...]
    pool_ref[0] = jnp.mean(z[1:, :], axis=0, keepdims=True)


def pl_encoder_tail(x, ng, nb, dw, db):
    Bx, T, D = x.shape
    Dd = dw.shape[1]
    dec, pooled = pl.pallas_call(
        partial(_encoder_tail_kernel, eps=LN_EPS),
        grid=(Bx,),
        in_specs=[pl.BlockSpec((1, T, D), lambda b: (b, 0, 0)),
                  _rep0((1, D)), _rep0((1, D)),
                  _rep0((D, Dd)), _rep0((1, Dd))],
        out_specs=(pl.BlockSpec((1, T, Dd), lambda b: (b, 0, 0)),
                   pl.BlockSpec((1, 1, D), lambda b: (b, 0, 0))),
        out_shape=(jax.ShapeDtypeStruct((Bx, T, Dd), jnp.float32),
                   jax.ShapeDtypeStruct((Bx, 1, D), jnp.float32)),
        compiler_params=pltpu.CompilerParams(dimension_semantics=("parallel",)),
    )(x, ng.reshape(1, D), nb.reshape(1, D), dw, db.reshape(1, Dd))
    return dec, pooled.reshape(Bx, D)


def _decoder_tail_kernel(x_ref, ng, nb, pw, pb, o_ref, *, eps):
    z = _ln(x_ref[0], ng[...], nb[...], eps)
    o_ref[0] = jnp.dot(z, pw[...], preferred_element_type=jnp.float32) + pb[...]


def pl_decoder_tail(x, ng, nb, pw, pb):
    Bx, T, D = x.shape
    P = pw.shape[1]
    return pl.pallas_call(
        partial(_decoder_tail_kernel, eps=LN_EPS),
        grid=(Bx,),
        in_specs=[pl.BlockSpec((1, T, D), lambda b: (b, 0, 0)),
                  _rep0((1, D)), _rep0((1, D)),
                  _rep0((D, P)), _rep0((1, P))],
        out_specs=pl.BlockSpec((1, T, P), lambda b: (b, 0, 0)),
        out_shape=jax.ShapeDtypeStruct((Bx, T, P), jnp.float32),
        compiler_params=pltpu.CompilerParams(dimension_semantics=("parallel",)),
    )(x, ng.reshape(1, D), nb.reshape(1, D), pw, pb.reshape(1, P))


def _projector_kernel(u_ref, w1, b1, g1, be1, w2, b2, g2, be2, w3, b3, o_ref, *, eps):
    # Linear -> BN(batch stats, train mode) -> ReLU, twice, then Linear; one kernel.
    def bn_relu(h, g, be):
        mean = jnp.mean(h, axis=0, keepdims=True)
        d = h - mean
        var = jnp.mean(d * d, axis=0, keepdims=True)
        return jnp.maximum(d * jax.lax.rsqrt(var + eps) * g + be, 0.0)

    h = jnp.dot(u_ref[...], w1[...], preferred_element_type=jnp.float32) + b1[...]
    h = bn_relu(h, g1[...], be1[...])
    h = jnp.dot(h, w2[...], preferred_element_type=jnp.float32) + b2[...]
    h = bn_relu(h, g2[...], be2[...])
    o_ref[...] = jnp.dot(h, w3[...], preferred_element_type=jnp.float32) + b3[...]


def pl_projector(u, p):
    Bn, D = u.shape
    H = p['w1'].shape[1]
    O = p['w3'].shape[1]
    return pl.pallas_call(
        partial(_projector_kernel, eps=BN_EPS),
        grid=(1,),
        in_specs=[_rep0((Bn, D)),
                  _rep0((D, H)), _rep0((1, H)), _rep0((1, H)), _rep0((1, H)),
                  _rep0((H, H)), _rep0((1, H)), _rep0((1, H)), _rep0((1, H)),
                  _rep0((H, O)), _rep0((1, O))],
        out_specs=_rep0((Bn, O)),
        out_shape=jax.ShapeDtypeStruct((Bn, O), jnp.float32),
    )(u,
      p['w1'], p['b1'].reshape(1, H), p['bn1_g'].reshape(1, H), p['bn1_b'].reshape(1, H),
      p['w2'], p['b2'].reshape(1, H), p['bn2_g'].reshape(1, H), p['bn2_b'].reshape(1, H),
      p['w3'], p['b3'].reshape(1, O))


# ----------------------------- plain-JAX glue -----------------------------
def extract_patches_conv(imgs, p):
    """NCHW -> (B, L, C*p*p) with (c, i, j) ordering == Conv2d weight flatten."""
    Bn, C, H, W = imgs.shape
    h, w = H // p, W // p
    x = imgs.reshape(Bn, C, h, p, w, p)
    x = x.transpose(0, 2, 4, 1, 3, 5)            # n h w c p q
    return x.reshape(Bn, h * w, C * p * p)


def patchify(imgs, p):
    """MAE target patchify: nchpwq -> nhwpqc -> (B, L, p*p*C)."""
    Bn, C, H, W = imgs.shape
    h = H // p
    x = imgs.reshape(Bn, C, h, p, h, p)
    x = x.transpose(0, 2, 4, 3, 5, 1)            # n h w p q c
    return x.reshape(Bn, h * h, p * p * C)


def random_masking(x, mask_ratio, rng):
    N, L, D = x.shape
    len_keep = int(L * (1 - mask_ratio))
    noise = jax.random.uniform(rng, (N, L))
    ids_shuffle = jnp.argsort(noise, axis=1)
    ids_restore = jnp.argsort(ids_shuffle, axis=1)
    ids_keep = ids_shuffle[:, :len_keep]
    x_masked = jnp.take_along_axis(x, ids_keep[:, :, None], axis=1)
    mask = jnp.ones((N, L), dtype=jnp.float32).at[:, :len_keep].set(0.0)
    mask = jnp.take_along_axis(mask, ids_restore, axis=1)
    return x_masked, mask, ids_restore


def forward_encoder(imgs, params, mask_ratio, rng):
    patches = extract_patches_conv(imgs, PATCH)
    x = pl_patch_embed(patches, params['pe_w'], params['pe_b'],
                       params['pos_embed'][0, 1:, :])                # conv==matmul +bias +pos
    x, mask, ids_restore = random_masking(x, mask_ratio, rng)
    cls = params['cls_token'] + params['pos_embed'][:, :1, :]
    cls = jnp.broadcast_to(cls, (x.shape[0], 1, EMBED_DIM))
    x = jnp.concatenate([cls, x], axis=1)
    for blk in params['blocks']:
        x = pl_block(x, blk, NUM_HEADS)
    return x, mask, ids_restore                   # pre-norm tokens; norm fused in tail


def forward_decoder(x_dec, ids_restore, params):
    # x_dec: already LN'd + decoder_embed'ed tokens from the encoder-tail kernel.
    Bn, Tk, Dd = x_dec.shape
    L = ids_restore.shape[1]
    mask_tokens = jnp.broadcast_to(params['mask_token'], (Bn, L + 1 - Tk, Dd))
    x_ = jnp.concatenate([x_dec[:, 1:, :], mask_tokens], axis=1)
    x_ = jnp.take_along_axis(x_, ids_restore[:, :, None], axis=1)
    x = jnp.concatenate([x_dec[:, :1, :], x_], axis=1)
    x = x + params['dec_pos_embed']
    for blk in params['dec_blocks']:
        x = pl_block(x, blk, DEC_NUM_HEADS)
    x = pl_decoder_tail(x, params['dec_norm_g'], params['dec_norm_b'],
                        params['dec_pred_w'], params['dec_pred_b'])
    return x[:, 1:, :]


def mse_loss(imgs, pred, mask):
    target = patchify(imgs, PATCH)
    if NORM_PIX:
        mean = target.mean(axis=-1, keepdims=True)
        var = target.var(axis=-1, keepdims=True, ddof=1)    # torch .var default: unbiased
        target = (target - mean) / (var + 1e-6) ** 0.5
    loss = ((pred - target) ** 2).mean(axis=-1)
    return (loss * mask).sum() / mask.sum()


def info_nce_loss(z, temperature):
    # TODO(synk): torch.distributed all_gather has no single-device Pallas equivalent;
    # with world_size == 1 gather() is the identity, which is what we implement.
    norm = jnp.sqrt(jnp.sum(z * z, axis=-1, keepdims=True))
    z = z / jnp.maximum(norm, 1e-12)                        # F.normalize
    n = z.shape[0]
    sim = jnp.exp(jnp.dot(z, z.T) / temperature)            # 4x32@32x4: too tiny for Pallas
    indexes = jnp.tile(jnp.arange(n // 2), 2)
    pos_mask = (indexes[:, None] == indexes[None, :]) & (~jnp.eye(n, dtype=bool))
    neg_mask = indexes[:, None] != indexes[None, :]
    pos = jnp.sum(sim * pos_mask, axis=1)
    neg = jnp.sum(sim * neg_mask, axis=1)
    return -jnp.mean(jnp.log(pos / (pos + neg)))


def vicmae_forward(params, imgs_pair, rng):
    x1, x2 = imgs_pair
    rng1, rng2 = jax.random.split(rng)

    enc1, mask1, ids1 = forward_encoder(x1, params, MASK_RATIO, rng1)
    enc2, mask2, ids2 = forward_encoder(x2, params, MASK_RATIO, rng2)

    # final LN + decoder_embed + non-cls mean pooling, fused per view
    dec_in1, pooled1 = pl_encoder_tail(enc1, params['norm_g'], params['norm_b'],
                                       params['dec_embed_w'], params['dec_embed_b'])
    dec_in2, pooled2 = pl_encoder_tail(enc2, params['norm_g'], params['norm_b'],
                                       params['dec_embed_w'], params['dec_embed_b'])

    u1 = pl_projector(pooled1, params['projector'])
    u2 = pl_projector(pooled2, params['projector'])

    x1_pred = forward_decoder(dec_in1, ids1, params)
    x2_pred = forward_decoder(dec_in2, ids2, params)

    pred = jnp.stack([x1_pred, x2_pred], axis=1)
    mask = jnp.stack([mask1, mask2], axis=1)

    loss_contrast = info_nce_loss(jnp.concatenate([u1, u2], axis=0), TEMPERATURE)
    loss_recon = 0.5 * (mse_loss(x1, x1_pred, mask1) + mse_loss(x2, x2_pred, mask2))
    loss = W_CONTRAST * loss_contrast + W_RECON * loss_recon
    return loss, pred, mask


# ----------------------------- parameter init -----------------------------
def _xavier(key, fan_in, fan_out):
    a = math.sqrt(6.0 / (fan_in + fan_out))
    return jax.random.uniform(key, (fan_in, fan_out), minval=-a, maxval=a,
                              dtype=jnp.float32)


def _sincos_1d(embed_dim, pos):
    omega = np.arange(embed_dim // 2, dtype=np.float64) / (embed_dim / 2.0)
    omega = 1.0 / 10000 ** omega
    out = np.einsum('m,d->md', pos.reshape(-1), omega)
    return np.concatenate([np.sin(out), np.cos(out)], axis=1)


def get_2d_sincos_pos_embed(embed_dim, grid_size, cls_token=False):
    gh = np.arange(grid_size, dtype=np.float32)
    gw = np.arange(grid_size, dtype=np.float32)
    grid = np.meshgrid(gw, gh)
    grid = np.stack(grid, axis=0).reshape([2, 1, grid_size, grid_size])
    emb_h = _sincos_1d(embed_dim // 2, grid[0])
    emb_w = _sincos_1d(embed_dim // 2, grid[1])
    pe = np.concatenate([emb_h, emb_w], axis=1)
    if cls_token:
        pe = np.concatenate([np.zeros([1, embed_dim]), pe], axis=0)
    return pe.astype(np.float32)


def init_block(key, dim, mlp_ratio):
    ks = jax.random.split(key, 4)
    hidden = int(dim * mlp_ratio)
    return dict(
        n1_g=jnp.ones(dim), n1_b=jnp.zeros(dim),
        qkv_w=_xavier(ks[0], dim, 3 * dim), qkv_b=jnp.zeros(3 * dim),
        proj_w=_xavier(ks[1], dim, dim), proj_b=jnp.zeros(dim),
        n2_g=jnp.ones(dim), n2_b=jnp.zeros(dim),
        fc1_w=_xavier(ks[2], dim, hidden), fc1_b=jnp.zeros(hidden),
        fc2_w=_xavier(ks[3], hidden, dim), fc2_b=jnp.zeros(dim),
    )


def init_params(key):
    ks = jax.random.split(key, 12)
    patch_dim = IN_CHANS * PATCH * PATCH
    p = {
        'pe_w': _xavier(ks[0], patch_dim, EMBED_DIM),
        'pe_b': jnp.zeros(EMBED_DIM),
        'cls_token': 0.02 * jax.random.normal(ks[1], (1, 1, EMBED_DIM)),
        'pos_embed': jnp.asarray(
            get_2d_sincos_pos_embed(EMBED_DIM, GRID, cls_token=True))[None],
        'blocks': [init_block(k, EMBED_DIM, MLP_RATIO)
                   for k in jax.random.split(ks[2], DEPTH)],
        'norm_g': jnp.ones(EMBED_DIM), 'norm_b': jnp.zeros(EMBED_DIM),
        'dec_embed_w': _xavier(ks[3], EMBED_DIM, DEC_DIM),
        'dec_embed_b': jnp.zeros(DEC_DIM),
        'mask_token': 0.02 * jax.random.normal(ks[4], (1, 1, DEC_DIM)),
        'dec_pos_embed': jnp.asarray(
            get_2d_sincos_pos_embed(DEC_DIM, GRID, cls_token=True))[None],
        'dec_blocks': [init_block(k, DEC_DIM, MLP_RATIO)
                       for k in jax.random.split(ks[5], DEC_DEPTH)],
        'dec_norm_g': jnp.ones(DEC_DIM), 'dec_norm_b': jnp.zeros(DEC_DIM),
        'dec_pred_w': _xavier(ks[6], DEC_DIM, PATCH * PATCH * IN_CHANS),
        'dec_pred_b': jnp.zeros(PATCH * PATCH * IN_CHANS),
        'projector': dict(
            w1=_xavier(ks[7], EMBED_DIM, PROJ_HIDDEN), b1=jnp.zeros(PROJ_HIDDEN),
            bn1_g=jnp.ones(PROJ_HIDDEN), bn1_b=jnp.zeros(PROJ_HIDDEN),
            w2=_xavier(ks[8], PROJ_HIDDEN, PROJ_HIDDEN), b2=jnp.zeros(PROJ_HIDDEN),
            bn2_g=jnp.ones(PROJ_HIDDEN), bn2_b=jnp.zeros(PROJ_HIDDEN),
            w3=_xavier(ks[9], PROJ_HIDDEN, PROJ_OUT), b3=jnp.zeros(PROJ_OUT),
        ),
    }
    return p


# ----------------------------- main -----------------------------
if __name__ == "__main__":
    key = jax.random.PRNGKey(0)
    k_params, k_x1, k_x2, k_mask = jax.random.split(key, 4)
    params = init_params(k_params)
    x1 = jax.random.normal(k_x1, (B, IN_CHANS, IMG, IMG), dtype=jnp.float32)
    x2 = jax.random.normal(k_x2, (B, IN_CHANS, IMG, IMG), dtype=jnp.float32)

    fwd = jax.jit(vicmae_forward)
    loss, pred, mask = fwd(params, (x1, x2), k_mask)
    jax.block_until_ready((loss, pred, mask))

    assert loss.shape == ()
    assert pred.shape == (B, 2, NUM_PATCHES, PATCH * PATCH * IN_CHANS)
    assert mask.shape == (B, 2, NUM_PATCHES)
    print("KERNEL_OK")
</pallas_src>

<mosaic_0001>
module attributes {stable_mosaic.version = 11 : i64} {
  func.func @_encoder_tail_kernel(%arg0: i32, %arg1: memref<1x9x32xf32, #tpu.memory_space<vmem>>, %arg2: memref<1x32xf32, #tpu.memory_space<vmem>>, %arg3: memref<1x32xf32, #tpu.memory_space<vmem>>, %arg4: memref<32x16xf32, #tpu.memory_space<vmem>>, %arg5: memref<1x16xf32, #tpu.memory_space<vmem>>, %arg6: memref<1x9x16xf32, #tpu.memory_space<vmem>>, %arg7: memref<1x1x32xf32, #tpu.memory_space<vmem>>) attributes {dimension_semantics = [#tpu.dimension_semantics<parallel>], iteration_bounds = array<i64: 2>, scalar_prefetch = 0 : i64, scratch_operands = 0 : i64, tpu.core_type = #tpu.core_type<tc>, window_params = [{transform_indices = @transform_0, window_bounds = array<i64: 1, 9, 32>}, {pipeline_mode = #tpu.pipeline_mode<synchronous>, transform_indices = @transform_1, window_bounds = array<i64: 1, 32>}, {pipeline_mode = #tpu.pipeline_mode<synchronous>, transform_indices = @transform_2, window_bounds = array<i64: 1, 32>}, {pipeline_mode = #tpu.pipeline_mode<synchronous>, transform_indices = @transform_3, window_bounds = array<i64: 32, 16>}, {pipeline_mode = #tpu.pipeline_mode<synchronous>, transform_indices = @transform_4, window_bounds = array<i64: 1, 16>}, {transform_indices = @transform_5, window_bounds = array<i64: 1, 9, 16>}, {transform_indices = @transform_6, window_bounds = array<i64: 1, 1, 32>}]} {
    %c0 = arith.constant 0 : index
    %c0_0 = arith.constant 0 : index
    %c0_1 = arith.constant 0 : index
    %0 = vector.load %arg1[%c0, %c0_0, %c0_1] : memref<1x9x32xf32, #tpu.memory_space<vmem>>, vector<1x9x32xf32>
    %1 = vector.shape_cast %0 : vector<1x9x32xf32> to vector<9x32xf32>
    %c0_2 = arith.constant 0 : index
    %c0_3 = arith.constant 0 : index
    %2 = vector.load %arg2[%c0_2, %c0_3] : memref<1x32xf32, #tpu.memory_space<vmem>>, vector<1x32xf32>
    %c0_4 = arith.constant 0 : index
    %c0_5 = arith.constant 0 : index
    %3 = vector.load %arg3[%c0_4, %c0_5] : memref<1x32xf32, #tpu.memory_space<vmem>>, vector<1x32xf32>
    %cst = arith.constant dense<0.000000e+00> : vector<9xf32>
    %4 = vector.multi_reduction <add>, %1, %cst [1] : vector<9x32xf32> to vector<9xf32>
    %5 = vector.shape_cast %4 : vector<9xf32> to vector<9x1xf32>
    %cst_6 = arith.constant 3.200000e+01 : f32
    %6 = vector.broadcast %cst_6 : f32 to vector<9x1xf32>
    %7 = arith.divf %5, %6 : vector<9x1xf32>
    %8 = vector.broadcast %7 : vector<9x1xf32> to vector<9x32xf32>
    %9 = arith.subf %1, %8 : vector<9x32xf32>
    %10 = arith.mulf %9, %9 : vector<9x32xf32>
    %cst_7 = arith.constant dense<0.000000e+00> : vector<9xf32>
    %11 = vector.multi_reduction <add>, %10, %cst_7 [1] : vector<9x32xf32> to vector<9xf32>
    %12 = vector.shape_cast %11 : vector<9xf32> to vector<9x1xf32>
    %cst_8 = arith.constant 3.200000e+01 : f32
    %13 = vector.broadcast %cst_8 : f32 to vector<9x1xf32>
    %14 = arith.divf %12, %13 : vector<9x1xf32>
    %cst_9 = arith.constant 9.99999974E-6 : f32
    %15 = vector.broadcast %cst_9 : f32 to vector<9x1xf32>
    %16 = arith.addf %14, %15 : vector<9x1xf32>
    %17 = math.rsqrt %16 : vector<9x1xf32>
    %18 = vector.broadcast %17 : vector<9x1xf32> to vector<9x32xf32>
    %19 = arith.mulf %9, %18 : vector<9x32xf32>
    %20 = vector.broadcast %2 : vector<1x32xf32> to vector<9x32xf32>
    %21 = arith.mulf %19, %20 : vector<9x32xf32>
    %22 = vector.broadcast %3 : vector<1x32xf32> to vector<9x32xf32>
    %23 = arith.addf %21, %22 : vector<9x32xf32>
    %c0_10 = arith.constant 0 : index
    %c0_11 = arith.constant 0 : index
    %24 = vector.load %arg4[%c0_10, %c0_11] : memref<32x16xf32, #tpu.memory_space<vmem>>, vector<32x16xf32>
    %cst_12 = arith.constant dense<0.000000e+00> : vector<9x16xf32>
    %25 = tpu.matmul %23, %24, %cst_12 {dimension_numbers = #tpu.dot_dimension_numbers<[1], [0], [0], [1], [0, 0, 1, 1], [], []>} : vector<9x32xf32>, vector<32x16xf32>, vector<9x16xf32> -> vector<9x16xf32>
    %c0_13 = arith.constant 0 : index
    %c0_14 = arith.constant 0 : index
    %26 = vector.load %arg5[%c0_13, %c0_14] : memref<1x16xf32, #tpu.memory_space<vmem>>, vector<1x16xf32>
    %27 = vector.broadcast %26 : vector<1x16xf32> to vector<9x16xf32>
    %28 = arith.addf %25, %27 : vector<9x16xf32>
    %c0_15 = arith.constant 0 : index
    %c0_16 = arith.constant 0 : index
    %c0_17 = arith.constant 0 : index
    %29 = vector.load %arg6[%c0_15, %c0_16, %c0_17] : memref<1x9x16xf32, #tpu.memory_space<vmem>>, vector<1x9x16xf32>
    %30 = vector.shape_cast %29 : vector<1x9x16xf32> to vector<9x16xf32>
    %31 = vector.shape_cast %28 : vector<9x16xf32> to vector<1x9x16xf32>
    tpu.vector_store %arg6[%c0_15, %c0_16, %c0_17], %31 {strides = array<i32>} : memref<1x9x16xf32, #tpu.memory_space<vmem>>, vector<1x9x16xf32>,
    %32 = vector.extract_strided_slice %23 {offsets = [1, 0], sizes = [8, 32], strides = [1, 1]} : vector<9x32xf32> to vector<8x32xf32>
    %cst_18 = arith.constant dense<0.000000e+00> : vector<32xf32>
    %33 = vector.multi_reduction <add>, %32, %cst_18 [0] : vector<8x32xf32> to vector<32xf32>
    %34 = vector.shape_cast %33 : vector<32xf32> to vector<1x32xf32>
    %cst_19 = arith.constant 8.000000e+00 : f32
    %35 = vector.broadcast %cst_19 : f32 to vector<1x32xf32>
    %36 = arith.divf %34, %35 : vector<1x32xf32>
    %c0_20 = arith.constant 0 : index
    %c0_21 = arith.constant 0 : index
    %c0_22 = arith.constant 0 : index
    %37 = vector.load %arg7[%c0_20, %c0_21, %c0_22] : memref<1x1x32xf32, #tpu.memory_space<vmem>>, vector<1x1x32xf32>
    %38 = vector.shape_cast %37 : vector<1x1x32xf32> to vector<1x32xf32>
    %39 = vector.shape_cast %36 : vector<1x32xf32> to vector<1x1x32xf32>
    tpu.vector_store %arg7[%c0_20, %c0_21, %c0_22], %39 {strides = array<i32>} : memref<1x1x32xf32, #tpu.memory_space<vmem>>, vector<1x1x32xf32>,
    return
  }
  func.func @transform_0(%arg0: i32) -> (i32, i32, i32) {
    %c0_i32 = arith.constant 0 : i32
    %c0_i32_0 = arith.constant 0 : i32
    %c0_i32_1 = arith.constant 0 : i32
    return %arg0, %c0_i32, %c0_i32_0 : i32, i32, i32
  }
  func.func @transform_1(%arg0: i32) -> (i32, i32) {
    %c0_i32 = arith.constant 0 : i32
    %c0_i32_0 = arith.constant 0 : i32
    %c0_i32_1 = arith.constant 0 : i32
    return %c0_i32, %c0_i32_0 : i32, i32
  }
  func.func @transform_2(%arg0: i32) -> (i32, i32) {
    %c0_i32 = arith.constant 0 : i32
    %c0_i32_0 = arith.constant 0 : i32
    %c0_i32_1 = arith.constant 0 : i32
    return %c0_i32, %c0_i32_0 : i32, i32
  }
  func.func @transform_3(%arg0: i32) -> (i32, i32) {
    %c0_i32 = arith.constant 0 : i32
    %c0_i32_0 = arith.constant 0 : i32
    %c0_i32_1 = arith.constant 0 : i32
    return %c0_i32, %c0_i32_0 : i32, i32
  }
  func.func @transform_4(%arg0: i32) -> (i32, i32) {
    %c0_i32 = arith.constant 0 : i32
    %c0_i32_0 = arith.constant 0 : i32
    %c0_i32_1 = arith.constant 0 : i32
    return %c0_i32, %c0_i32_0 : i32, i32
  }
  func.func @transform_5(%arg0: i32) -> (i32, i32, i32) {
    %c0_i32 = arith.constant 0 : i32
    %c0_i32_0 = arith.constant 0 : i32
    %c0_i32_1 = arith.constant 0 : i32
    return %arg0, %c0_i32, %c0_i32_0 : i32, i32, i32
  }
  func.func @transform_6(%arg0: i32) -> (i32, i32, i32) {
    %c0_i32 = arith.constant 0 : i32
    %c0_i32_0 = arith.constant 0 : i32
    %c0_i32_1 = arith.constant 0 : i32
    return %arg0, %c0_i32, %c0_i32_0 : i32, i32, i32
  }
}

module attributes {stable_mosaic.version = 11 : i64} {
  func.func @_patch_embed_kernel(%arg0: i32, %arg1: memref<1x16x48xf32, #tpu.memory_space<vmem>>, %arg2: memref<48x32xf32, #tpu.memory_space<vmem>>, %arg3: memref<1x32xf32, #tpu.memory_space<vmem>>, %arg4: memref<16x32xf32, #tpu.memory_space<vmem>>, %arg5: memref<1x16x32xf32, #tpu.memory_space<vmem>>) attributes {dimension_semantics = [#tpu.dimension_semantics<parallel>], iteration_bounds = array<i64: 2>, scalar_prefetch = 0 : i64, scratch_operands = 0 : i64, tpu.core_type = #tpu.core_type<tc>, window_params = [{transform_indices = @transform_0, window_bounds = array<i64: 1, 16, 48>}, {pipeline_mode = #tpu.pipeline_mode<synchronous>, transform_indices = @transform_1, window_bounds = array<i64: 48, 32>}, {pipeline_mode = #tpu.pipeline_mode<synchronous>, transform_indices = @transform_2, window_bounds = array<i64: 1, 32>}, {pipeline_mode = #tpu.pipeline_mode<synchronous>, transform_indices = @transform_3, window_bounds = array<i64: 16, 32>}, {transform_indices = @transform_4, window_bounds = array<i64: 1, 16, 32>}]} {
    %c0 = arith.constant 0 : index
    %c0_0 = arith.constant 0 : index
    %c0_1 = arith.constant 0 : index
    %0 = vector.load %arg1[%c0, %c0_0, %c0_1] : memref<1x16x48xf32, #tpu.memory_space<vmem>>, vector<1x16x48xf32>
    %1 = vector.shape_cast %0 : vector<1x16x48xf32> to vector<16x48xf32>
    %c0_2 = arith.constant 0 : index
    %c0_3 = arith.constant 0 : index
    %2 = vector.load %arg2[%c0_2, %c0_3] : memref<48x32xf32, #tpu.memory_space<vmem>>, vector<48x32xf32>
    %cst = arith.constant dense<0.000000e+00> : vector<16x32xf32>
    %3 = tpu.matmul %1, %2, %cst {dimension_numbers = #tpu.dot_dimension_numbers<[1], [0], [0], [1], [0, 0, 1, 1], [], []>} : vector<16x48xf32>, vector<48x32xf32>, vector<16x32xf32> -> vector<16x32xf32>
    %c0_4 = arith.constant 0 : index
    %c0_5 = arith.constant 0 : index
    %4 = vector.load %arg3[%c0_4, %c0_5] : memref<1x32xf32, #tpu.memory_space<vmem>>, vector<1x32xf32>
    %5 = vector.broadcast %4 : vector<1x32xf32> to vector<16x32xf32>
    %6 = arith.addf %3, %5 : vector<16x32xf32>
    %c0_6 = arith.constant 0 : index
    %c0_7 = arith.constant 0 : index
    %7 = vector.load %arg4[%c0_6, %c0_7] : memref<16x32xf32, #tpu.memory_space<vmem>>, vector<16x32xf32>
    %8 = arith.addf %6, %7 : vector<16x32xf32>
    %c0_8 = arith.constant 0 : index
    %c0_9 = arith.constant 0 : index
    %c0_10 = arith.constant 0 : index
    %9 = vector.load %arg5[%c0_8, %c0_9, %c0_10] : memref<1x16x32xf32, #tpu.memory_space<vmem>>, vector<1x16x32xf32>
    %10 = vector.shape_cast %9 : vector<1x16x32xf32> to vector<16x32xf32>
    %11 = vector.shape_cast %8 : vector<16x32xf32> to vector<1x16x32xf32>
    tpu.vector_store %arg5[%c0_8, %c0_9, %c0_10], %11 {strides = array<i32>} : memref<1x16x32xf32, #tpu.memory_space<vmem>>, vector<1x16x32xf32>,
    return
  }
  func.func @transform_0(%arg0: i32) -> (i32, i32, i32) {
    %c0_i32 = arith.constant 0 : i32
    %c0_i32_0 = arith.constant 0 : i32
    %c0_i32_1 = arith.constant 0 : i32
    return %arg0, %c0_i32, %c0_i32_0 : i32, i32, i32
  }
  func.func @transform_1(%arg0: i32) -> (i32, i32) {
    %c0_i32 = arith.constant 0 : i32
    %c0_i32_0 = arith.constant 0 : i32
    %c0_i32_1 = arith.constant 0 : i32
    return %c0_i32, %c0_i32_0 : i32, i32
  }
  func.func @transform_2(%arg0: i32) -> (i32, i32) {
    %c0_i32 = arith.constant 0 : i32
    %c0_i32_0 = arith.constant 0 : i32
    %c0_i32_1 = arith.constant 0 : i32
    return %c0_i32, %c0_i32_0 : i32, i32
  }
  func.func @transform_3(%arg0: i32) -> (i32, i32) {
    %c0_i32 = arith.constant 0 : i32
    %c0_i32_0 = arith.constant 0 : i32
    %c0_i32_1 = arith.constant 0 : i32
    return %c0_i32, %c0_i32_0 : i32, i32
  }
  func.func @transform_4(%arg0: i32) -> (i32, i32, i32) {
    %c0_i32 = arith.constant 0 : i32
    %c0_i32_0 = arith.constant 0 : i32
    %c0_i32_1 = arith.constant 0 : i32
    return %arg0, %c0_i32, %c0_i32_0 : i32, i32, i32
  }
}

module attributes {stable_mosaic.version = 11 : i64} {
  func.func @_block_kernel(%arg0: i32, %arg1: memref<1x9x32xf32, #tpu.memory_space<vmem>>, %arg2: memref<1x32xf32, #tpu.memory_space<vmem>>, %arg3: memref<1x32xf32, #tpu.memory_space<vmem>>, %arg4: memref<32x96xf32, #tpu.memory_space<vmem>>, %arg5: memref<1x96xf32, #tpu.memory_space<vmem>>, %arg6: memref<32x32xf32, #tpu.memory_space<vmem>>, %arg7: memref<1x32xf32, #tpu.memory_space<vmem>>, %arg8: memref<1x32xf32, #tpu.memory_space<vmem>>, %arg9: memref<1x32xf32, #tpu.memory_space<vmem>>, %arg10: memref<32x128xf32, #tpu.memory_space<vmem>>, %arg11: memref<1x128xf32, #tpu.memory_space<vmem>>, %arg12: memref<128x32xf32, #tpu.memory_space<vmem>>, %arg13: memref<1x32xf32, #tpu.memory_space<vmem>>, %arg14: memref<1x9x32xf32, #tpu.memory_space<vmem>>, %arg15: memref<9x32xf32, #tpu.memory_space<vmem>>) attributes {dimension_semantics = [#tpu.dimension_semantics<parallel>], iteration_bounds = array<i64: 2>, scalar_prefetch = 0 : i64, scratch_operands = 1 : i64, tpu.core_type = #tpu.core_type<tc>, window_params = [{transform_indices = @transform_0, window_bounds = array<i64: 1, 9, 32>}, {pipeline_mode = #tpu.pipeline_mode<synchronous>, transform_indices = @transform_1, window_bounds = array<i64: 1, 32>}, {pipeline_mode = #tpu.pipeline_mode<synchronous>, transform_indices = @transform_2, window_bounds = array<i64: 1, 32>}, {pipeline_mode = #tpu.pipeline_mode<synchronous>, transform_indices = @transform_3, window_bounds = array<i64: 32, 96>}, {pipeline_mode = #tpu.pipeline_mode<synchronous>, transform_indices = @transform_4, window_bounds = array<i64: 1, 96>}, {pipeline_mode = #tpu.pipeline_mode<synchronous>, transform_indices = @transform_5, window_bounds = array<i64: 32, 32>}, {pipeline_mode = #tpu.pipeline_mode<synchronous>, transform_indices = @transform_6, window_bounds = array<i64: 1, 32>}, {pipeline_mode = #tpu.pipeline_mode<synchronous>, transform_indices = @transform_7, window_bounds = array<i64: 1, 32>}, {pipeline_mode = #tpu.pipeline_mode<synchronous>, transform_indices = @transform_8, window_bounds = array<i64: 1, 32>}, {pipeline_mode = #tpu.pipeline_mode<synchronous>, transform_indices = @transform_9, window_bounds = array<i64: 32, 128>}, {pipeline_mode = #tpu.pipeline_mode<synchronous>, transform_indices = @transform_10, window_bounds = array<i64: 1, 128>}, {pipeline_mode = #tpu.pipeline_mode<synchronous>, transform_indices = @transform_11, window_bounds = array<i64: 128, 32>}, {pipeline_mode = #tpu.pipeline_mode<synchronous>, transform_indices = @transform_12, window_bounds = array<i64: 1, 32>}, {transform_indices = @transform_13, window_bounds = array<i64: 1, 9, 32>}]} {
    %c0 = arith.constant 0 : index
    %c0_0 = arith.constant 0 : index
    %c0_1 = arith.constant 0 : index
    %0 = vector.load %arg1[%c0, %c0_0, %c0_1] : memref<1x9x32xf32, #tpu.memory_space<vmem>>, vector<1x9x32xf32>
    %1 = vector.shape_cast %0 : vector<1x9x32xf32> to vector<9x32xf32>
    %c0_2 = arith.constant 0 : index
    %c0_3 = arith.constant 0 : index
    %2 = vector.load %arg2[%c0_2, %c0_3] : memref<1x32xf32, #tpu.memory_space<vmem>>, vector<1x32xf32>
    %c0_4 = arith.constant 0 : index
    %c0_5 = arith.constant 0 : index
    %3 = vector.load %arg3[%c0_4, %c0_5] : memref<1x32xf32, #tpu.memory_space<vmem>>, vector<1x32xf32>
    %cst = arith.constant dense<0.000000e+00> : vector<9xf32>
    %4 = vector.multi_reduction <add>, %1, %cst [1] : vector<9x32xf32> to vector<9xf32>
    %5 = vector.shape_cast %4 : vector<9xf32> to vector<9x1xf32>
    %cst_6 = arith.constant 3.200000e+01 : f32
    %6 = vector.broadcast %cst_6 : f32 to vector<9x1xf32>
    %7 = arith.divf %5, %6 : vector<9x1xf32>
    %8 = vector.broadcast %7 : vector<9x1xf32> to vector<9x32xf32>
    %9 = arith.subf %1, %8 : vector<9x32xf32>
    %10 = arith.mulf %9, %9 : vector<9x32xf32>
    %cst_7 = arith.constant dense<0.000000e+00> : vector<9xf32>
    %11 = vector.multi_reduction <add>, %10, %cst_7 [1] : vector<9x32xf32> to vector<9xf32>
    %12 = vector.shape_cast %11 : vector<9xf32> to vector<9x1xf32>
    %cst_8 = arith.constant 3.200000e+01 : f32
    %13 = vector.broadcast %cst_8 : f32 to vector<9x1xf32>
    %14 = arith.divf %12, %13 : vector<9x1xf32>
    %cst_9 = arith.constant 9.99999974E-6 : f32
    %15 = vector.broadcast %cst_9 : f32 to vector<9x1xf32>
    %16 = arith.addf %14, %15 : vector<9x1xf32>
    %17 = math.rsqrt %16 : vector<9x1xf32>
    %18 = vector.broadcast %17 : vector<9x1xf32> to vector<9x32xf32>
    %19 = arith.mulf %9, %18 : vector<9x32xf32>
    %20 = vector.broadcast %2 : vector<1x32xf32> to vector<9x32xf32>
    %21 = arith.mulf %19, %20 : vector<9x32xf32>
    %22 = vector.broadcast %3 : vector<1x32xf32> to vector<9x32xf32>
    %23 = arith.addf %21, %22 : vector<9x32xf32>
    %c0_10 = arith.constant 0 : index
    %c0_11 = arith.constant 0 : index
    %24 = vector.load %arg4[%c0_10, %c0_11] : memref<32x96xf32, #tpu.memory_space<vmem>>, vector<32x96xf32>
    %cst_12 = arith.constant dense<0.000000e+00> : vector<9x96xf32>
    %25 = tpu.matmul %23, %24, %cst_12 {dimension_numbers = #tpu.dot_dimension_numbers<[1], [0], [0], [1], [0, 0, 1, 1], [], []>} : vector<9x32xf32>, vector<32x96xf32>, vector<9x96xf32> -> vector<9x96xf32>
    %c0_13 = arith.constant 0 : index
    %c0_14 = arith.constant 0 : index
    %26 = vector.load %arg5[%c0_13, %c0_14] : memref<1x96xf32, #tpu.memory_space<vmem>>, vector<1x96xf32>
    %27 = vector.broadcast %26 : vector<1x96xf32> to vector<9x96xf32>
    %28 = arith.addf %25, %27 : vector<9x96xf32>
    %29 = vector.extract_strided_slice %28 {offsets = [0, 0], sizes = [9, 8], strides = [1, 1]} : vector<9x96xf32> to vector<9x8xf32>
    %30 = vector.extract_strided_slice %28 {offsets = [0, 32], sizes = [9, 8], strides = [1, 1]} : vector<9x96xf32> to vector<9x8xf32>
    %31 = vector.extract_strided_slice %28 {offsets = [0, 64], sizes = [9, 8], strides = [1, 1]} : vector<9x96xf32> to vector<9x8xf32>
    %cst_15 = arith.constant dense<0.000000e+00> : vector<9x9xf32>
    %32 = tpu.matmul %29, %30, %cst_15 {dimension_numbers = #tpu.dot_dimension_numbers<[1], [1], [0], [0], [0, 0, 1, 0], [], []>} : vector<9x8xf32>, vector<9x8xf32>, vector<9x9xf32> -> vector<9x9xf32>
    %cst_16 = arith.constant 0.353553385 : f32
    %33 = vector.broadcast %cst_16 : f32 to vector<9x9xf32>
    %34 = arith.mulf %32, %33 : vector<9x9xf32>
    %cst_17 = arith.constant dense<0xFF800000> : vector<9xf32>
    %35 = vector.multi_reduction <maximumf>, %34, %cst_17 [1] : vector<9x9xf32> to vector<9xf32>
    %36 = vector.shape_cast %35 : vector<9xf32> to vector<9x1xf32>
    %37 = vector.broadcast %36 : vector<9x1xf32> to vector<9x9xf32>
    %38 = arith.subf %34, %37 : vector<9x9xf32>
    %39 = math.exp %38 : vector<9x9xf32>
    %cst_18 = arith.constant dense<0.000000e+00> : vector<9xf32>
    %40 = vector.multi_reduction <add>, %39, %cst_18 [1] : vector<9x9xf32> to vector<9xf32>
    %41 = vector.shape_cast %40 : vector<9xf32> to vector<9x1xf32>
    %42 = tpu.reciprocal %41 {approx = true} : vector<9x1xf32> -> vector<9x1xf32>
    %43 = vector.broadcast %42 : vector<9x1xf32> to vector<9x9xf32>
    %44 = arith.mulf %39, %43 : vector<9x9xf32>
    %cst_19 = arith.constant dense<0.000000e+00> : vector<9x8xf32>
    %45 = tpu.matmul %44, %31, %cst_19 {dimension_numbers = #tpu.dot_dimension_numbers<[1], [0], [0], [1], [0, 0, 1, 1], [], []>} : vector<9x9xf32>, vector<9x8xf32>, vector<9x8xf32> -> vector<9x8xf32>
    %c0_20 = arith.constant 0 : index
    %c0_21 = arith.constant 0 : index
    %46 = vector.load %arg15[%c0_20, %c0_21] : memref<9x32xf32, #tpu.memory_space<vmem>>, vector<9x8xf32>
    tpu.vector_store %arg15[%c0_20, %c0_21], %45 {strides = array<i32>} : memref<9x32xf32, #tpu.memory_space<vmem>>, vector<9x8xf32>,
    %47 = vector.extract_strided_slice %28 {offsets = [0, 8], sizes = [9, 8], strides = [1, 1]} : vector<9x96xf32> to vector<9x8xf32>
    %48 = vector.extract_strided_slice %28 {offsets = [0, 40], sizes = [9, 8], strides = [1, 1]} : vector<9x96xf32> to vector<9x8xf32>
    %49 = vector.extract_strided_slice %28 {offsets = [0, 72], sizes = [9, 8], strides = [1, 1]} : vector<9x96xf32> to vector<9x8xf32>
    %cst_22 = arith.constant dense<0.000000e+00> : vector<9x9xf32>
    %50 = tpu.matmul %47, %48, %cst_22 {dimension_numbers = #tpu.dot_dimension_numbers<[1], [1], [0], [0], [0, 0, 1, 0], [], []>} : vector<9x8xf32>, vector<9x8xf32>, vector<9x9xf32> -> vector<9x9xf32>
    %cst_23 = arith.constant 0.353553385 : f32
    %51 = vector.broadcast %cst_23 : f32 to vector<9x9xf32>
    %52 = arith.mulf %50, %51 : vector<9x9xf32>
    %cst_24 = arith.constant dense<0xFF800000> : vector<9xf32>
    %53 = vector.multi_reduction <maximumf>, %52, %cst_24 [1] : vector<9x9xf32> to vector<9xf32>
    %54 = vector.shape_cast %53 : vector<9xf32> to vector<9x1xf32>
    %55 = vector.broadcast %54 : vector<9x1xf32> to vector<9x9xf32>
    %56 = arith.subf %52, %55 : vector<9x9xf32>
    %57 = math.exp %56 : vector<9x9xf32>
    %cst_25 = arith.constant dense<0.000000e+00> : vector<9xf32>
    %58 = vector.multi_reduction <add>, %57, %cst_25 [1] : vector<9x9xf32> to vector<9xf32>
    %59 = vector.shape_cast %58 : vector<9xf32> to vector<9x1xf32>
    %60 = tpu.reciprocal %59 {approx = true} : vector<9x1xf32> -> vector<9x1xf32>
    %61 = vector.broadcast %60 : vector<9x1xf32> to vector<9x9xf32>
    %62 = arith.mulf %57, %61 : vector<9x9xf32>
    %cst_26 = arith.constant dense<0.000000e+00> : vector<9x8xf32>
    %63 = tpu.matmul %62, %49, %cst_26 {dimension_numbers = #tpu.dot_dimension_numbers<[1], [0], [0], [1], [0, 0, 1, 1], [], []>} : vector<9x9xf32>, vector<9x8xf32>, vector<9x8xf32> -> vector<9x8xf32>
    %c0_27 = arith.constant 0 : index
    %c8 = arith.constant 8 : index
    %64 = vector.load %arg15[%c0_27, %c8] : memref<9x32xf32, #tpu.memory_space<vmem>>, vector<9x8xf32>
    tpu.vector_store %arg15[%c0_27, %c8], %63 {strides = array<i32>} : memref<9x32xf32, #tpu.memory_space<vmem>>, vector<9x8xf32>,
    %65 = vector.extract_strided_slice %28 {offsets = [0, 16], sizes = [9, 8], strides = [1, 1]} : vector<9x96xf32> to vector<9x8xf32>
    %66 = vector.extract_strided_slice %28 {offsets = [0, 48], sizes = [9, 8], strides = [1, 1]} : vector<9x96xf32> to vector<9x8xf32>
    %67 = vector.extract_strided_slice %28 {offsets = [0, 80], sizes = [9, 8], strides = [1, 1]} : vector<9x96xf32> to vector<9x8xf32>
    %cst_28 = arith.constant dense<0.000000e+00> : vector<9x9xf32>
    %68 = tpu.matmul %65, %66, %cst_28 {dimension_numbers = #tpu.dot_dimension_numbers<[1], [1], [0], [0], [0, 0, 1, 0], [], []>} : vector<9x8xf32>, vector<9x8xf32>, vector<9x9xf32> -> vector<9x9xf32>
    %cst_29 = arith.constant 0.353553385 : f32
    %69 = vector.broadcast %cst_29 : f32 to vector<9x9xf32>
    %70 = arith.mulf %68, %69 : vector<9x9xf32>
    %cst_30 = arith.constant dense<0xFF800000> : vector<9xf32>
    %71 = vector.multi_reduction <maximumf>, %70, %cst_30 [1] : vector<9x9xf32> to vector<9xf32>
    %72 = vector.shape_cast %71 : vector<9xf32> to vector<9x1xf32>
    %73 = vector.broadcast %72 : vector<9x1xf32> to vector<9x9xf32>
    %74 = arith.subf %70, %73 : vector<9x9xf32>
    %75 = math.exp %74 : vector<9x9xf32>
    %cst_31 = arith.constant dense<0.000000e+00> : vector<9xf32>
    %76 = vector.multi_reduction <add>, %75, %cst_31 [1] : vector<9x9xf32> to vector<9xf32>
    %77 = vector.shape_cast %76 : vector<9xf32> to vector<9x1xf32>
    %78 = tpu.reciprocal %77 {approx = true} : vector<9x1xf32> -> vector<9x1xf32>
    %79 = vector.broadcast %78 : vector<9x1xf32> to vector<9x9xf32>
    %80 = arith.mulf %75, %79 : vector<9x9xf32>
    %cst_32 = arith.constant dense<0.000000e+00> : vector<9x8xf32>
    %81 = tpu.matmul %80, %67, %cst_32 {dimension_numbers = #tpu.dot_dimension_numbers<[1], [0], [0], [1], [0, 0, 1, 1], [], []>} : vector<9x9xf32>, vector<9x8xf32>, vector<9x8xf32> -> vector<9x8xf32>
    %c0_33 = arith.constant 0 : index
    %c16 = arith.constant 16 : index
    %82 = vector.load %arg15[%c0_33, %c16] : memref<9x32xf32, #tpu.memory_space<vmem>>, vector<9x8xf32>
    tpu.vector_store %arg15[%c0_33, %c16], %81 {strides = array<i32>} : memref<9x32xf32, #tpu.memory_space<vmem>>, vector<9x8xf32>,
    %83 = vector.extract_strided_slice %28 {offsets = [0, 24], sizes = [9, 8], strides = [1, 1]} : vector<9x96xf32> to vector<9x8xf32>
    %84 = vector.extract_strided_slice %28 {offsets = [0, 56], sizes = [9, 8], strides = [1, 1]} : vector<9x96xf32> to vector<9x8xf32>
    %85 = vector.extract_strided_slice %28 {offsets = [0, 88], sizes = [9, 8], strides = [1, 1]} : vector<9x96xf32> to vector<9x8xf32>
    %cst_34 = arith.constant dense<0.000000e+00> : vector<9x9xf32>
    %86 = tpu.matmul %83, %84, %cst_34 {dimension_numbers = #tpu.dot_dimension_numbers<[1], [1], [0], [0], [0, 0, 1, 0], [], []>} : vector<9x8xf32>, vector<9x8xf32>, vector<9x9xf32> -> vector<9x9xf32>
    %cst_35 = arith.constant 0.353553385 : f32
    %87 = vector.broadcast %cst_35 : f32 to vector<9x9xf32>
    %88 = arith.mulf %86, %87 : vector<9x9xf32>
    %cst_36 = arith.constant dense<0xFF800000> : vector<9xf32>
    %89 = vector.multi_reduction <maximumf>, %88, %cst_36 [1] : vector<9x9xf32> to vector<9xf32>
    %90 = vector.shape_cast %89 : vector<9xf32> to vector<9x1xf32>
    %91 = vector.broadcast %90 : vector<9x1xf32> to vector<9x9xf32>
    %92 = arith.subf %88, %91 : vector<9x9xf32>
    %93 = math.exp %92 : vector<9x9xf32>
    %cst_37 = arith.constant dense<0.000000e+00> : vector<9xf32>
    %94 = vector.multi_reduction <add>, %93, %cst_37 [1] : vector<9x9xf32> to vector<9xf32>
    %95 = vector.shape_cast %94 : vector<9xf32> to vector<9x1xf32>
    %96 = tpu.reciprocal %95 {approx = true} : vector<9x1xf32> -> vector<9x1xf32>
    %97 = vector.broadcast %96 : vector<9x1xf32> to vector<9x9xf32>
    %98 = arith.mulf %93, %97 : vector<9x9xf32>
    %cst_38 = arith.constant dense<0.000000e+00> : vector<9x8xf32>
    %99 = tpu.matmul %98, %85, %cst_38 {dimension_numbers = #tpu.dot_dimension_numbers<[1], [0], [0], [1], [0, 0, 1, 1], [], []>} : vector<9x9xf32>, vector<9x8xf32>, vector<9x8xf32> -> vector<9x8xf32>
    %c0_39 = arith.constant 0 : index
    %c24 = arith.constant 24 : index
    %100 = vector.load %arg15[%c0_39, %c24] : memref<9x32xf32, #tpu.memory_space<vmem>>, vector<9x8xf32>
    tpu.vector_store %arg15[%c0_39, %c24], %99 {strides = array<i32>} : memref<9x32xf32, #tpu.memory_space<vmem>>, vector<9x8xf32>,
    %c0_40 = arith.constant 0 : index
    %c0_41 = arith.constant 0 : index
    %101 = vector.load %arg15[%c0_40, %c0_41] : memref<9x32xf32, #tpu.memory_space<vmem>>, vector<9x32xf32>
    %c0_42 = arith.constant 0 : index
    %c0_43 = arith.constant 0 : index
    %102 = vector.load %arg6[%c0_42, %c0_43] : memref<32x32xf32, #tpu.memory_space<vmem>>, vector<32x32xf32>
    %cst_44 = arith.constant dense<0.000000e+00> : vector<9x32xf32>
    %103 = tpu.matmul %101, %102, %cst_44 {dimension_numbers = #tpu.dot_dimension_numbers<[1], [0], [0], [1], [0, 0, 1, 1], [], []>} : vector<9x32xf32>, vector<32x32xf32>, vector<9x32xf32> -> vector<9x32xf32>
    %104 = arith.addf %1, %103 : vector<9x32xf32>
    %c0_45 = arith.constant 0 : index
    %c0_46 = arith.constant 0 : index
    %105 = vector.load %arg7[%c0_45, %c0_46] : memref<1x32xf32, #tpu.memory_space<vmem>>, vector<1x32xf32>
    %106 = vector.broadcast %105 : vector<1x32xf32> to vector<9x32xf32>
    %107 = arith.addf %104, %106 : vector<9x32xf32>
    %c0_47 = arith.constant 0 : index
    %c0_48 = arith.constant 0 : index
    %108 = vector.load %arg8[%c0_47, %c0_48] : memref<1x32xf32, #tpu.memory_space<vmem>>, vector<1x32xf32>
    %c0_49 = arith.constant 0 : index
    %c0_50 = arith.constant 0 : index
    %109 = vector.load %arg9[%c0_49, %c0_50] : memref<1x32xf32, #tpu.memory_space<vmem>>, vector<1x32xf32>
    %cst_51 = arith.constant dense<0.000000e+00> : vector<9xf32>
    %110 = vector.multi_reduction <add>, %107, %cst_51 [1] : vector<9x32xf32> to vector<9xf32>
    %111 = vector.shape_cast %110 : vector<9xf32> to vector<9x1xf32>
    %cst_52 = arith.constant 3.200000e+01 : f32
    %112 = vector.broadcast %cst_52 : f32 to vector<9x1xf32>
    %113 = arith.divf %111, %112 : vector<9x1xf32>
    %114 = vector.broadcast %113 : vector<9x1xf32> to vector<9x32xf32>
    %115 = arith.subf %107, %114 : vector<9x32xf32>
    %116 = arith.mulf %115, %115 : vector<9x32xf32>
    %cst_53 = arith.constant dense<0.000000e+00> : vector<9xf32>
    %117 = vector.multi_reduction <add>, %116, %cst_53 [1] : vector<9x32xf32> to vector<9xf32>
    %118 = vector.shape_cast %117 : vector<9xf32> to vector<9x1xf32>
    %cst_54 = arith.constant 3.200000e+01 : f32
    %119 = vector.broadcast %cst_54 : f32 to vector<9x1xf32>
    %120 = arith.divf %118, %119 : vector<9x1xf32>
    %cst_55 = arith.constant 9.99999974E-6 : f32
    %121 = vector.broadcast %cst_55 : f32 to vector<9x1xf32>
    %122 = arith.addf %120, %121 : vector<9x1xf32>
    %123 = math.rsqrt %122 : vector<9x1xf32>
    %124 = vector.broadcast %123 : vector<9x1xf32> to vector<9x32xf32>
    %125 = arith.mulf %115, %124 : vector<9x32xf32>
    %126 = vector.broadcast %108 : vector<1x32xf32> to vector<9x32xf32>
    %127 = arith.mulf %125, %126 : vector<9x32xf32>
    %128 = vector.broadcast %109 : vector<1x32xf32> to vector<9x32xf32>
    %129 = arith.addf %127, %128 : vector<9x32xf32>
    %c0_56 = arith.constant 0 : index
    %c0_57 = arith.constant 0 : index
    %130 = vector.load %arg10[%c0_56, %c0_57] : memref<32x128xf32, #tpu.memory_space<vmem>>, vector<32x128xf32>
    %cst_58 = arith.constant dense<0.000000e+00> : vector<9x128xf32>
    %131 = tpu.matmul %129, %130, %cst_58 {dimension_numbers = #tpu.dot_dimension_numbers<[1], [0], [0], [1], [0, 0, 1, 1], [], []>} : vector<9x32xf32>, vector<32x128xf32>, vector<9x128xf32> -> vector<9x128xf32>
    %c0_59 = arith.constant 0 : index
    %c0_60 = arith.constant 0 : index
    %132 = vector.load %arg11[%c0_59, %c0_60] : memref<1x128xf32, #tpu.memory_space<vmem>>, vector<1x128xf32>
    %133 = vector.broadcast %132 : vector<1x128xf32> to vector<9x128xf32>
    %134 = arith.addf %131, %133 : vector<9x128xf32>
    %cst_61 = arith.constant 5.000000e-01 : f32
    %135 = vector.broadcast %cst_61 : f32 to vector<9x128xf32>
    %136 = arith.mulf %135, %134 : vector<9x128xf32>
    %cst_62 = arith.constant 0.707106769 : f32
    %137 = vector.broadcast %cst_62 : f32 to vector<9x128xf32>
    %138 = arith.mulf %134, %137 : vector<9x128xf32>
    %cst_63 = arith.constant 0.000000e+00 : f32
    %139 = vector.broadcast %cst_63 : f32 to vector<9x128xf32>
    %140 = arith.cmpf oge, %138, %139 : vector<9x128xf32>
    %cst_64 = arith.constant 1.000000e+00 : f32
    %cst_65 = arith.constant -1.000000e+00 : f32
    %141 = vector.broadcast %cst_64 : f32 to vector<9x128xf32>
    %142 = vector.broadcast %cst_65 : f32 to vector<9x128xf32>
    %143 = arith.select %140, %141, %142 : vector<9x128xi1>, vector<9x128xf32>
    %144 = math.absf %138 : vector<9x128xf32>
    %cst_66 = arith.constant 0.327591091 : f32
    %145 = vector.broadcast %cst_66 : f32 to vector<9x128xf32>
    %146 = arith.mulf %145, %144 : vector<9x128xf32>
    %cst_67 = arith.constant 1.000000e+00 : f32
    %147 = vector.broadcast %cst_67 : f32 to vector<9x128xf32>
    %148 = arith.addf %147, %146 : vector<9x128xf32>
    %cst_68 = arith.constant 1.000000e+00 : f32
    %149 = vector.broadcast %cst_68 : f32 to vector<9x128xf32>
    %150 = arith.divf %149, %148 : vector<9x128xf32>
    %cst_69 = arith.constant 1.06140542 : f32
    %151 = vector.broadcast %cst_69 : f32 to vector<9x128xf32>
    %152 = arith.mulf %151, %150 : vector<9x128xf32>
    %cst_70 = arith.constant -1.45315206 : f32
    %153 = vector.broadcast %cst_70 : f32 to vector<9x128xf32>
    %154 = arith.addf %152, %153 : vector<9x128xf32>
    %155 = arith.mulf %154, %150 : vector<9x128xf32>
    %cst_71 = arith.constant 1.42141378 : f32
    %156 = vector.broadcast %cst_71 : f32 to vector<9x128xf32>
    %157 = arith.addf %155, %156 : vector<9x128xf32>
    %158 = arith.mulf %157, %150 : vector<9x128xf32>
    %cst_72 = arith.constant -0.284496725 : f32
    %159 = vector.broadcast %cst_72 : f32 to vector<9x128xf32>
    %160 = arith.addf %158, %159 : vector<9x128xf32>
    %161 = arith.mulf %160, %150 : vector<9x128xf32>
    %cst_73 = arith.constant 0.254829586 : f32
    %162 = vector.broadcast %cst_73 : f32 to vector<9x128xf32>
    %163 = arith.addf %161, %162 : vector<9x128xf32>
    %164 = arith.mulf %163, %150 : vector<9x128xf32>
    %165 = arith.mulf %144, %144 : vector<9x128xf32>
    %cst_74 = arith.constant 0.000000e+00 : f32
    %166 = vector.broadcast %cst_74 : f32 to vector<9x128xf32>
    %167 = arith.subf %166, %165 : vector<9x128xf32>
    %168 = math.exp %167 : vector<9x128xf32>
    %169 = arith.mulf %164, %168 : vector<9x128xf32>
    %cst_75 = arith.constant 1.000000e+00 : f32
    %170 = vector.broadcast %cst_75 : f32 to vector<9x128xf32>
    %171 = arith.subf %170, %169 : vector<9x128xf32>
    %172 = arith.mulf %143, %171 : vector<9x128xf32>
    %cst_76 = arith.constant 1.000000e+00 : f32
    %173 = vector.broadcast %cst_76 : f32 to vector<9x128xf32>
    %174 = arith.addf %173, %172 : vector<9x128xf32>
    %175 = arith.mulf %136, %174 : vector<9x128xf32>
    %c0_77 = arith.constant 0 : index
    %c0_78 = arith.constant 0 : index
    %176 = vector.load %arg12[%c0_77, %c0_78] : memref<128x32xf32, #tpu.memory_space<vmem>>, vector<128x32xf32>
    %cst_79 = arith.constant dense<0.000000e+00> : vector<9x32xf32>
    %177 = tpu.matmul %175, %176, %cst_79 {dimension_numbers = #tpu.dot_dimension_numbers<[1], [0], [0], [1], [0, 0, 1, 1], [], []>} : vector<9x128xf32>, vector<128x32xf32>, vector<9x32xf32> -> vector<9x32xf32>
    %178 = arith.addf %107, %177 : vector<9x32xf32>
    %c0_80 = arith.constant 0 : index
    %c0_81 = arith.constant 0 : index
    %179 = vector.load %arg13[%c0_80, %c0_81] : memref<1x32xf32, #tpu.memory_space<vmem>>, vector<1x32xf32>
    %180 = vector.broadcast %179 : vector<1x32xf32> to vector<9x32xf32>
    %181 = arith.addf %178, %180 : vector<9x32xf32>
    %c0_82 = arith.constant 0 : index
    %c0_83 = arith.constant 0 : index
    %c0_84 = arith.constant 0 : index
    %182 = vector.load %arg14[%c0_82, %c0_83, %c0_84] : memref<1x9x32xf32, #tpu.memory_space<vmem>>, vector<1x9x32xf32>
    %183 = vector.shape_cast %182 : vector<1x9x32xf32> to vector<9x32xf32>
    %184 = vector.shape_cast %181 : vector<9x32xf32> to vector<1x9x32xf32>
    tpu.vector_store %arg14[%c0_82, %c0_83, %c0_84], %184 {strides = array<i32>} : memref<1x9x32xf32, #tpu.memory_space<vmem>>, vector<1x9x32xf32>,
    return
  }
  func.func @transform_0(%arg0: i32) -> (i32, i32, i32) {
    %c0_i32 = arith.constant 0 : i32
    %c0_i32_0 = arith.constant 0 : i32
    %c0_i32_1 = arith.constant 0 : i32
    return %arg0, %c0_i32, %c0_i32_0 : i32, i32, i32
  }
  func.func @transform_1(%arg0: i32) -> (i32, i32) {
    %c0_i32 = arith.constant 0 : i32
    %c0_i32_0 = arith.constant 0 : i32
    %c0_i32_1 = arith.constant 0 : i32
    return %c0_i32, %c0_i32_0 : i32, i32
  }
  func.func @transform_2(%arg0: i32) -> (i32, i32) {
    %c0_i32 = arith.constant 0 : i32
    %c0_i32_0 = arith.constant 0 : i32
    %c0_i32_1 = arith.constant 0 : i32
    return %c0_i32, %c0_i32_0 : i32, i32
  }
  func.func @transform_3(%arg0: i32) -> (i32, i32) {
    %c0_i32 = arith.constant 0 : i32
    %c0_i32_0 = arith.constant 0 : i32
    %c0_i32_1 = arith.constant 0 : i32
    return %c0_i32, %c0_i32_0 : i32, i32
  }
  func.func @transform_4(%arg0: i32) -> (i32, i32) {
    %c0_i32 = arith.constant 0 : i32
    %c0_i32_0 = arith.constant 0 : i32
    %c0_i32_1 = arith.constant 0 : i32
    return %c0_i32, %c0_i32_0 : i32, i32
  }
  func.func @transform_5(%arg0: i32) -> (i32, i32) {
    %c0_i32 = arith.constant 0 : i32
    %c0_i32_0 = arith.constant 0 : i32
    %c0_i32_1 = arith.constant 0 : i32
    return %c0_i32, %c0_i32_0 : i32, i32
  }
  func.func @transform_6(%arg0: i32) -> (i32, i32) {
    %c0_i32 = arith.constant 0 : i32
    %c0_i32_0 = arith.constant 0 : i32
    %c0_i32_1 = arith.constant 0 : i32
    return %c0_i32, %c0_i32_0 : i32, i32
  }
  func.func @transform_7(%arg0: i32) -> (i32, i32) {
    %c0_i32 = arith.constant 0 : i32
    %c0_i32_0 = arith.constant 0 : i32
    %c0_i32_1 = arith.constant 0 : i32
    return %c0_i32, %c0_i32_0 : i32, i32
  }
  func.func @transform_8(%arg0: i32) -> (i32, i32) {
    %c0_i32 = arith.constant 0 : i32
    %c0_i32_0 = arith.constant 0 : i32
    %c0_i32_1 = arith.constant 0 : i32
    return %c0_i32, %c0_i32_0 : i32, i32
  }
  func.func @transform_9(%arg0: i32) -> (i32, i32) {
    %c0_i32 = arith.constant 0 : i32
    %c0_i32_0 = arith.constant 0 : i32
    %c0_i32_1 = arith.constant 0 : i32
    return %c0_i32, %c0_i32_0 : i32, i32
  }
  func.func @transform_10(%arg0: i32) -> (i32, i32) {
    %c0_i32 = arith.constant 0 : i32
    %c0_i32_0 = arith.constant 0 : i32
    %c0_i32_1 = arith.constant 0 : i32
    return %c0_i32, %c0_i32_0 : i32, i32
  }
  func.func @transform_11(%arg0: i32) -> (i32, i32) {
    %c0_i32 = arith.constant 0 : i32
    %c0_i32_0 = arith.constant 0 : i32
    %c0_i32_1 = arith.constant 0 : i32
    return %c0_i32, %c0_i32_0 : i32, i32
  }
  func.func @transform_12(%arg0: i32) -> (i32, i32) {
    %c0_i32 = arith.constant 0 : i32
    %c0_i32_0 = arith.constant 0 : i32
    %c0_i32_1 = arith.constant 0 : i32
    return %c0_i32, %c0_i32_0 : i32, i32
  }
  func.func @transform_13(%arg0: i32) -> (i32, i32, i32) {
    %c0_i32 = arith.constant 0 : i32
    %c0_i32_0 = arith.constant 0 : i32
    %c0_i32_1 = arith.constant 0 : i32
    return %arg0, %c0_i32, %c0_i32_0 : i32, i32, i32
  }
}

module attributes {stable_mosaic.version = 11 : i64} {
  func.func @_projector_kernel(%arg0: i32, %arg1: memref<2x32xf32, #tpu.memory_space<vmem>>, %arg2: memref<32x64xf32, #tpu.memory_space<vmem>>, %arg3: memref<1x64xf32, #tpu.memory_space<vmem>>, %arg4: memref<1x64xf32, #tpu.memory_space<vmem>>, %arg5: memref<1x64xf32, #tpu.memory_space<vmem>>, %arg6: memref<64x64xf32, #tpu.memory_space<vmem>>, %arg7: memref<1x64xf32, #tpu.memory_space<vmem>>, %arg8: memref<1x64xf32, #tpu.memory_space<vmem>>, %arg9: memref<1x64xf32, #tpu.memory_space<vmem>>, %arg10: memref<64x32xf32, #tpu.memory_space<vmem>>, %arg11: memref<1x32xf32, #tpu.memory_space<vmem>>, %arg12: memref<2x32xf32, #tpu.memory_space<vmem>>) attributes {dimension_semantics = [#tpu.dimension_semantics<arbitrary>], iteration_bounds = array<i64: 1>, scalar_prefetch = 0 : i64, scratch_operands = 0 : i64, tpu.core_type = #tpu.core_type<tc>, window_params = [{pipeline_mode = #tpu.pipeline_mode<synchronous>, transform_indices = @transform_0, window_bounds = array<i64: 2, 32>}, {pipeline_mode = #tpu.pipeline_mode<synchronous>, transform_indices = @transform_1, window_bounds = array<i64: 32, 64>}, {pipeline_mode = #tpu.pipeline_mode<synchronous>, transform_indices = @transform_2, window_bounds = array<i64: 1, 64>}, {pipeline_mode = #tpu.pipeline_mode<synchronous>, transform_indices = @transform_3, window_bounds = array<i64: 1, 64>}, {pipeline_mode = #tpu.pipeline_mode<synchronous>, transform_indices = @transform_4, window_bounds = array<i64: 1, 64>}, {pipeline_mode = #tpu.pipeline_mode<synchronous>, transform_indices = @transform_5, window_bounds = array<i64: 64, 64>}, {pipeline_mode = #tpu.pipeline_mode<synchronous>, transform_indices = @transform_6, window_bounds = array<i64: 1, 64>}, {pipeline_mode = #tpu.pipeline_mode<synchronous>, transform_indices = @transform_7, window_bounds = array<i64: 1, 64>}, {pipeline_mode = #tpu.pipeline_mode<synchronous>, transform_indices = @transform_8, window_bounds = array<i64: 1, 64>}, {pipeline_mode = #tpu.pipeline_mode<synchronous>, transform_indices = @transform_9, window_bounds = array<i64: 64, 32>}, {pipeline_mode = #tpu.pipeline_mode<synchronous>, transform_indices = @transform_10, window_bounds = array<i64: 1, 32>}, {pipeline_mode = #tpu.pipeline_mode<synchronous>, transform_indices = @transform_11, window_bounds = array<i64: 2, 32>}]} {
    %c0 = arith.constant 0 : index
    %c0_0 = arith.constant 0 : index
    %0 = vector.load %arg1[%c0, %c0_0] : memref<2x32xf32, #tpu.memory_space<vmem>>, vector<2x32xf32>
    %c0_1 = arith.constant 0 : index
    %c0_2 = arith.constant 0 : index
    %1 = vector.load %arg2[%c0_1, %c0_2] : memref<32x64xf32, #tpu.memory_space<vmem>>, vector<32x64xf32>
    %cst = arith.constant dense<0.000000e+00> : vector<2x64xf32>
    %2 = tpu.matmul %0, %1, %cst {dimension_numbers = #tpu.dot_dimension_numbers<[1], [0], [0], [1], [0, 0, 1, 1], [], []>} : vector<2x32xf32>, vector<32x64xf32>, vector<2x64xf32> -> vector<2x64xf32>
    %c0_3 = arith.constant 0 : index
    %c0_4 = arith.constant 0 : index
    %3 = vector.load %arg3[%c0_3, %c0_4] : memref<1x64xf32, #tpu.memory_space<vmem>>, vector<1x64xf32>
    %4 = vector.broadcast %3 : vector<1x64xf32> to vector<2x64xf32>
    %5 = arith.addf %2, %4 : vector<2x64xf32>
    %c0_5 = arith.constant 0 : index
    %c0_6 = arith.constant 0 : index
    %6 = vector.load %arg4[%c0_5, %c0_6] : memref<1x64xf32, #tpu.memory_space<vmem>>, vector<1x64xf32>
    %c0_7 = arith.constant 0 : index
    %c0_8 = arith.constant 0 : index
    %7 = vector.load %arg5[%c0_7, %c0_8] : memref<1x64xf32, #tpu.memory_space<vmem>>, vector<1x64xf32>
    %cst_9 = arith.constant dense<0.000000e+00> : vector<64xf32>
    %8 = vector.multi_reduction <add>, %5, %cst_9 [0] : vector<2x64xf32> to vector<64xf32>
    %9 = vector.shape_cast %8 : vector<64xf32> to vector<1x64xf32>
    %cst_10 = arith.constant 2.000000e+00 : f32
    %10 = vector.broadcast %cst_10 : f32 to vector<1x64xf32>
    %11 = arith.divf %9, %10 : vector<1x64xf32>
    %12 = vector.broadcast %11 : vector<1x64xf32> to vector<2x64xf32>
    %13 = arith.subf %5, %12 : vector<2x64xf32>
    %14 = arith.mulf %13, %13 : vector<2x64xf32>
    %cst_11 = arith.constant dense<0.000000e+00> : vector<64xf32>
    %15 = vector.multi_reduction <add>, %14, %cst_11 [0] : vector<2x64xf32> to vector<64xf32>
    %16 = vector.shape_cast %15 : vector<64xf32> to vector<1x64xf32>
    %cst_12 = arith.constant 2.000000e+00 : f32
    %17 = vector.broadcast %cst_12 : f32 to vector<1x64xf32>
    %18 = arith.divf %16, %17 : vector<1x64xf32>
    %cst_13 = arith.constant 9.99999974E-6 : f32
    %19 = vector.broadcast %cst_13 : f32 to vector<1x64xf32>
    %20 = arith.addf %18, %19 : vector<1x64xf32>
    %21 = math.rsqrt %20 : vector<1x64xf32>
    %22 = vector.broadcast %21 : vector<1x64xf32> to vector<2x64xf32>
    %23 = arith.mulf %13, %22 : vector<2x64xf32>
    %24 = vector.broadcast %6 : vector<1x64xf32> to vector<2x64xf32>
    %25 = arith.mulf %23, %24 : vector<2x64xf32>
    %26 = vector.broadcast %7 : vector<1x64xf32> to vector<2x64xf32>
    %27 = arith.addf %25, %26 : vector<2x64xf32>
    %cst_14 = arith.constant 0.000000e+00 : f32
    %28 = vector.broadcast %cst_14 : f32 to vector<2x64xf32>
    %29 = arith.maximumf %27, %28 : vector<2x64xf32>
    %c0_15 = arith.constant 0 : index
    %c0_16 = arith.constant 0 : index
    %30 = vector.load %arg6[%c0_15, %c0_16] : memref<64x64xf32, #tpu.memory_space<vmem>>, vector<64x64xf32>
    %cst_17 = arith.constant dense<0.000000e+00> : vector<2x64xf32>
    %31 = tpu.matmul %29, %30, %cst_17 {dimension_numbers = #tpu.dot_dimension_numbers<[1], [0], [0], [1], [0, 0, 1, 1], [], []>} : vector<2x64xf32>, vector<64x64xf32>, vector<2x64xf32> -> vector<2x64xf32>
    %c0_18 = arith.constant 0 : index
    %c0_19 = arith.constant 0 : index
    %32 = vector.load %arg7[%c0_18, %c0_19] : memref<1x64xf32, #tpu.memory_space<vmem>>, vector<1x64xf32>
    %33 = vector.broadcast %32 : vector<1x64xf32> to vector<2x64xf32>
    %34 = arith.addf %31, %33 : vector<2x64xf32>
    %c0_20 = arith.constant 0 : index
    %c0_21 = arith.constant 0 : index
    %35 = vector.load %arg8[%c0_20, %c0_21] : memref<1x64xf32, #tpu.memory_space<vmem>>, vector<1x64xf32>
    %c0_22 = arith.constant 0 : index
    %c0_23 = arith.constant 0 : index
    %36 = vector.load %arg9[%c0_22, %c0_23] : memref<1x64xf32, #tpu.memory_space<vmem>>, vector<1x64xf32>
    %cst_24 = arith.constant dense<0.000000e+00> : vector<64xf32>
    %37 = vector.multi_reduction <add>, %34, %cst_24 [0] : vector<2x64xf32> to vector<64xf32>
    %38 = vector.shape_cast %37 : vector<64xf32> to vector<1x64xf32>
    %cst_25 = arith.constant 2.000000e+00 : f32
    %39 = vector.broadcast %cst_25 : f32 to vector<1x64xf32>
    %40 = arith.divf %38, %39 : vector<1x64xf32>
    %41 = vector.broadcast %40 : vector<1x64xf32> to vector<2x64xf32>
    %42 = arith.subf %34, %41 : vector<2x64xf32>
    %43 = arith.mulf %42, %42 : vector<2x64xf32>
    %cst_26 = arith.constant dense<0.000000e+00> : vector<64xf32>
    %44 = vector.multi_reduction <add>, %43, %cst_26 [0] : vector<2x64xf32> to vector<64xf32>
    %45 = vector.shape_cast %44 : vector<64xf32> to vector<1x64xf32>
    %cst_27 = arith.constant 2.000000e+00 : f32
    %46 = vector.broadcast %cst_27 : f32 to vector<1x64xf32>
    %47 = arith.divf %45, %46 : vector<1x64xf32>
    %cst_28 = arith.constant 9.99999974E-6 : f32
    %48 = vector.broadcast %cst_28 : f32 to vector<1x64xf32>
    %49 = arith.addf %47, %48 : vector<1x64xf32>
    %50 = math.rsqrt %49 : vector<1x64xf32>
    %51 = vector.broadcast %50 : vector<1x64xf32> to vector<2x64xf32>
    %52 = arith.mulf %42, %51 : vector<2x64xf32>
    %53 = vector.broadcast %35 : vector<1x64xf32> to vector<2x64xf32>
    %54 = arith.mulf %52, %53 : vector<2x64xf32>
    %55 = vector.broadcast %36 : vector<1x64xf32> to vector<2x64xf32>
    %56 = arith.addf %54, %55 : vector<2x64xf32>
    %cst_29 = arith.constant 0.000000e+00 : f32
    %57 = vector.broadcast %cst_29 : f32 to vector<2x64xf32>
    %58 = arith.maximumf %56, %57 : vector<2x64xf32>
    %c0_30 = arith.constant 0 : index
    %c0_31 = arith.constant 0 : index
    %59 = vector.load %arg10[%c0_30, %c0_31] : memref<64x32xf32, #tpu.memory_space<vmem>>, vector<64x32xf32>
    %cst_32 = arith.constant dense<0.000000e+00> : vector<2x32xf32>
    %60 = tpu.matmul %58, %59, %cst_32 {dimension_numbers = #tpu.dot_dimension_numbers<[1], [0], [0], [1], [0, 0, 1, 1], [], []>} : vector<2x64xf32>, vector<64x32xf32>, vector<2x32xf32> -> vector<2x32xf32>
    %c0_33 = arith.constant 0 : index
    %c0_34 = arith.constant 0 : index
    %61 = vector.load %arg11[%c0_33, %c0_34] : memref<1x32xf32, #tpu.memory_space<vmem>>, vector<1x32xf32>
    %62 = vector.broadcast %61 : vector<1x32xf32> to vector<2x32xf32>
    %63 = arith.addf %60, %62 : vector<2x32xf32>
    %c0_35 = arith.constant 0 : index
    %c0_36 = arith.constant 0 : index
    %64 = vector.load %arg12[%c0_35, %c0_36] : memref<2x32xf32, #tpu.memory_space<vmem>>, vector<2x32xf32>
    tpu.vector_store %arg12[%c0_35, %c0_36], %63 {strides = array<i32>} : memref<2x32xf32, #tpu.memory_space<vmem>>, vector<2x32xf32>,
    return
  }
  func.func @transform_0(%arg0: i32) -> (i32, i32) {
    %c0_i32 = arith.constant 0 : i32
    %c0_i32_0 = arith.constant 0 : i32
    %c0_i32_1 = arith.constant 0 : i32
    return %c0_i32, %c0_i32_0 : i32, i32
  }
  func.func @transform_1(%arg0: i32) -> (i32, i32) {
    %c0_i32 = arith.constant 0 : i32
    %c0_i32_0 = arith.constant 0 : i32
    %c0_i32_1 = arith.constant 0 : i32
    return %c0_i32, %c0_i32_0 : i32, i32
  }
  func.func @transform_2(%arg0: i32) -> (i32, i32) {
    %c0_i32 = arith.constant 0 : i32
    %c0_i32_0 = arith.constant 0 : i32
    %c0_i32_1 = arith.constant 0 : i32
    return %c0_i32, %c0_i32_0 : i32, i32
  }
  func.func @transform_3(%arg0: i32) -> (i32, i32) {
    %c0_i32 = arith.constant 0 : i32
    %c0_i32_0 = arith.constant 0 : i32
    %c0_i32_1 = arith.constant 0 : i32
    return %c0_i32, %c0_i32_0 : i32, i32
  }
  func.func @transform_4(%arg0: i32) -> (i32, i32) {
    %c0_i32 = arith.constant 0 : i32
    %c0_i32_0 = arith.constant 0 : i32
    %c0_i32_1 = arith.constant 0 : i32
    return %c0_i32, %c0_i32_0 : i32, i32
  }
  func.func @transform_5(%arg0: i32) -> (i32, i32) {
    %c0_i32 = arith.constant 0 : i32
    %c0_i32_0 = arith.constant 0 : i32
    %c0_i32_1 = arith.constant 0 : i32
    return %c0_i32, %c0_i32_0 : i32, i32
  }
  func.func @transform_6(%arg0: i32) -> (i32, i32) {
    %c0_i32 = arith.constant 0 : i32
    %c0_i32_0 = arith.constant 0 : i32
    %c0_i32_1 = arith.constant 0 : i32
    return %c0_i32, %c0_i32_0 : i32, i32
  }
  func.func @transform_7(%arg0: i32) -> (i32, i32) {
    %c0_i32 = arith.constant 0 : i32
    %c0_i32_0 = arith.constant 0 : i32
    %c0_i32_1 = arith.constant 0 : i32
    return %c0_i32, %c0_i32_0 : i32, i32
  }
  func.func @transform_8(%arg0: i32) -> (i32, i32) {
    %c0_i32 = arith.constant 0 : i32
    %c0_i32_0 = arith.constant 0 : i32
    %c0_i32_1 = arith.constant 0 : i32
    return %c0_i32, %c0_i32_0 : i32, i32
  }
  func.func @transform_9(%arg0: i32) -> (i32, i32) {
    %c0_i32 = arith.constant 0 : i32
    %c0_i32_0 = arith.constant 0 : i32
    %c0_i32_1 = arith.constant 0 : i32
    return %c0_i32, %c0_i32_0 : i32, i32
  }
  func.func @transform_10(%arg0: i32) -> (i32, i32) {
    %c0_i32 = arith.constant 0 : i32
    %c0_i32_0 = arith.constant 0 : i32
    %c0_i32_1 = arith.constant 0 : i32
    return %c0_i32, %c0_i32_0 : i32, i32
  }
  func.func @transform_11(%arg0: i32) -> (i32, i32) {
    %c0_i32 = arith.constant 0 : i32
    %c0_i32_0 = arith.constant 0 : i32
    %c0_i32_1 = arith.constant 0 : i32
    return %c0_i32, %c0_i32_0 : i32, i32
  }
}

module attributes {stable_mosaic.version = 11 : i64} {
  func.func @_decoder_tail_kernel(%arg0: i32, %arg1: memref<1x17x16xf32, #tpu.memory_space<vmem>>, %arg2: memref<1x16xf32, #tpu.memory_space<vmem>>, %arg3: memref<1x16xf32, #tpu.memory_space<vmem>>, %arg4: memref<16x48xf32, #tpu.memory_space<vmem>>, %arg5: memref<1x48xf32, #tpu.memory_space<vmem>>, %arg6: memref<1x17x48xf32, #tpu.memory_space<vmem>>) attributes {dimension_semantics = [#tpu.dimension_semantics<parallel>], iteration_bounds = array<i64: 2>, scalar_prefetch = 0 : i64, scratch_operands = 0 : i64, tpu.core_type = #tpu.core_type<tc>, window_params = [{transform_indices = @transform_0, window_bounds = array<i64: 1, 17, 16>}, {pipeline_mode = #tpu.pipeline_mode<synchronous>, transform_indices = @transform_1, window_bounds = array<i64: 1, 16>}, {pipeline_mode = #tpu.pipeline_mode<synchronous>, transform_indices = @transform_2, window_bounds = array<i64: 1, 16>}, {pipeline_mode = #tpu.pipeline_mode<synchronous>, transform_indices = @transform_3, window_bounds = array<i64: 16, 48>}, {pipeline_mode = #tpu.pipeline_mode<synchronous>, transform_indices = @transform_4, window_bounds = array<i64: 1, 48>}, {transform_indices = @transform_5, window_bounds = array<i64: 1, 17, 48>}]} {
    %c0 = arith.constant 0 : index
    %c0_0 = arith.constant 0 : index
    %c0_1 = arith.constant 0 : index
    %0 = vector.load %arg1[%c0, %c0_0, %c0_1] : memref<1x17x16xf32, #tpu.memory_space<vmem>>, vector<1x17x16xf32>
    %1 = vector.shape_cast %0 : vector<1x17x16xf32> to vector<17x16xf32>
    %c0_2 = arith.constant 0 : index
    %c0_3 = arith.constant 0 : index
    %2 = vector.load %arg2[%c0_2, %c0_3] : memref<1x16xf32, #tpu.memory_space<vmem>>, vector<1x16xf32>
    %c0_4 = arith.constant 0 : index
    %c0_5 = arith.constant 0 : index
    %3 = vector.load %arg3[%c0_4, %c0_5] : memref<1x16xf32, #tpu.memory_space<vmem>>, vector<1x16xf32>
    %cst = arith.constant dense<0.000000e+00> : vector<17xf32>
    %4 = vector.multi_reduction <add>, %1, %cst [1] : vector<17x16xf32> to vector<17xf32>
    %5 = vector.shape_cast %4 : vector<17xf32> to vector<17x1xf32>
    %cst_6 = arith.constant 1.600000e+01 : f32
    %6 = vector.broadcast %cst_6 : f32 to vector<17x1xf32>
    %7 = arith.divf %5, %6 : vector<17x1xf32>
    %8 = vector.broadcast %7 : vector<17x1xf32> to vector<17x16xf32>
    %9 = arith.subf %1, %8 : vector<17x16xf32>
    %10 = arith.mulf %9, %9 : vector<17x16xf32>
    %cst_7 = arith.constant dense<0.000000e+00> : vector<17xf32>
    %11 = vector.multi_reduction <add>, %10, %cst_7 [1] : vector<17x16xf32> to vector<17xf32>
    %12 = vector.shape_cast %11 : vector<17xf32> to vector<17x1xf32>
    %cst_8 = arith.constant 1.600000e+01 : f32
    %13 = vector.broadcast %cst_8 : f32 to vector<17x1xf32>
    %14 = arith.divf %12, %13 : vector<17x1xf32>
    %cst_9 = arith.constant 9.99999974E-6 : f32
    %15 = vector.broadcast %cst_9 : f32 to vector<17x1xf32>
    %16 = arith.addf %14, %15 : vector<17x1xf32>
    %17 = math.rsqrt %16 : vector<17x1xf32>
    %18 = vector.broadcast %17 : vector<17x1xf32> to vector<17x16xf32>
    %19 = arith.mulf %9, %18 : vector<17x16xf32>
    %20 = vector.broadcast %2 : vector<1x16xf32> to vector<17x16xf32>
    %21 = arith.mulf %19, %20 : vector<17x16xf32>
    %22 = vector.broadcast %3 : vector<1x16xf32> to vector<17x16xf32>
    %23 = arith.addf %21, %22 : vector<17x16xf32>
    %c0_10 = arith.constant 0 : index
    %c0_11 = arith.constant 0 : index
    %24 = vector.load %arg4[%c0_10, %c0_11] : memref<16x48xf32, #tpu.memory_space<vmem>>, vector<16x48xf32>
    %cst_12 = arith.constant dense<0.000000e+00> : vector<17x48xf32>
    %25 = tpu.matmul %23, %24, %cst_12 {dimension_numbers = #tpu.dot_dimension_numbers<[1], [0], [0], [1], [0, 0, 1, 1], [], []>} : vector<17x16xf32>, vector<16x48xf32>, vector<17x48xf32> -> vector<17x48xf32>
    %c0_13 = arith.constant 0 : index
    %c0_14 = arith.constant 0 : index
    %26 = vector.load %arg5[%c0_13, %c0_14] : memref<1x48xf32, #tpu.memory_space<vmem>>, vector<1x48xf32>
    %27 = vector.broadcast %26 : vector<1x48xf32> to vector<17x48xf32>
    %28 = arith.addf %25, %27 : vector<17x48xf32>
    %c0_15 = arith.constant 0 : index
    %c0_16 = arith.constant 0 : index
    %c0_17 = arith.constant 0 : index
    %29 = vector.load %arg6[%c0_15, %c0_16, %c0_17] : memref<1x17x48xf32, #tpu.memory_space<vmem>>, vector<1x17x48xf32>
    %30 = vector.shape_cast %29 : vector<1x17x48xf32> to vector<17x48xf32>
    %31 = vector.shape_cast %28 : vector<17x48xf32> to vector<1x17x48xf32>
    tpu.vector_store %arg6[%c0_15, %c0_16, %c0_17], %31 {strides = array<i32>} : memref<1x17x48xf32, #tpu.memory_space<vmem>>, vector<1x17x48xf32>,
    return
  }
  func.func @transform_0(%arg0: i32) -> (i32, i32, i32) {
    %c0_i32 = arith.constant 0 : i32
    %c0_i32_0 = arith.constant 0 : i32
    %c0_i32_1 = arith.constant 0 : i32
    return %arg0, %c0_i32, %c0_i32_0 : i32, i32, i32
  }
  func.func @transform_1(%arg0: i32) -> (i32, i32) {
    %c0_i32 = arith.constant 0 : i32
    %c0_i32_0 = arith.constant 0 : i32
    %c0_i32_1 = arith.constant 0 : i32
    return %c0_i32, %c0_i32_0 : i32, i32
  }
  func.func @transform_2(%arg0: i32) -> (i32, i32) {
    %c0_i32 = arith.constant 0 : i32
    %c0_i32_0 = arith.constant 0 : i32
    %c0_i32_1 = arith.constant 0 : i32
    return %c0_i32, %c0_i32_0 : i32, i32
  }
  func.func @transform_3(%arg0: i32) -> (i32, i32) {
    %c0_i32 = arith.constant 0 : i32
    %c0_i32_0 = arith.constant 0 : i32
    %c0_i32_1 = arith.constant 0 : i32
    return %c0_i32, %c0_i32_0 : i32, i32
  }
  func.func @transform_4(%arg0: i32) -> (i32, i32) {
    %c0_i32 = arith.constant 0 : i32
    %c0_i32_0 = arith.constant 0 : i32
    %c0_i32_1 = arith.constant 0 : i32
    return %c0_i32, %c0_i32_0 : i32, i32
  }
  func.func @transform_5(%arg0: i32) -> (i32, i32, i32) {
    %c0_i32 = arith.constant 0 : i32
    %c0_i32_0 = arith.constant 0 : i32
    %c0_i32_1 = arith.constant 0 : i32
    return %arg0, %c0_i32, %c0_i32_0 : i32, i32, i32
  }
}

module attributes {stable_mosaic.version = 11 : i64} {
  func.func @_block_kernel(%arg0: i32, %arg1: memref<1x17x16xf32, #tpu.memory_space<vmem>>, %arg2: memref<1x16xf32, #tpu.memory_space<vmem>>, %arg3: memref<1x16xf32, #tpu.memory_space<vmem>>, %arg4: memref<16x48xf32, #tpu.memory_space<vmem>>, %arg5: memref<1x48xf32, #tpu.memory_space<vmem>>, %arg6: memref<16x16xf32, #tpu.memory_space<vmem>>, %arg7: memref<1x16xf32, #tpu.memory_space<vmem>>, %arg8: memref<1x16xf32, #tpu.memory_space<vmem>>, %arg9: memref<1x16xf32, #tpu.memory_space<vmem>>, %arg10: memref<16x64xf32, #tpu.memory_space<vmem>>, %arg11: memref<1x64xf32, #tpu.memory_space<vmem>>, %arg12: memref<64x16xf32, #tpu.memory_space<vmem>>, %arg13: memref<1x16xf32, #tpu.memory_space<vmem>>, %arg14: memref<1x17x16xf32, #tpu.memory_space<vmem>>, %arg15: memref<17x16xf32, #tpu.memory_space<vmem>>) attributes {dimension_semantics = [#tpu.dimension_semantics<parallel>], iteration_bounds = array<i64: 2>, scalar_prefetch = 0 : i64, scratch_operands = 1 : i64, tpu.core_type = #tpu.core_type<tc>, window_params = [{transform_indices = @transform_0, window_bounds = array<i64: 1, 17, 16>}, {pipeline_mode = #tpu.pipeline_mode<synchronous>, transform_indices = @transform_1, window_bounds = array<i64: 1, 16>}, {pipeline_mode = #tpu.pipeline_mode<synchronous>, transform_indices = @transform_2, window_bounds = array<i64: 1, 16>}, {pipeline_mode = #tpu.pipeline_mode<synchronous>, transform_indices = @transform_3, window_bounds = array<i64: 16, 48>}, {pipeline_mode = #tpu.pipeline_mode<synchronous>, transform_indices = @transform_4, window_bounds = array<i64: 1, 48>}, {pipeline_mode = #tpu.pipeline_mode<synchronous>, transform_indices = @transform_5, window_bounds = array<i64: 16, 16>}, {pipeline_mode = #tpu.pipeline_mode<synchronous>, transform_indices = @transform_6, window_bounds = array<i64: 1, 16>}, {pipeline_mode = #tpu.pipeline_mode<synchronous>, transform_indices = @transform_7, window_bounds = array<i64: 1, 16>}, {pipeline_mode = #tpu.pipeline_mode<synchronous>, transform_indices = @transform_8, window_bounds = array<i64: 1, 16>}, {pipeline_mode = #tpu.pipeline_mode<synchronous>, transform_indices = @transform_9, window_bounds = array<i64: 16, 64>}, {pipeline_mode = #tpu.pipeline_mode<synchronous>, transform_indices = @transform_10, window_bounds = array<i64: 1, 64>}, {pipeline_mode = #tpu.pipeline_mode<synchronous>, transform_indices = @transform_11, window_bounds = array<i64: 64, 16>}, {pipeline_mode = #tpu.pipeline_mode<synchronous>, transform_indices = @transform_12, window_bounds = array<i64: 1, 16>}, {transform_indices = @transform_13, window_bounds = array<i64: 1, 17, 16>}]} {
    %c0 = arith.constant 0 : index
    %c0_0 = arith.constant 0 : index
    %c0_1 = arith.constant 0 : index
    %0 = vector.load %arg1[%c0, %c0_0, %c0_1] : memref<1x17x16xf32, #tpu.memory_space<vmem>>, vector<1x17x16xf32>
    %1 = vector.shape_cast %0 : vector<1x17x16xf32> to vector<17x16xf32>
    %c0_2 = arith.constant 0 : index
    %c0_3 = arith.constant 0 : index
    %2 = vector.load %arg2[%c0_2, %c0_3] : memref<1x16xf32, #tpu.memory_space<vmem>>, vector<1x16xf32>
    %c0_4 = arith.constant 0 : index
    %c0_5 = arith.constant 0 : index
    %3 = vector.load %arg3[%c0_4, %c0_5] : memref<1x16xf32, #tpu.memory_space<vmem>>, vector<1x16xf32>
    %cst = arith.constant dense<0.000000e+00> : vector<17xf32>
    %4 = vector.multi_reduction <add>, %1, %cst [1] : vector<17x16xf32> to vector<17xf32>
    %5 = vector.shape_cast %4 : vector<17xf32> to vector<17x1xf32>
    %cst_6 = arith.constant 1.600000e+01 : f32
    %6 = vector.broadcast %cst_6 : f32 to vector<17x1xf32>
    %7 = arith.divf %5, %6 : vector<17x1xf32>
    %8 = vector.broadcast %7 : vector<17x1xf32> to vector<17x16xf32>
    %9 = arith.subf %1, %8 : vector<17x16xf32>
    %10 = arith.mulf %9, %9 : vector<17x16xf32>
    %cst_7 = arith.constant dense<0.000000e+00> : vector<17xf32>
    %11 = vector.multi_reduction <add>, %10, %cst_7 [1] : vector<17x16xf32> to vector<17xf32>
    %12 = vector.shape_cast %11 : vector<17xf32> to vector<17x1xf32>
    %cst_8 = arith.constant 1.600000e+01 : f32
    %13 = vector.broadcast %cst_8 : f32 to vector<17x1xf32>
    %14 = arith.divf %12, %13 : vector<17x1xf32>
    %cst_9 = arith.constant 9.99999974E-6 : f32
    %15 = vector.broadcast %cst_9 : f32 to vector<17x1xf32>
    %16 = arith.addf %14, %15 : vector<17x1xf32>
    %17 = math.rsqrt %16 : vector<17x1xf32>
    %18 = vector.broadcast %17 : vector<17x1xf32> to vector<17x16xf32>
    %19 = arith.mulf %9, %18 : vector<17x16xf32>
    %20 = vector.broadcast %2 : vector<1x16xf32> to vector<17x16xf32>
    %21 = arith.mulf %19, %20 : vector<17x16xf32>
    %22 = vector.broadcast %3 : vector<1x16xf32> to vector<17x16xf32>
    %23 = arith.addf %21, %22 : vector<17x16xf32>
    %c0_10 = arith.constant 0 : index
    %c0_11 = arith.constant 0 : index
    %24 = vector.load %arg4[%c0_10, %c0_11] : memref<16x48xf32, #tpu.memory_space<vmem>>, vector<16x48xf32>
    %cst_12 = arith.constant dense<0.000000e+00> : vector<17x48xf32>
    %25 = tpu.matmul %23, %24, %cst_12 {dimension_numbers = #tpu.dot_dimension_numbers<[1], [0], [0], [1], [0, 0, 1, 1], [], []>} : vector<17x16xf32>, vector<16x48xf32>, vector<17x48xf32> -> vector<17x48xf32>
    %c0_13 = arith.constant 0 : index
    %c0_14 = arith.constant 0 : index
    %26 = vector.load %arg5[%c0_13, %c0_14] : memref<1x48xf32, #tpu.memory_space<vmem>>, vector<1x48xf32>
    %27 = vector.broadcast %26 : vector<1x48xf32> to vector<17x48xf32>
    %28 = arith.addf %25, %27 : vector<17x48xf32>
    %29 = vector.extract_strided_slice %28 {offsets = [0, 0], sizes = [17, 4], strides = [1, 1]} : vector<17x48xf32> to vector<17x4xf32>
    %30 = vector.extract_strided_slice %28 {offsets = [0, 16], sizes = [17, 4], strides = [1, 1]} : vector<17x48xf32> to vector<17x4xf32>
    %31 = vector.extract_strided_slice %28 {offsets = [0, 32], sizes = [17, 4], strides = [1, 1]} : vector<17x48xf32> to vector<17x4xf32>
    %cst_15 = arith.constant dense<0.000000e+00> : vector<17x17xf32>
    %32 = tpu.matmul %29, %30, %cst_15 {dimension_numbers = #tpu.dot_dimension_numbers<[1], [1], [0], [0], [0, 0, 1, 0], [], []>} : vector<17x4xf32>, vector<17x4xf32>, vector<17x17xf32> -> vector<17x17xf32>
    %cst_16 = arith.constant 5.000000e-01 : f32
    %33 = vector.broadcast %cst_16 : f32 to vector<17x17xf32>
    %34 = arith.mulf %32, %33 : vector<17x17xf32>
    %cst_17 = arith.constant dense<0xFF800000> : vector<17xf32>
    %35 = vector.multi_reduction <maximumf>, %34, %cst_17 [1] : vector<17x17xf32> to vector<17xf32>
    %36 = vector.shape_cast %35 : vector<17xf32> to vector<17x1xf32>
    %37 = vector.broadcast %36 : vector<17x1xf32> to vector<17x17xf32>
    %38 = arith.subf %34, %37 : vector<17x17xf32>
    %39 = math.exp %38 : vector<17x17xf32>
    %cst_18 = arith.constant dense<0.000000e+00> : vector<17xf32>
    %40 = vector.multi_reduction <add>, %39, %cst_18 [1] : vector<17x17xf32> to vector<17xf32>
    %41 = vector.shape_cast %40 : vector<17xf32> to vector<17x1xf32>
    %42 = tpu.reciprocal %41 {approx = true} : vector<17x1xf32> -> vector<17x1xf32>
    %43 = vector.broadcast %42 : vector<17x1xf32> to vector<17x17xf32>
    %44 = arith.mulf %39, %43 : vector<17x17xf32>
    %cst_19 = arith.constant dense<0.000000e+00> : vector<17x4xf32>
    %45 = tpu.matmul %44, %31, %cst_19 {dimension_numbers = #tpu.dot_dimension_numbers<[1], [0], [0], [1], [0, 0, 1, 1], [], []>} : vector<17x17xf32>, vector<17x4xf32>, vector<17x4xf32> -> vector<17x4xf32>
    %c0_20 = arith.constant 0 : index
    %c0_21 = arith.constant 0 : index
    %46 = vector.load %arg15[%c0_20, %c0_21] : memref<17x16xf32, #tpu.memory_space<vmem>>, vector<17x4xf32>
    tpu.vector_store %arg15[%c0_20, %c0_21], %45 {strides = array<i32>} : memref<17x16xf32, #tpu.memory_space<vmem>>, vector<17x4xf32>,
    %47 = vector.extract_strided_slice %28 {offsets = [0, 4], sizes = [17, 4], strides = [1, 1]} : vector<17x48xf32> to vector<17x4xf32>
    %48 = vector.extract_strided_slice %28 {offsets = [0, 20], sizes = [17, 4], strides = [1, 1]} : vector<17x48xf32> to vector<17x4xf32>
    %49 = vector.extract_strided_slice %28 {offsets = [0, 36], sizes = [17, 4], strides = [1, 1]} : vector<17x48xf32> to vector<17x4xf32>
    %cst_22 = arith.constant dense<0.000000e+00> : vector<17x17xf32>
    %50 = tpu.matmul %47, %48, %cst_22 {dimension_numbers = #tpu.dot_dimension_numbers<[1], [1], [0], [0], [0, 0, 1, 0], [], []>} : vector<17x4xf32>, vector<17x4xf32>, vector<17x17xf32> -> vector<17x17xf32>
    %cst_23 = arith.constant 5.000000e-01 : f32
    %51 = vector.broadcast %cst_23 : f32 to vector<17x17xf32>
    %52 = arith.mulf %50, %51 : vector<17x17xf32>
    %cst_24 = arith.constant dense<0xFF800000> : vector<17xf32>
    %53 = vector.multi_reduction <maximumf>, %52, %cst_24 [1] : vector<17x17xf32> to vector<17xf32>
    %54 = vector.shape_cast %53 : vector<17xf32> to vector<17x1xf32>
    %55 = vector.broadcast %54 : vector<17x1xf32> to vector<17x17xf32>
    %56 = arith.subf %52, %55 : vector<17x17xf32>
    %57 = math.exp %56 : vector<17x17xf32>
    %cst_25 = arith.constant dense<0.000000e+00> : vector<17xf32>
    %58 = vector.multi_reduction <add>, %57, %cst_25 [1] : vector<17x17xf32> to vector<17xf32>
    %59 = vector.shape_cast %58 : vector<17xf32> to vector<17x1xf32>
    %60 = tpu.reciprocal %59 {approx = true} : vector<17x1xf32> -> vector<17x1xf32>
    %61 = vector.broadcast %60 : vector<17x1xf32> to vector<17x17xf32>
    %62 = arith.mulf %57, %61 : vector<17x17xf32>
    %cst_26 = arith.constant dense<0.000000e+00> : vector<17x4xf32>
    %63 = tpu.matmul %62, %49, %cst_26 {dimension_numbers = #tpu.dot_dimension_numbers<[1], [0], [0], [1], [0, 0, 1, 1], [], []>} : vector<17x17xf32>, vector<17x4xf32>, vector<17x4xf32> -> vector<17x4xf32>
    %c0_27 = arith.constant 0 : index
    %c4 = arith.constant 4 : index
    %64 = vector.load %arg15[%c0_27, %c4] : memref<17x16xf32, #tpu.memory_space<vmem>>, vector<17x4xf32>
    tpu.vector_store %arg15[%c0_27, %c4], %63 {strides = array<i32>} : memref<17x16xf32, #tpu.memory_space<vmem>>, vector<17x4xf32>,
    %65 = vector.extract_strided_slice %28 {offsets = [0, 8], sizes = [17, 4], strides = [1, 1]} : vector<17x48xf32> to vector<17x4xf32>
    %66 = vector.extract_strided_slice %28 {offsets = [0, 24], sizes = [17, 4], strides = [1, 1]} : vector<17x48xf32> to vector<17x4xf32>
    %67 = vector.extract_strided_slice %28 {offsets = [0, 40], sizes = [17, 4], strides = [1, 1]} : vector<17x48xf32> to vector<17x4xf32>
    %cst_28 = arith.constant dense<0.000000e+00> : vector<17x17xf32>
    %68 = tpu.matmul %65, %66, %cst_28 {dimension_numbers = #tpu.dot_dimension_numbers<[1], [1], [0], [0], [0, 0, 1, 0], [], []>} : vector<17x4xf32>, vector<17x4xf32>, vector<17x17xf32> -> vector<17x17xf32>
    %cst_29 = arith.constant 5.000000e-01 : f32
    %69 = vector.broadcast %cst_29 : f32 to vector<17x17xf32>
    %70 = arith.mulf %68, %69 : vector<17x17xf32>
    %cst_30 = arith.constant dense<0xFF800000> : vector<17xf32>
    %71 = vector.multi_reduction <maximumf>, %70, %cst_30 [1] : vector<17x17xf32> to vector<17xf32>
    %72 = vector.shape_cast %71 : vector<17xf32> to vector<17x1xf32>
    %73 = vector.broadcast %72 : vector<17x1xf32> to vector<17x17xf32>
    %74 = arith.subf %70, %73 : vector<17x17xf32>
    %75 = math.exp %74 : vector<17x17xf32>
    %cst_31 = arith.constant dense<0.000000e+00> : vector<17xf32>
    %76 = vector.multi_reduction <add>, %75, %cst_31 [1] : vector<17x17xf32> to vector<17xf32>
    %77 = vector.shape_cast %76 : vector<17xf32> to vector<17x1xf32>
    %78 = tpu.reciprocal %77 {approx = true} : vector<17x1xf32> -> vector<17x1xf32>
    %79 = vector.broadcast %78 : vector<17x1xf32> to vector<17x17xf32>
    %80 = arith.mulf %75, %79 : vector<17x17xf32>
    %cst_32 = arith.constant dense<0.000000e+00> : vector<17x4xf32>
    %81 = tpu.matmul %80, %67, %cst_32 {dimension_numbers = #tpu.dot_dimension_numbers<[1], [0], [0], [1], [0, 0, 1, 1], [], []>} : vector<17x17xf32>, vector<17x4xf32>, vector<17x4xf32> -> vector<17x4xf32>
    %c0_33 = arith.constant 0 : index
    %c8 = arith.constant 8 : index
    %82 = vector.load %arg15[%c0_33, %c8] : memref<17x16xf32, #tpu.memory_space<vmem>>, vector<17x4xf32>
    tpu.vector_store %arg15[%c0_33, %c8], %81 {strides = array<i32>} : memref<17x16xf32, #tpu.memory_space<vmem>>, vector<17x4xf32>,
    %83 = vector.extract_strided_slice %28 {offsets = [0, 12], sizes = [17, 4], strides = [1, 1]} : vector<17x48xf32> to vector<17x4xf32>
    %84 = vector.extract_strided_slice %28 {offsets = [0, 28], sizes = [17, 4], strides = [1, 1]} : vector<17x48xf32> to vector<17x4xf32>
    %85 = vector.extract_strided_slice %28 {offsets = [0, 44], sizes = [17, 4], strides = [1, 1]} : vector<17x48xf32> to vector<17x4xf32>
    %cst_34 = arith.constant dense<0.000000e+00> : vector<17x17xf32>
    %86 = tpu.matmul %83, %84, %cst_34 {dimension_numbers = #tpu.dot_dimension_numbers<[1], [1], [0], [0], [0, 0, 1, 0], [], []>} : vector<17x4xf32>, vector<17x4xf32>, vector<17x17xf32> -> vector<17x17xf32>
    %cst_35 = arith.constant 5.000000e-01 : f32
    %87 = vector.broadcast %cst_35 : f32 to vector<17x17xf32>
    %88 = arith.mulf %86, %87 : vector<17x17xf32>
    %cst_36 = arith.constant dense<0xFF800000> : vector<17xf32>
    %89 = vector.multi_reduction <maximumf>, %88, %cst_36 [1] : vector<17x17xf32> to vector<17xf32>
    %90 = vector.shape_cast %89 : vector<17xf32> to vector<17x1xf32>
    %91 = vector.broadcast %90 : vector<17x1xf32> to vector<17x17xf32>
    %92 = arith.subf %88, %91 : vector<17x17xf32>
    %93 = math.exp %92 : vector<17x17xf32>
    %cst_37 = arith.constant dense<0.000000e+00> : vector<17xf32>
    %94 = vector.multi_reduction <add>, %93, %cst_37 [1] : vector<17x17xf32> to vector<17xf32>
    %95 = vector.shape_cast %94 : vector<17xf32> to vector<17x1xf32>
    %96 = tpu.reciprocal %95 {approx = true} : vector<17x1xf32> -> vector<17x1xf32>
    %97 = vector.broadcast %96 : vector<17x1xf32> to vector<17x17xf32>
    %98 = arith.mulf %93, %97 : vector<17x17xf32>
    %cst_38 = arith.constant dense<0.000000e+00> : vector<17x4xf32>
    %99 = tpu.matmul %98, %85, %cst_38 {dimension_numbers = #tpu.dot_dimension_numbers<[1], [0], [0], [1], [0, 0, 1, 1], [], []>} : vector<17x17xf32>, vector<17x4xf32>, vector<17x4xf32> -> vector<17x4xf32>
    %c0_39 = arith.constant 0 : index
    %c12 = arith.constant 12 : index
    %100 = vector.load %arg15[%c0_39, %c12] : memref<17x16xf32, #tpu.memory_space<vmem>>, vector<17x4xf32>
    tpu.vector_store %arg15[%c0_39, %c12], %99 {strides = array<i32>} : memref<17x16xf32, #tpu.memory_space<vmem>>, vector<17x4xf32>,
    %c0_40 = arith.constant 0 : index
    %c0_41 = arith.constant 0 : index
    %101 = vector.load %arg15[%c0_40, %c0_41] : memref<17x16xf32, #tpu.memory_space<vmem>>, vector<17x16xf32>
    %c0_42 = arith.constant 0 : index
    %c0_43 = arith.constant 0 : index
    %102 = vector.load %arg6[%c0_42, %c0_43] : memref<16x16xf32, #tpu.memory_space<vmem>>, vector<16x16xf32>
    %cst_44 = arith.constant dense<0.000000e+00> : vector<17x16xf32>
    %103 = tpu.matmul %101, %102, %cst_44 {dimension_numbers = #tpu.dot_dimension_numbers<[1], [0], [0], [1], [0, 0, 1, 1], [], []>} : vector<17x16xf32>, vector<16x16xf32>, vector<17x16xf32> -> vector<17x16xf32>
    %104 = arith.addf %1, %103 : vector<17x16xf32>
    %c0_45 = arith.constant 0 : index
    %c0_46 = arith.constant 0 : index
    %105 = vector.load %arg7[%c0_45, %c0_46] : memref<1x16xf32, #tpu.memory_space<vmem>>, vector<1x16xf32>
    %106 = vector.broadcast %105 : vector<1x16xf32> to vector<17x16xf32>
    %107 = arith.addf %104, %106 : vector<17x16xf32>
    %c0_47 = arith.constant 0 : index
    %c0_48 = arith.constant 0 : index
    %108 = vector.load %arg8[%c0_47, %c0_48] : memref<1x16xf32, #tpu.memory_space<vmem>>, vector<1x16xf32>
    %c0_49 = arith.constant 0 : index
    %c0_50 = arith.constant 0 : index
    %109 = vector.load %arg9[%c0_49, %c0_50] : memref<1x16xf32, #tpu.memory_space<vmem>>, vector<1x16xf32>
    %cst_51 = arith.constant dense<0.000000e+00> : vector<17xf32>
    %110 = vector.multi_reduction <add>, %107, %cst_51 [1] : vector<17x16xf32> to vector<17xf32>
    %111 = vector.shape_cast %110 : vector<17xf32> to vector<17x1xf32>
    %cst_52 = arith.constant 1.600000e+01 : f32
    %112 = vector.broadcast %cst_52 : f32 to vector<17x1xf32>
    %113 = arith.divf %111, %112 : vector<17x1xf32>
    %114 = vector.broadcast %113 : vector<17x1xf32> to vector<17x16xf32>
    %115 = arith.subf %107, %114 : vector<17x16xf32>
    %116 = arith.mulf %115, %115 : vector<17x16xf32>
    %cst_53 = arith.constant dense<0.000000e+00> : vector<17xf32>
    %117 = vector.multi_reduction <add>, %116, %cst_53 [1] : vector<17x16xf32> to vector<17xf32>
    %118 = vector.shape_cast %117 : vector<17xf32> to vector<17x1xf32>
    %cst_54 = arith.constant 1.600000e+01 : f32
    %119 = vector.broadcast %cst_54 : f32 to vector<17x1xf32>
    %120 = arith.divf %118, %119 : vector<17x1xf32>
    %cst_55 = arith.constant 9.99999974E-6 : f32
    %121 = vector.broadcast %cst_55 : f32 to vector<17x1xf32>
    %122 = arith.addf %120, %121 : vector<17x1xf32>
    %123 = math.rsqrt %122 : vector<17x1xf32>
    %124 = vector.broadcast %123 : vector<17x1xf32> to vector<17x16xf32>
    %125 = arith.mulf %115, %124 : vector<17x16xf32>
    %126 = vector.broadcast %108 : vector<1x16xf32> to vector<17x16xf32>
    %127 = arith.mulf %125, %126 : vector<17x16xf32>
    %128 = vector.broadcast %109 : vector<1x16xf32> to vector<17x16xf32>
    %129 = arith.addf %127, %128 : vector<17x16xf32>
    %c0_56 = arith.constant 0 : index
    %c0_57 = arith.constant 0 : index
    %130 = vector.load %arg10[%c0_56, %c0_57] : memref<16x64xf32, #tpu.memory_space<vmem>>, vector<16x64xf32>
    %cst_58 = arith.constant dense<0.000000e+00> : vector<17x64xf32>
    %131 = tpu.matmul %129, %130, %cst_58 {dimension_numbers = #tpu.dot_dimension_numbers<[1], [0], [0], [1], [0, 0, 1, 1], [], []>} : vector<17x16xf32>, vector<16x64xf32>, vector<17x64xf32> -> vector<17x64xf32>
    %c0_59 = arith.constant 0 : index
    %c0_60 = arith.constant 0 : index
    %132 = vector.load %arg11[%c0_59, %c0_60] : memref<1x64xf32, #tpu.memory_space<vmem>>, vector<1x64xf32>
    %133 = vector.broadcast %132 : vector<1x64xf32> to vector<17x64xf32>
    %134 = arith.addf %131, %133 : vector<17x64xf32>
    %cst_61 = arith.constant 5.000000e-01 : f32
    %135 = vector.broadcast %cst_61 : f32 to vector<17x64xf32>
    %136 = arith.mulf %135, %134 : vector<17x64xf32>
    %cst_62 = arith.constant 0.707106769 : f32
    %137 = vector.broadcast %cst_62 : f32 to vector<17x64xf32>
    %138 = arith.mulf %134, %137 : vector<17x64xf32>
    %cst_63 = arith.constant 0.000000e+00 : f32
    %139 = vector.broadcast %cst_63 : f32 to vector<17x64xf32>
    %140 = arith.cmpf oge, %138, %139 : vector<17x64xf32>
    %cst_64 = arith.constant 1.000000e+00 : f32
    %cst_65 = arith.constant -1.000000e+00 : f32
    %141 = vector.broadcast %cst_64 : f32 to vector<17x64xf32>
    %142 = vector.broadcast %cst_65 : f32 to vector<17x64xf32>
    %143 = arith.select %140, %141, %142 : vector<17x64xi1>, vector<17x64xf32>
    %144 = math.absf %138 : vector<17x64xf32>
    %cst_66 = arith.constant 0.327591091 : f32
    %145 = vector.broadcast %cst_66 : f32 to vector<17x64xf32>
    %146 = arith.mulf %145, %144 : vector<17x64xf32>
    %cst_67 = arith.constant 1.000000e+00 : f32
    %147 = vector.broadcast %cst_67 : f32 to vector<17x64xf32>
    %148 = arith.addf %147, %146 : vector<17x64xf32>
    %cst_68 = arith.constant 1.000000e+00 : f32
    %149 = vector.broadcast %cst_68 : f32 to vector<17x64xf32>
    %150 = arith.divf %149, %148 : vector<17x64xf32>
    %cst_69 = arith.constant 1.06140542 : f32
    %151 = vector.broadcast %cst_69 : f32 to vector<17x64xf32>
    %152 = arith.mulf %151, %150 : vector<17x64xf32>
    %cst_70 = arith.constant -1.45315206 : f32
    %153 = vector.broadcast %cst_70 : f32 to vector<17x64xf32>
    %154 = arith.addf %152, %153 : vector<17x64xf32>
    %155 = arith.mulf %154, %150 : vector<17x64xf32>
    %cst_71 = arith.constant 1.42141378 : f32
    %156 = vector.broadcast %cst_71 : f32 to vector<17x64xf32>
    %157 = arith.addf %155, %156 : vector<17x64xf32>
    %158 = arith.mulf %157, %150 : vector<17x64xf32>
    %cst_72 = arith.constant -0.284496725 : f32
    %159 = vector.broadcast %cst_72 : f32 to vector<17x64xf32>
    %160 = arith.addf %158, %159 : vector<17x64xf32>
    %161 = arith.mulf %160, %150 : vector<17x64xf32>
    %cst_73 = arith.constant 0.254829586 : f32
    %162 = vector.broadcast %cst_73 : f32 to vector<17x64xf32>
    %163 = arith.addf %161, %162 : vector<17x64xf32>
    %164 = arith.mulf %163, %150 : vector<17x64xf32>
    %165 = arith.mulf %144, %144 : vector<17x64xf32>
    %cst_74 = arith.constant 0.000000e+00 : f32
    %166 = vector.broadcast %cst_74 : f32 to vector<17x64xf32>
    %167 = arith.subf %166, %165 : vector<17x64xf32>
    %168 = math.exp %167 : vector<17x64xf32>
    %169 = arith.mulf %164, %168 : vector<17x64xf32>
    %cst_75 = arith.constant 1.000000e+00 : f32
    %170 = vector.broadcast %cst_75 : f32 to vector<17x64xf32>
    %171 = arith.subf %170, %169 : vector<17x64xf32>
    %172 = arith.mulf %143, %171 : vector<17x64xf32>
    %cst_76 = arith.constant 1.000000e+00 : f32
    %173 = vector.broadcast %cst_76 : f32 to vector<17x64xf32>
    %174 = arith.addf %173, %172 : vector<17x64xf32>
    %175 = arith.mulf %136, %174 : vector<17x64xf32>
    %c0_77 = arith.constant 0 : index
    %c0_78 = arith.constant 0 : index
    %176 = vector.load %arg12[%c0_77, %c0_78] : memref<64x16xf32, #tpu.memory_space<vmem>>, vector<64x16xf32>
    %cst_79 = arith.constant dense<0.000000e+00> : vector<17x16xf32>
    %177 = tpu.matmul %175, %176, %cst_79 {dimension_numbers = #tpu.dot_dimension_numbers<[1], [0], [0], [1], [0, 0, 1, 1], [], []>} : vector<17x64xf32>, vector<64x16xf32>, vector<17x16xf32> -> vector<17x16xf32>
    %178 = arith.addf %107, %177 : vector<17x16xf32>
    %c0_80 = arith.constant 0 : index
    %c0_81 = arith.constant 0 : index
    %179 = vector.load %arg13[%c0_80, %c0_81] : memref<1x16xf32, #tpu.memory_space<vmem>>, vector<1x16xf32>
    %180 = vector.broadcast %179 : vector<1x16xf32> to vector<17x16xf32>
    %181 = arith.addf %178, %180 : vector<17x16xf32>
    %c0_82 = arith.constant 0 : index
    %c0_83 = arith.constant 0 : index
    %c0_84 = arith.constant 0 : index
    %182 = vector.load %arg14[%c0_82, %c0_83, %c0_84] : memref<1x17x16xf32, #tpu.memory_space<vmem>>, vector<1x17x16xf32>
    %183 = vector.shape_cast %182 : vector<1x17x16xf32> to vector<17x16xf32>
    %184 = vector.shape_cast %181 : vector<17x16xf32> to vector<1x17x16xf32>
    tpu.vector_store %arg14[%c0_82, %c0_83, %c0_84], %184 {strides = array<i32>} : memref<1x17x16xf32, #tpu.memory_space<vmem>>, vector<1x17x16xf32>,
    return
  }
  func.func @transform_0(%arg0: i32) -> (i32, i32, i32) {
    %c0_i32 = arith.constant 0 : i32
    %c0_i32_0 = arith.constant 0 : i32
    %c0_i32_1 = arith.constant 0 : i32
    return %arg0, %c0_i32, %c0_i32_0 : i32, i32, i32
  }
  func.func @transform_1(%arg0: i32) -> (i32, i32) {
    %c0_i32 = arith.constant 0 : i32
    %c0_i32_0 = arith.constant 0 : i32
    %c0_i32_1 = arith.constant 0 : i32
    return %c0_i32, %c0_i32_0 : i32, i32
  }
  func.func @transform_2(%arg0: i32) -> (i32, i32) {
    %c0_i32 = arith.constant 0 : i32
    %c0_i32_0 = arith.constant 0 : i32
    %c0_i32_1 = arith.constant 0 : i32
    return %c0_i32, %c0_i32_0 : i32, i32
  }
  func.func @transform_3(%arg0: i32) -> (i32, i32) {
    %c0_i32 = arith.constant 0 : i32
    %c0_i32_0 = arith.constant 0 : i32
    %c0_i32_1 = arith.constant 0 : i32
    return %c0_i32, %c0_i32_0 : i32, i32
  }
  func.func @transform_4(%arg0: i32) -> (i32, i32) {
    %c0_i32 = arith.constant 0 : i32
    %c0_i32_0 = arith.constant 0 : i32
    %c0_i32_1 = arith.constant 0 : i32
    return %c0_i32, %c0_i32_0 : i32, i32
  }
  func.func @transform_5(%arg0: i32) -> (i32, i32) {
    %c0_i32 = arith.constant 0 : i32
    %c0_i32_0 = arith.constant 0 : i32
    %c0_i32_1 = arith.constant 0 : i32
    return %c0_i32, %c0_i32_0 : i32, i32
  }
  func.func @transform_6(%arg0: i32) -> (i32, i32) {
    %c0_i32 = arith.constant 0 : i32
    %c0_i32_0 = arith.constant 0 : i32
    %c0_i32_1 = arith.constant 0 : i32
    return %c0_i32, %c0_i32_0 : i32, i32
  }
  func.func @transform_7(%arg0: i32) -> (i32, i32) {
    %c0_i32 = arith.constant 0 : i32
    %c0_i32_0 = arith.constant 0 : i32
    %c0_i32_1 = arith.constant 0 : i32
    return %c0_i32, %c0_i32_0 : i32, i32
  }
  func.func @transform_8(%arg0: i32) -> (i32, i32) {
    %c0_i32 = arith.constant 0 : i32
    %c0_i32_0 = arith.constant 0 : i32
    %c0_i32_1 = arith.constant 0 : i32
    return %c0_i32, %c0_i32_0 : i32, i32
  }
  func.func @transform_9(%arg0: i32) -> (i32, i32) {
    %c0_i32 = arith.constant 0 : i32
    %c0_i32_0 = arith.constant 0 : i32
    %c0_i32_1 = arith.constant 0 : i32
    return %c0_i32, %c0_i32_0 : i32, i32
  }
  func.func @transform_10(%arg0: i32) -> (i32, i32) {
    %c0_i32 = arith.constant 0 : i32
    %c0_i32_0 = arith.constant 0 : i32
    %c0_i32_1 = arith.constant 0 : i32
    return %c0_i32, %c0_i32_0 : i32, i32
  }
  func.func @transform_11(%arg0: i32) -> (i32, i32) {
    %c0_i32 = arith.constant 0 : i32
    %c0_i32_0 = arith.constant 0 : i32
    %c0_i32_1 = arith.constant 0 : i32
    return %c0_i32, %c0_i32_0 : i32, i32
  }
  func.func @transform_12(%arg0: i32) -> (i32, i32) {
    %c0_i32 = arith.constant 0 : i32
    %c0_i32_0 = arith.constant 0 : i32
    %c0_i32_1 = arith.constant 0 : i32
    return %c0_i32, %c0_i32_0 : i32, i32
  }
  func.func @transform_13(%arg0: i32) -> (i32, i32, i32) {
    %c0_i32 = arith.constant 0 : i32
    %c0_i32_0 = arith.constant 0 : i32
    %c0_i32_1 = arith.constant 0 : i32
    return %arg0, %c0_i32, %c0_i32_0 : i32, i32, i32
  }
}

</mosaic_0001>

<llo_original>
// kernel: eq.13
$region0: #{eq.13}
  %s0 = inlined_call_operand.vmem [shape: s32[2,2], index: 0, kind: input, shape index: {}]
  %s1 = inlined_call_operand.vmem [shape: s32[4], index: 1, kind: output, shape index: {}]
  $region1: #{eq.13} parent=0
    #allocation0 [shape = 'u8[4096]{0}', space=vmem, size = 0x1000, scoped, tag = 'scoped mem for output reshape']
    #allocation1 [shape = 'u8[4096]{0}', space=vmem, size = 0x1000, scoped, tag = 'scoped mem for input reshape']
    %s3 = sshllo.u32 0, 2
    %v4 = vld [vmem:[%s0] sm:%s3]
    %5 = vst [vmem:[#allocation1] sm:%s3] %v4
    %v6 = vld [vmem:[#allocation1] sm:$0x1]
    %vm7 = vcmask 15360
    %8 = vst.msk [vmem:[#allocation0] sm:$0x1] %vm7, %v6
    %s9 = scalar_lea.vmem [#allocation1], 1
    %v10 = vld [vmem:[%s9] sm:$0x1]
    %11 = vrot.lane.b32.xlu0 %v10, 2
    %v12 = vpop.permute.xlu0 %11
    %vm13 = vcmask 31760
    %14 = vst.msk [vmem:[#allocation0] sm:$0x1] %vm13, %v12
    %s16 = sshllo.u32 0, 1
    %v18 = vld [vmem:[#allocation0] sm:%s16]
    %s19 = sshllo.u32 0, 1
    %20 = vst [vmem:[%s1] sm:%s19] %v18

// kernel: vicmae_forward.24
$region0: #{vicmae_forward.24}
  #allocation0 [shape = 'u32[]', space=smem, size = 0x4, offset = 0x4, fixed_abs, tag = 'smem constant byte address 0x4 - core index']
  #allocation1 [shape = 'u32[144,128]{1,0:T(1,128)}', space=vmem, size = 0x12000, scoped, tag = 'internal scratch']
  %s0 = inlined_call_operand.vmem [shape: f32[2,9,32], index: 0, kind: input, shape index: {}]
  %s1 = inlined_call_operand.vmem [shape: f32[1,32], index: 1, kind: input, shape index: {}]
  %s2 = inlined_call_operand.vmem [shape: f32[1,32], index: 2, kind: input, shape index: {}]
  %s3 = inlined_call_operand.vmem [shape: f32[32,16], index: 3, kind: input, shape index: {}]
  %s4 = inlined_call_operand.vmem [shape: f32[1,16], index: 4, kind: input, shape index: {}]
  %s5 = inlined_call_operand.vmem [shape: f32[2,9,16], index: 5, kind: output, shape index: {0}]
  %s6 = inlined_call_operand.vmem [shape: f32[2,1,32], index: 6, kind: output, shape index: {1}]
  %7 = xla_tuple %s5, %s6
  %s8 = sld [smem:[#allocation0]]
  $region61: #{vicmae_forward.24} parent=0
    _
  %s10 = ssub.s32 1, %s8
  %s11 = scalar_select 0, %s10, %s8
  loop: start=0, step=1, limit=4
  $region2: #{vicmae_forward.24} parent=0 // loop_pre_header
    _
  $region3: #{vicmae_forward.24} parent=0 // loop_header
    %s13 = sphi 0, %s17
    %p14 = scmp.ge.s32.totalorder %s13, 4
    %s23 = sphi 0, %s25
    %s26 = sphi 0, %s23
    %s27 = sphi 0, %s26
    %s43 = sphi 0, %s27
    %s47 = sphi 0, %s47
    %s49 = sphi 0, %s47
    %s50 = sphi 0, %s49
    %s64 = sphi 0, %s50
    %s68 = sphi 0, %s68
    %s70 = sphi 0, %s68
    %s71 = sphi 0, %s70
    %s85 = sphi 0, %s71
    %s89 = sphi 0, %s89
    %s91 = sphi 0, %s89
    %s92 = sphi 0, %s91
    %s106 = sphi 0, %s92
    %s110 = sphi 0, %s110
    %s112 = sphi 0, %s110
    %s113 = sphi 0, %s112
    %s127 = sphi 0, %s113
    %s133 = sphi 0, %s135
    %s136 = sphi 0, %s133
    %s137 = sphi 0, %s136
    %s153 = sphi 0, %s137
    %s159 = sphi 0, %s161
    %s162 = sphi 0, %s159
    %s163 = sphi 0, %s162
    %s179 = sphi 0, %s163
  $region4: #{vicmae_forward.24} parent=0 // loop_header_branch
    %16 = sbr.rel (%p14) target = $region8
  $region5: #{vicmae_forward.24} parent=0 // loop_body
    %s18 = ssub.s32 %s13, 1
    %s19 = ssub.s32 %s13, 2
    %s20 = sadd.s32 %s13, 1
    %s21 = ssub.s32 %s13, %s20
    %p22 = scmp.eq.s32.totalorder %s21, 0
    %s24 = sadd.s32 %s23, 1
    %s25 = scalar_select %p22, %s23, %s24
    %p28 = pneg %p22
    %p29 = scmp.eq.s32.totalorder %s13, 1
    %p30 = por %p28, %p29
    %p31 = scmp.ne.s32.totalorder %s23, %s26
    %p32 = scmp.eq.s32.totalorder %s13, 0
    %p33 = por %p31, %p32
    %p34 = scmp.ne.s32.totalorder %s23, %s26
    %p35 = scmp.eq.s32.totalorder %s18, 1
    %p36 = por %p34, %p35
    %p37 = scmp.ne.s32.totalorder %s26, %s27
    %p38 = scmp.eq.s32.totalorder %s18, 0
    %p39 = por %p37, %p38
    %p40 = scmp.ne.s32.totalorder %s26, %s27
    %p41 = scmp.eq.s32.totalorder %s19, 1
    %p42 = por %p40, %p41
    %p44 = scmp.ne.s32.totalorder %s27, %s43
    %p45 = scmp.eq.s32.totalorder %s19, 0
    %p46 = por %p44, %p45
    %s48 = sadd.s32 %s47, 1
    %p51 = scmp.eq.s32.totalorder %s13, 1
    %p52 = scmp.ne.s32.totalorder %s47, %s49
    %p53 = scmp.eq.s32.totalorder %s13, 0
    %p54 = por %p52, %p53
    %p55 = scmp.ne.s32.totalorder %s47, %s49
    %p56 = scmp.eq.s32.totalorder %s18, 1
    %p57 = por %p55, %p56
    %p58 = scmp.ne.s32.totalorder %s49, %s50
    %p59 = scmp.eq.s32.totalorder %s18, 0
    %p60 = por %p58, %p59
    %p61 = scmp.ne.s32.totalorder %s49, %s50
    %p62 = scmp.eq.s32.totalorder %s19, 1
    %p63 = por %p61, %p62
    %p65 = scmp.ne.s32.totalorder %s50, %s64
    %p66 = scmp.eq.s32.totalorder %s19, 0
    %p67 = por %p65, %p66
    %s69 = sadd.s32 %s68, 1
    %p72 = scmp.eq.s32.totalorder %s13, 1
    %p73 = scmp.ne.s32.totalorder %s68, %s70
    %p74 = scmp.eq.s32.totalorder %s13, 0
    %p75 = por %p73, %p74
    %p76 = scmp.ne.s32.totalorder %s68, %s70
    %p77 = scmp.eq.s32.totalorder %s18, 1
    %p78 = por %p76, %p77
    %p79 = scmp.ne.s32.totalorder %s70, %s71
    %p80 = scmp.eq.s32.totalorder %s18, 0
    %p81 = por %p79, %p80
    %p82 = scmp.ne.s32.totalorder %s70, %s71
    %p83 = scmp.eq.s32.totalorder %s19, 1
    %p84 = por %p82, %p83
    %p86 = scmp.ne.s32.totalorder %s71, %s85
    %p87 = scmp.eq.s32.totalorder %s19, 0
    %p88 = por %p86, %p87
    %s90 = sadd.s32 %s89, 1
    %p93 = scmp.eq.s32.totalorder %s13, 1
    %p94 = scmp.ne.s32.totalorder %s89, %s91
    %p95 = scmp.eq.s32.totalorder %s13, 0
    %p96 = por %p94, %p95
    %p97 = scmp.ne.s32.totalorder %s89, %s91
    %p98 = scmp.eq.s32.totalorder %s18, 1
    %p99 = por %p97, %p98
    %p100 = scmp.ne.s32.totalorder %s91, %s92
    %p101 = scmp.eq.s32.totalorder %s18, 0
    %p102 = por %p100, %p101
    %p103 = scmp.ne.s32.totalorder %s91, %s92
    %p104 = scmp.eq.s32.totalorder %s19, 1
    %p105 = por %p103, %p104
    %p107 = scmp.ne.s32.totalorder %s92, %s106
    %p108 = scmp.eq.s32.totalorder %s19, 0
    %p109 = por %p107, %p108
    %s111 = sadd.s32 %s110, 1
    %p114 = scmp.eq.s32.totalorder %s13, 1
    %p115 = scmp.ne.s32.totalorder %s110, %s112
    %p116 = scmp.eq.s32.totalorder %s13, 0
    %p117 = por %p115, %p116
    %p118 = scmp.ne.s32.totalorder %s110, %s112
    %p119 = scmp.eq.s32.totalorder %s18, 1
    %p120 = por %p118, %p119
    %p121 = scmp.ne.s32.totalorder %s112, %s113
    %p122 = scmp.eq.s32.totalorder %s18, 0
    %p123 = por %p121, %p122
    %p124 = scmp.ne.s32.totalorder %s112, %s113
    %p125 = scmp.eq.s32.totalorder %s19, 1
    %p126 = por %p124, %p125
    %p128 = scmp.ne.s32.totalorder %s113, %s127
    %p129 = scmp.eq.s32.totalorder %s19, 0
    %p130 = por %p128, %p129
    %s131 = ssub.s32 %s13, %s20
    %p132 = scmp.eq.s32.totalorder %s131, 0
    %s134 = sadd.s32 %s133, 1
    %s135 = scalar_select %p132, %s133, %s134
    %p138 = pneg %p132
    %p139 = scmp.eq.s32.totalorder %s13, 1
    %p140 = por %p138, %p139
    %p141 = scmp.ne.s32.totalorder %s133, %s136
    %p142 = scmp.eq.s32.totalorder %s13, 0
    %p143 = por %p141, %p142
    %p144 = scmp.ne.s32.totalorder %s133, %s136
    %p145 = scmp.eq.s32.totalorder %s18, 1
    %p146 = por %p144, %p145
    %p147 = scmp.ne.s32.totalorder %s136, %s137
    %p148 = scmp.eq.s32.totalorder %s18, 0
    %p149 = por %p147, %p148
    %p150 = scmp.ne.s32.totalorder %s136, %s137
    %p151 = scmp.eq.s32.totalorder %s19, 1
    %p152 = por %p150, %p151
    %p154 = scmp.ne.s32.totalorder %s137, %s153
    %p155 = scmp.eq.s32.totalorder %s19, 0
    %p156 = por %p154, %p155
    %s157 = ssub.s32 %s13, %s20
    %p158 = scmp.eq.s32.totalorder %s157, 0
    %s160 = sadd.s32 %s159, 1
    %s161 = scalar_select %p158, %s159, %s160
    %p164 = pneg %p158
    %p165 = scmp.eq.s32.totalorder %s13, 1
    %p166 = por %p164, %p165
    %p167 = scmp.ne.s32.totalorder %s159, %s162
    %p168 = scmp.eq.s32.totalorder %s13, 0
    %p169 = por %p167, %p168
    %p170 = scmp.ne.s32.totalorder %s159, %s162
    %p171 = scmp.eq.s32.totalorder %s18, 1
    %p172 = por %p170, %p171
    %p173 = scmp.ne.s32.totalorder %s162, %s163
    %p174 = scmp.eq.s32.totalorder %s18, 0
    %p175 = por %p173, %p174
    %p176 = scmp.ne.s32.totalorder %s162, %s163
    %p177 = scmp.eq.s32.totalorder %s19, 1
    %p178 = por %p176, %p177
    %p180 = scmp.ne.s32.totalorder %s163, %s179
    %p181 = scmp.eq.s32.totalorder %s19, 0
    %p182 = por %p180, %p181
    %p183 = scmp.le.s32.totalorder 1, %s13
    %p184 = scmp.lt.s32.totalorder %s13, 3
    %p185 = pnand %p183, %p184
    %p186 = pneg %p185
    // Predicated region
    $region9: #{vicmae_forward.24} parent=5 // pred_check
      _
    $region10: #{vicmae_forward.24} parent=5 // pred_check_branch
      %188 = sbr.rel (%p185) target = $region12
    $region11: #{vicmae_forward.24} parent=5 // pred_region
      %s189 = ssub.s32 %s13, 1
      // Predicated region
      $region13: #{vicmae_forward.24} parent=11 // pred_check
        %p190 = pneg %p60
      $region14: #{vicmae_forward.24} parent=11 // pred_check_branch
        %192 = sbr.rel (%p190) target = $region16
      $region15: #{vicmae_forward.24} parent=11 // pred_region
        _
      $region16: #{vicmae_forward.24} parent=11 // pred_fallthru
        _
      // Predicated region
      $region17: #{vicmae_forward.24} parent=11 // pred_check
        %p193 = pneg %p81
      $region18: #{vicmae_forward.24} parent=11 // pred_check_branch
        %195 = sbr.rel (%p193) target = $region20
      $region19: #{vicmae_forward.24} parent=11 // pred_region
        _
      $region20: #{vicmae_forward.24} parent=11 // pred_fallthru
        _
      // Predicated region
      $region21: #{vicmae_forward.24} parent=11 // pred_check
        %p196 = pneg %p102
      $region22: #{vicmae_forward.24} parent=11 // pred_check_branch
        %198 = sbr.rel (%p196) target = $region24
      $region23: #{vicmae_forward.24} parent=11 // pred_region
        _
      $region24: #{vicmae_forward.24} parent=11 // pred_fallthru
        _
      // Predicated region
      $region25: #{vicmae_forward.24} parent=11 // pred_check
        %p199 = pneg %p123
      $region26: #{vicmae_forward.24} parent=11 // pred_check_branch
        %201 = sbr.rel (%p199) target = $region28
      $region27: #{vicmae_forward.24} parent=11 // pred_region
        _
      $region28: #{vicmae_forward.24} parent=11 // pred_fallthru
        _
    $region12: #{vicmae_forward.24} parent=5 // pred_fallthru
      _
    %p202 = scmp.lt.s32.totalorder %s13, 2
    // Predicated region
    $region29: #{vicmae_forward.24} parent=5 // pred_check
      %p203 = pneg %p202
    $region30: #{vicmae_forward.24} parent=5 // pred_check_branch
      %205 = sbr.rel (%p203) target = $region32
    $region31: #{vicmae_forward.24} parent=5 // pred_region
      // Predicated region
      $region33: #{vicmae_forward.24} parent=31 // pred_check
        %p206 = pneg %p33
      $region34: #{vicmae_forward.24} parent=31 // pred_check_branch
        %208 = sbr.rel (%p206) target = $region36
      $region35: #{vicmae_forward.24} parent=31 // pred_region
        %p209 = scmp.lt.s32.totalorder %s13, 1
        %s210 = scalar_select %p209, %s13, 1
        %s211 = smul.addr %s210, 2
        %s212 = smul.addr %s211, 8
        %s213 = scalar_lea.vmem %s0, %s212
      $region36: #{vicmae_forward.24} parent=31 // pred_fallthru
        _
    $region32: #{vicmae_forward.24} parent=5 // pred_fallthru
      _
    %p214 = scmp.le.s32.totalorder 1, %s13
    %p215 = scmp.lt.s32.totalorder %s13, 3
    %p216 = pnand %p214, %p215
    %p217 = pneg %p216
    // Predicated region
    $region37: #{vicmae_forward.24} parent=5 // pred_check
      _
    $region38: #{vicmae_forward.24} parent=5 // pred_check_branch
      %219 = sbr.rel (%p216) target = $region40
    $region39: #{vicmae_forward.24} parent=5 // pred_region
      %s220 = ssub.s32 %s13, 1
      %p221 = scmp.lt.s32.totalorder %s18, 1
      %s222 = scalar_select %p221, %s18, 1
      %s223 = smul.addr %s222, 2
      %s224 = smul.addr %s223, 8
      %s225 = scalar_lea.vmem %s0, %s224
      %p226 = pneg %p39
      %p227 = pneg %p36
      %p228 = pneg %p60
      %p229 = pneg %p57
      %p230 = pneg %p81
      %p231 = pneg %p78
      %p232 = pneg %p102
      %p233 = pneg %p99
      %p234 = pneg %p123
      %p235 = pneg %p120
      %p236 = pneg %p149
      %p237 = pneg %p146
      %p238 = scmp.lt.s32.totalorder %s18, 1
      %s239 = scalar_select %p238, %s18, 1
      %s240 = smul.addr %s239, 2
      %s241 = smul.addr %s240, 8
      %s242 = scalar_lea.vmem %s5, %s241
      %p243 = pneg %p175
      %p244 = pneg %p172
      %p245 = scmp.lt.s32.totalorder %s18, 1
      %s246 = scalar_select %p245, %s18, 1
      %s247 = scalar_lea.vmem %s6, %s246
      %p248 = scmp.lt.s32.totalorder %s18, 1
      %s249 = scalar_select %p248, %s18, 1
      %s250 = smul.addr %s249, 2
      %s251 = smul.addr %s250, 8
      %s252 = scalar_lea.vmem %s0, %s251
      %p253 = scmp.lt.s32.totalorder %s18, 1
      %s254 = scalar_select %p253, %s18, 1
      %s255 = smul.addr %s254, 2
      %s256 = smul.addr %s255, 8
      %s257 = scalar_lea.vmem %s5, %s256
      %p258 = scmp.lt.s32.totalorder %s18, 1
      %s259 = scalar_select %p258, %s18, 1
      %s260 = scalar_lea.vmem %s6, %s259
      %v261 = vld [vmem:[%s252] sm:$0xff]
      %v262 = vld [vmem:[%s252 + $0x8] sm:$0x1]
      %v263 = vld [vmem:[%s1] sm:$0x1]
      %v264 = vld [vmem:[%s2] sm:$0x1]
      %vm265 = vcmask 261120
      %v266 = vsel %vm265, %v261, 0.0
      %267 = vadd.xlane.f32.xlu0 %v266
      %v268 = vpop.xlane.xlu0 %267
      %vm269 = vcmask 253952
      %v270 = vsel %vm269, %v262, 0.0
      %271 = vadd.xlane.f32.xlu0 %v270
      %v272 = vpop.xlane.xlu0 %271
      %v273 = vrcp.pop 32.0
      %v274 = vmul.f32 %v268, %v273
      %v275 = vmul.f32 %v272, %v273
      %v276 = vsub.f32 %v261, %v274
      %v277 = vsub.f32 %v262, %v275
      %v278 = vmul.f32 %v276, %v276
      %v279 = vmul.f32 %v277, %v277
      %v280 = vsel %vm265, %v278, 0.0
      %281 = vadd.xlane.f32.xlu0 %v280
      %v282 = vpop.xlane.xlu0 %281
      %v283 = vsel %vm269, %v279, 0.0
      %284 = vadd.xlane.f32.xlu0 %v283
      %v285 = vpop.xlane.xlu0 %284
      %v286 = vmul.f32 %v282, %v273
      %v287 = vmul.f32 %v285, %v273
      %v288 = vadd.f32 %v286, 1e-05
      %v289 = vadd.f32 %v287, 1e-05
      %v290 = vrsqrt.pop %v288
      %v291 = vrsqrt.pop %v289
      %v292 = vmul.f32 %v276, %v290
      %v293 = vmul.f32 %v277, %v291
      %v295 = vlaneseq
      %v296 = vshrl.u32 %v295, 7
      %v297 = vsub.s32 0, %v296
      %v298 = vrot.slane %v263, %v297
      %v300 = vmul.f32 %v292, %v298
      %v301 = vmul.f32 %v293, %v298
      %v303 = vlaneseq
      %v304 = vshrl.u32 %v303, 7
      %v305 = vsub.s32 0, %v304
      %v306 = vrot.slane %v264, %v305
      %v308 = vadd.f32 %v300, %v306
      %v309 = vadd.f32 %v301, %v306
      %v310 = vld [vmem:[%s3] sm:$0xff]
      %v311 = vld [vmem:[%s3 + $0x8] sm:$0xff]
      %v312 = vld [vmem:[%s3 + $0x10] sm:$0xff]
      %v313 = vld [vmem:[%s3 + $0x18] sm:$0xff]
      %v314 = vld [vmem:[%s4] sm:$0x1]
      %v316 = vlaneseq
      %v317 = vshrl.u32 %v316, 7
      %v318 = vsub.s32 0, %v317
      %v319 = vrot.slane %v314, %v318
      %v322 = vsel %vm265, %v308, 0
      %v325 = vsel %vm265, %v309, 0
      %327 = vmatprep.subr.mxu0 0.0
      %328 = vmatpush1.msra.mxu0 %v310
      %329 = vmatprep.subr.mxu0 0.0
      %330 = vmatpush1.msra.mxu0 %v311
      %331 = vmatprep.subr.mxu0 0.0
      %332 = vmatpush1.msra.mxu0 %v312
      %333 = vmatprep.subr.mxu0 0.0
      %334 = vmatpush1.msra.mxu0 %v313
      %335 = vmatprep.subr.mxu0 0.0
      %336 = vmatpush1.msra.mxu0 0.0
      %337 = vmatprep.subr.mxu0 0.0
      %338 = vmatpush1.msra.mxu0 0.0
      %339 = vmatprep.subr.mxu0 0.0
      %340 = vmatpush1.msra.mxu0 0.0
      %341 = vmatprep.subr.mxu0 0.0
      %342 = vmatpush1.msra.mxu0 0.0
      %343 = vmatprep.subr.mxu0 0.0
      %344 = vmatpush1.msra.mxu0 0.0
      %345 = vmatprep.subr.mxu0 0.0
      %346 = vmatpush1.msra.mxu0 0.0
      %347 = vmatprep.subr.mxu0 0.0
      %348 = vmatpush1.msra.mxu0 0.0
      %349 = vmatprep.subr.mxu0 0.0
      %350 = vmatpush1.msra.mxu0 0.0
      %351 = vmatprep.subr.mxu0 0.0
      %352 = vmatpush1.msra.mxu0 0.0
      %353 = vmatprep.subr.mxu0 0.0
      %354 = vmatpush1.msra.mxu0 0.0
      %355 = vmatprep.subr.mxu0 0.0
      %356 = vmatpush1.msra.mxu0 0.0
      %357 = vmatprep.subr.mxu0 0.0
      %358 = vmatpush1.msra.mxu0 0.0
      %359 = vmatprep.subr.mxu0 0.0
      %360 = vmatpush1.msra.mxu0 0.0
      %361 = vmatprep.subr.mxu0 0.0
      %362 = vmatpush1.msra.mxu0 0.0
      %363 = vmatprep.subr.mxu0 0.0
      %364 = vmatpush1.msra.mxu0 0.0
      %365 = vmatprep.subr.mxu0 0.0
      %366 = vmatpush1.msra.mxu0 0.0
      %367 = vmatprep.subr.mxu0 0.0
      %368 = vmatpush1.msra.mxu0 0.0
      %369 = vmatprep.subr.mxu0 0.0
      %370 = vmatpush1.msra.mxu0 0.0
      %371 = vmatprep.subr.mxu0 0.0
      %372 = vmatpush1.msra.mxu0 0.0
      %373 = vmatprep.subr.mxu0 0.0
      %374 = vmatpush1.msra.mxu0 0.0
      %375 = vmatprep.subr.mxu0 0.0
      %376 = vmatpush1.msra.mxu0 0.0
      %377 = vmatprep.subr.mxu0 0.0
      %378 = vmatpush1.msra.mxu0 0.0
      %379 = vmatprep.subr.mxu0 0.0
      %380 = vmatpush1.msra.mxu0 0.0
      %381 = vmatprep.subr.mxu0 0.0
      %382 = vmatpush1.msra.mxu0 0.0
      %383 = vmatprep.subr.mxu0 0.0
      %384 = vmatpush1.msra.mxu0 0.0
      %385 = vmatprep.subr.mxu0 0.0
      %386 = vmatpush1.msra.mxu0 0.0
      %387 = vmatprep.subr.mxu0 0.0
      %388 = vmatpush1.msra.mxu0 0.0
      %389 = vmatprep.subr.mxu0 0.0
      %390 = vmatpush1.msra.mxu0 0.0
      %391 = vmatprep.mubr.f32.mxu0 0.0
      %392 = vmatmul.mubr.f32.gmra.mrb[0].mxu0 %v322
      %v393 = vpop.f32.mrb[0].mxu0
      %v394 = vadd.f32 %v319, %v393
      %v395 = vpop.f32.mrb[0].mxu0
      %396 = vmatprep.mubr.f32.mxu0 0.0
      %397 = vmatmul.mubr.f32.gmra.mrb[0].mxu0 %v325
      %v398 = vpop.f32.mrb[0].mxu0
      %v399 = vadd.f32 %v319, %v398
      %v400 = vpop.f32.mrb[0].mxu0
      %401 = vdwg.mxu0
      %vm402 = vcmask 130048
      %403 = vst.msk [vmem:[%s257] sm:$0xff] %vm402, %v394
      %vm404 = vcmask 122880
      %405 = vst.msk [vmem:[%s257 + $0x8] sm:$0x1] %vm404, %v399
      %vm406 = vcmask 1046528
      %v407 = vrot.slane %v308, 1
      %v408 = vrot.slane %v309, 1
      %v409 = vsel %vm406, %v407, %v408
      %v411 = vsel %vm265, %v409, 0.0
      %v412 = vrot.slane %v411, 4
      %v413 = vadd.f32 %v411, %v412
      %v414 = vrot.slane %v413, 2
      %v415 = vadd.f32 %v413, %v414
      %v416 = vrot.slane %v415, 1
      %v417 = vadd.f32 %v415, %v416
      %v418 = vrcp.pop 8.0
      %v419 = vmul.f32 %v417, %v418
      %420 = vst.msk [vmem:[%s260] sm:$0x1] %vm269, %v419
      %p421 = scmp.lt.s32.totalorder %s18, 1
      %s422 = scalar_select %p421, %s18, 1
      %s423 = smul.addr %s422, 2
      %s424 = smul.addr %s423, 8
      %s425 = scalar_lea.vmem %s5, %s424
      %p426 = scmp.lt.s32.totalorder %s18, 1
      %s427 = scalar_select %p426, %s18, 1
      %s428 = scalar_lea.vmem %s6, %s427
      // Predicated region
      $region41: #{vicmae_forward.24} parent=39 // pred_check
        %p429 = pneg %p146
      $region42: #{vicmae_forward.24} parent=39 // pred_check_branch
        %431 = sbr.rel (%p429) target = $region44
      $region43: #{vicmae_forward.24} parent=39 // pred_region
        _
      $region44: #{vicmae_forward.24} parent=39 // pred_fallthru
        _
      // Predicated region
      $region45: #{vicmae_forward.24} parent=39 // pred_check
        %p432 = pneg %p172
      $region46: #{vicmae_forward.24} parent=39 // pred_check_branch
        %434 = sbr.rel (%p432) target = $region48
      $region47: #{vicmae_forward.24} parent=39 // pred_region
        _
      $region48: #{vicmae_forward.24} parent=39 // pred_fallthru
        _
    $region40: #{vicmae_forward.24} parent=5 // pred_fallthru
      _
    %p435 = scmp.le.s32.totalorder 2, %s13
    // Predicated region
    $region49: #{vicmae_forward.24} parent=5 // pred_check
      %p436 = pneg %p435
    $region50: #{vicmae_forward.24} parent=5 // pred_check_branch
      %438 = sbr.rel (%p436) target = $region52
    $region51: #{vicmae_forward.24} parent=5 // pred_region
      %s439 = ssub.s32 %s13, 2
      // Predicated region
      $region53: #{vicmae_forward.24} parent=51 // pred_check
        %p440 = pneg %p152
      $region54: #{vicmae_forward.24} parent=51 // pred_check_branch
        %442 = sbr.rel (%p440) target = $region56
      $region55: #{vicmae_forward.24} parent=51 // pred_region
        %p443 = scmp.lt.s32.totalorder %s19, 1
        %s444 = scalar_select %p443, %s19, 1
        %s445 = smul.addr %s444, 2
        %s446 = smul.addr %s445, 8
        %s447 = scalar_lea.vmem %s5, %s446
      $region56: #{vicmae_forward.24} parent=51 // pred_fallthru
        _
      // Predicated region
      $region57: #{vicmae_forward.24} parent=51 // pred_check
        %p448 = pneg %p178
      $region58: #{vicmae_forward.24} parent=51 // pred_check_branch
        %450 = sbr.rel (%p448) target = $region60
      $region59: #{vicmae_forward.24} parent=51 // pred_region
        %p451 = scmp.lt.s32.totalorder %s19, 1
        %s452 = scalar_select %p451, %s19, 1
        %s453 = scalar_lea.vmem %s6, %s452
      $region60: #{vicmae_forward.24} parent=51 // pred_fallthru
        _
    $region52: #{vicmae_forward.24} parent=5 // pred_fallthru
      _
  $region6: #{vicmae_forward.24} parent=0 // loop_footer
    %s17 = sadd.s32 1, %s13
  $region7: #{vicmae_forward.24} parent=0 // loop_footer_branch
    %12 = sbr.rel target = $region3
  $region8: #{vicmae_forward.24} parent=0 // loop_exit
    _

// kernel: vicmae_forward.16
$region0: #{vicmae_forward.16}
  #allocation0 [shape = 'u32[]', space=smem, size = 0x4, offset = 0x4, fixed_abs, tag = 'smem constant byte address 0x4 - core index']
  #allocation1 [shape = 'u32[144,128]{1,0:T(1,128)}', space=vmem, size = 0x12000, scoped, tag = 'internal scratch']
  %s0 = inlined_call_operand.vmem [shape: f32[2,16,48], index: 0, kind: input, shape index: {}]
  %s1 = inlined_call_operand.vmem [shape: f32[48,32], index: 1, kind: input, shape index: {}]
  %s2 = inlined_call_operand.vmem [shape: f32[1,32], index: 2, kind: input, shape index: {}]
  %s3 = inlined_call_operand.vmem [shape: f32[16,32], index: 3, kind: input, shape index: {}]
  %s4 = inlined_call_operand.vmem [shape: f32[2,16,32], index: 4, kind: output, shape index: {}]
  %s5 = sld [smem:[#allocation0]]
  $region49: #{vicmae_forward.16} parent=0
    _
  %s7 = ssub.s32 1, %s5
  %s8 = scalar_select 0, %s7, %s5
  loop: start=0, step=1, limit=4
  $region2: #{vicmae_forward.16} parent=0 // loop_pre_header
    _
  $region3: #{vicmae_forward.16} parent=0 // loop_header
    %s10 = sphi 0, %s14
    %p11 = scmp.ge.s32.totalorder %s10, 4
    %s20 = sphi 0, %s22
    %s23 = sphi 0, %s20
    %s24 = sphi 0, %s23
    %s40 = sphi 0, %s24
    %s44 = sphi 0, %s44
    %s46 = sphi 0, %s44
    %s47 = sphi 0, %s46
    %s61 = sphi 0, %s47
    %s65 = sphi 0, %s65
    %s67 = sphi 0, %s65
    %s68 = sphi 0, %s67
    %s82 = sphi 0, %s68
    %s86 = sphi 0, %s86
    %s88 = sphi 0, %s86
    %s89 = sphi 0, %s88
    %s103 = sphi 0, %s89
    %s109 = sphi 0, %s111
    %s112 = sphi 0, %s109
    %s113 = sphi 0, %s112
    %s129 = sphi 0, %s113
  $region4: #{vicmae_forward.16} parent=0 // loop_header_branch
    %13 = sbr.rel (%p11) target = $region8
  $region5: #{vicmae_forward.16} parent=0 // loop_body
    %s15 = ssub.s32 %s10, 1
    %s16 = ssub.s32 %s10, 2
    %s17 = sadd.s32 %s10, 1
    %s18 = ssub.s32 %s10, %s17
    %p19 = scmp.eq.s32.totalorder %s18, 0
    %s21 = sadd.s32 %s20, 1
    %s22 = scalar_select %p19, %s20, %s21
    %p25 = pneg %p19
    %p26 = scmp.eq.s32.totalorder %s10, 1
    %p27 = por %p25, %p26
    %p28 = scmp.ne.s32.totalorder %s20, %s23
    %p29 = scmp.eq.s32.totalorder %s10, 0
    %p30 = por %p28, %p29
    %p31 = scmp.ne.s32.totalorder %s20, %s23
    %p32 = scmp.eq.s32.totalorder %s15, 1
    %p33 = por %p31, %p32
    %p34 = scmp.ne.s32.totalorder %s23, %s24
    %p35 = scmp.eq.s32.totalorder %s15, 0
    %p36 = por %p34, %p35
    %p37 = scmp.ne.s32.totalorder %s23, %s24
    %p38 = scmp.eq.s32.totalorder %s16, 1
    %p39 = por %p37, %p38
    %p41 = scmp.ne.s32.totalorder %s24, %s40
    %p42 = scmp.eq.s32.totalorder %s16, 0
    %p43 = por %p41, %p42
    %s45 = sadd.s32 %s44, 1
    %p48 = scmp.eq.s32.totalorder %s10, 1
    %p49 = scmp.ne.s32.totalorder %s44, %s46
    %p50 = scmp.eq.s32.totalorder %s10, 0
    %p51 = por %p49, %p50
    %p52 = scmp.ne.s32.totalorder %s44, %s46
    %p53 = scmp.eq.s32.totalorder %s15, 1
    %p54 = por %p52, %p53
    %p55 = scmp.ne.s32.totalorder %s46, %s47
    %p56 = scmp.eq.s32.totalorder %s15, 0
    %p57 = por %p55, %p56
    %p58 = scmp.ne.s32.totalorder %s46, %s47
    %p59 = scmp.eq.s32.totalorder %s16, 1
    %p60 = por %p58, %p59
    %p62 = scmp.ne.s32.totalorder %s47, %s61
    %p63 = scmp.eq.s32.totalorder %s16, 0
    %p64 = por %p62, %p63
    %s66 = sadd.s32 %s65, 1
    %p69 = scmp.eq.s32.totalorder %s10, 1
    %p70 = scmp.ne.s32.totalorder %s65, %s67
    %p71 = scmp.eq.s32.totalorder %s10, 0
    %p72 = por %p70, %p71
    %p73 = scmp.ne.s32.totalorder %s65, %s67
    %p74 = scmp.eq.s32.totalorder %s15, 1
    %p75 = por %p73, %p74
    %p76 = scmp.ne.s32.totalorder %s67, %s68
    %p77 = scmp.eq.s32.totalorder %s15, 0
    %p78 = por %p76, %p77
    %p79 = scmp.ne.s32.totalorder %s67, %s68
    %p80 = scmp.eq.s32.totalorder %s16, 1
    %p81 = por %p79, %p80
    %p83 = scmp.ne.s32.totalorder %s68, %s82
    %p84 = scmp.eq.s32.totalorder %s16, 0
    %p85 = por %p83, %p84
    %s87 = sadd.s32 %s86, 1
    %p90 = scmp.eq.s32.totalorder %s10, 1
    %p91 = scmp.ne.s32.totalorder %s86, %s88
    %p92 = scmp.eq.s32.totalorder %s10, 0
    %p93 = por %p91, %p92
    %p94 = scmp.ne.s32.totalorder %s86, %s88
    %p95 = scmp.eq.s32.totalorder %s15, 1
    %p96 = por %p94, %p95
    %p97 = scmp.ne.s32.totalorder %s88, %s89
    %p98 = scmp.eq.s32.totalorder %s15, 0
    %p99 = por %p97, %p98
    %p100 = scmp.ne.s32.totalorder %s88, %s89
    %p101 = scmp.eq.s32.totalorder %s16, 1
    %p102 = por %p100, %p101
    %p104 = scmp.ne.s32.totalorder %s89, %s103
    %p105 = scmp.eq.s32.totalorder %s16, 0
    %p106 = por %p104, %p105
    %s107 = ssub.s32 %s10, %s17
    %p108 = scmp.eq.s32.totalorder %s107, 0
    %s110 = sadd.s32 %s109, 1
    %s111 = scalar_select %p108, %s109, %s110
    %p114 = pneg %p108
    %p115 = scmp.eq.s32.totalorder %s10, 1
    %p116 = por %p114, %p115
    %p117 = scmp.ne.s32.totalorder %s109, %s112
    %p118 = scmp.eq.s32.totalorder %s10, 0
    %p119 = por %p117, %p118
    %p120 = scmp.ne.s32.totalorder %s109, %s112
    %p121 = scmp.eq.s32.totalorder %s15, 1
    %p122 = por %p120, %p121
    %p123 = scmp.ne.s32.totalorder %s112, %s113
    %p124 = scmp.eq.s32.totalorder %s15, 0
    %p125 = por %p123, %p124
    %p126 = scmp.ne.s32.totalorder %s112, %s113
    %p127 = scmp.eq.s32.totalorder %s16, 1
    %p128 = por %p126, %p127
    %p130 = scmp.ne.s32.totalorder %s113, %s129
    %p131 = scmp.eq.s32.totalorder %s16, 0
    %p132 = por %p130, %p131
    %p133 = scmp.le.s32.totalorder 1, %s10
    %p134 = scmp.lt.s32.totalorder %s10, 3
    %p135 = pnand %p133, %p134
    %p136 = pneg %p135
    // Predicated region
    $region9: #{vicmae_forward.16} parent=5 // pred_check
      _
    $region10: #{vicmae_forward.16} parent=5 // pred_check_branch
      %138 = sbr.rel (%p135) target = $region12
    $region11: #{vicmae_forward.16} parent=5 // pred_region
      %s139 = ssub.s32 %s10, 1
      // Predicated region
      $region13: #{vicmae_forward.16} parent=11 // pred_check
        %p140 = pneg %p57
      $region14: #{vicmae_forward.16} parent=11 // pred_check_branch
        %142 = sbr.rel (%p140) target = $region16
      $region15: #{vicmae_forward.16} parent=11 // pred_region
        _
      $region16: #{vicmae_forward.16} parent=11 // pred_fallthru
        _
      // Predicated region
      $region17: #{vicmae_forward.16} parent=11 // pred_check
        %p143 = pneg %p78
      $region18: #{vicmae_forward.16} parent=11 // pred_check_branch
        %145 = sbr.rel (%p143) target = $region20
      $region19: #{vicmae_forward.16} parent=11 // pred_region
        _
      $region20: #{vicmae_forward.16} parent=11 // pred_fallthru
        _
      // Predicated region
      $region21: #{vicmae_forward.16} parent=11 // pred_check
        %p146 = pneg %p99
      $region22: #{vicmae_forward.16} parent=11 // pred_check_branch
        %148 = sbr.rel (%p146) target = $region24
      $region23: #{vicmae_forward.16} parent=11 // pred_region
        _
      $region24: #{vicmae_forward.16} parent=11 // pred_fallthru
        _
    $region12: #{vicmae_forward.16} parent=5 // pred_fallthru
      _
    %p149 = scmp.lt.s32.totalorder %s10, 2
    // Predicated region
    $region25: #{vicmae_forward.16} parent=5 // pred_check
      %p150 = pneg %p149
    $region26: #{vicmae_forward.16} parent=5 // pred_check_branch
      %152 = sbr.rel (%p150) target = $region28
    $region27: #{vicmae_forward.16} parent=5 // pred_region
      // Predicated region
      $region29: #{vicmae_forward.16} parent=27 // pred_check
        %p153 = pneg %p30
      $region30: #{vicmae_forward.16} parent=27 // pred_check_branch
        %155 = sbr.rel (%p153) target = $region32
      $region31: #{vicmae_forward.16} parent=27 // pred_region
        %p156 = scmp.lt.s32.totalorder %s10, 1
        %s157 = scalar_select %p156, %s10, 1
        %s158 = smul.addr %s157, 2
        %s159 = smul.addr %s158, 8
        %s160 = scalar_lea.vmem %s0, %s159
      $region32: #{vicmae_forward.16} parent=27 // pred_fallthru
        _
    $region28: #{vicmae_forward.16} parent=5 // pred_fallthru
      _
    %p161 = scmp.le.s32.totalorder 1, %s10
    %p162 = scmp.lt.s32.totalorder %s10, 3
    %p163 = pnand %p161, %p162
    %p164 = pneg %p163
    // Predicated region
    $region33: #{vicmae_forward.16} parent=5 // pred_check
      _
    $region34: #{vicmae_forward.16} parent=5 // pred_check_branch
      %166 = sbr.rel (%p163) target = $region36
    $region35: #{vicmae_forward.16} parent=5 // pred_region
      %s167 = ssub.s32 %s10, 1
      %p168 = scmp.lt.s32.totalorder %s15, 1
      %s169 = scalar_select %p168, %s15, 1
      %s170 = smul.addr %s169, 2
      %s171 = smul.addr %s170, 8
      %s172 = scalar_lea.vmem %s0, %s171
      %p173 = pneg %p36
      %p174 = pneg %p33
      %p175 = pneg %p57
      %p176 = pneg %p54
      %p177 = pneg %p78
      %p178 = pneg %p75
      %p179 = pneg %p99
      %p180 = pneg %p96
      %p181 = pneg %p125
      %p182 = pneg %p122
      %p183 = scmp.lt.s32.totalorder %s15, 1
      %s184 = scalar_select %p183, %s15, 1
      %s185 = smul.addr %s184, 2
      %s186 = smul.addr %s185, 8
      %s187 = scalar_lea.vmem %s4, %s186
      %p188 = scmp.lt.s32.totalorder %s15, 1
      %s189 = scalar_select %p188, %s15, 1
      %s190 = smul.addr %s189, 2
      %s191 = smul.addr %s190, 8
      %s192 = scalar_lea.vmem %s0, %s191
      %p193 = scmp.lt.s32.totalorder %s15, 1
      %s194 = scalar_select %p193, %s15, 1
      %s195 = smul.addr %s194, 2
      %s196 = smul.addr %s195, 8
      %s197 = scalar_lea.vmem %s4, %s196
      %v198 = vld [vmem:[%s192] sm:$0xff]
      %v199 = vld [vmem:[%s192 + $0x8] sm:$0xff]
      %v200 = vld [vmem:[%s1] sm:$0xff]
      %v201 = vld [vmem:[%s1 + $0x8] sm:$0xff]
      %v202 = vld [vmem:[%s1 + $0x10] sm:$0xff]
      %v203 = vld [vmem:[%s1 + $0x18] sm:$0xff]
      %v204 = vld [vmem:[%s1 + $0x20] sm:$0xff]
      %v205 = vld [vmem:[%s1 + $0x28] sm:$0xff]
      %v206 = vld [vmem:[%s2] sm:$0x1]
      %v208 = vlaneseq
      %v209 = vshrl.u32 %v208, 7
      %v210 = vsub.s32 0, %v209
      %v211 = vrot.slane %v206, %v210
      %vm213 = vcmask 392192
      %v215 = vsel %vm213, %v198, 0
      %v218 = vsel %vm213, %v199, 0
      %220 = vmatprep.subr.mxu0 0.0
      %221 = vmatpush1.msra.mxu0 %v200
      %222 = vmatprep.subr.mxu0 0.0
      %223 = vmatpush1.msra.mxu0 %v201
      %224 = vmatprep.subr.mxu0 0.0
      %225 = vmatpush1.msra.mxu0 %v202
      %226 = vmatprep.subr.mxu0 0.0
      %227 = vmatpush1.msra.mxu0 %v203
      %228 = vmatprep.subr.mxu0 0.0
      %229 = vmatpush1.msra.mxu0 %v204
      %230 = vmatprep.subr.mxu0 0.0
      %231 = vmatpush1.msra.mxu0 %v205
      %232 = vmatprep.subr.mxu0 0.0
      %233 = vmatpush1.msra.mxu0 0.0
      %234 = vmatprep.subr.mxu0 0.0
      %235 = vmatpush1.msra.mxu0 0.0
      %236 = vmatprep.subr.mxu0 0.0
      %237 = vmatpush1.msra.mxu0 0.0
      %238 = vmatprep.subr.mxu0 0.0
      %239 = vmatpush1.msra.mxu0 0.0
      %240 = vmatprep.subr.mxu0 0.0
      %241 = vmatpush1.msra.mxu0 0.0
      %242 = vmatprep.subr.mxu0 0.0
      %243 = vmatpush1.msra.mxu0 0.0
      %244 = vmatprep.subr.mxu0 0.0
      %245 = vmatpush1.msra.mxu0 0.0
      %246 = vmatprep.subr.mxu0 0.0
      %247 = vmatpush1.msra.mxu0 0.0
      %248 = vmatprep.subr.mxu0 0.0
      %249 = vmatpush1.msra.mxu0 0.0
      %250 = vmatprep.subr.mxu0 0.0
      %251 = vmatpush1.msra.mxu0 0.0
      %252 = vmatprep.subr.mxu0 0.0
      %253 = vmatpush1.msra.mxu0 0.0
      %254 = vmatprep.subr.mxu0 0.0
      %255 = vmatpush1.msra.mxu0 0.0
      %256 = vmatprep.subr.mxu0 0.0
      %257 = vmatpush1.msra.mxu0 0.0
      %258 = vmatprep.subr.mxu0 0.0
      %259 = vmatpush1.msra.mxu0 0.0
      %260 = vmatprep.subr.mxu0 0.0
      %261 = vmatpush1.msra.mxu0 0.0
      %262 = vmatprep.subr.mxu0 0.0
      %263 = vmatpush1.msra.mxu0 0.0
      %264 = vmatprep.subr.mxu0 0.0
      %265 = vmatpush1.msra.mxu0 0.0
      %266 = vmatprep.subr.mxu0 0.0
      %267 = vmatpush1.msra.mxu0 0.0
      %268 = vmatprep.subr.mxu0 0.0
      %269 = vmatpush1.msra.mxu0 0.0
      %270 = vmatprep.subr.mxu0 0.0
      %271 = vmatpush1.msra.mxu0 0.0
      %272 = vmatprep.subr.mxu0 0.0
      %273 = vmatpush1.msra.mxu0 0.0
      %274 = vmatprep.subr.mxu0 0.0
      %275 = vmatpush1.msra.mxu0 0.0
      %276 = vmatprep.subr.mxu0 0.0
      %277 = vmatpush1.msra.mxu0 0.0
      %278 = vmatprep.subr.mxu0 0.0
      %279 = vmatpush1.msra.mxu0 0.0
      %280 = vmatprep.subr.mxu0 0.0
      %281 = vmatpush1.msra.mxu0 0.0
      %282 = vmatprep.subr.mxu0 0.0
      %283 = vmatpush1.msra.mxu0 0.0
      %284 = vmatprep.mubr.f32.mxu0 0.0
      %285 = vmatmul.mubr.f32.gmra.mrb[0].mxu0 %v215
      %v286 = vpop.f32.mrb[0].mxu0
      %v287 = vadd.f32 %v211, %v286
      %v288 = vpop.f32.mrb[0].mxu0
      %289 = vmatprep.mubr.f32.mxu0 0.0
      %290 = vmatmul.mubr.f32.gmra.mrb[0].mxu0 %v218
      %v291 = vpop.f32.mrb[0].mxu0
      %v292 = vadd.f32 %v211, %v291
      %v293 = vpop.f32.mrb[0].mxu0
      %294 = vdwg.mxu0
      %v295 = vld [vmem:[%s3] sm:$0xff]
      %v296 = vld [vmem:[%s3 + $0x8] sm:$0xff]
      %v297 = vadd.f32 %v287, %v295
      %v298 = vadd.f32 %v292, %v296
      %vm299 = vcmask 261120
      %300 = vst.msk [vmem:[%s197] sm:$0xff] %vm299, %v297
      %301 = vst.msk [vmem:[%s197 + $0x8] sm:$0xff] %vm299, %v298
      %p302 = scmp.lt.s32.totalorder %s15, 1
      %s303 = scalar_select %p302, %s15, 1
      %s304 = smul.addr %s303, 2
      %s305 = smul.addr %s304, 8
      %s306 = scalar_lea.vmem %s4, %s305
      // Predicated region
      $region37: #{vicmae_forward.16} parent=35 // pred_check
        %p307 = pneg %p122
      $region38: #{vicmae_forward.16} parent=35 // pred_check_branch
        %309 = sbr.rel (%p307) target = $region40
      $region39: #{vicmae_forward.16} parent=35 // pred_region
        _
      $region40: #{vicmae_forward.16} parent=35 // pred_fallthru
        _
    $region36: #{vicmae_forward.16} parent=5 // pred_fallthru
      _
    %p310 = scmp.le.s32.totalorder 2, %s10
    // Predicated region
    $region41: #{vicmae_forward.16} parent=5 // pred_check
      %p311 = pneg %p310
    $region42: #{vicmae_forward.16} parent=5 // pred_check_branch
      %313 = sbr.rel (%p311) target = $region44
    $region43: #{vicmae_forward.16} parent=5 // pred_region
      %s314 = ssub.s32 %s10, 2
      // Predicated region
      $region45: #{vicmae_forward.16} parent=43 // pred_check
        %p315 = pneg %p128
      $region46: #{vicmae_forward.16} parent=43 // pred_check_branch
        %317 = sbr.rel (%p315) target = $region48
      $region47: #{vicmae_forward.16} parent=43 // pred_region
        %p318 = scmp.lt.s32.totalorder %s16, 1
        %s319 = scalar_select %p318, %s16, 1
        %s320 = smul.addr %s319, 2
        %s321 = smul.addr %s320, 8
        %s322 = scalar_lea.vmem %s4, %s321
      $region48: #{vicmae_forward.16} parent=43 // pred_fallthru
        _
    $region44: #{vicmae_forward.16} parent=5 // pred_fallthru
      _
  $region6: #{vicmae_forward.16} parent=0 // loop_footer
    %s14 = sadd.s32 1, %s10
  $region7: #{vicmae_forward.16} parent=0 // loop_footer_branch
    %9 = sbr.rel target = $region3
  $region8: #{vicmae_forward.16} parent=0 // loop_exit
    _

// kernel: vicmae_forward.25
$region0: #{vicmae_forward.25}
  #allocation0 [shape = 'u32[]', space=smem, size = 0x4, offset = 0x4, fixed_abs, tag = 'smem constant byte address 0x4 - core index']
  #allocation1 [shape = 'u32[144,128]{1,0:T(1,128)}', space=vmem, size = 0x12000, scoped, tag = 'internal scratch']
  %s0 = inlined_call_operand.vmem [shape: f32[2,32], index: 0, kind: input, shape index: {}]
  %s1 = inlined_call_operand.vmem [shape: f32[32,64], index: 1, kind: input, shape index: {}]
  %s2 = inlined_call_operand.vmem [shape: f32[1,64], index: 2, kind: input, shape index: {}]
  %s3 = inlined_call_operand.vmem [shape: f32[1,64], index: 3, kind: input, shape index: {}]
  %s4 = inlined_call_operand.vmem [shape: f32[1,64], index: 4, kind: input, shape index: {}]
  %s5 = inlined_call_operand.vmem [shape: f32[64,64], index: 5, kind: input, shape index: {}]
  %s6 = inlined_call_operand.vmem [shape: f32[1,64], index: 6, kind: input, shape index: {}]
  %s7 = inlined_call_operand.vmem [shape: f32[1,64], index: 7, kind: input, shape index: {}]
  %s8 = inlined_call_operand.vmem [shape: f32[1,64], index: 8, kind: input, shape index: {}]
  %s9 = inlined_call_operand.vmem [shape: f32[64,32], index: 9, kind: input, shape index: {}]
  %s10 = inlined_call_operand.vmem [shape: f32[1,32], index: 10, kind: input, shape index: {}]
  %s11 = inlined_call_operand.vmem [shape: f32[2,32], index: 11, kind: output, shape index: {}]
  %s12 = sld [smem:[#allocation0]]
  $region54: #{vicmae_forward.25} parent=0
    _
  %s14 = ssub.s32 1, %s12
  %s15 = scalar_select 0, %s14, %s12
  // Predicated region
  $region2: #{vicmae_forward.25} parent=0 // pred_check
    _
  $region3: #{vicmae_forward.25} parent=0 // pred_check_branch
    %17 = sbr.rel (0) target = $region5
  $region4: #{vicmae_forward.25} parent=0 // pred_region
    _
  $region5: #{vicmae_forward.25} parent=0 // pred_fallthru
    _
  // Predicated region
  $region6: #{vicmae_forward.25} parent=0 // pred_check
    _
  $region7: #{vicmae_forward.25} parent=0 // pred_check_branch
    %19 = sbr.rel (0) target = $region9
  $region8: #{vicmae_forward.25} parent=0 // pred_region
    _
  $region9: #{vicmae_forward.25} parent=0 // pred_fallthru
    _
  // Predicated region
  $region10: #{vicmae_forward.25} parent=0 // pred_check
    _
  $region11: #{vicmae_forward.25} parent=0 // pred_check_branch
    %21 = sbr.rel (0) target = $region13
  $region12: #{vicmae_forward.25} parent=0 // pred_region
    _
  $region13: #{vicmae_forward.25} parent=0 // pred_fallthru
    _
  // Predicated region
  $region14: #{vicmae_forward.25} parent=0 // pred_check
    _
  $region15: #{vicmae_forward.25} parent=0 // pred_check_branch
    %23 = sbr.rel (0) target = $region17
  $region16: #{vicmae_forward.25} parent=0 // pred_region
    _
  $region17: #{vicmae_forward.25} parent=0 // pred_fallthru
    _
  // Predicated region
  $region18: #{vicmae_forward.25} parent=0 // pred_check
    _
  $region19: #{vicmae_forward.25} parent=0 // pred_check_branch
    %25 = sbr.rel (0) target = $region21
  $region20: #{vicmae_forward.25} parent=0 // pred_region
    _
  $region21: #{vicmae_forward.25} parent=0 // pred_fallthru
    _
  // Predicated region
  $region22: #{vicmae_forward.25} parent=0 // pred_check
    _
  $region23: #{vicmae_forward.25} parent=0 // pred_check_branch
    %27 = sbr.rel (0) target = $region25
  $region24: #{vicmae_forward.25} parent=0 // pred_region
    _
  $region25: #{vicmae_forward.25} parent=0 // pred_fallthru
    _
  // Predicated region
  $region26: #{vicmae_forward.25} parent=0 // pred_check
    _
  $region27: #{vicmae_forward.25} parent=0 // pred_check_branch
    %29 = sbr.rel (0) target = $region29
  $region28: #{vicmae_forward.25} parent=0 // pred_region
    _
  $region29: #{vicmae_forward.25} parent=0 // pred_fallthru
    _
  // Predicated region
  $region30: #{vicmae_forward.25} parent=0 // pred_check
    _
  $region31: #{vicmae_forward.25} parent=0 // pred_check_branch
    %31 = sbr.rel (0) target = $region33
  $region32: #{vicmae_forward.25} parent=0 // pred_region
    _
  $region33: #{vicmae_forward.25} parent=0 // pred_fallthru
    _
  // Predicated region
  $region34: #{vicmae_forward.25} parent=0 // pred_check
    _
  $region35: #{vicmae_forward.25} parent=0 // pred_check_branch
    %33 = sbr.rel (0) target = $region37
  $region36: #{vicmae_forward.25} parent=0 // pred_region
    _
  $region37: #{vicmae_forward.25} parent=0 // pred_fallthru
    _
  // Predicated region
  $region38: #{vicmae_forward.25} parent=0 // pred_check
    _
  $region39: #{vicmae_forward.25} parent=0 // pred_check_branch
    %35 = sbr.rel (0) target = $region41
  $region40: #{vicmae_forward.25} parent=0 // pred_region
    _
  $region41: #{vicmae_forward.25} parent=0 // pred_fallthru
    _
  // Predicated region
  $region42: #{vicmae_forward.25} parent=0 // pred_check
    _
  $region43: #{vicmae_forward.25} parent=0 // pred_check_branch
    %37 = sbr.rel (0) target = $region45
  $region44: #{vicmae_forward.25} parent=0 // pred_region
    _
  $region45: #{vicmae_forward.25} parent=0 // pred_fallthru
    _
  %v38 = vld [vmem:[%s0] sm:$0x3]
  %v39 = vld [vmem:[%s1] sm:$0xff]
  %v40 = vld [vmem:[%s1 + $0x8] sm:$0xff]
  %v41 = vld [vmem:[%s1 + $0x10] sm:$0xff]
  %v42 = vld [vmem:[%s1 + $0x18] sm:$0xff]
  %v43 = vld [vmem:[%s2] sm:$0x1]
  %v45 = vlaneseq
  %v46 = vshrl.u32 %v45, 7
  %v47 = vsub.s32 0, %v46
  %v48 = vrot.slane %v43, %v47
  %vm50 = vcmask 261120
  %v52 = vsel %vm50, %v38, 0
  %54 = vmatprep.subr.mxu0 0.0
  %55 = vmatpush1.msra.mxu0 %v39
  %56 = vmatprep.subr.mxu0 0.0
  %57 = vmatpush1.msra.mxu0 %v40
  %58 = vmatprep.subr.mxu0 0.0
  %59 = vmatpush1.msra.mxu0 %v41
  %60 = vmatprep.subr.mxu0 0.0
  %61 = vmatpush1.msra.mxu0 %v42
  %62 = vmatprep.subr.mxu0 0.0
  %63 = vmatpush1.msra.mxu0 0.0
  %64 = vmatprep.subr.mxu0 0.0
  %65 = vmatpush1.msra.mxu0 0.0
  %66 = vmatprep.subr.mxu0 0.0
  %67 = vmatpush1.msra.mxu0 0.0
  %68 = vmatprep.subr.mxu0 0.0
  %69 = vmatpush1.msra.mxu0 0.0
  %70 = vmatprep.subr.mxu0 0.0
  %71 = vmatpush1.msra.mxu0 0.0
  %72 = vmatprep.subr.mxu0 0.0
  %73 = vmatpush1.msra.mxu0 0.0
  %74 = vmatprep.subr.mxu0 0.0
  %75 = vmatpush1.msra.mxu0 0.0
  %76 = vmatprep.subr.mxu0 0.0
  %77 = vmatpush1.msra.mxu0 0.0
  %78 = vmatprep.subr.mxu0 0.0
  %79 = vmatpush1.msra.mxu0 0.0
  %80 = vmatprep.subr.mxu0 0.0
  %81 = vmatpush1.msra.mxu0 0.0
  %82 = vmatprep.subr.mxu0 0.0
  %83 = vmatpush1.msra.mxu0 0.0
  %84 = vmatprep.subr.mxu0 0.0
  %85 = vmatpush1.msra.mxu0 0.0
  %86 = vmatprep.subr.mxu0 0.0
  %87 = vmatpush1.msra.mxu0 0.0
  %88 = vmatprep.subr.mxu0 0.0
  %89 = vmatpush1.msra.mxu0 0.0
  %90 = vmatprep.subr.mxu0 0.0
  %91 = vmatpush1.msra.mxu0 0.0
  %92 = vmatprep.subr.mxu0 0.0
  %93 = vmatpush1.msra.mxu0 0.0
  %94 = vmatprep.subr.mxu0 0.0
  %95 = vmatpush1.msra.mxu0 0.0
  %96 = vmatprep.subr.mxu0 0.0
  %97 = vmatpush1.msra.mxu0 0.0
  %98 = vmatprep.subr.mxu0 0.0
  %99 = vmatpush1.msra.mxu0 0.0
  %100 = vmatprep.subr.mxu0 0.0
  %101 = vmatpush1.msra.mxu0 0.0
  %102 = vmatprep.subr.mxu0 0.0
  %103 = vmatpush1.msra.mxu0 0.0
  %104 = vmatprep.subr.mxu0 0.0
  %105 = vmatpush1.msra.mxu0 0.0
  %106 = vmatprep.subr.mxu0 0.0
  %107 = vmatpush1.msra.mxu0 0.0
  %108 = vmatprep.subr.mxu0 0.0
  %109 = vmatpush1.msra.mxu0 0.0
  %110 = vmatprep.subr.mxu0 0.0
  %111 = vmatpush1.msra.mxu0 0.0
  %112 = vmatprep.subr.mxu0 0.0
  %113 = vmatpush1.msra.mxu0 0.0
  %114 = vmatprep.subr.mxu0 0.0
  %115 = vmatpush1.msra.mxu0 0.0
  %116 = vmatprep.subr.mxu0 0.0
  %117 = vmatpush1.msra.mxu0 0.0
  %118 = vmatprep.mubr.f32.mxu0 0.0
  %119 = vmatmul.mubr.f32.gmra.mrb[0].mxu0 %v52
  %v120 = vpop.f32.mrb[0].mxu0
  %v121 = vadd.f32 %v48, %v120
  %v122 = vpop.f32.mrb[0].mxu0
  %123 = vdwg.mxu0
  %v124 = vld [vmem:[%s3] sm:$0x1]
  %v125 = vld [vmem:[%s4] sm:$0x1]
  %vm126 = vcmask 517120
  %v127 = vsel %vm126, %v121, 0.0
  %v128 = vrot.slane %v127, 4
  %v129 = vadd.f32 %v127, %v128
  %v130 = vrot.slane %v129, 2
  %v131 = vadd.f32 %v129, %v130
  %v132 = vrot.slane %v131, 1
  %v133 = vadd.f32 %v131, %v132
  %v134 = vrcp.pop 2.0
  %v135 = vmul.f32 %v133, %v134
  %v136 = vsub.f32 %v121, %v135
  %v137 = vmul.f32 %v136, %v136
  %v138 = vsel %vm126, %v137, 0.0
  %v139 = vrot.slane %v138, 4
  %v140 = vadd.f32 %v138, %v139
  %v141 = vrot.slane %v140, 2
  %v142 = vadd.f32 %v140, %v141
  %v143 = vrot.slane %v142, 1
  %v144 = vadd.f32 %v142, %v143
  %v145 = vmul.f32 %v144, %v134
  %v146 = vadd.f32 %v145, 1e-05
  %v147 = vrsqrt.pop %v146
  %v148 = vmul.f32 %v136, %v147
  %v150 = vlaneseq
  %v151 = vshrl.u32 %v150, 7
  %v152 = vsub.s32 0, %v151
  %v153 = vrot.slane %v124, %v152
  %v155 = vmul.f32 %v148, %v153
  %v157 = vlaneseq
  %v158 = vshrl.u32 %v157, 7
  %v159 = vsub.s32 0, %v158
  %v160 = vrot.slane %v125, %v159
  %v162 = vadd.f32 %v155, %v160
  %v163 = vmax.f32 %v162, 0.0
  %v164 = vld [vmem:[%s5] sm:$0xff]
  %v165 = vld [vmem:[%s5 + $0x8] sm:$0xff]
  %v166 = vld [vmem:[%s5 + $0x10] sm:$0xff]
  %v167 = vld [vmem:[%s5 + $0x18] sm:$0xff]
  %v168 = vld [vmem:[%s5 + $0x20] sm:$0xff]
  %v169 = vld [vmem:[%s5 + $0x28] sm:$0xff]
  %v170 = vld [vmem:[%s5 + $0x30] sm:$0xff]
  %v171 = vld [vmem:[%s5 + $0x38] sm:$0xff]
  %v172 = vld [vmem:[%s6] sm:$0x1]
  %v174 = vlaneseq
  %v175 = vshrl.u32 %v174, 7
  %v176 = vsub.s32 0, %v175
  %v177 = vrot.slane %v172, %v176
  %vm179 = vcmask 523264
  %v181 = vsel %vm179, %v163, 0
  %183 = vmatprep.subr.mxu0 0.0
  %184 = vmatpush1.msra.mxu0 %v164
  %185 = vmatprep.subr.mxu0 0.0
  %186 = vmatpush1.msra.mxu0 %v165
  %187 = vmatprep.subr.mxu0 0.0
  %188 = vmatpush1.msra.mxu0 %v166
  %189 = vmatprep.subr.mxu0 0.0
  %190 = vmatpush1.msra.mxu0 %v167
  %191 = vmatprep.subr.mxu0 0.0
  %192 = vmatpush1.msra.mxu0 %v168
  %193 = vmatprep.subr.mxu0 0.0
  %194 = vmatpush1.msra.mxu0 %v169
  %195 = vmatprep.subr.mxu0 0.0
  %196 = vmatpush1.msra.mxu0 %v170
  %197 = vmatprep.subr.mxu0 0.0
  %198 = vmatpush1.msra.mxu0 %v171
  %199 = vmatprep.subr.mxu0 0.0
  %200 = vmatpush1.msra.mxu0 0.0
  %201 = vmatprep.subr.mxu0 0.0
  %202 = vmatpush1.msra.mxu0 0.0
  %203 = vmatprep.subr.mxu0 0.0
  %204 = vmatpush1.msra.mxu0 0.0
  %205 = vmatprep.subr.mxu0 0.0
  %206 = vmatpush1.msra.mxu0 0.0
  %207 = vmatprep.subr.mxu0 0.0
  %208 = vmatpush1.msra.mxu0 0.0
  %209 = vmatprep.subr.mxu0 0.0
  %210 = vmatpush1.msra.mxu0 0.0
  %211 = vmatprep.subr.mxu0 0.0
  %212 = vmatpush1.msra.mxu0 0.0
  %213 = vmatprep.subr.mxu0 0.0
  %214 = vmatpush1.msra.mxu0 0.0
  %215 = vmatprep.subr.mxu0 0.0
  %216 = vmatpush1.msra.mxu0 0.0
  %217 = vmatprep.subr.mxu0 0.0
  %218 = vmatpush1.msra.mxu0 0.0
  %219 = vmatprep.subr.mxu0 0.0
  %220 = vmatpush1.msra.mxu0 0.0
  %221 = vmatprep.subr.mxu0 0.0
  %222 = vmatpush1.msra.mxu0 0.0
  %223 = vmatprep.subr.mxu0 0.0
  %224 = vmatpush1.msra.mxu0 0.0
  %225 = vmatprep.subr.mxu0 0.0
  %226 = vmatpush1.msra.mxu0 0.0
  %227 = vmatprep.subr.mxu0 0.0
  %228 = vmatpush1.msra.mxu0 0.0
  %229 = vmatprep.subr.mxu0 0.0
  %230 = vmatpush1.msra.mxu0 0.0
  %231 = vmatprep.subr.mxu0 0.0
  %232 = vmatpush1.msra.mxu0 0.0
  %233 = vmatprep.subr.mxu0 0.0
  %234 = vmatpush1.msra.mxu0 0.0
  %235 = vmatprep.subr.mxu0 0.0
  %236 = vmatpush1.msra.mxu0 0.0
  %237 = vmatprep.subr.mxu0 0.0
  %238 = vmatpush1.msra.mxu0 0.0
  %239 = vmatprep.subr.mxu0 0.0
  %240 = vmatpush1.msra.mxu0 0.0
  %241 = vmatprep.subr.mxu0 0.0
  %242 = vmatpush1.msra.mxu0 0.0
  %243 = vmatprep.subr.mxu0 0.0
  %244 = vmatpush1.msra.mxu0 0.0
  %245 = vmatprep.subr.mxu0 0.0
  %246 = vmatpush1.msra.mxu0 0.0
  %247 = vmatprep.mubr.f32.mxu0 0.0
  %248 = vmatmul.mubr.f32.gmra.mrb[0].mxu0 %v181
  %v249 = vpop.f32.mrb[0].mxu0
  %v250 = vadd.f32 %v177, %v249
  %v251 = vpop.f32.mrb[0].mxu0
  %252 = vdwg.mxu0
  %v253 = vld [vmem:[%s7] sm:$0x1]
  %v254 = vld [vmem:[%s8] sm:$0x1]
  %v255 = vsel %vm126, %v250, 0.0
  %v256 = vrot.slane %v255, 4
  %v257 = vadd.f32 %v255, %v256
  %v258 = vrot.slane %v257, 2
  %v259 = vadd.f32 %v257, %v258
  %v260 = vrot.slane %v259, 1
  %v261 = vadd.f32 %v259, %v260
  %v262 = vmul.f32 %v261, %v134
  %v263 = vsub.f32 %v250, %v262
  %v264 = vmul.f32 %v263, %v263
  %v265 = vsel %vm126, %v264, 0.0
  %v266 = vrot.slane %v265, 4
  %v267 = vadd.f32 %v265, %v266
  %v268 = vrot.slane %v267, 2
  %v269 = vadd.f32 %v267, %v268
  %v270 = vrot.slane %v269, 1
  %v271 = vadd.f32 %v269, %v270
  %v272 = vmul.f32 %v271, %v134
  %v273 = vadd.f32 %v272, 1e-05
  %v274 = vrsqrt.pop %v273
  %v275 = vmul.f32 %v263, %v274
  %v277 = vlaneseq
  %v278 = vshrl.u32 %v277, 7
  %v279 = vsub.s32 0, %v278
  %v280 = vrot.slane %v253, %v279
  %v282 = vmul.f32 %v275, %v280
  %v284 = vlaneseq
  %v285 = vshrl.u32 %v284, 7
  %v286 = vsub.s32 0, %v285
  %v287 = vrot.slane %v254, %v286
  %v289 = vadd.f32 %v282, %v287
  %v290 = vmax.f32 %v289, 0.0
  %v291 = vld [vmem:[%s9] sm:$0xff]
  %v292 = vld [vmem:[%s9 + $0x8] sm:$0xff]
  %v293 = vld [vmem:[%s9 + $0x10] sm:$0xff]
  %v294 = vld [vmem:[%s9 + $0x18] sm:$0xff]
  %v295 = vld [vmem:[%s9 + $0x20] sm:$0xff]
  %v296 = vld [vmem:[%s9 + $0x28] sm:$0xff]
  %v297 = vld [vmem:[%s9 + $0x30] sm:$0xff]
  %v298 = vld [vmem:[%s9 + $0x38] sm:$0xff]
  %v299 = vld [vmem:[%s10] sm:$0x1]
  %v301 = vlaneseq
  %v302 = vshrl.u32 %v301, 7
  %v303 = vsub.s32 0, %v302
  %v304 = vrot.slane %v299, %v303
  %v307 = vsel %vm179, %v290, 0
  %309 = vmatprep.subr.mxu0 0.0
  %310 = vmatpush1.msra.mxu0 %v291
  %311 = vmatprep.subr.mxu0 0.0
  %312 = vmatpush1.msra.mxu0 %v292
  %313 = vmatprep.subr.mxu0 0.0
  %314 = vmatpush1.msra.mxu0 %v293
  %315 = vmatprep.subr.mxu0 0.0
  %316 = vmatpush1.msra.mxu0 %v294
  %317 = vmatprep.subr.mxu0 0.0
  %318 = vmatpush1.msra.mxu0 %v295
  %319 = vmatprep.subr.mxu0 0.0
  %320 = vmatpush1.msra.mxu0 %v296
  %321 = vmatprep.subr.mxu0 0.0
  %322 = vmatpush1.msra.mxu0 %v297
  %323 = vmatprep.subr.mxu0 0.0
  %324 = vmatpush1.msra.mxu0 %v298
  %325 = vmatprep.subr.mxu0 0.0
  %326 = vmatpush1.msra.mxu0 0.0
  %327 = vmatprep.subr.mxu0 0.0
  %328 = vmatpush1.msra.mxu0 0.0
  %329 = vmatprep.subr.mxu0 0.0
  %330 = vmatpush1.msra.mxu0 0.0
  %331 = vmatprep.subr.mxu0 0.0
  %332 = vmatpush1.msra.mxu0 0.0
  %333 = vmatprep.subr.mxu0 0.0
  %334 = vmatpush1.msra.mxu0 0.0
  %335 = vmatprep.subr.mxu0 0.0
  %336 = vmatpush1.msra.mxu0 0.0
  %337 = vmatprep.subr.mxu0 0.0
  %338 = vmatpush1.msra.mxu0 0.0
  %339 = vmatprep.subr.mxu0 0.0
  %340 = vmatpush1.msra.mxu0 0.0
  %341 = vmatprep.subr.mxu0 0.0
  %342 = vmatpush1.msra.mxu0 0.0
  %343 = vmatprep.subr.mxu0 0.0
  %344 = vmatpush1.msra.mxu0 0.0
  %345 = vmatprep.subr.mxu0 0.0
  %346 = vmatpush1.msra.mxu0 0.0
  %347 = vmatprep.subr.mxu0 0.0
  %348 = vmatpush1.msra.mxu0 0.0
  %349 = vmatprep.subr.mxu0 0.0
  %350 = vmatpush1.msra.mxu0 0.0
  %351 = vmatprep.subr.mxu0 0.0
  %352 = vmatpush1.msra.mxu0 0.0
  %353 = vmatprep.subr.mxu0 0.0
  %354 = vmatpush1.msra.mxu0 0.0
  %355 = vmatprep.subr.mxu0 0.0
  %356 = vmatpush1.msra.mxu0 0.0
  %357 = vmatprep.subr.mxu0 0.0
  %358 = vmatpush1.msra.mxu0 0.0
  %359 = vmatprep.subr.mxu0 0.0
  %360 = vmatpush1.msra.mxu0 0.0
  %361 = vmatprep.subr.mxu0 0.0
  %362 = vmatpush1.msra.mxu0 0.0
  %363 = vmatprep.subr.mxu0 0.0
  %364 = vmatpush1.msra.mxu0 0.0
  %365 = vmatprep.subr.mxu0 0.0
  %366 = vmatpush1.msra.mxu0 0.0
  %367 = vmatprep.subr.mxu0 0.0
  %368 = vmatpush1.msra.mxu0 0.0
  %369 = vmatprep.subr.mxu0 0.0
  %370 = vmatpush1.msra.mxu0 0.0
  %371 = vmatprep.subr.mxu0 0.0
  %372 = vmatpush1.msra.mxu0 0.0
  %373 = vmatprep.mubr.f32.mxu0 0.0
  %374 = vmatmul.mubr.f32.gmra.mrb[0].mxu0 %v307
  %v375 = vpop.f32.mrb[0].mxu0
  %v376 = vadd.f32 %v304, %v375
  %v377 = vpop.f32.mrb[0].mxu0
  %378 = vdwg.mxu0
  %vm379 = vcmask 254976
  %380 = vst.msk [vmem:[%s11] sm:$0x3] %vm379, %v376
  // Predicated region
  $region46: #{vicmae_forward.25} parent=0 // pred_check
    _
  $region47: #{vicmae_forward.25} parent=0 // pred_check_branch
    %382 = sbr.rel (0) target = $region49
  $region48: #{vicmae_forward.25} parent=0 // pred_region
    _
  $region49: #{vicmae_forward.25} parent=0 // pred_fallthru
    _
  // Predicated region
  $region50: #{vicmae_forward.25} parent=0 // pred_check
    _
  $region51: #{vicmae_forward.25} parent=0 // pred_check_branch
    %384 = sbr.rel (0) target = $region53
  $region52: #{vicmae_forward.25} parent=0 // pred_region
    _
  $region53: #{vicmae_forward.25} parent=0 // pred_fallthru
    _

// kernel: vicmae_forward.22
$region0: #{vicmae_forward.22}
  #allocation0 [shape = 'u32[]', space=smem, size = 0x4, offset = 0x4, fixed_abs, tag = 'smem constant byte address 0x4 - core index']
  #allocation1 [shape = 'u32[144,128]{1,0:T(1,128)}', space=vmem, size = 0x12000, scoped, tag = 'internal scratch']
  #allocation2 [shape = 'f32[9,32]{1,0:T(8,128)}', space=vmem, size = 0x2000, scoped, tag = 'scratch operand']
  %s0 = inlined_call_operand.vmem [shape: f32[2,9,32], index: 0, kind: input, shape index: {}]
  %s1 = inlined_call_operand.vmem [shape: f32[1,32], index: 1, kind: input, shape index: {}]
  %s2 = inlined_call_operand.vmem [shape: f32[1,32], index: 2, kind: input, shape index: {}]
  %s3 = inlined_call_operand.vmem [shape: f32[32,96], index: 3, kind: input, shape index: {}]
  %s4 = inlined_call_operand.vmem [shape: f32[1,96], index: 4, kind: input, shape index: {}]
  %s5 = inlined_call_operand.vmem [shape: f32[32,32], index: 5, kind: input, shape index: {}]
  %s6 = inlined_call_operand.vmem [shape: f32[1,32], index: 6, kind: input, shape index: {}]
  %s7 = inlined_call_operand.vmem [shape: f32[1,32], index: 7, kind: input, shape index: {}]
  %s8 = inlined_call_operand.vmem [shape: f32[1,32], index: 8, kind: input, shape index: {}]
  %s9 = inlined_call_operand.vmem [shape: f32[32,128], index: 9, kind: input, shape index: {}]
  %s10 = inlined_call_operand.vmem [shape: f32[1,128], index: 10, kind: input, shape index: {}]
  %s11 = inlined_call_operand.vmem [shape: f32[128,32], index: 11, kind: input, shape index: {}]
  %s12 = inlined_call_operand.vmem [shape: f32[1,32], index: 12, kind: input, shape index: {}]
  %s13 = inlined_call_operand.vmem [shape: f32[2,9,32], index: 13, kind: output, shape index: {}]
  %s14 = sld [smem:[#allocation0]]
  $region85: #{vicmae_forward.22} parent=0
    _
  %s16 = ssub.s32 1, %s14
  %s17 = scalar_select 0, %s16, %s14
  loop: start=0, step=1, limit=4
  $region2: #{vicmae_forward.22} parent=0 // loop_pre_header
    _
  $region3: #{vicmae_forward.22} parent=0 // loop_header
    %s19 = sphi 0, %s23
    %p20 = scmp.ge.s32.totalorder %s19, 4
    %s29 = sphi 0, %s31
    %s32 = sphi 0, %s29
    %s33 = sphi 0, %s32
    %s49 = sphi 0, %s33
    %s53 = sphi 0, %s53
    %s55 = sphi 0, %s53
    %s56 = sphi 0, %s55
    %s70 = sphi 0, %s56
    %s74 = sphi 0, %s74
    %s76 = sphi 0, %s74
    %s77 = sphi 0, %s76
    %s91 = sphi 0, %s77
    %s95 = sphi 0, %s95
    %s97 = sphi 0, %s95
    %s98 = sphi 0, %s97
    %s112 = sphi 0, %s98
    %s116 = sphi 0, %s116
    %s118 = sphi 0, %s116
    %s119 = sphi 0, %s118
    %s133 = sphi 0, %s119
    %s137 = sphi 0, %s137
    %s139 = sphi 0, %s137
    %s140 = sphi 0, %s139
    %s154 = sphi 0, %s140
    %s158 = sphi 0, %s158
    %s160 = sphi 0, %s158
    %s161 = sphi 0, %s160
    %s175 = sphi 0, %s161
    %s179 = sphi 0, %s179
    %s181 = sphi 0, %s179
    %s182 = sphi 0, %s181
    %s196 = sphi 0, %s182
    %s200 = sphi 0, %s200
    %s202 = sphi 0, %s200
    %s203 = sphi 0, %s202
    %s217 = sphi 0, %s203
    %s221 = sphi 0, %s221
    %s223 = sphi 0, %s221
    %s224 = sphi 0, %s223
    %s238 = sphi 0, %s224
    %s242 = sphi 0, %s242
    %s244 = sphi 0, %s242
    %s245 = sphi 0, %s244
    %s259 = sphi 0, %s245
    %s263 = sphi 0, %s263
    %s265 = sphi 0, %s263
    %s266 = sphi 0, %s265
    %s280 = sphi 0, %s266
    %s284 = sphi 0, %s284
    %s286 = sphi 0, %s284
    %s287 = sphi 0, %s286
    %s301 = sphi 0, %s287
    %s307 = sphi 0, %s309
    %s310 = sphi 0, %s307
    %s311 = sphi 0, %s310
    %s327 = sphi 0, %s311
  $region4: #{vicmae_forward.22} parent=0 // loop_header_branch
    %22 = sbr.rel (%p20) target = $region8
  $region5: #{vicmae_forward.22} parent=0 // loop_body
    %s24 = ssub.s32 %s19, 1
    %s25 = ssub.s32 %s19, 2
    %s26 = sadd.s32 %s19, 1
    %s27 = ssub.s32 %s19, %s26
    %p28 = scmp.eq.s32.totalorder %s27, 0
    %s30 = sadd.s32 %s29, 1
    %s31 = scalar_select %p28, %s29, %s30
    %p34 = pneg %p28
    %p35 = scmp.eq.s32.totalorder %s19, 1
    %p36 = por %p34, %p35
    %p37 = scmp.ne.s32.totalorder %s29, %s32
    %p38 = scmp.eq.s32.totalorder %s19, 0
    %p39 = por %p37, %p38
    %p40 = scmp.ne.s32.totalorder %s29, %s32
    %p41 = scmp.eq.s32.totalorder %s24, 1
    %p42 = por %p40, %p41
    %p43 = scmp.ne.s32.totalorder %s32, %s33
    %p44 = scmp.eq.s32.totalorder %s24, 0
    %p45 = por %p43, %p44
    %p46 = scmp.ne.s32.totalorder %s32, %s33
    %p47 = scmp.eq.s32.totalorder %s25, 1
    %p48 = por %p46, %p47
    %p50 = scmp.ne.s32.totalorder %s33, %s49
    %p51 = scmp.eq.s32.totalorder %s25, 0
    %p52 = por %p50, %p51
    %s54 = sadd.s32 %s53, 1
    %p57 = scmp.eq.s32.totalorder %s19, 1
    %p58 = scmp.ne.s32.totalorder %s53, %s55
    %p59 = scmp.eq.s32.totalorder %s19, 0
    %p60 = por %p58, %p59
    %p61 = scmp.ne.s32.totalorder %s53, %s55
    %p62 = scmp.eq.s32.totalorder %s24, 1
    %p63 = por %p61, %p62
    %p64 = scmp.ne.s32.totalorder %s55, %s56
    %p65 = scmp.eq.s32.totalorder %s24, 0
    %p66 = por %p64, %p65
    %p67 = scmp.ne.s32.totalorder %s55, %s56
    %p68 = scmp.eq.s32.totalorder %s25, 1
    %p69 = por %p67, %p68
    %p71 = scmp.ne.s32.totalorder %s56, %s70
    %p72 = scmp.eq.s32.totalorder %s25, 0
    %p73 = por %p71, %p72
    %s75 = sadd.s32 %s74, 1
    %p78 = scmp.eq.s32.totalorder %s19, 1
    %p79 = scmp.ne.s32.totalorder %s74, %s76
    %p80 = scmp.eq.s32.totalorder %s19, 0
    %p81 = por %p79, %p80
    %p82 = scmp.ne.s32.totalorder %s74, %s76
    %p83 = scmp.eq.s32.totalorder %s24, 1
    %p84 = por %p82, %p83
    %p85 = scmp.ne.s32.totalorder %s76, %s77
    %p86 = scmp.eq.s32.totalorder %s24, 0
    %p87 = por %p85, %p86
    %p88 = scmp.ne.s32.totalorder %s76, %s77
    %p89 = scmp.eq.s32.totalorder %s25, 1
    %p90 = por %p88, %p89
    %p92 = scmp.ne.s32.totalorder %s77, %s91
    %p93 = scmp.eq.s32.totalorder %s25, 0
    %p94 = por %p92, %p93
    %s96 = sadd.s32 %s95, 1
    %p99 = scmp.eq.s32.totalorder %s19, 1
    %p100 = scmp.ne.s32.totalorder %s95, %s97
    %p101 = scmp.eq.s32.totalorder %s19, 0
    %p102 = por %p100, %p101
    %p103 = scmp.ne.s32.totalorder %s95, %s97
    %p104 = scmp.eq.s32.totalorder %s24, 1
    %p105 = por %p103, %p104
    %p106 = scmp.ne.s32.totalorder %s97, %s98
    %p107 = scmp.eq.s32.totalorder %s24, 0
    %p108 = por %p106, %p107
    %p109 = scmp.ne.s32.totalorder %s97, %s98
    %p110 = scmp.eq.s32.totalorder %s25, 1
    %p111 = por %p109, %p110
    %p113 = scmp.ne.s32.totalorder %s98, %s112
    %p114 = scmp.eq.s32.totalorder %s25, 0
    %p115 = por %p113, %p114
    %s117 = sadd.s32 %s116, 1
    %p120 = scmp.eq.s32.totalorder %s19, 1
    %p121 = scmp.ne.s32.totalorder %s116, %s118
    %p122 = scmp.eq.s32.totalorder %s19, 0
    %p123 = por %p121, %p122
    %p124 = scmp.ne.s32.totalorder %s116, %s118
    %p125 = scmp.eq.s32.totalorder %s24, 1
    %p126 = por %p124, %p125
    %p127 = scmp.ne.s32.totalorder %s118, %s119
    %p128 = scmp.eq.s32.totalorder %s24, 0
    %p129 = por %p127, %p128
    %p130 = scmp.ne.s32.totalorder %s118, %s119
    %p131 = scmp.eq.s32.totalorder %s25, 1
    %p132 = por %p130, %p131
    %p134 = scmp.ne.s32.totalorder %s119, %s133
    %p135 = scmp.eq.s32.totalorder %s25, 0
    %p136 = por %p134, %p135
    %s138 = sadd.s32 %s137, 1
    %p141 = scmp.eq.s32.totalorder %s19, 1
    %p142 = scmp.ne.s32.totalorder %s137, %s139
    %p143 = scmp.eq.s32.totalorder %s19, 0
    %p144 = por %p142, %p143
    %p145 = scmp.ne.s32.totalorder %s137, %s139
    %p146 = scmp.eq.s32.totalorder %s24, 1
    %p147 = por %p145, %p146
    %p148 = scmp.ne.s32.totalorder %s139, %s140
    %p149 = scmp.eq.s32.totalorder %s24, 0
    %p150 = por %p148, %p149
    %p151 = scmp.ne.s32.totalorder %s139, %s140
    %p152 = scmp.eq.s32.totalorder %s25, 1
    %p153 = por %p151, %p152
    %p155 = scmp.ne.s32.totalorder %s140, %s154
    %p156 = scmp.eq.s32.totalorder %s25, 0
    %p157 = por %p155, %p156
    %s159 = sadd.s32 %s158, 1
    %p162 = scmp.eq.s32.totalorder %s19, 1
    %p163 = scmp.ne.s32.totalorder %s158, %s160
    %p164 = scmp.eq.s32.totalorder %s19, 0
    %p165 = por %p163, %p164
    %p166 = scmp.ne.s32.totalorder %s158, %s160
    %p167 = scmp.eq.s32.totalorder %s24, 1
    %p168 = por %p166, %p167
    %p169 = scmp.ne.s32.totalorder %s160, %s161
    %p170 = scmp.eq.s32.totalorder %s24, 0
    %p171 = por %p169, %p170
    %p172 = scmp.ne.s32.totalorder %s160, %s161
    %p173 = scmp.eq.s32.totalorder %s25, 1
    %p174 = por %p172, %p173
    %p176 = scmp.ne.s32.totalorder %s161, %s175
    %p177 = scmp.eq.s32.totalorder %s25, 0
    %p178 = por %p176, %p177
    %s180 = sadd.s32 %s179, 1
    %p183 = scmp.eq.s32.totalorder %s19, 1
    %p184 = scmp.ne.s32.totalorder %s179, %s181
    %p185 = scmp.eq.s32.totalorder %s19, 0
    %p186 = por %p184, %p185
    %p187 = scmp.ne.s32.totalorder %s179, %s181
    %p188 = scmp.eq.s32.totalorder %s24, 1
    %p189 = por %p187, %p188
    %p190 = scmp.ne.s32.totalorder %s181, %s182
    %p191 = scmp.eq.s32.totalorder %s24, 0
    %p192 = por %p190, %p191
    %p193 = scmp.ne.s32.totalorder %s181, %s182
    %p194 = scmp.eq.s32.totalorder %s25, 1
    %p195 = por %p193, %p194
    %p197 = scmp.ne.s32.totalorder %s182, %s196
    %p198 = scmp.eq.s32.totalorder %s25, 0
    %p199 = por %p197, %p198
    %s201 = sadd.s32 %s200, 1
    %p204 = scmp.eq.s32.totalorder %s19, 1
    %p205 = scmp.ne.s32.totalorder %s200, %s202
    %p206 = scmp.eq.s32.totalorder %s19, 0
    %p207 = por %p205, %p206
    %p208 = scmp.ne.s32.totalorder %s200, %s202
    %p209 = scmp.eq.s32.totalorder %s24, 1
    %p210 = por %p208, %p209
    %p211 = scmp.ne.s32.totalorder %s202, %s203
    %p212 = scmp.eq.s32.totalorder %s24, 0
    %p213 = por %p211, %p212
    %p214 = scmp.ne.s32.totalorder %s202, %s203
    %p215 = scmp.eq.s32.totalorder %s25, 1
    %p216 = por %p214, %p215
    %p218 = scmp.ne.s32.totalorder %s203, %s217
    %p219 = scmp.eq.s32.totalorder %s25, 0
    %p220 = por %p218, %p219
    %s222 = sadd.s32 %s221, 1
    %p225 = scmp.eq.s32.totalorder %s19, 1
    %p226 = scmp.ne.s32.totalorder %s221, %s223
    %p227 = scmp.eq.s32.totalorder %s19, 0
    %p228 = por %p226, %p227
    %p229 = scmp.ne.s32.totalorder %s221, %s223
    %p230 = scmp.eq.s32.totalorder %s24, 1
    %p231 = por %p229, %p230
    %p232 = scmp.ne.s32.totalorder %s223, %s224
    %p233 = scmp.eq.s32.totalorder %s24, 0
    %p234 = por %p232, %p233
    %p235 = scmp.ne.s32.totalorder %s223, %s224
    %p236 = scmp.eq.s32.totalorder %s25, 1
    %p237 = por %p235, %p236
    %p239 = scmp.ne.s32.totalorder %s224, %s238
    %p240 = scmp.eq.s32.totalorder %s25, 0
    %p241 = por %p239, %p240
    %s243 = sadd.s32 %s242, 1
    %p246 = scmp.eq.s32.totalorder %s19, 1
    %p247 = scmp.ne.s32.totalorder %s242, %s244
    %p248 = scmp.eq.s32.totalorder %s19, 0
    %p249 = por %p247, %p248
    %p250 = scmp.ne.s32.totalorder %s242, %s244
    %p251 = scmp.eq.s32.totalorder %s24, 1
    %p252 = por %p250, %p251
    %p253 = scmp.ne.s32.totalorder %s244, %s245
    %p254 = scmp.eq.s32.totalorder %s24, 0
    %p255 = por %p253, %p254
    %p256 = scmp.ne.s32.totalorder %s244, %s245
    %p257 = scmp.eq.s32.totalorder %s25, 1
    %p258 = por %p256, %p257
    %p260 = scmp.ne.s32.totalorder %s245, %s259
    %p261 = scmp.eq.s32.totalorder %s25, 0
    %p262 = por %p260, %p261
    %s264 = sadd.s32 %s263, 1
    %p267 = scmp.eq.s32.totalorder %s19, 1
    %p268 = scmp.ne.s32.totalorder %s263, %s265
    %p269 = scmp.eq.s32.totalorder %s19, 0
    %p270 = por %p268, %p269
    %p271 = scmp.ne.s32.totalorder %s263, %s265
    %p272 = scmp.eq.s32.totalorder %s24, 1
    %p273 = por %p271, %p272
    %p274 = scmp.ne.s32.totalorder %s265, %s266
    %p275 = scmp.eq.s32.totalorder %s24, 0
    %p276 = por %p274, %p275
    %p277 = scmp.ne.s32.totalorder %s265, %s266
    %p278 = scmp.eq.s32.totalorder %s25, 1
    %p279 = por %p277, %p278
    %p281 = scmp.ne.s32.totalorder %s266, %s280
    %p282 = scmp.eq.s32.totalorder %s25, 0
    %p283 = por %p281, %p282
    %s285 = sadd.s32 %s284, 1
    %p288 = scmp.eq.s32.totalorder %s19, 1
    %p289 = scmp.ne.s32.totalorder %s284, %s286
    %p290 = scmp.eq.s32.totalorder %s19, 0
    %p291 = por %p289, %p290
    %p292 = scmp.ne.s32.totalorder %s284, %s286
    %p293 = scmp.eq.s32.totalorder %s24, 1
    %p294 = por %p292, %p293
    %p295 = scmp.ne.s32.totalorder %s286, %s287
    %p296 = scmp.eq.s32.totalorder %s24, 0
    %p297 = por %p295, %p296
    %p298 = scmp.ne.s32.totalorder %s286, %s287
    %p299 = scmp.eq.s32.totalorder %s25, 1
    %p300 = por %p298, %p299
    %p302 = scmp.ne.s32.totalorder %s287, %s301
    %p303 = scmp.eq.s32.totalorder %s25, 0
    %p304 = por %p302, %p303
    %s305 = ssub.s32 %s19, %s26
    %p306 = scmp.eq.s32.totalorder %s305, 0
    %s308 = sadd.s32 %s307, 1
    %s309 = scalar_select %p306, %s307, %s308
    %p312 = pneg %p306
    %p313 = scmp.eq.s32.totalorder %s19, 1
    %p314 = por %p312, %p313
    %p315 = scmp.ne.s32.totalorder %s307, %s310
    %p316 = scmp.eq.s32.totalorder %s19, 0
    %p317 = por %p315, %p316
    %p318 = scmp.ne.s32.totalorder %s307, %s310
    %p319 = scmp.eq.s32.totalorder %s24, 1
    %p320 = por %p318, %p319
    %p321 = scmp.ne.s32.totalorder %s310, %s311
    %p322 = scmp.eq.s32.totalorder %s24, 0
    %p323 = por %p321, %p322
    %p324 = scmp.ne.s32.totalorder %s310, %s311
    %p325 = scmp.eq.s32.totalorder %s25, 1
    %p326 = por %p324, %p325
    %p328 = scmp.ne.s32.totalorder %s311, %s327
    %p329 = scmp.eq.s32.totalorder %s25, 0
    %p330 = por %p328, %p329
    %p331 = scmp.le.s32.totalorder 1, %s19
    %p332 = scmp.lt.s32.totalorder %s19, 3
    %p333 = pnand %p331, %p332
    %p334 = pneg %p333
    // Predicated region
    $region9: #{vicmae_forward.22} parent=5 // pred_check
      _
    $region10: #{vicmae_forward.22} parent=5 // pred_check_branch
      %336 = sbr.rel (%p333) target = $region12
    $region11: #{vicmae_forward.22} parent=5 // pred_region
      %s337 = ssub.s32 %s19, 1
      // Predicated region
      $region13: #{vicmae_forward.22} parent=11 // pred_check
        %p338 = pneg %p66
      $region14: #{vicmae_forward.22} parent=11 // pred_check_branch
        %340 = sbr.rel (%p338) target = $region16
      $region15: #{vicmae_forward.22} parent=11 // pred_region
        _
      $region16: #{vicmae_forward.22} parent=11 // pred_fallthru
        _
      // Predicated region
      $region17: #{vicmae_forward.22} parent=11 // pred_check
        %p341 = pneg %p87
      $region18: #{vicmae_forward.22} parent=11 // pred_check_branch
        %343 = sbr.rel (%p341) target = $region20
      $region19: #{vicmae_forward.22} parent=11 // pred_region
        _
      $region20: #{vicmae_forward.22} parent=11 // pred_fallthru
        _
      // Predicated region
      $region21: #{vicmae_forward.22} parent=11 // pred_check
        %p344 = pneg %p108
      $region22: #{vicmae_forward.22} parent=11 // pred_check_branch
        %346 = sbr.rel (%p344) target = $region24
      $region23: #{vicmae_forward.22} parent=11 // pred_region
        _
      $region24: #{vicmae_forward.22} parent=11 // pred_fallthru
        _
      // Predicated region
      $region25: #{vicmae_forward.22} parent=11 // pred_check
        %p347 = pneg %p129
      $region26: #{vicmae_forward.22} parent=11 // pred_check_branch
        %349 = sbr.rel (%p347) target = $region28
      $region27: #{vicmae_forward.22} parent=11 // pred_region
        _
      $region28: #{vicmae_forward.22} parent=11 // pred_fallthru
        _
      // Predicated region
      $region29: #{vicmae_forward.22} parent=11 // pred_check
        %p350 = pneg %p150
      $region30: #{vicmae_forward.22} parent=11 // pred_check_branch
        %352 = sbr.rel (%p350) target = $region32
      $region31: #{vicmae_forward.22} parent=11 // pred_region
        _
      $region32: #{vicmae_forward.22} parent=11 // pred_fallthru
        _
      // Predicated region
      $region33: #{vicmae_forward.22} parent=11 // pred_check
        %p353 = pneg %p171
      $region34: #{vicmae_forward.22} parent=11 // pred_check_branch
        %355 = sbr.rel (%p353) target = $region36
      $region35: #{vicmae_forward.22} parent=11 // pred_region
        _
      $region36: #{vicmae_forward.22} parent=11 // pred_fallthru
        _
      // Predicated region
      $region37: #{vicmae_forward.22} parent=11 // pred_check
        %p356 = pneg %p192
      $region38: #{vicmae_forward.22} parent=11 // pred_check_branch
        %358 = sbr.rel (%p356) target = $region40
      $region39: #{vicmae_forward.22} parent=11 // pred_region
        _
      $region40: #{vicmae_forward.22} parent=11 // pred_fallthru
        _
      // Predicated region
      $region41: #{vicmae_forward.22} parent=11 // pred_check
        %p359 = pneg %p213
      $region42: #{vicmae_forward.22} parent=11 // pred_check_branch
        %361 = sbr.rel (%p359) target = $region44
      $region43: #{vicmae_forward.22} parent=11 // pred_region
        _
      $region44: #{vicmae_forward.22} parent=11 // pred_fallthru
        _
      // Predicated region
      $region45: #{vicmae_forward.22} parent=11 // pred_check
        %p362 = pneg %p234
      $region46: #{vicmae_forward.22} parent=11 // pred_check_branch
        %364 = sbr.rel (%p362) target = $region48
      $region47: #{vicmae_forward.22} parent=11 // pred_region
        _
      $region48: #{vicmae_forward.22} parent=11 // pred_fallthru
        _
      // Predicated region
      $region49: #{vicmae_forward.22} parent=11 // pred_check
        %p365 = pneg %p255
      $region50: #{vicmae_forward.22} parent=11 // pred_check_branch
        %367 = sbr.rel (%p365) target = $region52
      $region51: #{vicmae_forward.22} parent=11 // pred_region
        _
      $region52: #{vicmae_forward.22} parent=11 // pred_fallthru
        _
      // Predicated region
      $region53: #{vicmae_forward.22} parent=11 // pred_check
        %p368 = pneg %p276
      $region54: #{vicmae_forward.22} parent=11 // pred_check_branch
        %370 = sbr.rel (%p368) target = $region56
      $region55: #{vicmae_forward.22} parent=11 // pred_region
        _
      $region56: #{vicmae_forward.22} parent=11 // pred_fallthru
        _
      // Predicated region
      $region57: #{vicmae_forward.22} parent=11 // pred_check
        %p371 = pneg %p297
      $region58: #{vicmae_forward.22} parent=11 // pred_check_branch
        %373 = sbr.rel (%p371) target = $region60
      $region59: #{vicmae_forward.22} parent=11 // pred_region
        _
      $region60: #{vicmae_forward.22} parent=11 // pred_fallthru
        _
    $region12: #{vicmae_forward.22} parent=5 // pred_fallthru
      _
    %p374 = scmp.lt.s32.totalorder %s19, 2
    // Predicated region
    $region61: #{vicmae_forward.22} parent=5 // pred_check
      %p375 = pneg %p374
    $region62: #{vicmae_forward.22} parent=5 // pred_check_branch
      %377 = sbr.rel (%p375) target = $region64
    $region63: #{vicmae_forward.22} parent=5 // pred_region
      // Predicated region
      $region65: #{vicmae_forward.22} parent=63 // pred_check
        %p378 = pneg %p39
      $region66: #{vicmae_forward.22} parent=63 // pred_check_branch
        %380 = sbr.rel (%p378) target = $region68
      $region67: #{vicmae_forward.22} parent=63 // pred_region
        %p381 = scmp.lt.s32.totalorder %s19, 1
        %s382 = scalar_select %p381, %s19, 1
        %s383 = smul.addr %s382, 2
        %s384 = smul.addr %s383, 8
        %s385 = scalar_lea.vmem %s0, %s384
      $region68: #{vicmae_forward.22} parent=63 // pred_fallthru
        _
    $region64: #{vicmae_forward.22} parent=5 // pred_fallthru
      _
    %p386 = scmp.le.s32.totalorder 1, %s19
    %p387 = scmp.lt.s32.totalorder %s19, 3
    %p388 = pnand %p386, %p387
    %p389 = pneg %p388
    // Predicated region
    $region69: #{vicmae_forward.22} parent=5 // pred_check
      _
    $region70: #{vicmae_forward.22} parent=5 // pred_check_branch
      %391 = sbr.rel (%p388) target = $region72
    $region71: #{vicmae_forward.22} parent=5 // pred_region
      %s392 = ssub.s32 %s19, 1
      %p393 = scmp.lt.s32.totalorder %s24, 1
      %s394 = scalar_select %p393, %s24, 1
      %s395 = smul.addr %s394, 2
      %s396 = smul.addr %s395, 8
      %s397 = scalar_lea.vmem %s0, %s396
      %p398 = pneg %p45
      %p399 = pneg %p42
      %p400 = pneg %p66
      %p401 = pneg %p63
      %p402 = pneg %p87
      %p403 = pneg %p84
      %p404 = pneg %p108
      %p405 = pneg %p105
      %p406 = pneg %p129
      %p407 = pneg %p126
      %p408 = pneg %p150
      %p409 = pneg %p147
      %p410 = pneg %p171
      %p411 = pneg %p168
      %p412 = pneg %p192
      %p413 = pneg %p189
      %p414 = pneg %p213
      %p415 = pneg %p210
      %p416 = pneg %p234
      %p417 = pneg %p231
      %p418 = pneg %p255
      %p419 = pneg %p252
      %p420 = pneg %p276
      %p421 = pneg %p273
      %p422 = pneg %p297
      %p423 = pneg %p294
      %p424 = pneg %p323
      %p425 = pneg %p320
      %p426 = scmp.lt.s32.totalorder %s24, 1
      %s427 = scalar_select %p426, %s24, 1
      %s428 = smul.addr %s427, 2
      %s429 = smul.addr %s428, 8
      %s430 = scalar_lea.vmem %s13, %s429
      %p431 = scmp.lt.s32.totalorder %s24, 1
      %s432 = scalar_select %p431, %s24, 1
      %s433 = smul.addr %s432, 2
      %s434 = smul.addr %s433, 8
      %s435 = scalar_lea.vmem %s0, %s434
      %p436 = scmp.lt.s32.totalorder %s24, 1
      %s437 = scalar_select %p436, %s24, 1
      %s438 = smul.addr %s437, 2
      %s439 = smul.addr %s438, 8
      %s440 = scalar_lea.vmem %s13, %s439
      %v441 = vld [vmem:[%s435] sm:$0xff]
      %v442 = vld [vmem:[%s435 + $0x8] sm:$0x1]
      %v443 = vld [vmem:[%s1] sm:$0x1]
      %v444 = vld [vmem:[%s2] sm:$0x1]
      %vm445 = vcmask 261120
      %v446 = vsel %vm445, %v441, 0.0
      %447 = vadd.xlane.f32.xlu0 %v446
      %v448 = vpop.xlane.xlu0 %447
      %vm449 = vcmask 253952
      %v450 = vsel %vm449, %v442, 0.0
      %451 = vadd.xlane.f32.xlu0 %v450
      %v452 = vpop.xlane.xlu0 %451
      %v453 = vrcp.pop 32.0
      %v454 = vmul.f32 %v448, %v453
      %v455 = vmul.f32 %v452, %v453
      %v456 = vsub.f32 %v441, %v454
      %v457 = vsub.f32 %v442, %v455
      %v458 = vmul.f32 %v456, %v456
      %v459 = vmul.f32 %v457, %v457
      %v460 = vsel %vm445, %v458, 0.0
      %461 = vadd.xlane.f32.xlu0 %v460
      %v462 = vpop.xlane.xlu0 %461
      %v463 = vsel %vm449, %v459, 0.0
      %464 = vadd.xlane.f32.xlu0 %v463
      %v465 = vpop.xlane.xlu0 %464
      %v466 = vmul.f32 %v462, %v453
      %v467 = vmul.f32 %v465, %v453
      %v468 = vadd.f32 %v466, 1e-05
      %v469 = vadd.f32 %v467, 1e-05
      %v470 = vrsqrt.pop %v468
      %v471 = vrsqrt.pop %v469
      %v472 = vmul.f32 %v456, %v470
      %v473 = vmul.f32 %v457, %v471
      %v475 = vlaneseq
      %v476 = vshrl.u32 %v475, 7
      %v477 = vsub.s32 0, %v476
      %v478 = vrot.slane %v443, %v477
      %v480 = vmul.f32 %v472, %v478
      %v481 = vmul.f32 %v473, %v478
      %v483 = vlaneseq
      %v484 = vshrl.u32 %v483, 7
      %v485 = vsub.s32 0, %v484
      %v486 = vrot.slane %v444, %v485
      %v488 = vadd.f32 %v480, %v486
      %v489 = vadd.f32 %v481, %v486
      %v490 = vld [vmem:[%s3] sm:$0xff]
      %v491 = vld [vmem:[%s3 + $0x8] sm:$0xff]
      %v492 = vld [vmem:[%s3 + $0x10] sm:$0xff]
      %v493 = vld [vmem:[%s3 + $0x18] sm:$0xff]
      %v494 = vld [vmem:[%s4] sm:$0x1]
      %v496 = vlaneseq
      %v497 = vshrl.u32 %v496, 7
      %v498 = vsub.s32 0, %v497
      %v499 = vrot.slane %v494, %v498
      %v502 = vsel %vm445, %v488, 0
      %v505 = vsel %vm445, %v489, 0
      %507 = vmatprep.subr.mxu0 0.0
      %508 = vmatpush1.msra.mxu0 %v490
      %509 = vmatprep.subr.mxu0 0.0
      %510 = vmatpush1.msra.mxu0 %v491
      %511 = vmatprep.subr.mxu0 0.0
      %512 = vmatpush1.msra.mxu0 %v492
      %513 = vmatprep.subr.mxu0 0.0
      %514 = vmatpush1.msra.mxu0 %v493
      %515 = vmatprep.subr.mxu0 0.0
      %516 = vmatpush1.msra.mxu0 0.0
      %517 = vmatprep.subr.mxu0 0.0
      %518 = vmatpush1.msra.mxu0 0.0
      %519 = vmatprep.subr.mxu0 0.0
      %520 = vmatpush1.msra.mxu0 0.0
      %521 = vmatprep.subr.mxu0 0.0
      %522 = vmatpush1.msra.mxu0 0.0
      %523 = vmatprep.subr.mxu0 0.0
      %524 = vmatpush1.msra.mxu0 0.0
      %525 = vmatprep.subr.mxu0 0.0
      %526 = vmatpush1.msra.mxu0 0.0
      %527 = vmatprep.subr.mxu0 0.0
      %528 = vmatpush1.msra.mxu0 0.0
      %529 = vmatprep.subr.mxu0 0.0
      %530 = vmatpush1.msra.mxu0 0.0
      %531 = vmatprep.subr.mxu0 0.0
      %532 = vmatpush1.msra.mxu0 0.0
      %533 = vmatprep.subr.mxu0 0.0
      %534 = vmatpush1.msra.mxu0 0.0
      %535 = vmatprep.subr.mxu0 0.0
      %536 = vmatpush1.msra.mxu0 0.0
      %537 = vmatprep.subr.mxu0 0.0
      %538 = vmatpush1.msra.mxu0 0.0
      %539 = vmatprep.subr.mxu0 0.0
      %540 = vmatpush1.msra.mxu0 0.0
      %541 = vmatprep.subr.mxu0 0.0
      %542 = vmatpush1.msra.mxu0 0.0
      %543 = vmatprep.subr.mxu0 0.0
      %544 = vmatpush1.msra.mxu0 0.0
      %545 = vmatprep.subr.mxu0 0.0
      %546 = vmatpush1.msra.mxu0 0.0
      %547 = vmatprep.subr.mxu0 0.0
      %548 = vmatpush1.msra.mxu0 0.0
      %549 = vmatprep.subr.mxu0 0.0
      %550 = vmatpush1.msra.mxu0 0.0
      %551 = vmatprep.subr.mxu0 0.0
      %552 = vmatpush1.msra.mxu0 0.0
      %553 = vmatprep.subr.mxu0 0.0
      %554 = vmatpush1.msra.mxu0 0.0
      %555 = vmatprep.subr.mxu0 0.0
      %556 = vmatpush1.msra.mxu0 0.0
      %557 = vmatprep.subr.mxu0 0.0
      %558 = vmatpush1.msra.mxu0 0.0
      %559 = vmatprep.subr.mxu0 0.0
      %560 = vmatpush1.msra.mxu0 0.0
      %561 = vmatprep.subr.mxu0 0.0
      %562 = vmatpush1.msra.mxu0 0.0
      %563 = vmatprep.subr.mxu0 0.0
      %564 = vmatpush1.msra.mxu0 0.0
      %565 = vmatprep.subr.mxu0 0.0
      %566 = vmatpush1.msra.mxu0 0.0
      %567 = vmatprep.subr.mxu0 0.0
      %568 = vmatpush1.msra.mxu0 0.0
      %569 = vmatprep.subr.mxu0 0.0
      %570 = vmatpush1.msra.mxu0 0.0
      %571 = vmatprep.mubr.f32.mxu0 0.0
      %572 = vmatmul.mubr.f32.gmra.mrb[0].mxu0 %v502
      %v573 = vpop.f32.mrb[0].mxu0
      %v574 = vadd.f32 %v499, %v573
      %v575 = vpop.f32.mrb[0].mxu0
      %576 = vmatprep.mubr.f32.mxu0 0.0
      %577 = vmatmul.mubr.f32.gmra.mrb[0].mxu0 %v505
      %v578 = vpop.f32.mrb[0].mxu0
      %v579 = vadd.f32 %v499, %v578
      %v580 = vpop.f32.mrb[0].mxu0
      %581 = vdwg.mxu0
      %584 = vrot.lane.b32.xlu0 %v574, 96
      %v585 = vpop.permute.xlu0 %584
      %586 = vrot.lane.b32.xlu0 %v579, 96
      %v587 = vpop.permute.xlu0 %586
      %vm588 = vcmask 64512
      %v589 = vsel %vm588, %v574, 0
      %v591 = vsel %vm588, %v579, 0
      %v593 = vsel %vm588, %v585, 0
      %v595 = vsel %vm588, %v587, 0
      %597 = vmatprep.subr.mxu0 0.0
      %598 = vmatpush1.xpose.msra.mxu0 %v593
      %599 = vmatprep.subr.mxu0 0.0
      %600 = vmatpush1.xpose.msra.mxu0 %v595
      %601 = vmatprep.subr.mxu0 0.0
      %602 = vmatpush1.xpose.msra.mxu0 0.0
      %603 = vmatprep.subr.mxu0 0.0
      %604 = vmatpush1.xpose.msra.mxu0 0.0
      %605 = vmatprep.subr.mxu0 0.0
      %606 = vmatpush1.xpose.msra.mxu0 0.0
      %607 = vmatprep.subr.mxu0 0.0
      %608 = vmatpush1.xpose.msra.mxu0 0.0
      %609 = vmatprep.subr.mxu0 0.0
      %610 = vmatpush1.xpose.msra.mxu0 0.0
      %611 = vmatprep.subr.mxu0 0.0
      %612 = vmatpush1.xpose.msra.mxu0 0.0
      %613 = vmatprep.subr.mxu0 0.0
      %614 = vmatpush1.xpose.msra.mxu0 0.0
      %615 = vmatprep.subr.mxu0 0.0
      %616 = vmatpush1.xpose.msra.mxu0 0.0
      %617 = vmatprep.subr.mxu0 0.0
      %618 = vmatpush1.xpose.msra.mxu0 0.0
      %619 = vmatprep.subr.mxu0 0.0
      %620 = vmatpush1.xpose.msra.mxu0 0.0
      %621 = vmatprep.subr.mxu0 0.0
      %622 = vmatpush1.xpose.msra.mxu0 0.0
      %623 = vmatprep.subr.mxu0 0.0
      %624 = vmatpush1.xpose.msra.mxu0 0.0
      %625 = vmatprep.subr.mxu0 0.0
      %626 = vmatpush1.xpose.msra.mxu0 0.0
      %627 = vmatprep.subr.mxu0 0.0
      %628 = vmatpush1.xpose.msra.mxu0 0.0
      %629 = vmatprep.subr.mxu0 0.0
      %630 = vmatpush1.xpose.msra.mxu0 0.0
      %631 = vmatprep.subr.mxu0 0.0
      %632 = vmatpush1.xpose.msra.mxu0 0.0
      %633 = vmatprep.subr.mxu0 0.0
      %634 = vmatpush1.xpose.msra.mxu0 0.0
      %635 = vmatprep.subr.mxu0 0.0
      %636 = vmatpush1.xpose.msra.mxu0 0.0
      %637 = vmatprep.subr.mxu0 0.0
      %638 = vmatpush1.xpose.msra.mxu0 0.0
      %639 = vmatprep.subr.mxu0 0.0
      %640 = vmatpush1.xpose.msra.mxu0 0.0
      %641 = vmatprep.subr.mxu0 0.0
      %642 = vmatpush1.xpose.msra.mxu0 0.0
      %643 = vmatprep.subr.mxu0 0.0
      %644 = vmatpush1.xpose.msra.mxu0 0.0
      %645 = vmatprep.subr.mxu0 0.0
      %646 = vmatpush1.xpose.msra.mxu0 0.0
      %647 = vmatprep.subr.mxu0 0.0
      %648 = vmatpush1.xpose.msra.mxu0 0.0
      %649 = vmatprep.subr.mxu0 0.0
      %650 = vmatpush1.xpose.msra.mxu0 0.0
      %651 = vmatprep.subr.mxu0 0.0
      %652 = vmatpush1.xpose.msra.mxu0 0.0
      %653 = vmatprep.subr.mxu0 0.0
      %654 = vmatpush1.xpose.msra.mxu0 0.0
      %655 = vmatprep.subr.mxu0 0.0
      %656 = vmatpush1.xpose.msra.mxu0 0.0
      %657 = vmatprep.subr.mxu0 0.0
      %658 = vmatpush1.xpose.msra.mxu0 0.0
      %659 = vmatprep.subr.mxu0 0.0
      %660 = vmatpush1.xpose.msra.mxu0 0.0
      %661 = vmatprep.mubr.f32.mxu0 0.0
      %662 = vmatmul.mubr.f32.gmra.mrb[0].mxu0 %v589
      %v663 = vpop.f32.mrb[0].mxu0
      %v664 = vadd.f32 0.0, %v663
      %v665 = vpop.f32.mrb[0].mxu0
      %666 = vmatprep.mubr.f32.mxu0 0.0
      %667 = vmatmul.mubr.f32.gmra.mrb[0].mxu0 %v591
      %v668 = vpop.f32.mrb[0].mxu0
      %v669 = vadd.f32 0.0, %v668
      %v670 = vpop.f32.mrb[0].mxu0
      %671 = vdwg.mxu0
      %v672 = vmul.f32 %v664, 0.35355338
      %v673 = vmul.f32 %v669, 0.35355338
      %vm674 = vcmask 72704
      %v675 = vsel %vm674, %v672, -inf
      %676 = vmax.xlane.f32.xlu0 %v675
      %v677 = vpop.xlane.xlu0 %676
      %vm678 = vcmask 65536
      %v679 = vsel %vm678, %v673, -inf
      %680 = vmax.xlane.f32.xlu0 %v679
      %v681 = vpop.xlane.xlu0 %680
      %v682 = vsub.f32 %v672, %v677
      %v683 = vsub.f32 %v673, %v681
      %v684 = vmul.f32 %v682, 1.442695
      %v685 = vpow.pop %v684
      %v686 = vmul.f32 %v683, 1.442695
      %v687 = vpow.pop %v686
      %v688 = vsel %vm674, %v685, 0.0
      %689 = vadd.xlane.f32.xlu0 %v688
      %v690 = vpop.xlane.xlu0 %689
      %v691 = vsel %vm678, %v687, 0.0
      %692 = vadd.xlane.f32.xlu0 %v691
      %v693 = vpop.xlane.xlu0 %692
      %v694 = vrcp.pop %v690
      %v695 = vrcp.pop %v693
      %v696 = vmul.f32 %v685, %v694
      %v697 = vmul.f32 %v687, %v695
      %698 = vrot.lane.b32.xlu0 %v574, 64
      %v699 = vpop.permute.xlu0 %698
      %700 = vrot.lane.b32.xlu0 %v579, 64
      %v701 = vpop.permute.xlu0 %700
      %v704 = vsel %vm674, %v696, 0
      %v707 = vsel %vm674, %v697, 0
      %vm709 = vcmask 1040384
      %v710 = vsel %vm709, %v701, 0
      %712 = vmatprep.subr.mxu0 0.0
      %713 = vmatpush1.msra.mxu0 %v699
      %714 = vmatprep.subr.mxu0 0.0
      %715 = vmatpush1.msra.mxu0 %v710
      %716 = vmatprep.subr.mxu0 0.0
      %717 = vmatpush1.msra.mxu0 0.0
      %718 = vmatprep.subr.mxu0 0.0
      %719 = vmatpush1.msra.mxu0 0.0
      %720 = vmatprep.subr.mxu0 0.0
      %721 = vmatpush1.msra.mxu0 0.0
      %722 = vmatprep.subr.mxu0 0.0
      %723 = vmatpush1.msra.mxu0 0.0
      %724 = vmatprep.subr.mxu0 0.0
      %725 = vmatpush1.msra.mxu0 0.0
      %726 = vmatprep.subr.mxu0 0.0
      %727 = vmatpush1.msra.mxu0 0.0
      %728 = vmatprep.subr.mxu0 0.0
      %729 = vmatpush1.msra.mxu0 0.0
      %730 = vmatprep.subr.mxu0 0.0
      %731 = vmatpush1.msra.mxu0 0.0
      %732 = vmatprep.subr.mxu0 0.0
      %733 = vmatpush1.msra.mxu0 0.0
      %734 = vmatprep.subr.mxu0 0.0
      %735 = vmatpush1.msra.mxu0 0.0
      %736 = vmatprep.subr.mxu0 0.0
      %737 = vmatpush1.msra.mxu0 0.0
      %738 = vmatprep.subr.mxu0 0.0
      %739 = vmatpush1.msra.mxu0 0.0
      %740 = vmatprep.subr.mxu0 0.0
      %741 = vmatpush1.msra.mxu0 0.0
      %742 = vmatprep.subr.mxu0 0.0
      %743 = vmatpush1.msra.mxu0 0.0
      %744 = vmatprep.subr.mxu0 0.0
      %745 = vmatpush1.msra.mxu0 0.0
      %746 = vmatprep.subr.mxu0 0.0
      %747 = vmatpush1.msra.mxu0 0.0
      %748 = vmatprep.subr.mxu0 0.0
      %749 = vmatpush1.msra.mxu0 0.0
      %750 = vmatprep.subr.mxu0 0.0
      %751 = vmatpush1.msra.mxu0 0.0
      %752 = vmatprep.subr.mxu0 0.0
      %753 = vmatpush1.msra.mxu0 0.0
      %754 = vmatprep.subr.mxu0 0.0
      %755 = vmatpush1.msra.mxu0 0.0
      %756 = vmatprep.subr.mxu0 0.0
      %757 = vmatpush1.msra.mxu0 0.0
      %758 = vmatprep.subr.mxu0 0.0
      %759 = vmatpush1.msra.mxu0 0.0
      %760 = vmatprep.subr.mxu0 0.0
      %761 = vmatpush1.msra.mxu0 0.0
      %762 = vmatprep.subr.mxu0 0.0
      %763 = vmatpush1.msra.mxu0 0.0
      %764 = vmatprep.subr.mxu0 0.0
      %765 = vmatpush1.msra.mxu0 0.0
      %766 = vmatprep.subr.mxu0 0.0
      %767 = vmatpush1.msra.mxu0 0.0
      %768 = vmatprep.subr.mxu0 0.0
      %769 = vmatpush1.msra.mxu0 0.0
      %770 = vmatprep.subr.mxu0 0.0
      %771 = vmatpush1.msra.mxu0 0.0
      %772 = vmatprep.subr.mxu0 0.0
      %773 = vmatpush1.msra.mxu0 0.0
      %774 = vmatprep.subr.mxu0 0.0
      %775 = vmatpush1.msra.mxu0 0.0
      %776 = vmatprep.mubr.f32.mxu0 0.0
      %777 = vmatmul.mubr.f32.gmra.mrb[0].mxu0 %v704
      %v778 = vpop.f32.mrb[0].mxu0
      %v779 = vadd.f32 0.0, %v778
      %v780 = vpop.f32.mrb[0].mxu0
      %781 = vmatprep.mubr.f32.mxu0 0.0
      %782 = vmatmul.mubr.f32.gmra.mrb[0].mxu0 %v707
      %v783 = vpop.f32.mrb[0].mxu0
      %v784 = vadd.f32 0.0, %v783
      %v785 = vpop.f32.mrb[0].mxu0
      %786 = vdwg.mxu0
      %787 = vst.msk [vmem:[#allocation2] sm:$0xff] %vm588, %v779
      %vm788 = vcmask 57344
      %789 = vst.msk [vmem:[#allocation2 + $0x8] sm:$0x1] %vm788, %v784
      %790 = vrot.lane.b32.xlu0 %v574, 120
      %v791 = vpop.permute.xlu0 %790
      %792 = vrot.lane.b32.xlu0 %v579, 120
      %v793 = vpop.permute.xlu0 %792
      %794 = vrot.lane.b32.xlu0 %v574, 88
      %v795 = vpop.permute.xlu0 %794
      %796 = vrot.lane.b32.xlu0 %v579, 88
      %v797 = vpop.permute.xlu0 %796
      %v798 = vsel %vm588, %v791, 0
      %v800 = vsel %vm588, %v793, 0
      %v802 = vsel %vm588, %v795, 0
      %v804 = vsel %vm588, %v797, 0
      %806 = vmatprep.subr.mxu0 0.0
      %807 = vmatpush1.xpose.msra.mxu0 %v802
      %808 = vmatprep.subr.mxu0 0.0
      %809 = vmatpush1.xpose.msra.mxu0 %v804
      %810 = vmatprep.subr.mxu0 0.0
      %811 = vmatpush1.xpose.msra.mxu0 0.0
      %812 = vmatprep.subr.mxu0 0.0
      %813 = vmatpush1.xpose.msra.mxu0 0.0
      %814 = vmatprep.subr.mxu0 0.0
      %815 = vmatpush1.xpose.msra.mxu0 0.0
      %816 = vmatprep.subr.mxu0 0.0
      %817 = vmatpush1.xpose.msra.mxu0 0.0
      %818 = vmatprep.subr.mxu0 0.0
      %819 = vmatpush1.xpose.msra.mxu0 0.0
      %820 = vmatprep.subr.mxu0 0.0
      %821 = vmatpush1.xpose.msra.mxu0 0.0
      %822 = vmatprep.subr.mxu0 0.0
      %823 = vmatpush1.xpose.msra.mxu0 0.0
      %824 = vmatprep.subr.mxu0 0.0
      %825 = vmatpush1.xpose.msra.mxu0 0.0
      %826 = vmatprep.subr.mxu0 0.0
      %827 = vmatpush1.xpose.msra.mxu0 0.0
      %828 = vmatprep.subr.mxu0 0.0
      %829 = vmatpush1.xpose.msra.mxu0 0.0
      %830 = vmatprep.subr.mxu0 0.0
      %831 = vmatpush1.xpose.msra.mxu0 0.0
      %832 = vmatprep.subr.mxu0 0.0
      %833 = vmatpush1.xpose.msra.mxu0 0.0
      %834 = vmatprep.subr.mxu0 0.0
      %835 = vmatpush1.xpose.msra.mxu0 0.0
      %836 = vmatprep.subr.mxu0 0.0
      %837 = vmatpush1.xpose.msra.mxu0 0.0
      %838 = vmatprep.subr.mxu0 0.0
      %839 = vmatpush1.xpose.msra.mxu0 0.0
      %840 = vmatprep.subr.mxu0 0.0
      %841 = vmatpush1.xpose.msra.mxu0 0.0
      %842 = vmatprep.subr.mxu0 0.0
      %843 = vmatpush1.xpose.msra.mxu0 0.0
      %844 = vmatprep.subr.mxu0 0.0
      %845 = vmatpush1.xpose.msra.mxu0 0.0
      %846 = vmatprep.subr.mxu0 0.0
      %847 = vmatpush1.xpose.msra.mxu0 0.0
      %848 = vmatprep.subr.mxu0 0.0
      %849 = vmatpush1.xpose.msra.mxu0 0.0
      %850 = vmatprep.subr.mxu0 0.0
      %851 = vmatpush1.xpose.msra.mxu0 0.0
      %852 = vmatprep.subr.mxu0 0.0
      %853 = vmatpush1.xpose.msra.mxu0 0.0
      %854 = vmatprep.subr.mxu0 0.0
      %855 = vmatpush1.xpose.msra.mxu0 0.0
      %856 = vmatprep.subr.mxu0 0.0
      %857 = vmatpush1.xpose.msra.mxu0 0.0
      %858 = vmatprep.subr.mxu0 0.0
      %859 = vmatpush1.xpose.msra.mxu0 0.0
      %860 = vmatprep.subr.mxu0 0.0
      %861 = vmatpush1.xpose.msra.mxu0 0.0
      %862 = vmatprep.subr.mxu0 0.0
      %863 = vmatpush1.xpose.msra.mxu0 0.0
      %864 = vmatprep.subr.mxu0 0.0
      %865 = vmatpush1.xpose.msra.mxu0 0.0
      %866 = vmatprep.subr.mxu0 0.0
      %867 = vmatpush1.xpose.msra.mxu0 0.0
      %868 = vmatprep.subr.mxu0 0.0
      %869 = vmatpush1.xpose.msra.mxu0 0.0
      %870 = vmatprep.mubr.f32.mxu0 0.0
      %871 = vmatmul.mubr.f32.gmra.mrb[0].mxu0 %v798
      %v872 = vpop.f32.mrb[0].mxu0
      %v873 = vadd.f32 0.0, %v872
      %v874 = vpop.f32.mrb[0].mxu0
      %875 = vmatprep.mubr.f32.mxu0 0.0
      %876 = vmatmul.mubr.f32.gmra.mrb[0].mxu0 %v800
      %v877 = vpop.f32.mrb[0].mxu0
      %v878 = vadd.f32 0.0, %v877
      %v879 = vpop.f32.mrb[0].mxu0
      %880 = vdwg.mxu0
      %v881 = vmul.f32 %v873, 0.35355338
      %v882 = vmul.f32 %v878, 0.35355338
      %v883 = vsel %vm674, %v881, -inf
      %884 = vmax.xlane.f32.xlu0 %v883
      %v885 = vpop.xlane.xlu0 %884
      %v886 = vsel %vm678, %v882, -inf
      %887 = vmax.xlane.f32.xlu0 %v886
      %v888 = vpop.xlane.xlu0 %887
      %v889 = vsub.f32 %v881, %v885
      %v890 = vsub.f32 %v882, %v888
      %v891 = vmul.f32 %v889, 1.442695
      %v892 = vpow.pop %v891
      %v893 = vmul.f32 %v890, 1.442695
      %v894 = vpow.pop %v893
      %v895 = vsel %vm674, %v892, 0.0
      %896 = vadd.xlane.f32.xlu0 %v895
      %v897 = vpop.xlane.xlu0 %896
      %v898 = vsel %vm678, %v894, 0.0
      %899 = vadd.xlane.f32.xlu0 %v898
      %v900 = vpop.xlane.xlu0 %899
      %v901 = vrcp.pop %v897
      %v902 = vrcp.pop %v900
      %v903 = vmul.f32 %v892, %v901
      %v904 = vmul.f32 %v894, %v902
      %905 = vrot.lane.b32.xlu0 %v574, 56
      %v906 = vpop.permute.xlu0 %905
      %907 = vrot.lane.b32.xlu0 %v579, 56
      %v908 = vpop.permute.xlu0 %907
      %v911 = vsel %vm674, %v903, 0
      %v914 = vsel %vm674, %v904, 0
      %v916 = vsel %vm709, %v908, 0
      %918 = vmatprep.subr.mxu0 0.0
      %919 = vmatpush1.msra.mxu0 %v906
      %920 = vmatprep.subr.mxu0 0.0
      %921 = vmatpush1.msra.mxu0 %v916
      %922 = vmatprep.subr.mxu0 0.0
      %923 = vmatpush1.msra.mxu0 0.0
      %924 = vmatprep.subr.mxu0 0.0
      %925 = vmatpush1.msra.mxu0 0.0
      %926 = vmatprep.subr.mxu0 0.0
      %927 = vmatpush1.msra.mxu0 0.0
      %928 = vmatprep.subr.mxu0 0.0
      %929 = vmatpush1.msra.mxu0 0.0
      %930 = vmatprep.subr.mxu0 0.0
      %931 = vmatpush1.msra.mxu0 0.0
      %932 = vmatprep.subr.mxu0 0.0
      %933 = vmatpush1.msra.mxu0 0.0
      %934 = vmatprep.subr.mxu0 0.0
      %935 = vmatpush1.msra.mxu0 0.0
      %936 = vmatprep.subr.mxu0 0.0
      %937 = vmatpush1.msra.mxu0 0.0
      %938 = vmatprep.subr.mxu0 0.0
      %939 = vmatpush1.msra.mxu0 0.0
      %940 = vmatprep.subr.mxu0 0.0
      %941 = vmatpush1.msra.mxu0 0.0
      %942 = vmatprep.subr.mxu0 0.0
      %943 = vmatpush1.msra.mxu0 0.0
      %944 = vmatprep.subr.mxu0 0.0
      %945 = vmatpush1.msra.mxu0 0.0
      %946 = vmatprep.subr.mxu0 0.0
      %947 = vmatpush1.msra.mxu0 0.0
      %948 = vmatprep.subr.mxu0 0.0
      %949 = vmatpush1.msra.mxu0 0.0
      %950 = vmatprep.subr.mxu0 0.0
      %951 = vmatpush1.msra.mxu0 0.0
      %952 = vmatprep.subr.mxu0 0.0
      %953 = vmatpush1.msra.mxu0 0.0
      %954 = vmatprep.subr.mxu0 0.0
      %955 = vmatpush1.msra.mxu0 0.0
      %956 = vmatprep.subr.mxu0 0.0
      %957 = vmatpush1.msra.mxu0 0.0
      %958 = vmatprep.subr.mxu0 0.0
      %959 = vmatpush1.msra.mxu0 0.0
      %960 = vmatprep.subr.mxu0 0.0
      %961 = vmatpush1.msra.mxu0 0.0
      %962 = vmatprep.subr.mxu0 0.0
      %963 = vmatpush1.msra.mxu0 0.0
      %964 = vmatprep.subr.mxu0 0.0
      %965 = vmatpush1.msra.mxu0 0.0
      %966 = vmatprep.subr.mxu0 0.0
      %967 = vmatpush1.msra.mxu0 0.0
      %968 = vmatprep.subr.mxu0 0.0
      %969 = vmatpush1.msra.mxu0 0.0
      %970 = vmatprep.subr.mxu0 0.0
      %971 = vmatpush1.msra.mxu0 0.0
      %972 = vmatprep.subr.mxu0 0.0
      %973 = vmatpush1.msra.mxu0 0.0
      %974 = vmatprep.subr.mxu0 0.0
      %975 = vmatpush1.msra.mxu0 0.0
      %976 = vmatprep.subr.mxu0 0.0
      %977 = vmatpush1.msra.mxu0 0.0
      %978 = vmatprep.subr.mxu0 0.0
      %979 = vmatpush1.msra.mxu0 0.0
      %980 = vmatprep.subr.mxu0 0.0
      %981 = vmatpush1.msra.mxu0 0.0
      %982 = vmatprep.mubr.f32.mxu0 0.0
      %983 = vmatmul.mubr.f32.gmra.mrb[0].mxu0 %v911
      %v984 = vpop.f32.mrb[0].mxu0
      %v985 = vadd.f32 0.0, %v984
      %v986 = vpop.f32.mrb[0].mxu0
      %987 = vmatprep.mubr.f32.mxu0 0.0
      %988 = vmatmul.mubr.f32.gmra.mrb[0].mxu0 %v914
      %v989 = vpop.f32.mrb[0].mxu0
      %v990 = vadd.f32 0.0, %v989
      %v991 = vpop.f32.mrb[0].mxu0
      %992 = vdwg.mxu0
      %995 = vrot.lane.b32.xlu0 %v985, 8
      %v996 = vpop.permute.xlu0 %995
      %997 = vrot.lane.b32.xlu0 %v990, 8
      %v998 = vpop.permute.xlu0 %997
      %vm1001 = vcmask 130112
      %1002 = vst.msk [vmem:[#allocation2] sm:$0xff] %vm1001, %v996
      %vm1003 = vcmask 122944
      %1004 = vst.msk [vmem:[#allocation2 + $0x8] sm:$0x1] %vm1003, %v998
      %1005 = vrot.lane.b32.xlu0 %v574, 112
      %v1006 = vpop.permute.xlu0 %1005
      %1007 = vrot.lane.b32.xlu0 %v579, 112
      %v1008 = vpop.permute.xlu0 %1007
      %1009 = vrot.lane.b32.xlu0 %v574, 80
      %v1010 = vpop.permute.xlu0 %1009
      %1011 = vrot.lane.b32.xlu0 %v579, 80
      %v1012 = vpop.permute.xlu0 %1011
      %v1013 = vsel %vm588, %v1006, 0
      %v1015 = vsel %vm588, %v1008, 0
      %v1017 = vsel %vm588, %v1010, 0
      %v1019 = vsel %vm588, %v1012, 0
      %1021 = vmatprep.subr.mxu0 0.0
      %1022 = vmatpush1.xpose.msra.mxu0 %v1017
      %1023 = vmatprep.subr.mxu0 0.0
      %1024 = vmatpush1.xpose.msra.mxu0 %v1019
      %1025 = vmatprep.subr.mxu0 0.0
      %1026 = vmatpush1.xpose.msra.mxu0 0.0
      %1027 = vmatprep.subr.mxu0 0.0
      %1028 = vmatpush1.xpose.msra.mxu0 0.0
      %1029 = vmatprep.subr.mxu0 0.0
      %1030 = vmatpush1.xpose.msra.mxu0 0.0
      %1031 = vmatprep.subr.mxu0 0.0
      %1032 = vmatpush1.xpose.msra.mxu0 0.0
      %1033 = vmatprep.subr.mxu0 0.0
      %1034 = vmatpush1.xpose.msra.mxu0 0.0
      %1035 = vmatprep.subr.mxu0 0.0
      %1036 = vmatpush1.xpose.msra.mxu0 0.0
      %1037 = vmatprep.subr.mxu0 0.0
      %1038 = vmatpush1.xpose.msra.mxu0 0.0
      %1039 = vmatprep.subr.mxu0 0.0
      %1040 = vmatpush1.xpose.msra.mxu0 0.0
      %1041 = vmatprep.subr.mxu0 0.0
      %1042 = vmatpush1.xpose.msra.mxu0 0.0
      %1043 = vmatprep.subr.mxu0 0.0
      %1044 = vmatpush1.xpose.msra.mxu0 0.0
      %1045 = vmatprep.subr.mxu0 0.0
      %1046 = vmatpush1.xpose.msra.mxu0 0.0
      %1047 = vmatprep.subr.mxu0 0.0
      %1048 = vmatpush1.xpose.msra.mxu0 0.0
      %1049 = vmatprep.subr.mxu0 0.0
      %1050 = vmatpush1.xpose.msra.mxu0 0.0
      %1051 = vmatprep.subr.mxu0 0.0
      %1052 = vmatpush1.xpose.msra.mxu0 0.0
      %1053 = vmatprep.subr.mxu0 0.0
      %1054 = vmatpush1.xpose.msra.mxu0 0.0
      %1055 = vmatprep.subr.mxu0 0.0
      %1056 = vmatpush1.xpose.msra.mxu0 0.0
      %1057 = vmatprep.subr.mxu0 0.0
      %1058 = vmatpush1.xpose.msra.mxu0 0.0
      %1059 = vmatprep.subr.mxu0 0.0
      %1060 = vmatpush1.xpose.msra.mxu0 0.0
      %1061 = vmatprep.subr.mxu0 0.0
      %1062 = vmatpush1.xpose.msra.mxu0 0.0
      %1063 = vmatprep.subr.mxu0 0.0
      %1064 = vmatpush1.xpose.msra.mxu0 0.0
      %1065 = vmatprep.subr.mxu0 0.0
      %1066 = vmatpush1.xpose.msra.mxu0 0.0
      %1067 = vmatprep.subr.mxu0 0.0
      %1068 = vmatpush1.xpose.msra.mxu0 0.0
      %1069 = vmatprep.subr.mxu0 0.0
      %1070 = vmatpush1.xpose.msra.mxu0 0.0
      %1071 = vmatprep.subr.mxu0 0.0
      %1072 = vmatpush1.xpose.msra.mxu0 0.0
      %1073 = vmatprep.subr.mxu0 0.0
      %1074 = vmatpush1.xpose.msra.mxu0 0.0
      %1075 = vmatprep.subr.mxu0 0.0
      %1076 = vmatpush1.xpose.msra.mxu0 0.0
      %1077 = vmatprep.subr.mxu0 0.0
      %1078 = vmatpush1.xpose.msra.mxu0 0.0
      %1079 = vmatprep.subr.mxu0 0.0
      %1080 = vmatpush1.xpose.msra.mxu0 0.0
      %1081 = vmatprep.subr.mxu0 0.0
      %1082 = vmatpush1.xpose.msra.mxu0 0.0
      %1083 = vmatprep.subr.mxu0 0.0
      %1084 = vmatpush1.xpose.msra.mxu0 0.0
      %1085 = vmatprep.mubr.f32.mxu0 0.0
      %1086 = vmatmul.mubr.f32.gmra.mrb[0].mxu0 %v1013
      %v1087 = vpop.f32.mrb[0].mxu0
      %v1088 = vadd.f32 0.0, %v1087
      %v1089 = vpop.f32.mrb[0].mxu0
      %1090 = vmatprep.mubr.f32.mxu0 0.0
      %1091 = vmatmul.mubr.f32.gmra.mrb[0].mxu0 %v1015
      %v1092 = vpop.f32.mrb[0].mxu0
      %v1093 = vadd.f32 0.0, %v1092
      %v1094 = vpop.f32.mrb[0].mxu0
      %1095 = vdwg.mxu0
      %v1096 = vmul.f32 %v1088, 0.35355338
      %v1097 = vmul.f32 %v1093, 0.35355338
      %v1098 = vsel %vm674, %v1096, -inf
      %1099 = vmax.xlane.f32.xlu0 %v1098
      %v1100 = vpop.xlane.xlu0 %1099
      %v1101 = vsel %vm678, %v1097, -inf
      %1102 = vmax.xlane.f32.xlu0 %v1101
      %v1103 = vpop.xlane.xlu0 %1102
      %v1104 = vsub.f32 %v1096, %v1100
      %v1105 = vsub.f32 %v1097, %v1103
      %v1106 = vmul.f32 %v1104, 1.442695
      %v1107 = vpow.pop %v1106
      %v1108 = vmul.f32 %v1105, 1.442695
      %v1109 = vpow.pop %v1108
      %v1110 = vsel %vm674, %v1107, 0.0
      %1111 = vadd.xlane.f32.xlu0 %v1110
      %v1112 = vpop.xlane.xlu0 %1111
      %v1113 = vsel %vm678, %v1109, 0.0
      %1114 = vadd.xlane.f32.xlu0 %v1113
      %v1115 = vpop.xlane.xlu0 %1114
      %v1116 = vrcp.pop %v1112
      %v1117 = vrcp.pop %v1115
      %v1118 = vmul.f32 %v1107, %v1116
      %v1119 = vmul.f32 %v1109, %v1117
      %1120 = vrot.lane.b32.xlu0 %v574, 48
      %v1121 = vpop.permute.xlu0 %1120
      %1122 = vrot.lane.b32.xlu0 %v579, 48
      %v1123 = vpop.permute.xlu0 %1122
      %v1126 = vsel %vm674, %v1118, 0
      %v1129 = vsel %vm674, %v1119, 0
      %v1131 = vsel %vm709, %v1123, 0
      %1133 = vmatprep.subr.mxu0 0.0
      %1134 = vmatpush1.msra.mxu0 %v1121
      %1135 = vmatprep.subr.mxu0 0.0
      %1136 = vmatpush1.msra.mxu0 %v1131
      %1137 = vmatprep.subr.mxu0 0.0
      %1138 = vmatpush1.msra.mxu0 0.0
      %1139 = vmatprep.subr.mxu0 0.0
      %1140 = vmatpush1.msra.mxu0 0.0
      %1141 = vmatprep.subr.mxu0 0.0
      %1142 = vmatpush1.msra.mxu0 0.0
      %1143 = vmatprep.subr.mxu0 0.0
      %1144 = vmatpush1.msra.mxu0 0.0
      %1145 = vmatprep.subr.mxu0 0.0
      %1146 = vmatpush1.msra.mxu0 0.0
      %1147 = vmatprep.subr.mxu0 0.0
      %1148 = vmatpush1.msra.mxu0 0.0
      %1149 = vmatprep.subr.mxu0 0.0
      %1150 = vmatpush1.msra.mxu0 0.0
      %1151 = vmatprep.subr.mxu0 0.0
      %1152 = vmatpush1.msra.mxu0 0.0
      %1153 = vmatprep.subr.mxu0 0.0
      %1154 = vmatpush1.msra.mxu0 0.0
      %1155 = vmatprep.subr.mxu0 0.0
      %1156 = vmatpush1.msra.mxu0 0.0
      %1157 = vmatprep.subr.mxu0 0.0
      %1158 = vmatpush1.msra.mxu0 0.0
      %1159 = vmatprep.subr.mxu0 0.0
      %1160 = vmatpush1.msra.mxu0 0.0
      %1161 = vmatprep.subr.mxu0 0.0
      %1162 = vmatpush1.msra.mxu0 0.0
      %1163 = vmatprep.subr.mxu0 0.0
      %1164 = vmatpush1.msra.mxu0 0.0
      %1165 = vmatprep.subr.mxu0 0.0
      %1166 = vmatpush1.msra.mxu0 0.0
      %1167 = vmatprep.subr.mxu0 0.0
      %1168 = vmatpush1.msra.mxu0 0.0
      %1169 = vmatprep.subr.mxu0 0.0
      %1170 = vmatpush1.msra.mxu0 0.0
      %1171 = vmatprep.subr.mxu0 0.0
      %1172 = vmatpush1.msra.mxu0 0.0
      %1173 = vmatprep.subr.mxu0 0.0
      %1174 = vmatpush1.msra.mxu0 0.0
      %1175 = vmatprep.subr.mxu0 0.0
      %1176 = vmatpush1.msra.mxu0 0.0
      %1177 = vmatprep.subr.mxu0 0.0
      %1178 = vmatpush1.msra.mxu0 0.0
      %1179 = vmatprep.subr.mxu0 0.0
      %1180 = vmatpush1.msra.mxu0 0.0
      %1181 = vmatprep.subr.mxu0 0.0
      %1182 = vmatpush1.msra.mxu0 0.0
      %1183 = vmatprep.subr.mxu0 0.0
      %1184 = vmatpush1.msra.mxu0 0.0
      %1185 = vmatprep.subr.mxu0 0.0
      %1186 = vmatpush1.msra.mxu0 0.0
      %1187 = vmatprep.subr.mxu0 0.0
      %1188 = vmatpush1.msra.mxu0 0.0
      %1189 = vmatprep.subr.mxu0 0.0
      %1190 = vmatpush1.msra.mxu0 0.0
      %1191 = vmatprep.subr.mxu0 0.0
      %1192 = vmatpush1.msra.mxu0 0.0
      %1193 = vmatprep.subr.mxu0 0.0
      %1194 = vmatpush1.msra.mxu0 0.0
      %1195 = vmatprep.subr.mxu0 0.0
      %1196 = vmatpush1.msra.mxu0 0.0
      %1197 = vmatprep.mubr.f32.mxu0 0.0
      %1198 = vmatmul.mubr.f32.gmra.mrb[0].mxu0 %v1126
      %v1199 = vpop.f32.mrb[0].mxu0
      %v1200 = vadd.f32 0.0, %v1199
      %v1201 = vpop.f32.mrb[0].mxu0
      %1202 = vmatprep.mubr.f32.mxu0 0.0
      %1203 = vmatmul.mubr.f32.gmra.mrb[0].mxu0 %v1129
      %v1204 = vpop.f32.mrb[0].mxu0
      %v1205 = vadd.f32 0.0, %v1204
      %v1206 = vpop.f32.mrb[0].mxu0
      %1207 = vdwg.mxu0
      %1210 = vrot.lane.b32.xlu0 %v1200, 16
      %v1211 = vpop.permute.xlu0 %1210
      %1212 = vrot.lane.b32.xlu0 %v1205, 16
      %v1213 = vpop.permute.xlu0 %1212
      %vm1216 = vcmask 195712
      %1217 = vst.msk [vmem:[#allocation2] sm:$0xff] %vm1216, %v1211
      %vm1218 = vcmask 188544
      %1219 = vst.msk [vmem:[#allocation2 + $0x8] sm:$0x1] %vm1218, %v1213
      %1220 = vrot.lane.b32.xlu0 %v574, 104
      %v1221 = vpop.permute.xlu0 %1220
      %1222 = vrot.lane.b32.xlu0 %v579, 104
      %v1223 = vpop.permute.xlu0 %1222
      %1224 = vrot.lane.b32.xlu0 %v574, 72
      %v1225 = vpop.permute.xlu0 %1224
      %1226 = vrot.lane.b32.xlu0 %v579, 72
      %v1227 = vpop.permute.xlu0 %1226
      %v1228 = vsel %vm588, %v1221, 0
      %v1230 = vsel %vm588, %v1223, 0
      %v1232 = vsel %vm588, %v1225, 0
      %v1234 = vsel %vm588, %v1227, 0
      %1236 = vmatprep.subr.mxu0 0.0
      %1237 = vmatpush1.xpose.msra.mxu0 %v1232
      %1238 = vmatprep.subr.mxu0 0.0
      %1239 = vmatpush1.xpose.msra.mxu0 %v1234
      %1240 = vmatprep.subr.mxu0 0.0
      %1241 = vmatpush1.xpose.msra.mxu0 0.0
      %1242 = vmatprep.subr.mxu0 0.0
      %1243 = vmatpush1.xpose.msra.mxu0 0.0
      %1244 = vmatprep.subr.mxu0 0.0
      %1245 = vmatpush1.xpose.msra.mxu0 0.0
      %1246 = vmatprep.subr.mxu0 0.0
      %1247 = vmatpush1.xpose.msra.mxu0 0.0
      %1248 = vmatprep.subr.mxu0 0.0
      %1249 = vmatpush1.xpose.msra.mxu0 0.0
      %1250 = vmatprep.subr.mxu0 0.0
      %1251 = vmatpush1.xpose.msra.mxu0 0.0
      %1252 = vmatprep.subr.mxu0 0.0
      %1253 = vmatpush1.xpose.msra.mxu0 0.0
      %1254 = vmatprep.subr.mxu0 0.0
      %1255 = vmatpush1.xpose.msra.mxu0 0.0
      %1256 = vmatprep.subr.mxu0 0.0
      %1257 = vmatpush1.xpose.msra.mxu0 0.0
      %1258 = vmatprep.subr.mxu0 0.0
      %1259 = vmatpush1.xpose.msra.mxu0 0.0
      %1260 = vmatprep.subr.mxu0 0.0
      %1261 = vmatpush1.xpose.msra.mxu0 0.0
      %1262 = vmatprep.subr.mxu0 0.0
      %1263 = vmatpush1.xpose.msra.mxu0 0.0
      %1264 = vmatprep.subr.mxu0 0.0
      %1265 = vmatpush1.xpose.msra.mxu0 0.0
      %1266 = vmatprep.subr.mxu0 0.0
      %1267 = vmatpush1.xpose.msra.mxu0 0.0
      %1268 = vmatprep.subr.mxu0 0.0
      %1269 = vmatpush1.xpose.msra.mxu0 0.0
      %1270 = vmatprep.subr.mxu0 0.0
      %1271 = vmatpush1.xpose.msra.mxu0 0.0
      %1272 = vmatprep.subr.mxu0 0.0
      %1273 = vmatpush1.xpose.msra.mxu0 0.0
      %1274 = vmatprep.subr.mxu0 0.0
      %1275 = vmatpush1.xpose.msra.mxu0 0.0
      %1276 = vmatprep.subr.mxu0 0.0
      %1277 = vmatpush1.xpose.msra.mxu0 0.0
      %1278 = vmatprep.subr.mxu0 0.0
      %1279 = vmatpush1.xpose.msra.mxu0 0.0
      %1280 = vmatprep.subr.mxu0 0.0
      %1281 = vmatpush1.xpose.msra.mxu0 0.0
      %1282 = vmatprep.subr.mxu0 0.0
      %1283 = vmatpush1.xpose.msra.mxu0 0.0
      %1284 = vmatprep.subr.mxu0 0.0
      %1285 = vmatpush1.xpose.msra.mxu0 0.0
      %1286 = vmatprep.subr.mxu0 0.0
      %1287 = vmatpush1.xpose.msra.mxu0 0.0
      %1288 = vmatprep.subr.mxu0 0.0
      %1289 = vmatpush1.xpose.msra.mxu0 0.0
      %1290 = vmatprep.subr.mxu0 0.0
      %1291 = vmatpush1.xpose.msra.mxu0 0.0
      %1292 = vmatprep.subr.mxu0 0.0
      %1293 = vmatpush1.xpose.msra.mxu0 0.0
      %1294 = vmatprep.subr.mxu0 0.0
      %1295 = vmatpush1.xpose.msra.mxu0 0.0
      %1296 = vmatprep.subr.mxu0 0.0
      %1297 = vmatpush1.xpose.msra.mxu0 0.0
      %1298 = vmatprep.subr.mxu0 0.0
      %1299 = vmatpush1.xpose.msra.mxu0 0.0
      %1300 = vmatprep.mubr.f32.mxu0 0.0
      %1301 = vmatmul.mubr.f32.gmra.mrb[0].mxu0 %v1228
      %v1302 = vpop.f32.mrb[0].mxu0
      %v1303 = vadd.f32 0.0, %v1302
      %v1304 = vpop.f32.mrb[0].mxu0
      %1305 = vmatprep.mubr.f32.mxu0 0.0
      %1306 = vmatmul.mubr.f32.gmra.mrb[0].mxu0 %v1230
      %v1307 = vpop.f32.mrb[0].mxu0
      %v1308 = vadd.f32 0.0, %v1307
      %v1309 = vpop.f32.mrb[0].mxu0
      %1310 = vdwg.mxu0
      %v1311 = vmul.f32 %v1303, 0.35355338
      %v1312 = vmul.f32 %v1308, 0.35355338
      %v1313 = vsel %vm674, %v1311, -inf
      %1314 = vmax.xlane.f32.xlu0 %v1313
      %v1315 = vpop.xlane.xlu0 %1314
      %v1316 = vsel %vm678, %v1312, -inf
      %1317 = vmax.xlane.f32.xlu0 %v1316
      %v1318 = vpop.xlane.xlu0 %1317
      %v1319 = vsub.f32 %v1311, %v1315
      %v1320 = vsub.f32 %v1312, %v1318
      %v1321 = vmul.f32 %v1319, 1.442695
      %v1322 = vpow.pop %v1321
      %v1323 = vmul.f32 %v1320, 1.442695
      %v1324 = vpow.pop %v1323
      %v1325 = vsel %vm674, %v1322, 0.0
      %1326 = vadd.xlane.f32.xlu0 %v1325
      %v1327 = vpop.xlane.xlu0 %1326
      %v1328 = vsel %vm678, %v1324, 0.0
      %1329 = vadd.xlane.f32.xlu0 %v1328
      %v1330 = vpop.xlane.xlu0 %1329
      %v1331 = vrcp.pop %v1327
      %v1332 = vrcp.pop %v1330
      %v1333 = vmul.f32 %v1322, %v1331
      %v1334 = vmul.f32 %v1324, %v1332
      %1335 = vrot.lane.b32.xlu0 %v574, 40
      %v1336 = vpop.permute.xlu0 %1335
      %1337 = vrot.lane.b32.xlu0 %v579, 40
      %v1338 = vpop.permute.xlu0 %1337
      %v1341 = vsel %vm674, %v1333, 0
      %v1344 = vsel %vm674, %v1334, 0
      %v1346 = vsel %vm709, %v1338, 0
      %1348 = vmatprep.subr.mxu0 0.0
      %1349 = vmatpush1.msra.mxu0 %v1336
      %1350 = vmatprep.subr.mxu0 0.0
      %1351 = vmatpush1.msra.mxu0 %v1346
      %1352 = vmatprep.subr.mxu0 0.0
      %1353 = vmatpush1.msra.mxu0 0.0
      %1354 = vmatprep.subr.mxu0 0.0
      %1355 = vmatpush1.msra.mxu0 0.0
      %1356 = vmatprep.subr.mxu0 0.0
      %1357 = vmatpush1.msra.mxu0 0.0
      %1358 = vmatprep.subr.mxu0 0.0
      %1359 = vmatpush1.msra.mxu0 0.0
      %1360 = vmatprep.subr.mxu0 0.0
      %1361 = vmatpush1.msra.mxu0 0.0
      %1362 = vmatprep.subr.mxu0 0.0
      %1363 = vmatpush1.msra.mxu0 0.0
      %1364 = vmatprep.subr.mxu0 0.0
      %1365 = vmatpush1.msra.mxu0 0.0
      %1366 = vmatprep.subr.mxu0 0.0
      %1367 = vmatpush1.msra.mxu0 0.0
      %1368 = vmatprep.subr.mxu0 0.0
      %1369 = vmatpush1.msra.mxu0 0.0
      %1370 = vmatprep.subr.mxu0 0.0
      %1371 = vmatpush1.msra.mxu0 0.0
      %1372 = vmatprep.subr.mxu0 0.0
      %1373 = vmatpush1.msra.mxu0 0.0
      %1374 = vmatprep.subr.mxu0 0.0
      %1375 = vmatpush1.msra.mxu0 0.0
      %1376 = vmatprep.subr.mxu0 0.0
      %1377 = vmatpush1.msra.mxu0 0.0
      %1378 = vmatprep.subr.mxu0 0.0
      %1379 = vmatpush1.msra.mxu0 0.0
      %1380 = vmatprep.subr.mxu0 0.0
      %1381 = vmatpush1.msra.mxu0 0.0
      %1382 = vmatprep.subr.mxu0 0.0
      %1383 = vmatpush1.msra.mxu0 0.0
      %1384 = vmatprep.subr.mxu0 0.0
      %1385 = vmatpush1.msra.mxu0 0.0
      %1386 = vmatprep.subr.mxu0 0.0
      %1387 = vmatpush1.msra.mxu0 0.0
      %1388 = vmatprep.subr.mxu0 0.0
      %1389 = vmatpush1.msra.mxu0 0.0
      %1390 = vmatprep.subr.mxu0 0.0
      %1391 = vmatpush1.msra.mxu0 0.0
      %1392 = vmatprep.subr.mxu0 0.0
      %1393 = vmatpush1.msra.mxu0 0.0
      %1394 = vmatprep.subr.mxu0 0.0
      %1395 = vmatpush1.msra.mxu0 0.0
      %1396 = vmatprep.subr.mxu0 0.0
      %1397 = vmatpush1.msra.mxu0 0.0
      %1398 = vmatprep.subr.mxu0 0.0
      %1399 = vmatpush1.msra.mxu0 0.0
      %1400 = vmatprep.subr.mxu0 0.0
      %1401 = vmatpush1.msra.mxu0 0.0
      %1402 = vmatprep.subr.mxu0 0.0
      %1403 = vmatpush1.msra.mxu0 0.0
      %1404 = vmatprep.subr.mxu0 0.0
      %1405 = vmatpush1.msra.mxu0 0.0
      %1406 = vmatprep.subr.mxu0 0.0
      %1407 = vmatpush1.msra.mxu0 0.0
      %1408 = vmatprep.subr.mxu0 0.0
      %1409 = vmatpush1.msra.mxu0 0.0
      %1410 = vmatprep.subr.mxu0 0.0
      %1411 = vmatpush1.msra.mxu0 0.0
      %1412 = vmatprep.mubr.f32.mxu0 0.0
      %1413 = vmatmul.mubr.f32.gmra.mrb[0].mxu0 %v1341
      %v1414 = vpop.f32.mrb[0].mxu0
      %v1415 = vadd.f32 0.0, %v1414
      %v1416 = vpop.f32.mrb[0].mxu0
      %1417 = vmatprep.mubr.f32.mxu0 0.0
      %1418 = vmatmul.mubr.f32.gmra.mrb[0].mxu0 %v1344
      %v1419 = vpop.f32.mrb[0].mxu0
      %v1420 = vadd.f32 0.0, %v1419
      %v1421 = vpop.f32.mrb[0].mxu0
      %1422 = vdwg.mxu0
      %1425 = vrot.lane.b32.xlu0 %v1415, 24
      %v1426 = vpop.permute.xlu0 %1425
      %1427 = vrot.lane.b32.xlu0 %v1420, 24
      %v1428 = vpop.permute.xlu0 %1427
      %vm1431 = vcmask 261312
      %1432 = vst.msk [vmem:[#allocation2] sm:$0xff] %vm1431, %v1426
      %vm1433 = vcmask 254144
      %1434 = vst.msk [vmem:[#allocation2 + $0x8] sm:$0x1] %vm1433, %v1428
      %v1435 = vld [vmem:[#allocation2] sm:$0xff]
      %v1436 = vld [vmem:[#allocation2 + $0x8] sm:$0x1]
      %v1437 = vld [vmem:[%s5] sm:$0xff]
      %v1438 = vld [vmem:[%s5 + $0x8] sm:$0xff]
      %v1439 = vld [vmem:[%s5 + $0x10] sm:$0xff]
      %v1440 = vld [vmem:[%s5 + $0x18] sm:$0xff]
      %v1442 = vsel %vm445, %v1435, 0
      %v1445 = vsel %vm445, %v1436, 0
      %1447 = vmatprep.subr.mxu0 0.0
      %1448 = vmatpush1.msra.mxu0 %v1437
      %1449 = vmatprep.subr.mxu0 0.0
      %1450 = vmatpush1.msra.mxu0 %v1438
      %1451 = vmatprep.subr.mxu0 0.0
      %1452 = vmatpush1.msra.mxu0 %v1439
      %1453 = vmatprep.subr.mxu0 0.0
      %1454 = vmatpush1.msra.mxu0 %v1440
      %1455 = vmatprep.subr.mxu0 0.0
      %1456 = vmatpush1.msra.mxu0 0.0
      %1457 = vmatprep.subr.mxu0 0.0
      %1458 = vmatpush1.msra.mxu0 0.0
      %1459 = vmatprep.subr.mxu0 0.0
      %1460 = vmatpush1.msra.mxu0 0.0
      %1461 = vmatprep.subr.mxu0 0.0
      %1462 = vmatpush1.msra.mxu0 0.0
      %1463 = vmatprep.subr.mxu0 0.0
      %1464 = vmatpush1.msra.mxu0 0.0
      %1465 = vmatprep.subr.mxu0 0.0
      %1466 = vmatpush1.msra.mxu0 0.0
      %1467 = vmatprep.subr.mxu0 0.0
      %1468 = vmatpush1.msra.mxu0 0.0
      %1469 = vmatprep.subr.mxu0 0.0
      %1470 = vmatpush1.msra.mxu0 0.0
      %1471 = vmatprep.subr.mxu0 0.0
      %1472 = vmatpush1.msra.mxu0 0.0
      %1473 = vmatprep.subr.mxu0 0.0
      %1474 = vmatpush1.msra.mxu0 0.0
      %1475 = vmatprep.subr.mxu0 0.0
      %1476 = vmatpush1.msra.mxu0 0.0
      %1477 = vmatprep.subr.mxu0 0.0
      %1478 = vmatpush1.msra.mxu0 0.0
      %1479 = vmatprep.subr.mxu0 0.0
      %1480 = vmatpush1.msra.mxu0 0.0
      %1481 = vmatprep.subr.mxu0 0.0
      %1482 = vmatpush1.msra.mxu0 0.0
      %1483 = vmatprep.subr.mxu0 0.0
      %1484 = vmatpush1.msra.mxu0 0.0
      %1485 = vmatprep.subr.mxu0 0.0
      %1486 = vmatpush1.msra.mxu0 0.0
      %1487 = vmatprep.subr.mxu0 0.0
      %1488 = vmatpush1.msra.mxu0 0.0
      %1489 = vmatprep.subr.mxu0 0.0
      %1490 = vmatpush1.msra.mxu0 0.0
      %1491 = vmatprep.subr.mxu0 0.0
      %1492 = vmatpush1.msra.mxu0 0.0
      %1493 = vmatprep.subr.mxu0 0.0
      %1494 = vmatpush1.msra.mxu0 0.0
      %1495 = vmatprep.subr.mxu0 0.0
      %1496 = vmatpush1.msra.mxu0 0.0
      %1497 = vmatprep.subr.mxu0 0.0
      %1498 = vmatpush1.msra.mxu0 0.0
      %1499 = vmatprep.subr.mxu0 0.0
      %1500 = vmatpush1.msra.mxu0 0.0
      %1501 = vmatprep.subr.mxu0 0.0
      %1502 = vmatpush1.msra.mxu0 0.0
      %1503 = vmatprep.subr.mxu0 0.0
      %1504 = vmatpush1.msra.mxu0 0.0
      %1505 = vmatprep.subr.mxu0 0.0
      %1506 = vmatpush1.msra.mxu0 0.0
      %1507 = vmatprep.subr.mxu0 0.0
      %1508 = vmatpush1.msra.mxu0 0.0
      %1509 = vmatprep.subr.mxu0 0.0
      %1510 = vmatpush1.msra.mxu0 0.0
      %1511 = vmatprep.mubr.f32.mxu0 0.0
      %1512 = vmatmul.mubr.f32.gmra.mrb[0].mxu0 %v1442
      %v1513 = vpop.f32.mrb[0].mxu0
      %v1514 = vadd.f32 0.0, %v1513
      %v1515 = vpop.f32.mrb[0].mxu0
      %1516 = vmatprep.mubr.f32.mxu0 0.0
      %1517 = vmatmul.mubr.f32.gmra.mrb[0].mxu0 %v1445
      %v1518 = vpop.f32.mrb[0].mxu0
      %v1519 = vadd.f32 0.0, %v1518
      %v1520 = vpop.f32.mrb[0].mxu0
      %1521 = vdwg.mxu0
      %v1522 = vadd.f32 %v441, %v1514
      %v1523 = vadd.f32 %v442, %v1519
      %v1524 = vld [vmem:[%s6] sm:$0x1]
      %v1526 = vlaneseq
      %v1527 = vshrl.u32 %v1526, 7
      %v1528 = vsub.s32 0, %v1527
      %v1529 = vrot.slane %v1524, %v1528
      %v1531 = vadd.f32 %v1522, %v1529
      %v1532 = vadd.f32 %v1523, %v1529
      %v1533 = vld [vmem:[%s7] sm:$0x1]
      %v1534 = vld [vmem:[%s8] sm:$0x1]
      %v1535 = vsel %vm445, %v1531, 0.0
      %1536 = vadd.xlane.f32.xlu0 %v1535
      %v1537 = vpop.xlane.xlu0 %1536
      %v1538 = vsel %vm449, %v1532, 0.0
      %1539 = vadd.xlane.f32.xlu0 %v1538
      %v1540 = vpop.xlane.xlu0 %1539
      %v1541 = vmul.f32 %v1537, %v453
      %v1542 = vmul.f32 %v1540, %v453
      %v1543 = vsub.f32 %v1531, %v1541
      %v1544 = vsub.f32 %v1532, %v1542
      %v1545 = vmul.f32 %v1543, %v1543
      %v1546 = vmul.f32 %v1544, %v1544
      %v1547 = vsel %vm445, %v1545, 0.0
      %1548 = vadd.xlane.f32.xlu0 %v1547
      %v1549 = vpop.xlane.xlu0 %1548
      %v1550 = vsel %vm449, %v1546, 0.0
      %1551 = vadd.xlane.f32.xlu0 %v1550
      %v1552 = vpop.xlane.xlu0 %1551
      %v1553 = vmul.f32 %v1549, %v453
      %v1554 = vmul.f32 %v1552, %v453
      %v1555 = vadd.f32 %v1553, 1e-05
      %v1556 = vadd.f32 %v1554, 1e-05
      %v1557 = vrsqrt.pop %v1555
      %v1558 = vrsqrt.pop %v1556
      %v1559 = vmul.f32 %v1543, %v1557
      %v1560 = vmul.f32 %v1544, %v1558
      %v1562 = vlaneseq
      %v1563 = vshrl.u32 %v1562, 7
      %v1564 = vsub.s32 0, %v1563
      %v1565 = vrot.slane %v1533, %v1564
      %v1567 = vmul.f32 %v1559, %v1565
      %v1568 = vmul.f32 %v1560, %v1565
      %v1570 = vlaneseq
      %v1571 = vshrl.u32 %v1570, 7
      %v1572 = vsub.s32 0, %v1571
      %v1573 = vrot.slane %v1534, %v1572
      %v1575 = vadd.f32 %v1567, %v1573
      %v1576 = vadd.f32 %v1568, %v1573
      %v1577 = vld [vmem:[%s9] sm:$0xff]
      %v1578 = vld [vmem:[%s9 + $0x8] sm:$0xff]
      %v1579 = vld [vmem:[%s9 + $0x10] sm:$0xff]
      %v1580 = vld [vmem:[%s9 + $0x18] sm:$0xff]
      %v1581 = vld [vmem:[%s10] sm:$0x1]
      %v1583 = vlaneseq
      %v1584 = vshrl.u32 %v1583, 7
      %v1585 = vsub.s32 0, %v1584
      %v1586 = vrot.slane %v1581, %v1585
      %v1589 = vsel %vm445, %v1575, 0
      %v1592 = vsel %vm445, %v1576, 0
      %1594 = vmatprep.subr.mxu0 0.0
      %1595 = vmatpush1.msra.mxu0 %v1577
      %1596 = vmatprep.subr.mxu0 0.0
      %1597 = vmatpush1.msra.mxu0 %v1578
      %1598 = vmatprep.subr.mxu0 0.0
      %1599 = vmatpush1.msra.mxu0 %v1579
      %1600 = vmatprep.subr.mxu0 0.0
      %1601 = vmatpush1.msra.mxu0 %v1580
      %1602 = vmatprep.subr.mxu0 0.0
      %1603 = vmatpush1.msra.mxu0 0.0
      %1604 = vmatprep.subr.mxu0 0.0
      %1605 = vmatpush1.msra.mxu0 0.0
      %1606 = vmatprep.subr.mxu0 0.0
      %1607 = vmatpush1.msra.mxu0 0.0
      %1608 = vmatprep.subr.mxu0 0.0
      %1609 = vmatpush1.msra.mxu0 0.0
      %1610 = vmatprep.subr.mxu0 0.0
      %1611 = vmatpush1.msra.mxu0 0.0
      %1612 = vmatprep.subr.mxu0 0.0
      %1613 = vmatpush1.msra.mxu0 0.0
      %1614 = vmatprep.subr.mxu0 0.0
      %1615 = vmatpush1.msra.mxu0 0.0
      %1616 = vmatprep.subr.mxu0 0.0
      %1617 = vmatpush1.msra.mxu0 0.0
      %1618 = vmatprep.subr.mxu0 0.0
      %1619 = vmatpush1.msra.mxu0 0.0
      %1620 = vmatprep.subr.mxu0 0.0
      %1621 = vmatpush1.msra.mxu0 0.0
      %1622 = vmatprep.subr.mxu0 0.0
      %1623 = vmatpush1.msra.mxu0 0.0
      %1624 = vmatprep.subr.mxu0 0.0
      %1625 = vmatpush1.msra.mxu0 0.0
      %1626 = vmatprep.subr.mxu0 0.0
      %1627 = vmatpush1.msra.mxu0 0.0
      %1628 = vmatprep.subr.mxu0 0.0
      %1629 = vmatpush1.msra.mxu0 0.0
      %1630 = vmatprep.subr.mxu0 0.0
      %1631 = vmatpush1.msra.mxu0 0.0
      %1632 = vmatprep.subr.mxu0 0.0
      %1633 = vmatpush1.msra.mxu0 0.0
      %1634 = vmatprep.subr.mxu0 0.0
      %1635 = vmatpush1.msra.mxu0 0.0
      %1636 = vmatprep.subr.mxu0 0.0
      %1637 = vmatpush1.msra.mxu0 0.0
      %1638 = vmatprep.subr.mxu0 0.0
      %1639 = vmatpush1.msra.mxu0 0.0
      %1640 = vmatprep.subr.mxu0 0.0
      %1641 = vmatpush1.msra.mxu0 0.0
      %1642 = vmatprep.subr.mxu0 0.0
      %1643 = vmatpush1.msra.mxu0 0.0
      %1644 = vmatprep.subr.mxu0 0.0
      %1645 = vmatpush1.msra.mxu0 0.0
      %1646 = vmatprep.subr.mxu0 0.0
      %1647 = vmatpush1.msra.mxu0 0.0
      %1648 = vmatprep.subr.mxu0 0.0
      %1649 = vmatpush1.msra.mxu0 0.0
      %1650 = vmatprep.subr.mxu0 0.0
      %1651 = vmatpush1.msra.mxu0 0.0
      %1652 = vmatprep.subr.mxu0 0.0
      %1653 = vmatpush1.msra.mxu0 0.0
      %1654 = vmatprep.subr.mxu0 0.0
      %1655 = vmatpush1.msra.mxu0 0.0
      %1656 = vmatprep.subr.mxu0 0.0
      %1657 = vmatpush1.msra.mxu0 0.0
      %1658 = vmatprep.mubr.f32.mxu0 0.0
      %1659 = vmatmul.mubr.f32.gmra.mrb[0].mxu0 %v1589
      %v1660 = vpop.f32.mrb[0].mxu0
      %v1661 = vadd.f32 %v1586, %v1660
      %v1662 = vpop.f32.mrb[0].mxu0
      %1663 = vmatprep.mubr.f32.mxu0 0.0
      %1664 = vmatmul.mubr.f32.gmra.mrb[0].mxu0 %v1592
      %v1665 = vpop.f32.mrb[0].mxu0
      %v1666 = vadd.f32 %v1586, %v1665
      %v1667 = vpop.f32.mrb[0].mxu0
      %1668 = vdwg.mxu0
      %v1669 = vmul.f32 %v1661, 0.5
      %v1670 = vmul.f32 %v1666, 0.5
      %v1671 = vmul.f32 %v1661, 0.70710677
      %v1672 = vmul.f32 %v1666, 0.70710677
      %vm1673 = vcmp.ge.f32.partialorder %v1671, 0.0
      %vm1674 = vcmp.ge.f32.partialorder %v1672, 0.0
      %v1675 = vsel %vm1673, 1.0, -1.0
      %v1676 = vsel %vm1674, 1.0, -1.0
      %v1677 = vand.u32 2147483647, %v1671
      %v1678 = vand.u32 2147483647, %v1672
      %v1679 = vmul.f32 %v1677, 0.3275911
      %v1680 = vmul.f32 %v1678, 0.3275911
      %v1681 = vadd.f32 %v1679, 1.0
      %v1682 = vadd.f32 %v1680, 1.0
      %v1683 = vrcp.pop %v1681
      %v1684 = vmul.f32 1.0, %v1683
      %v1685 = vrcp.pop %v1682
      %v1686 = vmul.f32 1.0, %v1685
      %v1687 = vmul.f32 %v1684, 1.0614054
      %v1688 = vmul.f32 %v1686, 1.0614054
      %v1689 = vadd.f32 %v1687, -1.4531521
      %v1690 = vadd.f32 %v1688, -1.4531521
      %v1691 = vmul.f32 %v1689, %v1684
      %v1692 = vmul.f32 %v1690, %v1686
      %v1693 = vadd.f32 %v1691, 1.4214138
      %v1694 = vadd.f32 %v1692, 1.4214138
      %v1695 = vmul.f32 %v1693, %v1684
      %v1696 = vmul.f32 %v1694, %v1686
      %v1697 = vadd.f32 %v1695, -0.28449672
      %v1698 = vadd.f32 %v1696, -0.28449672
      %v1699 = vmul.f32 %v1697, %v1684
      %v1700 = vmul.f32 %v1698, %v1686
      %v1701 = vadd.f32 %v1699, 0.2548296
      %v1702 = vadd.f32 %v1700, 0.2548296
      %v1703 = vmul.f32 %v1701, %v1684
      %v1704 = vmul.f32 %v1702, %v1686
      %v1705 = vmul.f32 %v1677, %v1677
      %v1706 = vmul.f32 %v1678, %v1678
      %v1707 = vsub.f32 0.0, %v1705
      %v1708 = vsub.f32 0.0, %v1706
      %v1709 = vmul.f32 %v1707, 1.442695
      %v1710 = vpow.pop %v1709
      %v1711 = vmul.f32 %v1708, 1.442695
      %v1712 = vpow.pop %v1711
      %v1713 = vmul.f32 %v1703, %v1710
      %v1714 = vmul.f32 %v1704, %v1712
      %v1715 = vsub.f32 1.0, %v1713
      %v1716 = vsub.f32 1.0, %v1714
      %v1717 = vmul.f32 %v1675, %v1715
      %v1718 = vmul.f32 %v1676, %v1716
      %v1719 = vadd.f32 %v1717, 1.0
      %v1720 = vadd.f32 %v1718, 1.0
      %v1721 = vmul.f32 %v1669, %v1719
      %v1722 = vmul.f32 %v1670, %v1720
      %v1723 = vld [vmem:[%s11] sm:$0xff]
      %v1724 = vld [vmem:[%s11 + $0x8] sm:$0xff]
      %v1725 = vld [vmem:[%s11 + $0x10] sm:$0xff]
      %v1726 = vld [vmem:[%s11 + $0x18] sm:$0xff]
      %v1727 = vld [vmem:[%s11 + $0x20] sm:$0xff]
      %v1728 = vld [vmem:[%s11 + $0x28] sm:$0xff]
      %v1729 = vld [vmem:[%s11 + $0x30] sm:$0xff]
      %v1730 = vld [vmem:[%s11 + $0x38] sm:$0xff]
      %v1731 = vld [vmem:[%s11 + $0x40] sm:$0xff]
      %v1732 = vld [vmem:[%s11 + $0x48] sm:$0xff]
      %v1733 = vld [vmem:[%s11 + $0x50] sm:$0xff]
      %v1734 = vld [vmem:[%s11 + $0x58] sm:$0xff]
      %v1735 = vld [vmem:[%s11 + $0x60] sm:$0xff]
      %v1736 = vld [vmem:[%s11 + $0x68] sm:$0xff]
      %v1737 = vld [vmem:[%s11 + $0x70] sm:$0xff]
      %v1738 = vld [vmem:[%s11 + $0x78] sm:$0xff]
      %1739 = vmatprep.subr.mxu0 0.0
      %1740 = vmatpush1.msra.mxu0 %v1723
      %1741 = vmatprep.subr.mxu0 0.0
      %1742 = vmatpush1.msra.mxu0 %v1724
      %1743 = vmatprep.subr.mxu0 0.0
      %1744 = vmatpush1.msra.mxu0 %v1725
      %1745 = vmatprep.subr.mxu0 0.0
      %1746 = vmatpush1.msra.mxu0 %v1726
      %1747 = vmatprep.subr.mxu0 0.0
      %1748 = vmatpush1.msra.mxu0 %v1727
      %1749 = vmatprep.subr.mxu0 0.0
      %1750 = vmatpush1.msra.mxu0 %v1728
      %1751 = vmatprep.subr.mxu0 0.0
      %1752 = vmatpush1.msra.mxu0 %v1729
      %1753 = vmatprep.subr.mxu0 0.0
      %1754 = vmatpush1.msra.mxu0 %v1730
      %1755 = vmatprep.subr.mxu0 0.0
      %1756 = vmatpush1.msra.mxu0 %v1731
      %1757 = vmatprep.subr.mxu0 0.0
      %1758 = vmatpush1.msra.mxu0 %v1732
      %1759 = vmatprep.subr.mxu0 0.0
      %1760 = vmatpush1.msra.mxu0 %v1733
      %1761 = vmatprep.subr.mxu0 0.0
      %1762 = vmatpush1.msra.mxu0 %v1734
      %1763 = vmatprep.subr.mxu0 0.0
      %1764 = vmatpush1.msra.mxu0 %v1735
      %1765 = vmatprep.subr.mxu0 0.0
      %1766 = vmatpush1.msra.mxu0 %v1736
      %1767 = vmatprep.subr.mxu0 0.0
      %1768 = vmatpush1.msra.mxu0 %v1737
      %1769 = vmatprep.subr.mxu0 0.0
      %1770 = vmatpush1.msra.mxu0 %v1738
      %1771 = vmatprep.subr.mxu0 0.0
      %1772 = vmatpush1.msra.mxu0 0.0
      %1773 = vmatprep.subr.mxu0 0.0
      %1774 = vmatpush1.msra.mxu0 0.0
      %1775 = vmatprep.subr.mxu0 0.0
      %1776 = vmatpush1.msra.mxu0 0.0
      %1777 = vmatprep.subr.mxu0 0.0
      %1778 = vmatpush1.msra.mxu0 0.0
      %1779 = vmatprep.subr.mxu0 0.0
      %1780 = vmatpush1.msra.mxu0 0.0
      %1781 = vmatprep.subr.mxu0 0.0
      %1782 = vmatpush1.msra.mxu0 0.0
      %1783 = vmatprep.subr.mxu0 0.0
      %1784 = vmatpush1.msra.mxu0 0.0
      %1785 = vmatprep.subr.mxu0 0.0
      %1786 = vmatpush1.msra.mxu0 0.0
      %1787 = vmatprep.subr.mxu0 0.0
      %1788 = vmatpush1.msra.mxu0 0.0
      %1789 = vmatprep.subr.mxu0 0.0
      %1790 = vmatpush1.msra.mxu0 0.0
      %1791 = vmatprep.subr.mxu0 0.0
      %1792 = vmatpush1.msra.mxu0 0.0
      %1793 = vmatprep.subr.mxu0 0.0
      %1794 = vmatpush1.msra.mxu0 0.0
      %1795 = vmatprep.subr.mxu0 0.0
      %1796 = vmatpush1.msra.mxu0 0.0
      %1797 = vmatprep.subr.mxu0 0.0
      %1798 = vmatpush1.msra.mxu0 0.0
      %1799 = vmatprep.subr.mxu0 0.0
      %1800 = vmatpush1.msra.mxu0 0.0
      %1801 = vmatprep.subr.mxu0 0.0
      %1802 = vmatpush1.msra.mxu0 0.0
      %1803 = vmatprep.mubr.f32.mxu0 0.0
      %1804 = vmatmul.mubr.f32.gmra.mrb[0].mxu0 %v1721
      %v1805 = vpop.f32.mrb[0].mxu0
      %v1806 = vadd.f32 0.0, %v1805
      %v1807 = vpop.f32.mrb[0].mxu0
      %1808 = vmatprep.mubr.f32.mxu0 0.0
      %1809 = vmatmul.mubr.f32.gmra.mrb[0].mxu0 %v1722
      %v1810 = vpop.f32.mrb[0].mxu0
      %v1811 = vadd.f32 0.0, %v1810
      %v1812 = vpop.f32.mrb[0].mxu0
      %1813 = vdwg.mxu0
      %v1814 = vadd.f32 %v1531, %v1806
      %v1815 = vadd.f32 %v1532, %v1811
      %v1816 = vld [vmem:[%s12] sm:$0x1]
      %v1818 = vlaneseq
      %v1819 = vshrl.u32 %v1818, 7
      %v1820 = vsub.s32 0, %v1819
      %v1821 = vrot.slane %v1816, %v1820
      %v1823 = vadd.f32 %v1814, %v1821
      %v1824 = vadd.f32 %v1815, %v1821
      %1825 = vst.msk [vmem:[%s440] sm:$0xff] %vm445, %v1823
      %1826 = vst.msk [vmem:[%s440 + $0x8] sm:$0x1] %vm449, %v1824
      %p1827 = scmp.lt.s32.totalorder %s24, 1
      %s1828 = scalar_select %p1827, %s24, 1
      %s1829 = smul.addr %s1828, 2
      %s1830 = smul.addr %s1829, 8
      %s1831 = scalar_lea.vmem %s13, %s1830
      // Predicated region
      $region73: #{vicmae_forward.22} parent=71 // pred_check
        %p1832 = pneg %p320
      $region74: #{vicmae_forward.22} parent=71 // pred_check_branch
        %1834 = sbr.rel (%p1832) target = $region76
      $region75: #{vicmae_forward.22} parent=71 // pred_region
        _
      $region76: #{vicmae_forward.22} parent=71 // pred_fallthru
        _
    $region72: #{vicmae_forward.22} parent=5 // pred_fallthru
      _
    %p1835 = scmp.le.s32.totalorder 2, %s19
    // Predicated region
    $region77: #{vicmae_forward.22} parent=5 // pred_check
      %p1836 = pneg %p1835
    $region78: #{vicmae_forward.22} parent=5 // pred_check_branch
      %1838 = sbr.rel (%p1836) target = $region80
    $region79: #{vicmae_forward.22} parent=5 // pred_region
      %s1839 = ssub.s32 %s19, 2
      // Predicated region
      $region81: #{vicmae_forward.22} parent=79 // pred_check
        %p1840 = pneg %p326
      $region82: #{vicmae_forward.22} parent=79 // pred_check_branch
        %1842 = sbr.rel (%p1840) target = $region84
      $region83: #{vicmae_forward.22} parent=79 // pred_region
        %p1843 = scmp.lt.s32.totalorder %s25, 1
        %s1844 = scalar_select %p1843, %s25, 1
        %s1845 = smul.addr %s1844, 2
        %s1846 = smul.addr %s1845, 8
        %s1847 = scalar_lea.vmem %s13, %s1846
      $region84: #{vicmae_forward.22} parent=79 // pred_fallthru
        _
    $region80: #{vicmae_forward.22} parent=5 // pred_fallthru
      _
  $region6: #{vicmae_forward.22} parent=0 // loop_footer
    %s23 = sadd.s32 1, %s19
  $region7: #{vicmae_forward.22} parent=0 // loop_footer_branch
    %18 = sbr.rel target = $region3
  $region8: #{vicmae_forward.22} parent=0 // loop_exit
    _

// kernel: vicmae_forward.27
$region0: #{vicmae_forward.27}
  #allocation0 [shape = 'u32[]', space=smem, size = 0x4, offset = 0x4, fixed_abs, tag = 'smem constant byte address 0x4 - core index']
  #allocation1 [shape = 'u32[144,128]{1,0:T(1,128)}', space=vmem, size = 0x12000, scoped, tag = 'internal scratch']
  %s0 = inlined_call_operand.vmem [shape: f32[2,17,16], index: 0, kind: input, shape index: {}]
  %s1 = inlined_call_operand.vmem [shape: f32[1,16], index: 1, kind: input, shape index: {}]
  %s2 = inlined_call_operand.vmem [shape: f32[1,16], index: 2, kind: input, shape index: {}]
  %s3 = inlined_call_operand.vmem [shape: f32[16,48], index: 3, kind: input, shape index: {}]
  %s4 = inlined_call_operand.vmem [shape: f32[1,48], index: 4, kind: input, shape index: {}]
  %s5 = inlined_call_operand.vmem [shape: f32[2,17,48], index: 5, kind: output, shape index: {}]
  %s6 = sld [smem:[#allocation0]]
  $region53: #{vicmae_forward.27} parent=0
    _
  %s8 = ssub.s32 1, %s6
  %s9 = scalar_select 0, %s8, %s6
  loop: start=0, step=1, limit=4
  $region2: #{vicmae_forward.27} parent=0 // loop_pre_header
    _
  $region3: #{vicmae_forward.27} parent=0 // loop_header
    %s11 = sphi 0, %s15
    %p12 = scmp.ge.s32.totalorder %s11, 4
    %s21 = sphi 0, %s23
    %s24 = sphi 0, %s21
    %s25 = sphi 0, %s24
    %s41 = sphi 0, %s25
    %s45 = sphi 0, %s45
    %s47 = sphi 0, %s45
    %s48 = sphi 0, %s47
    %s62 = sphi 0, %s48
    %s66 = sphi 0, %s66
    %s68 = sphi 0, %s66
    %s69 = sphi 0, %s68
    %s83 = sphi 0, %s69
    %s87 = sphi 0, %s87
    %s89 = sphi 0, %s87
    %s90 = sphi 0, %s89
    %s104 = sphi 0, %s90
    %s108 = sphi 0, %s108
    %s110 = sphi 0, %s108
    %s111 = sphi 0, %s110
    %s125 = sphi 0, %s111
    %s131 = sphi 0, %s133
    %s134 = sphi 0, %s131
    %s135 = sphi 0, %s134
    %s151 = sphi 0, %s135
  $region4: #{vicmae_forward.27} parent=0 // loop_header_branch
    %14 = sbr.rel (%p12) target = $region8
  $region5: #{vicmae_forward.27} parent=0 // loop_body
    %s16 = ssub.s32 %s11, 1
    %s17 = ssub.s32 %s11, 2
    %s18 = sadd.s32 %s11, 1
    %s19 = ssub.s32 %s11, %s18
    %p20 = scmp.eq.s32.totalorder %s19, 0
    %s22 = sadd.s32 %s21, 1
    %s23 = scalar_select %p20, %s21, %s22
    %p26 = pneg %p20
    %p27 = scmp.eq.s32.totalorder %s11, 1
    %p28 = por %p26, %p27
    %p29 = scmp.ne.s32.totalorder %s21, %s24
    %p30 = scmp.eq.s32.totalorder %s11, 0
    %p31 = por %p29, %p30
    %p32 = scmp.ne.s32.totalorder %s21, %s24
    %p33 = scmp.eq.s32.totalorder %s16, 1
    %p34 = por %p32, %p33
    %p35 = scmp.ne.s32.totalorder %s24, %s25
    %p36 = scmp.eq.s32.totalorder %s16, 0
    %p37 = por %p35, %p36
    %p38 = scmp.ne.s32.totalorder %s24, %s25
    %p39 = scmp.eq.s32.totalorder %s17, 1
    %p40 = por %p38, %p39
    %p42 = scmp.ne.s32.totalorder %s25, %s41
    %p43 = scmp.eq.s32.totalorder %s17, 0
    %p44 = por %p42, %p43
    %s46 = sadd.s32 %s45, 1
    %p49 = scmp.eq.s32.totalorder %s11, 1
    %p50 = scmp.ne.s32.totalorder %s45, %s47
    %p51 = scmp.eq.s32.totalorder %s11, 0
    %p52 = por %p50, %p51
    %p53 = scmp.ne.s32.totalorder %s45, %s47
    %p54 = scmp.eq.s32.totalorder %s16, 1
    %p55 = por %p53, %p54
    %p56 = scmp.ne.s32.totalorder %s47, %s48
    %p57 = scmp.eq.s32.totalorder %s16, 0
    %p58 = por %p56, %p57
    %p59 = scmp.ne.s32.totalorder %s47, %s48
    %p60 = scmp.eq.s32.totalorder %s17, 1
    %p61 = por %p59, %p60
    %p63 = scmp.ne.s32.totalorder %s48, %s62
    %p64 = scmp.eq.s32.totalorder %s17, 0
    %p65 = por %p63, %p64
    %s67 = sadd.s32 %s66, 1
    %p70 = scmp.eq.s32.totalorder %s11, 1
    %p71 = scmp.ne.s32.totalorder %s66, %s68
    %p72 = scmp.eq.s32.totalorder %s11, 0
    %p73 = por %p71, %p72
    %p74 = scmp.ne.s32.totalorder %s66, %s68
    %p75 = scmp.eq.s32.totalorder %s16, 1
    %p76 = por %p74, %p75
    %p77 = scmp.ne.s32.totalorder %s68, %s69
    %p78 = scmp.eq.s32.totalorder %s16, 0
    %p79 = por %p77, %p78
    %p80 = scmp.ne.s32.totalorder %s68, %s69
    %p81 = scmp.eq.s32.totalorder %s17, 1
    %p82 = por %p80, %p81
    %p84 = scmp.ne.s32.totalorder %s69, %s83
    %p85 = scmp.eq.s32.totalorder %s17, 0
    %p86 = por %p84, %p85
    %s88 = sadd.s32 %s87, 1
    %p91 = scmp.eq.s32.totalorder %s11, 1
    %p92 = scmp.ne.s32.totalorder %s87, %s89
    %p93 = scmp.eq.s32.totalorder %s11, 0
    %p94 = por %p92, %p93
    %p95 = scmp.ne.s32.totalorder %s87, %s89
    %p96 = scmp.eq.s32.totalorder %s16, 1
    %p97 = por %p95, %p96
    %p98 = scmp.ne.s32.totalorder %s89, %s90
    %p99 = scmp.eq.s32.totalorder %s16, 0
    %p100 = por %p98, %p99
    %p101 = scmp.ne.s32.totalorder %s89, %s90
    %p102 = scmp.eq.s32.totalorder %s17, 1
    %p103 = por %p101, %p102
    %p105 = scmp.ne.s32.totalorder %s90, %s104
    %p106 = scmp.eq.s32.totalorder %s17, 0
    %p107 = por %p105, %p106
    %s109 = sadd.s32 %s108, 1
    %p112 = scmp.eq.s32.totalorder %s11, 1
    %p113 = scmp.ne.s32.totalorder %s108, %s110
    %p114 = scmp.eq.s32.totalorder %s11, 0
    %p115 = por %p113, %p114
    %p116 = scmp.ne.s32.totalorder %s108, %s110
    %p117 = scmp.eq.s32.totalorder %s16, 1
    %p118 = por %p116, %p117
    %p119 = scmp.ne.s32.totalorder %s110, %s111
    %p120 = scmp.eq.s32.totalorder %s16, 0
    %p121 = por %p119, %p120
    %p122 = scmp.ne.s32.totalorder %s110, %s111
    %p123 = scmp.eq.s32.totalorder %s17, 1
    %p124 = por %p122, %p123
    %p126 = scmp.ne.s32.totalorder %s111, %s125
    %p127 = scmp.eq.s32.totalorder %s17, 0
    %p128 = por %p126, %p127
    %s129 = ssub.s32 %s11, %s18
    %p130 = scmp.eq.s32.totalorder %s129, 0
    %s132 = sadd.s32 %s131, 1
    %s133 = scalar_select %p130, %s131, %s132
    %p136 = pneg %p130
    %p137 = scmp.eq.s32.totalorder %s11, 1
    %p138 = por %p136, %p137
    %p139 = scmp.ne.s32.totalorder %s131, %s134
    %p140 = scmp.eq.s32.totalorder %s11, 0
    %p141 = por %p139, %p140
    %p142 = scmp.ne.s32.totalorder %s131, %s134
    %p143 = scmp.eq.s32.totalorder %s16, 1
    %p144 = por %p142, %p143
    %p145 = scmp.ne.s32.totalorder %s134, %s135
    %p146 = scmp.eq.s32.totalorder %s16, 0
    %p147 = por %p145, %p146
    %p148 = scmp.ne.s32.totalorder %s134, %s135
    %p149 = scmp.eq.s32.totalorder %s17, 1
    %p150 = por %p148, %p149
    %p152 = scmp.ne.s32.totalorder %s135, %s151
    %p153 = scmp.eq.s32.totalorder %s17, 0
    %p154 = por %p152, %p153
    %p155 = scmp.le.s32.totalorder 1, %s11
    %p156 = scmp.lt.s32.totalorder %s11, 3
    %p157 = pnand %p155, %p156
    %p158 = pneg %p157
    // Predicated region
    $region9: #{vicmae_forward.27} parent=5 // pred_check
      _
    $region10: #{vicmae_forward.27} parent=5 // pred_check_branch
      %160 = sbr.rel (%p157) target = $region12
    $region11: #{vicmae_forward.27} parent=5 // pred_region
      %s161 = ssub.s32 %s11, 1
      // Predicated region
      $region13: #{vicmae_forward.27} parent=11 // pred_check
        %p162 = pneg %p58
      $region14: #{vicmae_forward.27} parent=11 // pred_check_branch
        %164 = sbr.rel (%p162) target = $region16
      $region15: #{vicmae_forward.27} parent=11 // pred_region
        _
      $region16: #{vicmae_forward.27} parent=11 // pred_fallthru
        _
      // Predicated region
      $region17: #{vicmae_forward.27} parent=11 // pred_check
        %p165 = pneg %p79
      $region18: #{vicmae_forward.27} parent=11 // pred_check_branch
        %167 = sbr.rel (%p165) target = $region20
      $region19: #{vicmae_forward.27} parent=11 // pred_region
        _
      $region20: #{vicmae_forward.27} parent=11 // pred_fallthru
        _
      // Predicated region
      $region21: #{vicmae_forward.27} parent=11 // pred_check
        %p168 = pneg %p100
      $region22: #{vicmae_forward.27} parent=11 // pred_check_branch
        %170 = sbr.rel (%p168) target = $region24
      $region23: #{vicmae_forward.27} parent=11 // pred_region
        _
      $region24: #{vicmae_forward.27} parent=11 // pred_fallthru
        _
      // Predicated region
      $region25: #{vicmae_forward.27} parent=11 // pred_check
        %p171 = pneg %p121
      $region26: #{vicmae_forward.27} parent=11 // pred_check_branch
        %173 = sbr.rel (%p171) target = $region28
      $region27: #{vicmae_forward.27} parent=11 // pred_region
        _
      $region28: #{vicmae_forward.27} parent=11 // pred_fallthru
        _
    $region12: #{vicmae_forward.27} parent=5 // pred_fallthru
      _
    %p174 = scmp.lt.s32.totalorder %s11, 2
    // Predicated region
    $region29: #{vicmae_forward.27} parent=5 // pred_check
      %p175 = pneg %p174
    $region30: #{vicmae_forward.27} parent=5 // pred_check_branch
      %177 = sbr.rel (%p175) target = $region32
    $region31: #{vicmae_forward.27} parent=5 // pred_region
      // Predicated region
      $region33: #{vicmae_forward.27} parent=31 // pred_check
        %p178 = pneg %p31
      $region34: #{vicmae_forward.27} parent=31 // pred_check_branch
        %180 = sbr.rel (%p178) target = $region36
      $region35: #{vicmae_forward.27} parent=31 // pred_region
        %p181 = scmp.lt.s32.totalorder %s11, 1
        %s182 = scalar_select %p181, %s11, 1
        %s183 = smul.addr %s182, 3
        %s184 = smul.addr %s183, 8
        %s185 = scalar_lea.vmem %s0, %s184
      $region36: #{vicmae_forward.27} parent=31 // pred_fallthru
        _
    $region32: #{vicmae_forward.27} parent=5 // pred_fallthru
      _
    %p186 = scmp.le.s32.totalorder 1, %s11
    %p187 = scmp.lt.s32.totalorder %s11, 3
    %p188 = pnand %p186, %p187
    %p189 = pneg %p188
    // Predicated region
    $region37: #{vicmae_forward.27} parent=5 // pred_check
      _
    $region38: #{vicmae_forward.27} parent=5 // pred_check_branch
      %191 = sbr.rel (%p188) target = $region40
    $region39: #{vicmae_forward.27} parent=5 // pred_region
      %s192 = ssub.s32 %s11, 1
      %p193 = scmp.lt.s32.totalorder %s16, 1
      %s194 = scalar_select %p193, %s16, 1
      %s195 = smul.addr %s194, 3
      %s196 = smul.addr %s195, 8
      %s197 = scalar_lea.vmem %s0, %s196
      %p198 = pneg %p37
      %p199 = pneg %p34
      %p200 = pneg %p58
      %p201 = pneg %p55
      %p202 = pneg %p79
      %p203 = pneg %p76
      %p204 = pneg %p100
      %p205 = pneg %p97
      %p206 = pneg %p121
      %p207 = pneg %p118
      %p208 = pneg %p147
      %p209 = pneg %p144
      %p210 = scmp.lt.s32.totalorder %s16, 1
      %s211 = scalar_select %p210, %s16, 1
      %s212 = smul.addr %s211, 3
      %s213 = smul.addr %s212, 8
      %s214 = scalar_lea.vmem %s5, %s213
      %p215 = scmp.lt.s32.totalorder %s16, 1
      %s216 = scalar_select %p215, %s16, 1
      %s217 = smul.addr %s216, 3
      %s218 = smul.addr %s217, 8
      %s219 = scalar_lea.vmem %s0, %s218
      %p220 = scmp.lt.s32.totalorder %s16, 1
      %s221 = scalar_select %p220, %s16, 1
      %s222 = smul.addr %s221, 3
      %s223 = smul.addr %s222, 8
      %s224 = scalar_lea.vmem %s5, %s223
      %v225 = vld [vmem:[%s219] sm:$0xff]
      %v226 = vld [vmem:[%s219 + $0x8] sm:$0xff]
      %v227 = vld [vmem:[%s219 + $0x10] sm:$0x1]
      %v228 = vld [vmem:[%s1] sm:$0x1]
      %v229 = vld [vmem:[%s2] sm:$0x1]
      %vm230 = vcmask 130048
      %v231 = vsel %vm230, %v225, 0.0
      %232 = vadd.xlane.f32.xlu0 %v231
      %v233 = vpop.xlane.xlu0 %232
      %v234 = vsel %vm230, %v226, 0.0
      %235 = vadd.xlane.f32.xlu0 %v234
      %v236 = vpop.xlane.xlu0 %235
      %vm237 = vcmask 122880
      %v238 = vsel %vm237, %v227, 0.0
      %239 = vadd.xlane.f32.xlu0 %v238
      %v240 = vpop.xlane.xlu0 %239
      %v241 = vrcp.pop 16.0
      %v242 = vmul.f32 %v233, %v241
      %v243 = vmul.f32 %v236, %v241
      %v244 = vmul.f32 %v240, %v241
      %v245 = vsub.f32 %v225, %v242
      %v246 = vsub.f32 %v226, %v243
      %v247 = vsub.f32 %v227, %v244
      %v248 = vmul.f32 %v245, %v245
      %v249 = vmul.f32 %v246, %v246
      %v250 = vmul.f32 %v247, %v247
      %v251 = vsel %vm230, %v248, 0.0
      %252 = vadd.xlane.f32.xlu0 %v251
      %v253 = vpop.xlane.xlu0 %252
      %v254 = vsel %vm230, %v249, 0.0
      %255 = vadd.xlane.f32.xlu0 %v254
      %v256 = vpop.xlane.xlu0 %255
      %v257 = vsel %vm237, %v250, 0.0
      %258 = vadd.xlane.f32.xlu0 %v257
      %v259 = vpop.xlane.xlu0 %258
      %v260 = vmul.f32 %v253, %v241
      %v261 = vmul.f32 %v256, %v241
      %v262 = vmul.f32 %v259, %v241
      %v263 = vadd.f32 %v260, 1e-05
      %v264 = vadd.f32 %v261, 1e-05
      %v265 = vadd.f32 %v262, 1e-05
      %v266 = vrsqrt.pop %v263
      %v267 = vrsqrt.pop %v264
      %v268 = vrsqrt.pop %v265
      %v269 = vmul.f32 %v245, %v266
      %v270 = vmul.f32 %v246, %v267
      %v271 = vmul.f32 %v247, %v268
      %v273 = vlaneseq
      %v274 = vshrl.u32 %v273, 7
      %v275 = vsub.s32 0, %v274
      %v276 = vrot.slane %v228, %v275
      %v278 = vmul.f32 %v269, %v276
      %v279 = vmul.f32 %v270, %v276
      %v280 = vmul.f32 %v271, %v276
      %v282 = vlaneseq
      %v283 = vshrl.u32 %v282, 7
      %v284 = vsub.s32 0, %v283
      %v285 = vrot.slane %v229, %v284
      %v287 = vadd.f32 %v278, %v285
      %v288 = vadd.f32 %v279, %v285
      %v289 = vadd.f32 %v280, %v285
      %v290 = vld [vmem:[%s3] sm:$0xff]
      %v291 = vld [vmem:[%s3 + $0x8] sm:$0xff]
      %v292 = vld [vmem:[%s4] sm:$0x1]
      %v294 = vlaneseq
      %v295 = vshrl.u32 %v294, 7
      %v296 = vsub.s32 0, %v295
      %v297 = vrot.slane %v292, %v296
      %v300 = vsel %vm230, %v287, 0
      %v303 = vsel %vm230, %v288, 0
      %v306 = vsel %vm230, %v289, 0
      %308 = vmatprep.subr.mxu0 0.0
      %309 = vmatpush1.msra.mxu0 %v290
      %310 = vmatprep.subr.mxu0 0.0
      %311 = vmatpush1.msra.mxu0 %v291
      %312 = vmatprep.subr.mxu0 0.0
      %313 = vmatpush1.msra.mxu0 0.0
      %314 = vmatprep.subr.mxu0 0.0
      %315 = vmatpush1.msra.mxu0 0.0
      %316 = vmatprep.subr.mxu0 0.0
      %317 = vmatpush1.msra.mxu0 0.0
      %318 = vmatprep.subr.mxu0 0.0
      %319 = vmatpush1.msra.mxu0 0.0
      %320 = vmatprep.subr.mxu0 0.0
      %321 = vmatpush1.msra.mxu0 0.0
      %322 = vmatprep.subr.mxu0 0.0
      %323 = vmatpush1.msra.mxu0 0.0
      %324 = vmatprep.subr.mxu0 0.0
      %325 = vmatpush1.msra.mxu0 0.0
      %326 = vmatprep.subr.mxu0 0.0
      %327 = vmatpush1.msra.mxu0 0.0
      %328 = vmatprep.subr.mxu0 0.0
      %329 = vmatpush1.msra.mxu0 0.0
      %330 = vmatprep.subr.mxu0 0.0
      %331 = vmatpush1.msra.mxu0 0.0
      %332 = vmatprep.subr.mxu0 0.0
      %333 = vmatpush1.msra.mxu0 0.0
      %334 = vmatprep.subr.mxu0 0.0
      %335 = vmatpush1.msra.mxu0 0.0
      %336 = vmatprep.subr.mxu0 0.0
      %337 = vmatpush1.msra.mxu0 0.0
      %338 = vmatprep.subr.mxu0 0.0
      %339 = vmatpush1.msra.mxu0 0.0
      %340 = vmatprep.subr.mxu0 0.0
      %341 = vmatpush1.msra.mxu0 0.0
      %342 = vmatprep.subr.mxu0 0.0
      %343 = vmatpush1.msra.mxu0 0.0
      %344 = vmatprep.subr.mxu0 0.0
      %345 = vmatpush1.msra.mxu0 0.0
      %346 = vmatprep.subr.mxu0 0.0
      %347 = vmatpush1.msra.mxu0 0.0
      %348 = vmatprep.subr.mxu0 0.0
      %349 = vmatpush1.msra.mxu0 0.0
      %350 = vmatprep.subr.mxu0 0.0
      %351 = vmatpush1.msra.mxu0 0.0
      %352 = vmatprep.subr.mxu0 0.0
      %353 = vmatpush1.msra.mxu0 0.0
      %354 = vmatprep.subr.mxu0 0.0
      %355 = vmatpush1.msra.mxu0 0.0
      %356 = vmatprep.subr.mxu0 0.0
      %357 = vmatpush1.msra.mxu0 0.0
      %358 = vmatprep.subr.mxu0 0.0
      %359 = vmatpush1.msra.mxu0 0.0
      %360 = vmatprep.subr.mxu0 0.0
      %361 = vmatpush1.msra.mxu0 0.0
      %362 = vmatprep.subr.mxu0 0.0
      %363 = vmatpush1.msra.mxu0 0.0
      %364 = vmatprep.subr.mxu0 0.0
      %365 = vmatpush1.msra.mxu0 0.0
      %366 = vmatprep.subr.mxu0 0.0
      %367 = vmatpush1.msra.mxu0 0.0
      %368 = vmatprep.subr.mxu0 0.0
      %369 = vmatpush1.msra.mxu0 0.0
      %370 = vmatprep.subr.mxu0 0.0
      %371 = vmatpush1.msra.mxu0 0.0
      %372 = vmatprep.mubr.f32.mxu0 0.0
      %373 = vmatmul.mubr.f32.gmra.mrb[0].mxu0 %v300
      %v374 = vpop.f32.mrb[0].mxu0
      %v375 = vadd.f32 %v297, %v374
      %v376 = vpop.f32.mrb[0].mxu0
      %377 = vmatprep.mubr.f32.mxu0 0.0
      %378 = vmatmul.mubr.f32.gmra.mrb[0].mxu0 %v303
      %v379 = vpop.f32.mrb[0].mxu0
      %v380 = vadd.f32 %v297, %v379
      %v381 = vpop.f32.mrb[0].mxu0
      %382 = vmatprep.mubr.f32.mxu0 0.0
      %383 = vmatmul.mubr.f32.gmra.mrb[0].mxu0 %v306
      %v384 = vpop.f32.mrb[0].mxu0
      %v385 = vadd.f32 %v297, %v384
      %v386 = vpop.f32.mrb[0].mxu0
      %387 = vdwg.mxu0
      %vm388 = vcmask 392192
      %389 = vst.msk [vmem:[%s224] sm:$0xff] %vm388, %v375
      %390 = vst.msk [vmem:[%s224 + $0x8] sm:$0xff] %vm388, %v380
      %vm391 = vcmask 385024
      %392 = vst.msk [vmem:[%s224 + $0x10] sm:$0x1] %vm391, %v385
      %p393 = scmp.lt.s32.totalorder %s16, 1
      %s394 = scalar_select %p393, %s16, 1
      %s395 = smul.addr %s394, 3
      %s396 = smul.addr %s395, 8
      %s397 = scalar_lea.vmem %s5, %s396
      // Predicated region
      $region41: #{vicmae_forward.27} parent=39 // pred_check
        %p398 = pneg %p144
      $region42: #{vicmae_forward.27} parent=39 // pred_check_branch
        %400 = sbr.rel (%p398) target = $region44
      $region43: #{vicmae_forward.27} parent=39 // pred_region
        _
      $region44: #{vicmae_forward.27} parent=39 // pred_fallthru
        _
    $region40: #{vicmae_forward.27} parent=5 // pred_fallthru
      _
    %p401 = scmp.le.s32.totalorder 2, %s11
    // Predicated region
    $region45: #{vicmae_forward.27} parent=5 // pred_check
      %p402 = pneg %p401
    $region46: #{vicmae_forward.27} parent=5 // pred_check_branch
      %404 = sbr.rel (%p402) target = $region48
    $region47: #{vicmae_forward.27} parent=5 // pred_region
      %s405 = ssub.s32 %s11, 2
      // Predicated region
      $region49: #{vicmae_forward.27} parent=47 // pred_check
        %p406 = pneg %p150
      $region50: #{vicmae_forward.27} parent=47 // pred_check_branch
        %408 = sbr.rel (%p406) target = $region52
      $region51: #{vicmae_forward.27} parent=47 // pred_region
        %p409 = scmp.lt.s32.totalorder %s17, 1
        %s410 = scalar_select %p409, %s17, 1
        %s411 = smul.addr %s410, 3
        %s412 = smul.addr %s411, 8
        %s413 = scalar_lea.vmem %s5, %s412
      $region52: #{vicmae_forward.27} parent=47 // pred_fallthru
        _
    $region48: #{vicmae_forward.27} parent=5 // pred_fallthru
      _
  $region6: #{vicmae_forward.27} parent=0 // loop_footer
    %s15 = sadd.s32 1, %s11
  $region7: #{vicmae_forward.27} parent=0 // loop_footer_branch
    %10 = sbr.rel target = $region3
  $region8: #{vicmae_forward.27} parent=0 // loop_exit
    _

// kernel: vicmae_forward.26
$region0: #{vicmae_forward.26}
  #allocation0 [shape = 'u32[]', space=smem, size = 0x4, offset = 0x4, fixed_abs, tag = 'smem constant byte address 0x4 - core index']
  #allocation1 [shape = 'u32[144,128]{1,0:T(1,128)}', space=vmem, size = 0x12000, scoped, tag = 'internal scratch']
  #allocation2 [shape = 'f32[17,16]{1,0:T(8,128)}', space=vmem, size = 0x3000, scoped, tag = 'scratch operand']
  %s0 = inlined_call_operand.vmem [shape: f32[2,17,16], index: 0, kind: input, shape index: {}]
  %s1 = inlined_call_operand.vmem [shape: f32[1,16], index: 1, kind: input, shape index: {}]
  %s2 = inlined_call_operand.vmem [shape: f32[1,16], index: 2, kind: input, shape index: {}]
  %s3 = inlined_call_operand.vmem [shape: f32[16,48], index: 3, kind: input, shape index: {}]
  %s4 = inlined_call_operand.vmem [shape: f32[1,48], index: 4, kind: input, shape index: {}]
  %s5 = inlined_call_operand.vmem [shape: f32[16,16], index: 5, kind: input, shape index: {}]
  %s6 = inlined_call_operand.vmem [shape: f32[1,16], index: 6, kind: input, shape index: {}]
  %s7 = inlined_call_operand.vmem [shape: f32[1,16], index: 7, kind: input, shape index: {}]
  %s8 = inlined_call_operand.vmem [shape: f32[1,16], index: 8, kind: input, shape index: {}]
  %s9 = inlined_call_operand.vmem [shape: f32[16,64], index: 9, kind: input, shape index: {}]
  %s10 = inlined_call_operand.vmem [shape: f32[1,64], index: 10, kind: input, shape index: {}]
  %s11 = inlined_call_operand.vmem [shape: f32[64,16], index: 11, kind: input, shape index: {}]
  %s12 = inlined_call_operand.vmem [shape: f32[1,16], index: 12, kind: input, shape index: {}]
  %s13 = inlined_call_operand.vmem [shape: f32[2,17,16], index: 13, kind: output, shape index: {}]
  %s14 = sld [smem:[#allocation0]]
  $region85: #{vicmae_forward.26} parent=0
    _
  %s16 = ssub.s32 1, %s14
  %s17 = scalar_select 0, %s16, %s14
  loop: start=0, step=1, limit=4
  $region2: #{vicmae_forward.26} parent=0 // loop_pre_header
    _
  $region3: #{vicmae_forward.26} parent=0 // loop_header
    %s19 = sphi 0, %s23
    %p20 = scmp.ge.s32.totalorder %s19, 4
    %s29 = sphi 0, %s31
    %s32 = sphi 0, %s29
    %s33 = sphi 0, %s32
    %s49 = sphi 0, %s33
    %s53 = sphi 0, %s53
    %s55 = sphi 0, %s53
    %s56 = sphi 0, %s55
    %s70 = sphi 0, %s56
    %s74 = sphi 0, %s74
    %s76 = sphi 0, %s74
    %s77 = sphi 0, %s76
    %s91 = sphi 0, %s77
    %s95 = sphi 0, %s95
    %s97 = sphi 0, %s95
    %s98 = sphi 0, %s97
    %s112 = sphi 0, %s98
    %s116 = sphi 0, %s116
    %s118 = sphi 0, %s116
    %s119 = sphi 0, %s118
    %s133 = sphi 0, %s119
    %s137 = sphi 0, %s137
    %s139 = sphi 0, %s137
    %s140 = sphi 0, %s139
    %s154 = sphi 0, %s140
    %s158 = sphi 0, %s158
    %s160 = sphi 0, %s158
    %s161 = sphi 0, %s160
    %s175 = sphi 0, %s161
    %s179 = sphi 0, %s179
    %s181 = sphi 0, %s179
    %s182 = sphi 0, %s181
    %s196 = sphi 0, %s182
    %s200 = sphi 0, %s200
    %s202 = sphi 0, %s200
    %s203 = sphi 0, %s202
    %s217 = sphi 0, %s203
    %s221 = sphi 0, %s221
    %s223 = sphi 0, %s221
    %s224 = sphi 0, %s223
    %s238 = sphi 0, %s224
    %s242 = sphi 0, %s242
    %s244 = sphi 0, %s242
    %s245 = sphi 0, %s244
    %s259 = sphi 0, %s245
    %s263 = sphi 0, %s263
    %s265 = sphi 0, %s263
    %s266 = sphi 0, %s265
    %s280 = sphi 0, %s266
    %s284 = sphi 0, %s284
    %s286 = sphi 0, %s284
    %s287 = sphi 0, %s286
    %s301 = sphi 0, %s287
    %s307 = sphi 0, %s309
    %s310 = sphi 0, %s307
    %s311 = sphi 0, %s310
    %s327 = sphi 0, %s311
  $region4: #{vicmae_forward.26} parent=0 // loop_header_branch
    %22 = sbr.rel (%p20) target = $region8
  $region5: #{vicmae_forward.26} parent=0 // loop_body
    %s24 = ssub.s32 %s19, 1
    %s25 = ssub.s32 %s19, 2
    %s26 = sadd.s32 %s19, 1
    %s27 = ssub.s32 %s19, %s26
    %p28 = scmp.eq.s32.totalorder %s27, 0
    %s30 = sadd.s32 %s29, 1
    %s31 = scalar_select %p28, %s29, %s30
    %p34 = pneg %p28
    %p35 = scmp.eq.s32.totalorder %s19, 1
    %p36 = por %p34, %p35
    %p37 = scmp.ne.s32.totalorder %s29, %s32
    %p38 = scmp.eq.s32.totalorder %s19, 0
    %p39 = por %p37, %p38
    %p40 = scmp.ne.s32.totalorder %s29, %s32
    %p41 = scmp.eq.s32.totalorder %s24, 1
    %p42 = por %p40, %p41
    %p43 = scmp.ne.s32.totalorder %s32, %s33
    %p44 = scmp.eq.s32.totalorder %s24, 0
    %p45 = por %p43, %p44
    %p46 = scmp.ne.s32.totalorder %s32, %s33
    %p47 = scmp.eq.s32.totalorder %s25, 1
    %p48 = por %p46, %p47
    %p50 = scmp.ne.s32.totalorder %s33, %s49
    %p51 = scmp.eq.s32.totalorder %s25, 0
    %p52 = por %p50, %p51
    %s54 = sadd.s32 %s53, 1
    %p57 = scmp.eq.s32.totalorder %s19, 1
    %p58 = scmp.ne.s32.totalorder %s53, %s55
    %p59 = scmp.eq.s32.totalorder %s19, 0
    %p60 = por %p58, %p59
    %p61 = scmp.ne.s32.totalorder %s53, %s55
    %p62 = scmp.eq.s32.totalorder %s24, 1
    %p63 = por %p61, %p62
    %p64 = scmp.ne.s32.totalorder %s55, %s56
    %p65 = scmp.eq.s32.totalorder %s24, 0
    %p66 = por %p64, %p65
    %p67 = scmp.ne.s32.totalorder %s55, %s56
    %p68 = scmp.eq.s32.totalorder %s25, 1
    %p69 = por %p67, %p68
    %p71 = scmp.ne.s32.totalorder %s56, %s70
    %p72 = scmp.eq.s32.totalorder %s25, 0
    %p73 = por %p71, %p72
    %s75 = sadd.s32 %s74, 1
    %p78 = scmp.eq.s32.totalorder %s19, 1
    %p79 = scmp.ne.s32.totalorder %s74, %s76
    %p80 = scmp.eq.s32.totalorder %s19, 0
    %p81 = por %p79, %p80
    %p82 = scmp.ne.s32.totalorder %s74, %s76
    %p83 = scmp.eq.s32.totalorder %s24, 1
    %p84 = por %p82, %p83
    %p85 = scmp.ne.s32.totalorder %s76, %s77
    %p86 = scmp.eq.s32.totalorder %s24, 0
    %p87 = por %p85, %p86
    %p88 = scmp.ne.s32.totalorder %s76, %s77
    %p89 = scmp.eq.s32.totalorder %s25, 1
    %p90 = por %p88, %p89
    %p92 = scmp.ne.s32.totalorder %s77, %s91
    %p93 = scmp.eq.s32.totalorder %s25, 0
    %p94 = por %p92, %p93
    %s96 = sadd.s32 %s95, 1
    %p99 = scmp.eq.s32.totalorder %s19, 1
    %p100 = scmp.ne.s32.totalorder %s95, %s97
    %p101 = scmp.eq.s32.totalorder %s19, 0
    %p102 = por %p100, %p101
    %p103 = scmp.ne.s32.totalorder %s95, %s97
    %p104 = scmp.eq.s32.totalorder %s24, 1
    %p105 = por %p103, %p104
    %p106 = scmp.ne.s32.totalorder %s97, %s98
    %p107 = scmp.eq.s32.totalorder %s24, 0
    %p108 = por %p106, %p107
    %p109 = scmp.ne.s32.totalorder %s97, %s98
    %p110 = scmp.eq.s32.totalorder %s25, 1
    %p111 = por %p109, %p110
    %p113 = scmp.ne.s32.totalorder %s98, %s112
    %p114 = scmp.eq.s32.totalorder %s25, 0
    %p115 = por %p113, %p114
    %s117 = sadd.s32 %s116, 1
    %p120 = scmp.eq.s32.totalorder %s19, 1
    %p121 = scmp.ne.s32.totalorder %s116, %s118
    %p122 = scmp.eq.s32.totalorder %s19, 0
    %p123 = por %p121, %p122
    %p124 = scmp.ne.s32.totalorder %s116, %s118
    %p125 = scmp.eq.s32.totalorder %s24, 1
    %p126 = por %p124, %p125
    %p127 = scmp.ne.s32.totalorder %s118, %s119
    %p128 = scmp.eq.s32.totalorder %s24, 0
    %p129 = por %p127, %p128
    %p130 = scmp.ne.s32.totalorder %s118, %s119
    %p131 = scmp.eq.s32.totalorder %s25, 1
    %p132 = por %p130, %p131
    %p134 = scmp.ne.s32.totalorder %s119, %s133
    %p135 = scmp.eq.s32.totalorder %s25, 0
    %p136 = por %p134, %p135
    %s138 = sadd.s32 %s137, 1
    %p141 = scmp.eq.s32.totalorder %s19, 1
    %p142 = scmp.ne.s32.totalorder %s137, %s139
    %p143 = scmp.eq.s32.totalorder %s19, 0
    %p144 = por %p142, %p143
    %p145 = scmp.ne.s32.totalorder %s137, %s139
    %p146 = scmp.eq.s32.totalorder %s24, 1
    %p147 = por %p145, %p146
    %p148 = scmp.ne.s32.totalorder %s139, %s140
    %p149 = scmp.eq.s32.totalorder %s24, 0
    %p150 = por %p148, %p149
    %p151 = scmp.ne.s32.totalorder %s139, %s140
    %p152 = scmp.eq.s32.totalorder %s25, 1
    %p153 = por %p151, %p152
    %p155 = scmp.ne.s32.totalorder %s140, %s154
    %p156 = scmp.eq.s32.totalorder %s25, 0
    %p157 = por %p155, %p156
    %s159 = sadd.s32 %s158, 1
    %p162 = scmp.eq.s32.totalorder %s19, 1
    %p163 = scmp.ne.s32.totalorder %s158, %s160
    %p164 = scmp.eq.s32.totalorder %s19, 0
    %p165 = por %p163, %p164
    %p166 = scmp.ne.s32.totalorder %s158, %s160
    %p167 = scmp.eq.s32.totalorder %s24, 1
    %p168 = por %p166, %p167
    %p169 = scmp.ne.s32.totalorder %s160, %s161
    %p170 = scmp.eq.s32.totalorder %s24, 0
    %p171 = por %p169, %p170
    %p172 = scmp.ne.s32.totalorder %s160, %s161
    %p173 = scmp.eq.s32.totalorder %s25, 1
    %p174 = por %p172, %p173
    %p176 = scmp.ne.s32.totalorder %s161, %s175
    %p177 = scmp.eq.s32.totalorder %s25, 0
    %p178 = por %p176, %p177
    %s180 = sadd.s32 %s179, 1
    %p183 = scmp.eq.s32.totalorder %s19, 1
    %p184 = scmp.ne.s32.totalorder %s179, %s181
    %p185 = scmp.eq.s32.totalorder %s19, 0
    %p186 = por %p184, %p185
    %p187 = scmp.ne.s32.totalorder %s179, %s181
    %p188 = scmp.eq.s32.totalorder %s24, 1
    %p189 = por %p187, %p188
    %p190 = scmp.ne.s32.totalorder %s181, %s182
    %p191 = scmp.eq.s32.totalorder %s24, 0
    %p192 = por %p190, %p191
    %p193 = scmp.ne.s32.totalorder %s181, %s182
    %p194 = scmp.eq.s32.totalorder %s25, 1
    %p195 = por %p193, %p194
    %p197 = scmp.ne.s32.totalorder %s182, %s196
    %p198 = scmp.eq.s32.totalorder %s25, 0
    %p199 = por %p197, %p198
    %s201 = sadd.s32 %s200, 1
    %p204 = scmp.eq.s32.totalorder %s19, 1
    %p205 = scmp.ne.s32.totalorder %s200, %s202
    %p206 = scmp.eq.s32.totalorder %s19, 0
    %p207 = por %p205, %p206
    %p208 = scmp.ne.s32.totalorder %s200, %s202
    %p209 = scmp.eq.s32.totalorder %s24, 1
    %p210 = por %p208, %p209
    %p211 = scmp.ne.s32.totalorder %s202, %s203
    %p212 = scmp.eq.s32.totalorder %s24, 0
    %p213 = por %p211, %p212
    %p214 = scmp.ne.s32.totalorder %s202, %s203
    %p215 = scmp.eq.s32.totalorder %s25, 1
    %p216 = por %p214, %p215
    %p218 = scmp.ne.s32.totalorder %s203, %s217
    %p219 = scmp.eq.s32.totalorder %s25, 0
    %p220 = por %p218, %p219
    %s222 = sadd.s32 %s221, 1
    %p225 = scmp.eq.s32.totalorder %s19, 1
    %p226 = scmp.ne.s32.totalorder %s221, %s223
    %p227 = scmp.eq.s32.totalorder %s19, 0
    %p228 = por %p226, %p227
    %p229 = scmp.ne.s32.totalorder %s221, %s223
    %p230 = scmp.eq.s32.totalorder %s24, 1
    %p231 = por %p229, %p230
    %p232 = scmp.ne.s32.totalorder %s223, %s224
    %p233 = scmp.eq.s32.totalorder %s24, 0
    %p234 = por %p232, %p233
    %p235 = scmp.ne.s32.totalorder %s223, %s224
    %p236 = scmp.eq.s32.totalorder %s25, 1
    %p237 = por %p235, %p236
    %p239 = scmp.ne.s32.totalorder %s224, %s238
    %p240 = scmp.eq.s32.totalorder %s25, 0
    %p241 = por %p239, %p240
    %s243 = sadd.s32 %s242, 1
    %p246 = scmp.eq.s32.totalorder %s19, 1
    %p247 = scmp.ne.s32.totalorder %s242, %s244
    %p248 = scmp.eq.s32.totalorder %s19, 0
    %p249 = por %p247, %p248
    %p250 = scmp.ne.s32.totalorder %s242, %s244
    %p251 = scmp.eq.s32.totalorder %s24, 1
    %p252 = por %p250, %p251
    %p253 = scmp.ne.s32.totalorder %s244, %s245
    %p254 = scmp.eq.s32.totalorder %s24, 0
    %p255 = por %p253, %p254
    %p256 = scmp.ne.s32.totalorder %s244, %s245
    %p257 = scmp.eq.s32.totalorder %s25, 1
    %p258 = por %p256, %p257
    %p260 = scmp.ne.s32.totalorder %s245, %s259
    %p261 = scmp.eq.s32.totalorder %s25, 0
    %p262 = por %p260, %p261
    %s264 = sadd.s32 %s263, 1
    %p267 = scmp.eq.s32.totalorder %s19, 1
    %p268 = scmp.ne.s32.totalorder %s263, %s265
    %p269 = scmp.eq.s32.totalorder %s19, 0
    %p270 = por %p268, %p269
    %p271 = scmp.ne.s32.totalorder %s263, %s265
    %p272 = scmp.eq.s32.totalorder %s24, 1
    %p273 = por %p271, %p272
    %p274 = scmp.ne.s32.totalorder %s265, %s266
    %p275 = scmp.eq.s32.totalorder %s24, 0
    %p276 = por %p274, %p275
    %p277 = scmp.ne.s32.totalorder %s265, %s266
    %p278 = scmp.eq.s32.totalorder %s25, 1
    %p279 = por %p277, %p278
    %p281 = scmp.ne.s32.totalorder %s266, %s280
    %p282 = scmp.eq.s32.totalorder %s25, 0
    %p283 = por %p281, %p282
    %s285 = sadd.s32 %s284, 1
    %p288 = scmp.eq.s32.totalorder %s19, 1
    %p289 = scmp.ne.s32.totalorder %s284, %s286
    %p290 = scmp.eq.s32.totalorder %s19, 0
    %p291 = por %p289, %p290
    %p292 = scmp.ne.s32.totalorder %s284, %s286
    %p293 = scmp.eq.s32.totalorder %s24, 1
    %p294 = por %p292, %p293
    %p295 = scmp.ne.s32.totalorder %s286, %s287
    %p296 = scmp.eq.s32.totalorder %s24, 0
    %p297 = por %p295, %p296
    %p298 = scmp.ne.s32.totalorder %s286, %s287
    %p299 = scmp.eq.s32.totalorder %s25, 1
    %p300 = por %p298, %p299
    %p302 = scmp.ne.s32.totalorder %s287, %s301
    %p303 = scmp.eq.s32.totalorder %s25, 0
    %p304 = por %p302, %p303
    %s305 = ssub.s32 %s19, %s26
    %p306 = scmp.eq.s32.totalorder %s305, 0
    %s308 = sadd.s32 %s307, 1
    %s309 = scalar_select %p306, %s307, %s308
    %p312 = pneg %p306
    %p313 = scmp.eq.s32.totalorder %s19, 1
    %p314 = por %p312, %p313
    %p315 = scmp.ne.s32.totalorder %s307, %s310
    %p316 = scmp.eq.s32.totalorder %s19, 0
    %p317 = por %p315, %p316
    %p318 = scmp.ne.s32.totalorder %s307, %s310
    %p319 = scmp.eq.s32.totalorder %s24, 1
    %p320 = por %p318, %p319
    %p321 = scmp.ne.s32.totalorder %s310, %s311
    %p322 = scmp.eq.s32.totalorder %s24, 0
    %p323 = por %p321, %p322
    %p324 = scmp.ne.s32.totalorder %s310, %s311
    %p325 = scmp.eq.s32.totalorder %s25, 1
    %p326 = por %p324, %p325
    %p328 = scmp.ne.s32.totalorder %s311, %s327
    %p329 = scmp.eq.s32.totalorder %s25, 0
    %p330 = por %p328, %p329
    %p331 = scmp.le.s32.totalorder 1, %s19
    %p332 = scmp.lt.s32.totalorder %s19, 3
    %p333 = pnand %p331, %p332
    %p334 = pneg %p333
    // Predicated region
    $region9: #{vicmae_forward.26} parent=5 // pred_check
      _
    $region10: #{vicmae_forward.26} parent=5 // pred_check_branch
      %336 = sbr.rel (%p333) target = $region12
    $region11: #{vicmae_forward.26} parent=5 // pred_region
      %s337 = ssub.s32 %s19, 1
      // Predicated region
      $region13: #{vicmae_forward.26} parent=11 // pred_check
        %p338 = pneg %p66
      $region14: #{vicmae_forward.26} parent=11 // pred_check_branch
        %340 = sbr.rel (%p338) target = $region16
      $region15: #{vicmae_forward.26} parent=11 // pred_region
        _
      $region16: #{vicmae_forward.26} parent=11 // pred_fallthru
        _
      // Predicated region
      $region17: #{vicmae_forward.26} parent=11 // pred_check
        %p341 = pneg %p87
      $region18: #{vicmae_forward.26} parent=11 // pred_check_branch
        %343 = sbr.rel (%p341) target = $region20
      $region19: #{vicmae_forward.26} parent=11 // pred_region
        _
      $region20: #{vicmae_forward.26} parent=11 // pred_fallthru
        _
      // Predicated region
      $region21: #{vicmae_forward.26} parent=11 // pred_check
        %p344 = pneg %p108
      $region22: #{vicmae_forward.26} parent=11 // pred_check_branch
        %346 = sbr.rel (%p344) target = $region24
      $region23: #{vicmae_forward.26} parent=11 // pred_region
        _
      $region24: #{vicmae_forward.26} parent=11 // pred_fallthru
        _
      // Predicated region
      $region25: #{vicmae_forward.26} parent=11 // pred_check
        %p347 = pneg %p129
      $region26: #{vicmae_forward.26} parent=11 // pred_check_branch
        %349 = sbr.rel (%p347) target = $region28
      $region27: #{vicmae_forward.26} parent=11 // pred_region
        _
      $region28: #{vicmae_forward.26} parent=11 // pred_fallthru
        _
      // Predicated region
      $region29: #{vicmae_forward.26} parent=11 // pred_check
        %p350 = pneg %p150
      $region30: #{vicmae_forward.26} parent=11 // pred_check_branch
        %352 = sbr.rel (%p350) target = $region32
      $region31: #{vicmae_forward.26} parent=11 // pred_region
        _
      $region32: #{vicmae_forward.26} parent=11 // pred_fallthru
        _
      // Predicated region
      $region33: #{vicmae_forward.26} parent=11 // pred_check
        %p353 = pneg %p171
      $region34: #{vicmae_forward.26} parent=11 // pred_check_branch
        %355 = sbr.rel (%p353) target = $region36
      $region35: #{vicmae_forward.26} parent=11 // pred_region
        _
      $region36: #{vicmae_forward.26} parent=11 // pred_fallthru
        _
      // Predicated region
      $region37: #{vicmae_forward.26} parent=11 // pred_check
        %p356 = pneg %p192
      $region38: #{vicmae_forward.26} parent=11 // pred_check_branch
        %358 = sbr.rel (%p356) target = $region40
      $region39: #{vicmae_forward.26} parent=11 // pred_region
        _
      $region40: #{vicmae_forward.26} parent=11 // pred_fallthru
        _
      // Predicated region
      $region41: #{vicmae_forward.26} parent=11 // pred_check
        %p359 = pneg %p213
      $region42: #{vicmae_forward.26} parent=11 // pred_check_branch
        %361 = sbr.rel (%p359) target = $region44
      $region43: #{vicmae_forward.26} parent=11 // pred_region
        _
      $region44: #{vicmae_forward.26} parent=11 // pred_fallthru
        _
      // Predicated region
      $region45: #{vicmae_forward.26} parent=11 // pred_check
        %p362 = pneg %p234
      $region46: #{vicmae_forward.26} parent=11 // pred_check_branch
        %364 = sbr.rel (%p362) target = $region48
      $region47: #{vicmae_forward.26} parent=11 // pred_region
        _
      $region48: #{vicmae_forward.26} parent=11 // pred_fallthru
        _
      // Predicated region
      $region49: #{vicmae_forward.26} parent=11 // pred_check
        %p365 = pneg %p255
      $region50: #{vicmae_forward.26} parent=11 // pred_check_branch
        %367 = sbr.rel (%p365) target = $region52
      $region51: #{vicmae_forward.26} parent=11 // pred_region
        _
      $region52: #{vicmae_forward.26} parent=11 // pred_fallthru
        _
      // Predicated region
      $region53: #{vicmae_forward.26} parent=11 // pred_check
        %p368 = pneg %p276
      $region54: #{vicmae_forward.26} parent=11 // pred_check_branch
        %370 = sbr.rel (%p368) target = $region56
      $region55: #{vicmae_forward.26} parent=11 // pred_region
        _
      $region56: #{vicmae_forward.26} parent=11 // pred_fallthru
        _
      // Predicated region
      $region57: #{vicmae_forward.26} parent=11 // pred_check
        %p371 = pneg %p297
      $region58: #{vicmae_forward.26} parent=11 // pred_check_branch
        %373 = sbr.rel (%p371) target = $region60
      $region59: #{vicmae_forward.26} parent=11 // pred_region
        _
      $region60: #{vicmae_forward.26} parent=11 // pred_fallthru
        _
    $region12: #{vicmae_forward.26} parent=5 // pred_fallthru
      _
    %p374 = scmp.lt.s32.totalorder %s19, 2
    // Predicated region
    $region61: #{vicmae_forward.26} parent=5 // pred_check
      %p375 = pneg %p374
    $region62: #{vicmae_forward.26} parent=5 // pred_check_branch
      %377 = sbr.rel (%p375) target = $region64
    $region63: #{vicmae_forward.26} parent=5 // pred_region
      // Predicated region
      $region65: #{vicmae_forward.26} parent=63 // pred_check
        %p378 = pneg %p39
      $region66: #{vicmae_forward.26} parent=63 // pred_check_branch
        %380 = sbr.rel (%p378) target = $region68
      $region67: #{vicmae_forward.26} parent=63 // pred_region
        %p381 = scmp.lt.s32.totalorder %s19, 1
        %s382 = scalar_select %p381, %s19, 1
        %s383 = smul.addr %s382, 3
        %s384 = smul.addr %s383, 8
        %s385 = scalar_lea.vmem %s0, %s384
      $region68: #{vicmae_forward.26} parent=63 // pred_fallthru
        _
    $region64: #{vicmae_forward.26} parent=5 // pred_fallthru
      _
    %p386 = scmp.le.s32.totalorder 1, %s19
    %p387 = scmp.lt.s32.totalorder %s19, 3
    %p388 = pnand %p386, %p387
    %p389 = pneg %p388
    // Predicated region
    $region69: #{vicmae_forward.26} parent=5 // pred_check
      _
    $region70: #{vicmae_forward.26} parent=5 // pred_check_branch
      %391 = sbr.rel (%p388) target = $region72
    $region71: #{vicmae_forward.26} parent=5 // pred_region
      %s392 = ssub.s32 %s19, 1
      %p393 = scmp.lt.s32.totalorder %s24, 1
      %s394 = scalar_select %p393, %s24, 1
      %s395 = smul.addr %s394, 3
      %s396 = smul.addr %s395, 8
      %s397 = scalar_lea.vmem %s0, %s396
      %p398 = pneg %p45
      %p399 = pneg %p42
      %p400 = pneg %p66
      %p401 = pneg %p63
      %p402 = pneg %p87
      %p403 = pneg %p84
      %p404 = pneg %p108
      %p405 = pneg %p105
      %p406 = pneg %p129
      %p407 = pneg %p126
      %p408 = pneg %p150
      %p409 = pneg %p147
      %p410 = pneg %p171
      %p411 = pneg %p168
      %p412 = pneg %p192
      %p413 = pneg %p189
      %p414 = pneg %p213
      %p415 = pneg %p210
      %p416 = pneg %p234
      %p417 = pneg %p231
      %p418 = pneg %p255
      %p419 = pneg %p252
      %p420 = pneg %p276
      %p421 = pneg %p273
      %p422 = pneg %p297
      %p423 = pneg %p294
      %p424 = pneg %p323
      %p425 = pneg %p320
      %p426 = scmp.lt.s32.totalorder %s24, 1
      %s427 = scalar_select %p426, %s24, 1
      %s428 = smul.addr %s427, 3
      %s429 = smul.addr %s428, 8
      %s430 = scalar_lea.vmem %s13, %s429
      %p431 = scmp.lt.s32.totalorder %s24, 1
      %s432 = scalar_select %p431, %s24, 1
      %s433 = smul.addr %s432, 3
      %s434 = smul.addr %s433, 8
      %s435 = scalar_lea.vmem %s0, %s434
      %p436 = scmp.lt.s32.totalorder %s24, 1
      %s437 = scalar_select %p436, %s24, 1
      %s438 = smul.addr %s437, 3
      %s439 = smul.addr %s438, 8
      %s440 = scalar_lea.vmem %s13, %s439
      %v441 = vld [vmem:[%s435] sm:$0xff]
      %v442 = vld [vmem:[%s435 + $0x8] sm:$0xff]
      %v443 = vld [vmem:[%s435 + $0x10] sm:$0x1]
      %v444 = vld [vmem:[%s1] sm:$0x1]
      %v445 = vld [vmem:[%s2] sm:$0x1]
      %vm446 = vcmask 130048
      %v447 = vsel %vm446, %v441, 0.0
      %448 = vadd.xlane.f32.xlu0 %v447
      %v449 = vpop.xlane.xlu0 %448
      %v450 = vsel %vm446, %v442, 0.0
      %451 = vadd.xlane.f32.xlu0 %v450
      %v452 = vpop.xlane.xlu0 %451
      %vm453 = vcmask 122880
      %v454 = vsel %vm453, %v443, 0.0
      %455 = vadd.xlane.f32.xlu0 %v454
      %v456 = vpop.xlane.xlu0 %455
      %v457 = vrcp.pop 16.0
      %v458 = vmul.f32 %v449, %v457
      %v459 = vmul.f32 %v452, %v457
      %v460 = vmul.f32 %v456, %v457
      %v461 = vsub.f32 %v441, %v458
      %v462 = vsub.f32 %v442, %v459
      %v463 = vsub.f32 %v443, %v460
      %v464 = vmul.f32 %v461, %v461
      %v465 = vmul.f32 %v462, %v462
      %v466 = vmul.f32 %v463, %v463
      %v467 = vsel %vm446, %v464, 0.0
      %468 = vadd.xlane.f32.xlu0 %v467
      %v469 = vpop.xlane.xlu0 %468
      %v470 = vsel %vm446, %v465, 0.0
      %471 = vadd.xlane.f32.xlu0 %v470
      %v472 = vpop.xlane.xlu0 %471
      %v473 = vsel %vm453, %v466, 0.0
      %474 = vadd.xlane.f32.xlu0 %v473
      %v475 = vpop.xlane.xlu0 %474
      %v476 = vmul.f32 %v469, %v457
      %v477 = vmul.f32 %v472, %v457
      %v478 = vmul.f32 %v475, %v457
      %v479 = vadd.f32 %v476, 1e-05
      %v480 = vadd.f32 %v477, 1e-05
      %v481 = vadd.f32 %v478, 1e-05
      %v482 = vrsqrt.pop %v479
      %v483 = vrsqrt.pop %v480
      %v484 = vrsqrt.pop %v481
      %v485 = vmul.f32 %v461, %v482
      %v486 = vmul.f32 %v462, %v483
      %v487 = vmul.f32 %v463, %v484
      %v489 = vlaneseq
      %v490 = vshrl.u32 %v489, 7
      %v491 = vsub.s32 0, %v490
      %v492 = vrot.slane %v444, %v491
      %v494 = vmul.f32 %v485, %v492
      %v495 = vmul.f32 %v486, %v492
      %v496 = vmul.f32 %v487, %v492
      %v498 = vlaneseq
      %v499 = vshrl.u32 %v498, 7
      %v500 = vsub.s32 0, %v499
      %v501 = vrot.slane %v445, %v500
      %v503 = vadd.f32 %v494, %v501
      %v504 = vadd.f32 %v495, %v501
      %v505 = vadd.f32 %v496, %v501
      %v506 = vld [vmem:[%s3] sm:$0xff]
      %v507 = vld [vmem:[%s3 + $0x8] sm:$0xff]
      %v508 = vld [vmem:[%s4] sm:$0x1]
      %v510 = vlaneseq
      %v511 = vshrl.u32 %v510, 7
      %v512 = vsub.s32 0, %v511
      %v513 = vrot.slane %v508, %v512
      %v516 = vsel %vm446, %v503, 0
      %v519 = vsel %vm446, %v504, 0
      %v522 = vsel %vm446, %v505, 0
      %524 = vmatprep.subr.mxu0 0.0
      %525 = vmatpush1.msra.mxu0 %v506
      %526 = vmatprep.subr.mxu0 0.0
      %527 = vmatpush1.msra.mxu0 %v507
      %528 = vmatprep.subr.mxu0 0.0
      %529 = vmatpush1.msra.mxu0 0.0
      %530 = vmatprep.subr.mxu0 0.0
      %531 = vmatpush1.msra.mxu0 0.0
      %532 = vmatprep.subr.mxu0 0.0
      %533 = vmatpush1.msra.mxu0 0.0
      %534 = vmatprep.subr.mxu0 0.0
      %535 = vmatpush1.msra.mxu0 0.0
      %536 = vmatprep.subr.mxu0 0.0
      %537 = vmatpush1.msra.mxu0 0.0
      %538 = vmatprep.subr.mxu0 0.0
      %539 = vmatpush1.msra.mxu0 0.0
      %540 = vmatprep.subr.mxu0 0.0
      %541 = vmatpush1.msra.mxu0 0.0
      %542 = vmatprep.subr.mxu0 0.0
      %543 = vmatpush1.msra.mxu0 0.0
      %544 = vmatprep.subr.mxu0 0.0
      %545 = vmatpush1.msra.mxu0 0.0
      %546 = vmatprep.subr.mxu0 0.0
      %547 = vmatpush1.msra.mxu0 0.0
      %548 = vmatprep.subr.mxu0 0.0
      %549 = vmatpush1.msra.mxu0 0.0
      %550 = vmatprep.subr.mxu0 0.0
      %551 = vmatpush1.msra.mxu0 0.0
      %552 = vmatprep.subr.mxu0 0.0
      %553 = vmatpush1.msra.mxu0 0.0
      %554 = vmatprep.subr.mxu0 0.0
      %555 = vmatpush1.msra.mxu0 0.0
      %556 = vmatprep.subr.mxu0 0.0
      %557 = vmatpush1.msra.mxu0 0.0
      %558 = vmatprep.subr.mxu0 0.0
      %559 = vmatpush1.msra.mxu0 0.0
      %560 = vmatprep.subr.mxu0 0.0
      %561 = vmatpush1.msra.mxu0 0.0
      %562 = vmatprep.subr.mxu0 0.0
      %563 = vmatpush1.msra.mxu0 0.0
      %564 = vmatprep.subr.mxu0 0.0
      %565 = vmatpush1.msra.mxu0 0.0
      %566 = vmatprep.subr.mxu0 0.0
      %567 = vmatpush1.msra.mxu0 0.0
      %568 = vmatprep.subr.mxu0 0.0
      %569 = vmatpush1.msra.mxu0 0.0
      %570 = vmatprep.subr.mxu0 0.0
      %571 = vmatpush1.msra.mxu0 0.0
      %572 = vmatprep.subr.mxu0 0.0
      %573 = vmatpush1.msra.mxu0 0.0
      %574 = vmatprep.subr.mxu0 0.0
      %575 = vmatpush1.msra.mxu0 0.0
      %576 = vmatprep.subr.mxu0 0.0
      %577 = vmatpush1.msra.mxu0 0.0
      %578 = vmatprep.subr.mxu0 0.0
      %579 = vmatpush1.msra.mxu0 0.0
      %580 = vmatprep.subr.mxu0 0.0
      %581 = vmatpush1.msra.mxu0 0.0
      %582 = vmatprep.subr.mxu0 0.0
      %583 = vmatpush1.msra.mxu0 0.0
      %584 = vmatprep.subr.mxu0 0.0
      %585 = vmatpush1.msra.mxu0 0.0
      %586 = vmatprep.subr.mxu0 0.0
      %587 = vmatpush1.msra.mxu0 0.0
      %588 = vmatprep.mubr.f32.mxu0 0.0
      %589 = vmatmul.mubr.f32.gmra.mrb[0].mxu0 %v516
      %v590 = vpop.f32.mrb[0].mxu0
      %v591 = vadd.f32 %v513, %v590
      %v592 = vpop.f32.mrb[0].mxu0
      %593 = vmatprep.mubr.f32.mxu0 0.0
      %594 = vmatmul.mubr.f32.gmra.mrb[0].mxu0 %v519
      %v595 = vpop.f32.mrb[0].mxu0
      %v596 = vadd.f32 %v513, %v595
      %v597 = vpop.f32.mrb[0].mxu0
      %598 = vmatprep.mubr.f32.mxu0 0.0
      %599 = vmatmul.mubr.f32.gmra.mrb[0].mxu0 %v522
      %v600 = vpop.f32.mrb[0].mxu0
      %v601 = vadd.f32 %v513, %v600
      %v602 = vpop.f32.mrb[0].mxu0
      %603 = vdwg.mxu0
      %607 = vrot.lane.b32.xlu0 %v591, 112
      %v608 = vpop.permute.xlu0 %607
      %609 = vrot.lane.b32.xlu0 %v596, 112
      %v610 = vpop.permute.xlu0 %609
      %611 = vrot.lane.b32.xlu0 %v601, 112
      %v612 = vpop.permute.xlu0 %611
      %vm613 = vcmask 31744
      %v614 = vsel %vm613, %v591, 0
      %v616 = vsel %vm613, %v596, 0
      %v618 = vsel %vm613, %v601, 0
      %v620 = vsel %vm613, %v608, 0
      %v622 = vsel %vm613, %v610, 0
      %v624 = vsel %vm613, %v612, 0
      %626 = vmatprep.subr.mxu0 0.0
      %627 = vmatpush1.xpose.msra.mxu0 %v620
      %628 = vmatprep.subr.mxu0 0.0
      %629 = vmatpush1.xpose.msra.mxu0 %v622
      %630 = vmatprep.subr.mxu0 0.0
      %631 = vmatpush1.xpose.msra.mxu0 %v624
      %632 = vmatprep.subr.mxu0 0.0
      %633 = vmatpush1.xpose.msra.mxu0 0.0
      %634 = vmatprep.subr.mxu0 0.0
      %635 = vmatpush1.xpose.msra.mxu0 0.0
      %636 = vmatprep.subr.mxu0 0.0
      %637 = vmatpush1.xpose.msra.mxu0 0.0
      %638 = vmatprep.subr.mxu0 0.0
      %639 = vmatpush1.xpose.msra.mxu0 0.0
      %640 = vmatprep.subr.mxu0 0.0
      %641 = vmatpush1.xpose.msra.mxu0 0.0
      %642 = vmatprep.subr.mxu0 0.0
      %643 = vmatpush1.xpose.msra.mxu0 0.0
      %644 = vmatprep.subr.mxu0 0.0
      %645 = vmatpush1.xpose.msra.mxu0 0.0
      %646 = vmatprep.subr.mxu0 0.0
      %647 = vmatpush1.xpose.msra.mxu0 0.0
      %648 = vmatprep.subr.mxu0 0.0
      %649 = vmatpush1.xpose.msra.mxu0 0.0
      %650 = vmatprep.subr.mxu0 0.0
      %651 = vmatpush1.xpose.msra.mxu0 0.0
      %652 = vmatprep.subr.mxu0 0.0
      %653 = vmatpush1.xpose.msra.mxu0 0.0
      %654 = vmatprep.subr.mxu0 0.0
      %655 = vmatpush1.xpose.msra.mxu0 0.0
      %656 = vmatprep.subr.mxu0 0.0
      %657 = vmatpush1.xpose.msra.mxu0 0.0
      %658 = vmatprep.subr.mxu0 0.0
      %659 = vmatpush1.xpose.msra.mxu0 0.0
      %660 = vmatprep.subr.mxu0 0.0
      %661 = vmatpush1.xpose.msra.mxu0 0.0
      %662 = vmatprep.subr.mxu0 0.0
      %663 = vmatpush1.xpose.msra.mxu0 0.0
      %664 = vmatprep.subr.mxu0 0.0
      %665 = vmatpush1.xpose.msra.mxu0 0.0
      %666 = vmatprep.subr.mxu0 0.0
      %667 = vmatpush1.xpose.msra.mxu0 0.0
      %668 = vmatprep.subr.mxu0 0.0
      %669 = vmatpush1.xpose.msra.mxu0 0.0
      %670 = vmatprep.subr.mxu0 0.0
      %671 = vmatpush1.xpose.msra.mxu0 0.0
      %672 = vmatprep.subr.mxu0 0.0
      %673 = vmatpush1.xpose.msra.mxu0 0.0
      %674 = vmatprep.subr.mxu0 0.0
      %675 = vmatpush1.xpose.msra.mxu0 0.0
      %676 = vmatprep.subr.mxu0 0.0
      %677 = vmatpush1.xpose.msra.mxu0 0.0
      %678 = vmatprep.subr.mxu0 0.0
      %679 = vmatpush1.xpose.msra.mxu0 0.0
      %680 = vmatprep.subr.mxu0 0.0
      %681 = vmatpush1.xpose.msra.mxu0 0.0
      %682 = vmatprep.subr.mxu0 0.0
      %683 = vmatpush1.xpose.msra.mxu0 0.0
      %684 = vmatprep.subr.mxu0 0.0
      %685 = vmatpush1.xpose.msra.mxu0 0.0
      %686 = vmatprep.subr.mxu0 0.0
      %687 = vmatpush1.xpose.msra.mxu0 0.0
      %688 = vmatprep.subr.mxu0 0.0
      %689 = vmatpush1.xpose.msra.mxu0 0.0
      %690 = vmatprep.mubr.f32.mxu0 0.0
      %691 = vmatmul.mubr.f32.gmra.mrb[0].mxu0 %v614
      %v692 = vpop.f32.mrb[0].mxu0
      %v693 = vadd.f32 0.0, %v692
      %v694 = vpop.f32.mrb[0].mxu0
      %695 = vmatprep.mubr.f32.mxu0 0.0
      %696 = vmatmul.mubr.f32.gmra.mrb[0].mxu0 %v616
      %v697 = vpop.f32.mrb[0].mxu0
      %v698 = vadd.f32 0.0, %v697
      %v699 = vpop.f32.mrb[0].mxu0
      %700 = vmatprep.mubr.f32.mxu0 0.0
      %701 = vmatmul.mubr.f32.gmra.mrb[0].mxu0 %v618
      %v702 = vpop.f32.mrb[0].mxu0
      %v703 = vadd.f32 0.0, %v702
      %v704 = vpop.f32.mrb[0].mxu0
      %705 = vdwg.mxu0
      %v706 = vmul.f32 %v693, 0.5
      %v707 = vmul.f32 %v698, 0.5
      %v708 = vmul.f32 %v703, 0.5
      %vm709 = vcmask 138240
      %v710 = vsel %vm709, %v706, -inf
      %711 = vmax.xlane.f32.xlu0 %v710
      %v712 = vpop.xlane.xlu0 %711
      %v713 = vsel %vm709, %v707, -inf
      %714 = vmax.xlane.f32.xlu0 %v713
      %v715 = vpop.xlane.xlu0 %714
      %vm716 = vcmask 131072
      %v717 = vsel %vm716, %v708, -inf
      %718 = vmax.xlane.f32.xlu0 %v717
      %v719 = vpop.xlane.xlu0 %718
      %v720 = vsub.f32 %v706, %v712
      %v721 = vsub.f32 %v707, %v715
      %v722 = vsub.f32 %v708, %v719
      %v723 = vmul.f32 %v720, 1.442695
      %v724 = vpow.pop %v723
      %v725 = vmul.f32 %v721, 1.442695
      %v726 = vpow.pop %v725
      %v727 = vmul.f32 %v722, 1.442695
      %v728 = vpow.pop %v727
      %v729 = vsel %vm709, %v724, 0.0
      %730 = vadd.xlane.f32.xlu0 %v729
      %v731 = vpop.xlane.xlu0 %730
      %v732 = vsel %vm709, %v726, 0.0
      %733 = vadd.xlane.f32.xlu0 %v732
      %v734 = vpop.xlane.xlu0 %733
      %v735 = vsel %vm716, %v728, 0.0
      %736 = vadd.xlane.f32.xlu0 %v735
      %v737 = vpop.xlane.xlu0 %736
      %v738 = vrcp.pop %v731
      %v739 = vrcp.pop %v734
      %v740 = vrcp.pop %v737
      %v741 = vmul.f32 %v724, %v738
      %v742 = vmul.f32 %v726, %v739
      %v743 = vmul.f32 %v728, %v740
      %744 = vrot.lane.b32.xlu0 %v591, 96
      %v745 = vpop.permute.xlu0 %744
      %746 = vrot.lane.b32.xlu0 %v596, 96
      %v747 = vpop.permute.xlu0 %746
      %748 = vrot.lane.b32.xlu0 %v601, 96
      %v749 = vpop.permute.xlu0 %748
      %v753 = vsel %vm709, %v741, 0
      %v756 = vsel %vm709, %v742, 0
      %v759 = vsel %vm709, %v743, 0
      %vm761 = vcmask 1040384
      %v762 = vsel %vm761, %v749, 0
      %764 = vmatprep.subr.mxu0 0.0
      %765 = vmatpush1.msra.mxu0 %v745
      %766 = vmatprep.subr.mxu0 0.0
      %767 = vmatpush1.msra.mxu0 %v747
      %768 = vmatprep.subr.mxu0 0.0
      %769 = vmatpush1.msra.mxu0 %v762
      %770 = vmatprep.subr.mxu0 0.0
      %771 = vmatpush1.msra.mxu0 0.0
      %772 = vmatprep.subr.mxu0 0.0
      %773 = vmatpush1.msra.mxu0 0.0
      %774 = vmatprep.subr.mxu0 0.0
      %775 = vmatpush1.msra.mxu0 0.0
      %776 = vmatprep.subr.mxu0 0.0
      %777 = vmatpush1.msra.mxu0 0.0
      %778 = vmatprep.subr.mxu0 0.0
      %779 = vmatpush1.msra.mxu0 0.0
      %780 = vmatprep.subr.mxu0 0.0
      %781 = vmatpush1.msra.mxu0 0.0
      %782 = vmatprep.subr.mxu0 0.0
      %783 = vmatpush1.msra.mxu0 0.0
      %784 = vmatprep.subr.mxu0 0.0
      %785 = vmatpush1.msra.mxu0 0.0
      %786 = vmatprep.subr.mxu0 0.0
      %787 = vmatpush1.msra.mxu0 0.0
      %788 = vmatprep.subr.mxu0 0.0
      %789 = vmatpush1.msra.mxu0 0.0
      %790 = vmatprep.subr.mxu0 0.0
      %791 = vmatpush1.msra.mxu0 0.0
      %792 = vmatprep.subr.mxu0 0.0
      %793 = vmatpush1.msra.mxu0 0.0
      %794 = vmatprep.subr.mxu0 0.0
      %795 = vmatpush1.msra.mxu0 0.0
      %796 = vmatprep.subr.mxu0 0.0
      %797 = vmatpush1.msra.mxu0 0.0
      %798 = vmatprep.subr.mxu0 0.0
      %799 = vmatpush1.msra.mxu0 0.0
      %800 = vmatprep.subr.mxu0 0.0
      %801 = vmatpush1.msra.mxu0 0.0
      %802 = vmatprep.subr.mxu0 0.0
      %803 = vmatpush1.msra.mxu0 0.0
      %804 = vmatprep.subr.mxu0 0.0
      %805 = vmatpush1.msra.mxu0 0.0
      %806 = vmatprep.subr.mxu0 0.0
      %807 = vmatpush1.msra.mxu0 0.0
      %808 = vmatprep.subr.mxu0 0.0
      %809 = vmatpush1.msra.mxu0 0.0
      %810 = vmatprep.subr.mxu0 0.0
      %811 = vmatpush1.msra.mxu0 0.0
      %812 = vmatprep.subr.mxu0 0.0
      %813 = vmatpush1.msra.mxu0 0.0
      %814 = vmatprep.subr.mxu0 0.0
      %815 = vmatpush1.msra.mxu0 0.0
      %816 = vmatprep.subr.mxu0 0.0
      %817 = vmatpush1.msra.mxu0 0.0
      %818 = vmatprep.subr.mxu0 0.0
      %819 = vmatpush1.msra.mxu0 0.0
      %820 = vmatprep.subr.mxu0 0.0
      %821 = vmatpush1.msra.mxu0 0.0
      %822 = vmatprep.subr.mxu0 0.0
      %823 = vmatpush1.msra.mxu0 0.0
      %824 = vmatprep.subr.mxu0 0.0
      %825 = vmatpush1.msra.mxu0 0.0
      %826 = vmatprep.subr.mxu0 0.0
      %827 = vmatpush1.msra.mxu0 0.0
      %828 = vmatprep.mubr.f32.mxu0 0.0
      %829 = vmatmul.mubr.f32.gmra.mrb[0].mxu0 %v753
      %v830 = vpop.f32.mrb[0].mxu0
      %v831 = vadd.f32 0.0, %v830
      %v832 = vpop.f32.mrb[0].mxu0
      %833 = vmatprep.mubr.f32.mxu0 0.0
      %834 = vmatmul.mubr.f32.gmra.mrb[0].mxu0 %v756
      %v835 = vpop.f32.mrb[0].mxu0
      %v836 = vadd.f32 0.0, %v835
      %v837 = vpop.f32.mrb[0].mxu0
      %838 = vmatprep.mubr.f32.mxu0 0.0
      %839 = vmatmul.mubr.f32.gmra.mrb[0].mxu0 %v759
      %v840 = vpop.f32.mrb[0].mxu0
      %v841 = vadd.f32 0.0, %v840
      %v842 = vpop.f32.mrb[0].mxu0
      %843 = vdwg.mxu0
      %844 = vst.msk [vmem:[#allocation2] sm:$0xff] %vm613, %v831
      %845 = vst.msk [vmem:[#allocation2 + $0x8] sm:$0xff] %vm613, %v836
      %vm846 = vcmask 24576
      %847 = vst.msk [vmem:[#allocation2 + $0x10] sm:$0x1] %vm846, %v841
      %848 = vrot.lane.b32.xlu0 %v591, 124
      %v849 = vpop.permute.xlu0 %848
      %850 = vrot.lane.b32.xlu0 %v596, 124
      %v851 = vpop.permute.xlu0 %850
      %852 = vrot.lane.b32.xlu0 %v601, 124
      %v853 = vpop.permute.xlu0 %852
      %854 = vrot.lane.b32.xlu0 %v591, 108
      %v855 = vpop.permute.xlu0 %854
      %856 = vrot.lane.b32.xlu0 %v596, 108
      %v857 = vpop.permute.xlu0 %856
      %858 = vrot.lane.b32.xlu0 %v601, 108
      %v859 = vpop.permute.xlu0 %858
      %v860 = vsel %vm613, %v849, 0
      %v862 = vsel %vm613, %v851, 0
      %v864 = vsel %vm613, %v853, 0
      %v866 = vsel %vm613, %v855, 0
      %v868 = vsel %vm613, %v857, 0
      %v870 = vsel %vm613, %v859, 0
      %872 = vmatprep.subr.mxu0 0.0
      %873 = vmatpush1.xpose.msra.mxu0 %v866
      %874 = vmatprep.subr.mxu0 0.0
      %875 = vmatpush1.xpose.msra.mxu0 %v868
      %876 = vmatprep.subr.mxu0 0.0
      %877 = vmatpush1.xpose.msra.mxu0 %v870
      %878 = vmatprep.subr.mxu0 0.0
      %879 = vmatpush1.xpose.msra.mxu0 0.0
      %880 = vmatprep.subr.mxu0 0.0
      %881 = vmatpush1.xpose.msra.mxu0 0.0
      %882 = vmatprep.subr.mxu0 0.0
      %883 = vmatpush1.xpose.msra.mxu0 0.0
      %884 = vmatprep.subr.mxu0 0.0
      %885 = vmatpush1.xpose.msra.mxu0 0.0
      %886 = vmatprep.subr.mxu0 0.0
      %887 = vmatpush1.xpose.msra.mxu0 0.0
      %888 = vmatprep.subr.mxu0 0.0
      %889 = vmatpush1.xpose.msra.mxu0 0.0
      %890 = vmatprep.subr.mxu0 0.0
      %891 = vmatpush1.xpose.msra.mxu0 0.0
      %892 = vmatprep.subr.mxu0 0.0
      %893 = vmatpush1.xpose.msra.mxu0 0.0
      %894 = vmatprep.subr.mxu0 0.0
      %895 = vmatpush1.xpose.msra.mxu0 0.0
      %896 = vmatprep.subr.mxu0 0.0
      %897 = vmatpush1.xpose.msra.mxu0 0.0
      %898 = vmatprep.subr.mxu0 0.0
      %899 = vmatpush1.xpose.msra.mxu0 0.0
      %900 = vmatprep.subr.mxu0 0.0
      %901 = vmatpush1.xpose.msra.mxu0 0.0
      %902 = vmatprep.subr.mxu0 0.0
      %903 = vmatpush1.xpose.msra.mxu0 0.0
      %904 = vmatprep.subr.mxu0 0.0
      %905 = vmatpush1.xpose.msra.mxu0 0.0
      %906 = vmatprep.subr.mxu0 0.0
      %907 = vmatpush1.xpose.msra.mxu0 0.0
      %908 = vmatprep.subr.mxu0 0.0
      %909 = vmatpush1.xpose.msra.mxu0 0.0
      %910 = vmatprep.subr.mxu0 0.0
      %911 = vmatpush1.xpose.msra.mxu0 0.0
      %912 = vmatprep.subr.mxu0 0.0
      %913 = vmatpush1.xpose.msra.mxu0 0.0
      %914 = vmatprep.subr.mxu0 0.0
      %915 = vmatpush1.xpose.msra.mxu0 0.0
      %916 = vmatprep.subr.mxu0 0.0
      %917 = vmatpush1.xpose.msra.mxu0 0.0
      %918 = vmatprep.subr.mxu0 0.0
      %919 = vmatpush1.xpose.msra.mxu0 0.0
      %920 = vmatprep.subr.mxu0 0.0
      %921 = vmatpush1.xpose.msra.mxu0 0.0
      %922 = vmatprep.subr.mxu0 0.0
      %923 = vmatpush1.xpose.msra.mxu0 0.0
      %924 = vmatprep.subr.mxu0 0.0
      %925 = vmatpush1.xpose.msra.mxu0 0.0
      %926 = vmatprep.subr.mxu0 0.0
      %927 = vmatpush1.xpose.msra.mxu0 0.0
      %928 = vmatprep.subr.mxu0 0.0
      %929 = vmatpush1.xpose.msra.mxu0 0.0
      %930 = vmatprep.subr.mxu0 0.0
      %931 = vmatpush1.xpose.msra.mxu0 0.0
      %932 = vmatprep.subr.mxu0 0.0
      %933 = vmatpush1.xpose.msra.mxu0 0.0
      %934 = vmatprep.subr.mxu0 0.0
      %935 = vmatpush1.xpose.msra.mxu0 0.0
      %936 = vmatprep.mubr.f32.mxu0 0.0
      %937 = vmatmul.mubr.f32.gmra.mrb[0].mxu0 %v860
      %v938 = vpop.f32.mrb[0].mxu0
      %v939 = vadd.f32 0.0, %v938
      %v940 = vpop.f32.mrb[0].mxu0
      %941 = vmatprep.mubr.f32.mxu0 0.0
      %942 = vmatmul.mubr.f32.gmra.mrb[0].mxu0 %v862
      %v943 = vpop.f32.mrb[0].mxu0
      %v944 = vadd.f32 0.0, %v943
      %v945 = vpop.f32.mrb[0].mxu0
      %946 = vmatprep.mubr.f32.mxu0 0.0
      %947 = vmatmul.mubr.f32.gmra.mrb[0].mxu0 %v864
      %v948 = vpop.f32.mrb[0].mxu0
      %v949 = vadd.f32 0.0, %v948
      %v950 = vpop.f32.mrb[0].mxu0
      %951 = vdwg.mxu0
      %v952 = vmul.f32 %v939, 0.5
      %v953 = vmul.f32 %v944, 0.5
      %v954 = vmul.f32 %v949, 0.5
      %v955 = vsel %vm709, %v952, -inf
      %956 = vmax.xlane.f32.xlu0 %v955
      %v957 = vpop.xlane.xlu0 %956
      %v958 = vsel %vm709, %v953, -inf
      %959 = vmax.xlane.f32.xlu0 %v958
      %v960 = vpop.xlane.xlu0 %959
      %v961 = vsel %vm716, %v954, -inf
      %962 = vmax.xlane.f32.xlu0 %v961
      %v963 = vpop.xlane.xlu0 %962
      %v964 = vsub.f32 %v952, %v957
      %v965 = vsub.f32 %v953, %v960
      %v966 = vsub.f32 %v954, %v963
      %v967 = vmul.f32 %v964, 1.442695
      %v968 = vpow.pop %v967
      %v969 = vmul.f32 %v965, 1.442695
      %v970 = vpow.pop %v969
      %v971 = vmul.f32 %v966, 1.442695
      %v972 = vpow.pop %v971
      %v973 = vsel %vm709, %v968, 0.0
      %974 = vadd.xlane.f32.xlu0 %v973
      %v975 = vpop.xlane.xlu0 %974
      %v976 = vsel %vm709, %v970, 0.0
      %977 = vadd.xlane.f32.xlu0 %v976
      %v978 = vpop.xlane.xlu0 %977
      %v979 = vsel %vm716, %v972, 0.0
      %980 = vadd.xlane.f32.xlu0 %v979
      %v981 = vpop.xlane.xlu0 %980
      %v982 = vrcp.pop %v975
      %v983 = vrcp.pop %v978
      %v984 = vrcp.pop %v981
      %v985 = vmul.f32 %v968, %v982
      %v986 = vmul.f32 %v970, %v983
      %v987 = vmul.f32 %v972, %v984
      %988 = vrot.lane.b32.xlu0 %v591, 92
      %v989 = vpop.permute.xlu0 %988
      %990 = vrot.lane.b32.xlu0 %v596, 92
      %v991 = vpop.permute.xlu0 %990
      %992 = vrot.lane.b32.xlu0 %v601, 92
      %v993 = vpop.permute.xlu0 %992
      %v997 = vsel %vm709, %v985, 0
      %v1000 = vsel %vm709, %v986, 0
      %v1003 = vsel %vm709, %v987, 0
      %v1005 = vsel %vm761, %v993, 0
      %1007 = vmatprep.subr.mxu0 0.0
      %1008 = vmatpush1.msra.mxu0 %v989
      %1009 = vmatprep.subr.mxu0 0.0
      %1010 = vmatpush1.msra.mxu0 %v991
      %1011 = vmatprep.subr.mxu0 0.0
      %1012 = vmatpush1.msra.mxu0 %v1005
      %1013 = vmatprep.subr.mxu0 0.0
      %1014 = vmatpush1.msra.mxu0 0.0
      %1015 = vmatprep.subr.mxu0 0.0
      %1016 = vmatpush1.msra.mxu0 0.0
      %1017 = vmatprep.subr.mxu0 0.0
      %1018 = vmatpush1.msra.mxu0 0.0
      %1019 = vmatprep.subr.mxu0 0.0
      %1020 = vmatpush1.msra.mxu0 0.0
      %1021 = vmatprep.subr.mxu0 0.0
      %1022 = vmatpush1.msra.mxu0 0.0
      %1023 = vmatprep.subr.mxu0 0.0
      %1024 = vmatpush1.msra.mxu0 0.0
      %1025 = vmatprep.subr.mxu0 0.0
      %1026 = vmatpush1.msra.mxu0 0.0
      %1027 = vmatprep.subr.mxu0 0.0
      %1028 = vmatpush1.msra.mxu0 0.0
      %1029 = vmatprep.subr.mxu0 0.0
      %1030 = vmatpush1.msra.mxu0 0.0
      %1031 = vmatprep.subr.mxu0 0.0
      %1032 = vmatpush1.msra.mxu0 0.0
      %1033 = vmatprep.subr.mxu0 0.0
      %1034 = vmatpush1.msra.mxu0 0.0
      %1035 = vmatprep.subr.mxu0 0.0
      %1036 = vmatpush1.msra.mxu0 0.0
      %1037 = vmatprep.subr.mxu0 0.0
      %1038 = vmatpush1.msra.mxu0 0.0
      %1039 = vmatprep.subr.mxu0 0.0
      %1040 = vmatpush1.msra.mxu0 0.0
      %1041 = vmatprep.subr.mxu0 0.0
      %1042 = vmatpush1.msra.mxu0 0.0
      %1043 = vmatprep.subr.mxu0 0.0
      %1044 = vmatpush1.msra.mxu0 0.0
      %1045 = vmatprep.subr.mxu0 0.0
      %1046 = vmatpush1.msra.mxu0 0.0
      %1047 = vmatprep.subr.mxu0 0.0
      %1048 = vmatpush1.msra.mxu0 0.0
      %1049 = vmatprep.subr.mxu0 0.0
      %1050 = vmatpush1.msra.mxu0 0.0
      %1051 = vmatprep.subr.mxu0 0.0
      %1052 = vmatpush1.msra.mxu0 0.0
      %1053 = vmatprep.subr.mxu0 0.0
      %1054 = vmatpush1.msra.mxu0 0.0
      %1055 = vmatprep.subr.mxu0 0.0
      %1056 = vmatpush1.msra.mxu0 0.0
      %1057 = vmatprep.subr.mxu0 0.0
      %1058 = vmatpush1.msra.mxu0 0.0
      %1059 = vmatprep.subr.mxu0 0.0
      %1060 = vmatpush1.msra.mxu0 0.0
      %1061 = vmatprep.subr.mxu0 0.0
      %1062 = vmatpush1.msra.mxu0 0.0
      %1063 = vmatprep.subr.mxu0 0.0
      %1064 = vmatpush1.msra.mxu0 0.0
      %1065 = vmatprep.subr.mxu0 0.0
      %1066 = vmatpush1.msra.mxu0 0.0
      %1067 = vmatprep.subr.mxu0 0.0
      %1068 = vmatpush1.msra.mxu0 0.0
      %1069 = vmatprep.subr.mxu0 0.0
      %1070 = vmatpush1.msra.mxu0 0.0
      %1071 = vmatprep.mubr.f32.mxu0 0.0
      %1072 = vmatmul.mubr.f32.gmra.mrb[0].mxu0 %v997
      %v1073 = vpop.f32.mrb[0].mxu0
      %v1074 = vadd.f32 0.0, %v1073
      %v1075 = vpop.f32.mrb[0].mxu0
      %1076 = vmatprep.mubr.f32.mxu0 0.0
      %1077 = vmatmul.mubr.f32.gmra.mrb[0].mxu0 %v1000
      %v1078 = vpop.f32.mrb[0].mxu0
      %v1079 = vadd.f32 0.0, %v1078
      %v1080 = vpop.f32.mrb[0].mxu0
      %1081 = vmatprep.mubr.f32.mxu0 0.0
      %1082 = vmatmul.mubr.f32.gmra.mrb[0].mxu0 %v1003
      %v1083 = vpop.f32.mrb[0].mxu0
      %v1084 = vadd.f32 0.0, %v1083
      %v1085 = vpop.f32.mrb[0].mxu0
      %1086 = vdwg.mxu0
      %1090 = vrot.lane.b32.xlu0 %v1074, 4
      %v1091 = vpop.permute.xlu0 %1090
      %1092 = vrot.lane.b32.xlu0 %v1079, 4
      %v1093 = vpop.permute.xlu0 %1092
      %1094 = vrot.lane.b32.xlu0 %v1084, 4
      %v1095 = vpop.permute.xlu0 %1094
      %vm1099 = vcmask 64544
      %1100 = vst.msk [vmem:[#allocation2] sm:$0xff] %vm1099, %v1091
      %1101 = vst.msk [vmem:[#allocation2 + $0x8] sm:$0xff] %vm1099, %v1093
      %vm1102 = vcmask 57376
      %1103 = vst.msk [vmem:[#allocation2 + $0x10] sm:$0x1] %vm1102, %v1095
      %1104 = vrot.lane.b32.xlu0 %v591, 120
      %v1105 = vpop.permute.xlu0 %1104
      %1106 = vrot.lane.b32.xlu0 %v596, 120
      %v1107 = vpop.permute.xlu0 %1106
      %1108 = vrot.lane.b32.xlu0 %v601, 120
      %v1109 = vpop.permute.xlu0 %1108
      %1110 = vrot.lane.b32.xlu0 %v591, 104
      %v1111 = vpop.permute.xlu0 %1110
      %1112 = vrot.lane.b32.xlu0 %v596, 104
      %v1113 = vpop.permute.xlu0 %1112
      %1114 = vrot.lane.b32.xlu0 %v601, 104
      %v1115 = vpop.permute.xlu0 %1114
      %v1116 = vsel %vm613, %v1105, 0
      %v1118 = vsel %vm613, %v1107, 0
      %v1120 = vsel %vm613, %v1109, 0
      %v1122 = vsel %vm613, %v1111, 0
      %v1124 = vsel %vm613, %v1113, 0
      %v1126 = vsel %vm613, %v1115, 0
      %1128 = vmatprep.subr.mxu0 0.0
      %1129 = vmatpush1.xpose.msra.mxu0 %v1122
      %1130 = vmatprep.subr.mxu0 0.0
      %1131 = vmatpush1.xpose.msra.mxu0 %v1124
      %1132 = vmatprep.subr.mxu0 0.0
      %1133 = vmatpush1.xpose.msra.mxu0 %v1126
      %1134 = vmatprep.subr.mxu0 0.0
      %1135 = vmatpush1.xpose.msra.mxu0 0.0
      %1136 = vmatprep.subr.mxu0 0.0
      %1137 = vmatpush1.xpose.msra.mxu0 0.0
      %1138 = vmatprep.subr.mxu0 0.0
      %1139 = vmatpush1.xpose.msra.mxu0 0.0
      %1140 = vmatprep.subr.mxu0 0.0
      %1141 = vmatpush1.xpose.msra.mxu0 0.0
      %1142 = vmatprep.subr.mxu0 0.0
      %1143 = vmatpush1.xpose.msra.mxu0 0.0
      %1144 = vmatprep.subr.mxu0 0.0
      %1145 = vmatpush1.xpose.msra.mxu0 0.0
      %1146 = vmatprep.subr.mxu0 0.0
      %1147 = vmatpush1.xpose.msra.mxu0 0.0
      %1148 = vmatprep.subr.mxu0 0.0
      %1149 = vmatpush1.xpose.msra.mxu0 0.0
      %1150 = vmatprep.subr.mxu0 0.0
      %1151 = vmatpush1.xpose.msra.mxu0 0.0
      %1152 = vmatprep.subr.mxu0 0.0
      %1153 = vmatpush1.xpose.msra.mxu0 0.0
      %1154 = vmatprep.subr.mxu0 0.0
      %1155 = vmatpush1.xpose.msra.mxu0 0.0
      %1156 = vmatprep.subr.mxu0 0.0
      %1157 = vmatpush1.xpose.msra.mxu0 0.0
      %1158 = vmatprep.subr.mxu0 0.0
      %1159 = vmatpush1.xpose.msra.mxu0 0.0
      %1160 = vmatprep.subr.mxu0 0.0
      %1161 = vmatpush1.xpose.msra.mxu0 0.0
      %1162 = vmatprep.subr.mxu0 0.0
      %1163 = vmatpush1.xpose.msra.mxu0 0.0
      %1164 = vmatprep.subr.mxu0 0.0
      %1165 = vmatpush1.xpose.msra.mxu0 0.0
      %1166 = vmatprep.subr.mxu0 0.0
      %1167 = vmatpush1.xpose.msra.mxu0 0.0
      %1168 = vmatprep.subr.mxu0 0.0
      %1169 = vmatpush1.xpose.msra.mxu0 0.0
      %1170 = vmatprep.subr.mxu0 0.0
      %1171 = vmatpush1.xpose.msra.mxu0 0.0
      %1172 = vmatprep.subr.mxu0 0.0
      %1173 = vmatpush1.xpose.msra.mxu0 0.0
      %1174 = vmatprep.subr.mxu0 0.0
      %1175 = vmatpush1.xpose.msra.mxu0 0.0
      %1176 = vmatprep.subr.mxu0 0.0
      %1177 = vmatpush1.xpose.msra.mxu0 0.0
      %1178 = vmatprep.subr.mxu0 0.0
      %1179 = vmatpush1.xpose.msra.mxu0 0.0
      %1180 = vmatprep.subr.mxu0 0.0
      %1181 = vmatpush1.xpose.msra.mxu0 0.0
      %1182 = vmatprep.subr.mxu0 0.0
      %1183 = vmatpush1.xpose.msra.mxu0 0.0
      %1184 = vmatprep.subr.mxu0 0.0
      %1185 = vmatpush1.xpose.msra.mxu0 0.0
      %1186 = vmatprep.subr.mxu0 0.0
      %1187 = vmatpush1.xpose.msra.mxu0 0.0
      %1188 = vmatprep.subr.mxu0 0.0
      %1189 = vmatpush1.xpose.msra.mxu0 0.0
      %1190 = vmatprep.subr.mxu0 0.0
      %1191 = vmatpush1.xpose.msra.mxu0 0.0
      %1192 = vmatprep.mubr.f32.mxu0 0.0
      %1193 = vmatmul.mubr.f32.gmra.mrb[0].mxu0 %v1116
      %v1194 = vpop.f32.mrb[0].mxu0
      %v1195 = vadd.f32 0.0, %v1194
      %v1196 = vpop.f32.mrb[0].mxu0
      %1197 = vmatprep.mubr.f32.mxu0 0.0
      %1198 = vmatmul.mubr.f32.gmra.mrb[0].mxu0 %v1118
      %v1199 = vpop.f32.mrb[0].mxu0
      %v1200 = vadd.f32 0.0, %v1199
      %v1201 = vpop.f32.mrb[0].mxu0
      %1202 = vmatprep.mubr.f32.mxu0 0.0
      %1203 = vmatmul.mubr.f32.gmra.mrb[0].mxu0 %v1120
      %v1204 = vpop.f32.mrb[0].mxu0
      %v1205 = vadd.f32 0.0, %v1204
      %v1206 = vpop.f32.mrb[0].mxu0
      %1207 = vdwg.mxu0
      %v1208 = vmul.f32 %v1195, 0.5
      %v1209 = vmul.f32 %v1200, 0.5
      %v1210 = vmul.f32 %v1205, 0.5
      %v1211 = vsel %vm709, %v1208, -inf
      %1212 = vmax.xlane.f32.xlu0 %v1211
      %v1213 = vpop.xlane.xlu0 %1212
      %v1214 = vsel %vm709, %v1209, -inf
      %1215 = vmax.xlane.f32.xlu0 %v1214
      %v1216 = vpop.xlane.xlu0 %1215
      %v1217 = vsel %vm716, %v1210, -inf
      %1218 = vmax.xlane.f32.xlu0 %v1217
      %v1219 = vpop.xlane.xlu0 %1218
      %v1220 = vsub.f32 %v1208, %v1213
      %v1221 = vsub.f32 %v1209, %v1216
      %v1222 = vsub.f32 %v1210, %v1219
      %v1223 = vmul.f32 %v1220, 1.442695
      %v1224 = vpow.pop %v1223
      %v1225 = vmul.f32 %v1221, 1.442695
      %v1226 = vpow.pop %v1225
      %v1227 = vmul.f32 %v1222, 1.442695
      %v1228 = vpow.pop %v1227
      %v1229 = vsel %vm709, %v1224, 0.0
      %1230 = vadd.xlane.f32.xlu0 %v1229
      %v1231 = vpop.xlane.xlu0 %1230
      %v1232 = vsel %vm709, %v1226, 0.0
      %1233 = vadd.xlane.f32.xlu0 %v1232
      %v1234 = vpop.xlane.xlu0 %1233
      %v1235 = vsel %vm716, %v1228, 0.0
      %1236 = vadd.xlane.f32.xlu0 %v1235
      %v1237 = vpop.xlane.xlu0 %1236
      %v1238 = vrcp.pop %v1231
      %v1239 = vrcp.pop %v1234
      %v1240 = vrcp.pop %v1237
      %v1241 = vmul.f32 %v1224, %v1238
      %v1242 = vmul.f32 %v1226, %v1239
      %v1243 = vmul.f32 %v1228, %v1240
      %1244 = vrot.lane.b32.xlu0 %v591, 88
      %v1245 = vpop.permute.xlu0 %1244
      %1246 = vrot.lane.b32.xlu0 %v596, 88
      %v1247 = vpop.permute.xlu0 %1246
      %1248 = vrot.lane.b32.xlu0 %v601, 88
      %v1249 = vpop.permute.xlu0 %1248
      %v1253 = vsel %vm709, %v1241, 0
      %v1256 = vsel %vm709, %v1242, 0
      %v1259 = vsel %vm709, %v1243, 0
      %v1261 = vsel %vm761, %v1249, 0
      %1263 = vmatprep.subr.mxu0 0.0
      %1264 = vmatpush1.msra.mxu0 %v1245
      %1265 = vmatprep.subr.mxu0 0.0
      %1266 = vmatpush1.msra.mxu0 %v1247
      %1267 = vmatprep.subr.mxu0 0.0
      %1268 = vmatpush1.msra.mxu0 %v1261
      %1269 = vmatprep.subr.mxu0 0.0
      %1270 = vmatpush1.msra.mxu0 0.0
      %1271 = vmatprep.subr.mxu0 0.0
      %1272 = vmatpush1.msra.mxu0 0.0
      %1273 = vmatprep.subr.mxu0 0.0
      %1274 = vmatpush1.msra.mxu0 0.0
      %1275 = vmatprep.subr.mxu0 0.0
      %1276 = vmatpush1.msra.mxu0 0.0
      %1277 = vmatprep.subr.mxu0 0.0
      %1278 = vmatpush1.msra.mxu0 0.0
      %1279 = vmatprep.subr.mxu0 0.0
      %1280 = vmatpush1.msra.mxu0 0.0
      %1281 = vmatprep.subr.mxu0 0.0
      %1282 = vmatpush1.msra.mxu0 0.0
      %1283 = vmatprep.subr.mxu0 0.0
      %1284 = vmatpush1.msra.mxu0 0.0
      %1285 = vmatprep.subr.mxu0 0.0
      %1286 = vmatpush1.msra.mxu0 0.0
      %1287 = vmatprep.subr.mxu0 0.0
      %1288 = vmatpush1.msra.mxu0 0.0
      %1289 = vmatprep.subr.mxu0 0.0
      %1290 = vmatpush1.msra.mxu0 0.0
      %1291 = vmatprep.subr.mxu0 0.0
      %1292 = vmatpush1.msra.mxu0 0.0
      %1293 = vmatprep.subr.mxu0 0.0
      %1294 = vmatpush1.msra.mxu0 0.0
      %1295 = vmatprep.subr.mxu0 0.0
      %1296 = vmatpush1.msra.mxu0 0.0
      %1297 = vmatprep.subr.mxu0 0.0
      %1298 = vmatpush1.msra.mxu0 0.0
      %1299 = vmatprep.subr.mxu0 0.0
      %1300 = vmatpush1.msra.mxu0 0.0
      %1301 = vmatprep.subr.mxu0 0.0
      %1302 = vmatpush1.msra.mxu0 0.0
      %1303 = vmatprep.subr.mxu0 0.0
      %1304 = vmatpush1.msra.mxu0 0.0
      %1305 = vmatprep.subr.mxu0 0.0
      %1306 = vmatpush1.msra.mxu0 0.0
      %1307 = vmatprep.subr.mxu0 0.0
      %1308 = vmatpush1.msra.mxu0 0.0
      %1309 = vmatprep.subr.mxu0 0.0
      %1310 = vmatpush1.msra.mxu0 0.0
      %1311 = vmatprep.subr.mxu0 0.0
      %1312 = vmatpush1.msra.mxu0 0.0
      %1313 = vmatprep.subr.mxu0 0.0
      %1314 = vmatpush1.msra.mxu0 0.0
      %1315 = vmatprep.subr.mxu0 0.0
      %1316 = vmatpush1.msra.mxu0 0.0
      %1317 = vmatprep.subr.mxu0 0.0
      %1318 = vmatpush1.msra.mxu0 0.0
      %1319 = vmatprep.subr.mxu0 0.0
      %1320 = vmatpush1.msra.mxu0 0.0
      %1321 = vmatprep.subr.mxu0 0.0
      %1322 = vmatpush1.msra.mxu0 0.0
      %1323 = vmatprep.subr.mxu0 0.0
      %1324 = vmatpush1.msra.mxu0 0.0
      %1325 = vmatprep.subr.mxu0 0.0
      %1326 = vmatpush1.msra.mxu0 0.0
      %1327 = vmatprep.mubr.f32.mxu0 0.0
      %1328 = vmatmul.mubr.f32.gmra.mrb[0].mxu0 %v1253
      %v1329 = vpop.f32.mrb[0].mxu0
      %v1330 = vadd.f32 0.0, %v1329
      %v1331 = vpop.f32.mrb[0].mxu0
      %1332 = vmatprep.mubr.f32.mxu0 0.0
      %1333 = vmatmul.mubr.f32.gmra.mrb[0].mxu0 %v1256
      %v1334 = vpop.f32.mrb[0].mxu0
      %v1335 = vadd.f32 0.0, %v1334
      %v1336 = vpop.f32.mrb[0].mxu0
      %1337 = vmatprep.mubr.f32.mxu0 0.0
      %1338 = vmatmul.mubr.f32.gmra.mrb[0].mxu0 %v1259
      %v1339 = vpop.f32.mrb[0].mxu0
      %v1340 = vadd.f32 0.0, %v1339
      %v1341 = vpop.f32.mrb[0].mxu0
      %1342 = vdwg.mxu0
      %1346 = vrot.lane.b32.xlu0 %v1330, 8
      %v1347 = vpop.permute.xlu0 %1346
      %1348 = vrot.lane.b32.xlu0 %v1335, 8
      %v1349 = vpop.permute.xlu0 %1348
      %1350 = vrot.lane.b32.xlu0 %v1340, 8
      %v1351 = vpop.permute.xlu0 %1350
      %vm1355 = vcmask 97344
      %1356 = vst.msk [vmem:[#allocation2] sm:$0xff] %vm1355, %v1347
      %1357 = vst.msk [vmem:[#allocation2 + $0x8] sm:$0xff] %vm1355, %v1349
      %vm1358 = vcmask 90176
      %1359 = vst.msk [vmem:[#allocation2 + $0x10] sm:$0x1] %vm1358, %v1351
      %1360 = vrot.lane.b32.xlu0 %v591, 116
      %v1361 = vpop.permute.xlu0 %1360
      %1362 = vrot.lane.b32.xlu0 %v596, 116
      %v1363 = vpop.permute.xlu0 %1362
      %1364 = vrot.lane.b32.xlu0 %v601, 116
      %v1365 = vpop.permute.xlu0 %1364
      %1366 = vrot.lane.b32.xlu0 %v591, 100
      %v1367 = vpop.permute.xlu0 %1366
      %1368 = vrot.lane.b32.xlu0 %v596, 100
      %v1369 = vpop.permute.xlu0 %1368
      %1370 = vrot.lane.b32.xlu0 %v601, 100
      %v1371 = vpop.permute.xlu0 %1370
      %v1372 = vsel %vm613, %v1361, 0
      %v1374 = vsel %vm613, %v1363, 0
      %v1376 = vsel %vm613, %v1365, 0
      %v1378 = vsel %vm613, %v1367, 0
      %v1380 = vsel %vm613, %v1369, 0
      %v1382 = vsel %vm613, %v1371, 0
      %1384 = vmatprep.subr.mxu0 0.0
      %1385 = vmatpush1.xpose.msra.mxu0 %v1378
      %1386 = vmatprep.subr.mxu0 0.0
      %1387 = vmatpush1.xpose.msra.mxu0 %v1380
      %1388 = vmatprep.subr.mxu0 0.0
      %1389 = vmatpush1.xpose.msra.mxu0 %v1382
      %1390 = vmatprep.subr.mxu0 0.0
      %1391 = vmatpush1.xpose.msra.mxu0 0.0
      %1392 = vmatprep.subr.mxu0 0.0
      %1393 = vmatpush1.xpose.msra.mxu0 0.0
      %1394 = vmatprep.subr.mxu0 0.0
      %1395 = vmatpush1.xpose.msra.mxu0 0.0
      %1396 = vmatprep.subr.mxu0 0.0
      %1397 = vmatpush1.xpose.msra.mxu0 0.0
      %1398 = vmatprep.subr.mxu0 0.0
      %1399 = vmatpush1.xpose.msra.mxu0 0.0
      %1400 = vmatprep.subr.mxu0 0.0
      %1401 = vmatpush1.xpose.msra.mxu0 0.0
      %1402 = vmatprep.subr.mxu0 0.0
      %1403 = vmatpush1.xpose.msra.mxu0 0.0
      %1404 = vmatprep.subr.mxu0 0.0
      %1405 = vmatpush1.xpose.msra.mxu0 0.0
      %1406 = vmatprep.subr.mxu0 0.0
      %1407 = vmatpush1.xpose.msra.mxu0 0.0
      %1408 = vmatprep.subr.mxu0 0.0
      %1409 = vmatpush1.xpose.msra.mxu0 0.0
      %1410 = vmatprep.subr.mxu0 0.0
      %1411 = vmatpush1.xpose.msra.mxu0 0.0
      %1412 = vmatprep.subr.mxu0 0.0
      %1413 = vmatpush1.xpose.msra.mxu0 0.0
      %1414 = vmatprep.subr.mxu0 0.0
      %1415 = vmatpush1.xpose.msra.mxu0 0.0
      %1416 = vmatprep.subr.mxu0 0.0
      %1417 = vmatpush1.xpose.msra.mxu0 0.0
      %1418 = vmatprep.subr.mxu0 0.0
      %1419 = vmatpush1.xpose.msra.mxu0 0.0
      %1420 = vmatprep.subr.mxu0 0.0
      %1421 = vmatpush1.xpose.msra.mxu0 0.0
      %1422 = vmatprep.subr.mxu0 0.0
      %1423 = vmatpush1.xpose.msra.mxu0 0.0
      %1424 = vmatprep.subr.mxu0 0.0
      %1425 = vmatpush1.xpose.msra.mxu0 0.0
      %1426 = vmatprep.subr.mxu0 0.0
      %1427 = vmatpush1.xpose.msra.mxu0 0.0
      %1428 = vmatprep.subr.mxu0 0.0
      %1429 = vmatpush1.xpose.msra.mxu0 0.0
      %1430 = vmatprep.subr.mxu0 0.0
      %1431 = vmatpush1.xpose.msra.mxu0 0.0
      %1432 = vmatprep.subr.mxu0 0.0
      %1433 = vmatpush1.xpose.msra.mxu0 0.0
      %1434 = vmatprep.subr.mxu0 0.0
      %1435 = vmatpush1.xpose.msra.mxu0 0.0
      %1436 = vmatprep.subr.mxu0 0.0
      %1437 = vmatpush1.xpose.msra.mxu0 0.0
      %1438 = vmatprep.subr.mxu0 0.0
      %1439 = vmatpush1.xpose.msra.mxu0 0.0
      %1440 = vmatprep.subr.mxu0 0.0
      %1441 = vmatpush1.xpose.msra.mxu0 0.0
      %1442 = vmatprep.subr.mxu0 0.0
      %1443 = vmatpush1.xpose.msra.mxu0 0.0
      %1444 = vmatprep.subr.mxu0 0.0
      %1445 = vmatpush1.xpose.msra.mxu0 0.0
      %1446 = vmatprep.subr.mxu0 0.0
      %1447 = vmatpush1.xpose.msra.mxu0 0.0
      %1448 = vmatprep.mubr.f32.mxu0 0.0
      %1449 = vmatmul.mubr.f32.gmra.mrb[0].mxu0 %v1372
      %v1450 = vpop.f32.mrb[0].mxu0
      %v1451 = vadd.f32 0.0, %v1450
      %v1452 = vpop.f32.mrb[0].mxu0
      %1453 = vmatprep.mubr.f32.mxu0 0.0
      %1454 = vmatmul.mubr.f32.gmra.mrb[0].mxu0 %v1374
      %v1455 = vpop.f32.mrb[0].mxu0
      %v1456 = vadd.f32 0.0, %v1455
      %v1457 = vpop.f32.mrb[0].mxu0
      %1458 = vmatprep.mubr.f32.mxu0 0.0
      %1459 = vmatmul.mubr.f32.gmra.mrb[0].mxu0 %v1376
      %v1460 = vpop.f32.mrb[0].mxu0
      %v1461 = vadd.f32 0.0, %v1460
      %v1462 = vpop.f32.mrb[0].mxu0
      %1463 = vdwg.mxu0
      %v1464 = vmul.f32 %v1451, 0.5
      %v1465 = vmul.f32 %v1456, 0.5
      %v1466 = vmul.f32 %v1461, 0.5
      %v1467 = vsel %vm709, %v1464, -inf
      %1468 = vmax.xlane.f32.xlu0 %v1467
      %v1469 = vpop.xlane.xlu0 %1468
      %v1470 = vsel %vm709, %v1465, -inf
      %1471 = vmax.xlane.f32.xlu0 %v1470
      %v1472 = vpop.xlane.xlu0 %1471
      %v1473 = vsel %vm716, %v1466, -inf
      %1474 = vmax.xlane.f32.xlu0 %v1473
      %v1475 = vpop.xlane.xlu0 %1474
      %v1476 = vsub.f32 %v1464, %v1469
      %v1477 = vsub.f32 %v1465, %v1472
      %v1478 = vsub.f32 %v1466, %v1475
      %v1479 = vmul.f32 %v1476, 1.442695
      %v1480 = vpow.pop %v1479
      %v1481 = vmul.f32 %v1477, 1.442695
      %v1482 = vpow.pop %v1481
      %v1483 = vmul.f32 %v1478, 1.442695
      %v1484 = vpow.pop %v1483
      %v1485 = vsel %vm709, %v1480, 0.0
      %1486 = vadd.xlane.f32.xlu0 %v1485
      %v1487 = vpop.xlane.xlu0 %1486
      %v1488 = vsel %vm709, %v1482, 0.0
      %1489 = vadd.xlane.f32.xlu0 %v1488
      %v1490 = vpop.xlane.xlu0 %1489
      %v1491 = vsel %vm716, %v1484, 0.0
      %1492 = vadd.xlane.f32.xlu0 %v1491
      %v1493 = vpop.xlane.xlu0 %1492
      %v1494 = vrcp.pop %v1487
      %v1495 = vrcp.pop %v1490
      %v1496 = vrcp.pop %v1493
      %v1497 = vmul.f32 %v1480, %v1494
      %v1498 = vmul.f32 %v1482, %v1495
      %v1499 = vmul.f32 %v1484, %v1496
      %1500 = vrot.lane.b32.xlu0 %v591, 84
      %v1501 = vpop.permute.xlu0 %1500
      %1502 = vrot.lane.b32.xlu0 %v596, 84
      %v1503 = vpop.permute.xlu0 %1502
      %1504 = vrot.lane.b32.xlu0 %v601, 84
      %v1505 = vpop.permute.xlu0 %1504
      %v1509 = vsel %vm709, %v1497, 0
      %v1512 = vsel %vm709, %v1498, 0
      %v1515 = vsel %vm709, %v1499, 0
      %v1517 = vsel %vm761, %v1505, 0
      %1519 = vmatprep.subr.mxu0 0.0
      %1520 = vmatpush1.msra.mxu0 %v1501
      %1521 = vmatprep.subr.mxu0 0.0
      %1522 = vmatpush1.msra.mxu0 %v1503
      %1523 = vmatprep.subr.mxu0 0.0
      %1524 = vmatpush1.msra.mxu0 %v1517
      %1525 = vmatprep.subr.mxu0 0.0
      %1526 = vmatpush1.msra.mxu0 0.0
      %1527 = vmatprep.subr.mxu0 0.0
      %1528 = vmatpush1.msra.mxu0 0.0
      %1529 = vmatprep.subr.mxu0 0.0
      %1530 = vmatpush1.msra.mxu0 0.0
      %1531 = vmatprep.subr.mxu0 0.0
      %1532 = vmatpush1.msra.mxu0 0.0
      %1533 = vmatprep.subr.mxu0 0.0
      %1534 = vmatpush1.msra.mxu0 0.0
      %1535 = vmatprep.subr.mxu0 0.0
      %1536 = vmatpush1.msra.mxu0 0.0
      %1537 = vmatprep.subr.mxu0 0.0
      %1538 = vmatpush1.msra.mxu0 0.0
      %1539 = vmatprep.subr.mxu0 0.0
      %1540 = vmatpush1.msra.mxu0 0.0
      %1541 = vmatprep.subr.mxu0 0.0
      %1542 = vmatpush1.msra.mxu0 0.0
      %1543 = vmatprep.subr.mxu0 0.0
      %1544 = vmatpush1.msra.mxu0 0.0
      %1545 = vmatprep.subr.mxu0 0.0
      %1546 = vmatpush1.msra.mxu0 0.0
      %1547 = vmatprep.subr.mxu0 0.0
      %1548 = vmatpush1.msra.mxu0 0.0
      %1549 = vmatprep.subr.mxu0 0.0
      %1550 = vmatpush1.msra.mxu0 0.0
      %1551 = vmatprep.subr.mxu0 0.0
      %1552 = vmatpush1.msra.mxu0 0.0
      %1553 = vmatprep.subr.mxu0 0.0
      %1554 = vmatpush1.msra.mxu0 0.0
      %1555 = vmatprep.subr.mxu0 0.0
      %1556 = vmatpush1.msra.mxu0 0.0
      %1557 = vmatprep.subr.mxu0 0.0
      %1558 = vmatpush1.msra.mxu0 0.0
      %1559 = vmatprep.subr.mxu0 0.0
      %1560 = vmatpush1.msra.mxu0 0.0
      %1561 = vmatprep.subr.mxu0 0.0
      %1562 = vmatpush1.msra.mxu0 0.0
      %1563 = vmatprep.subr.mxu0 0.0
      %1564 = vmatpush1.msra.mxu0 0.0
      %1565 = vmatprep.subr.mxu0 0.0
      %1566 = vmatpush1.msra.mxu0 0.0
      %1567 = vmatprep.subr.mxu0 0.0
      %1568 = vmatpush1.msra.mxu0 0.0
      %1569 = vmatprep.subr.mxu0 0.0
      %1570 = vmatpush1.msra.mxu0 0.0
      %1571 = vmatprep.subr.mxu0 0.0
      %1572 = vmatpush1.msra.mxu0 0.0
      %1573 = vmatprep.subr.mxu0 0.0
      %1574 = vmatpush1.msra.mxu0 0.0
      %1575 = vmatprep.subr.mxu0 0.0
      %1576 = vmatpush1.msra.mxu0 0.0
      %1577 = vmatprep.subr.mxu0 0.0
      %1578 = vmatpush1.msra.mxu0 0.0
      %1579 = vmatprep.subr.mxu0 0.0
      %1580 = vmatpush1.msra.mxu0 0.0
      %1581 = vmatprep.subr.mxu0 0.0
      %1582 = vmatpush1.msra.mxu0 0.0
      %1583 = vmatprep.mubr.f32.mxu0 0.0
      %1584 = vmatmul.mubr.f32.gmra.mrb[0].mxu0 %v1509
      %v1585 = vpop.f32.mrb[0].mxu0
      %v1586 = vadd.f32 0.0, %v1585
      %v1587 = vpop.f32.mrb[0].mxu0
      %1588 = vmatprep.mubr.f32.mxu0 0.0
      %1589 = vmatmul.mubr.f32.gmra.mrb[0].mxu0 %v1512
      %v1590 = vpop.f32.mrb[0].mxu0
      %v1591 = vadd.f32 0.0, %v1590
      %v1592 = vpop.f32.mrb[0].mxu0
      %1593 = vmatprep.mubr.f32.mxu0 0.0
      %1594 = vmatmul.mubr.f32.gmra.mrb[0].mxu0 %v1515
      %v1595 = vpop.f32.mrb[0].mxu0
      %v1596 = vadd.f32 0.0, %v1595
      %v1597 = vpop.f32.mrb[0].mxu0
      %1598 = vdwg.mxu0
      %1602 = vrot.lane.b32.xlu0 %v1586, 12
      %v1603 = vpop.permute.xlu0 %1602
      %1604 = vrot.lane.b32.xlu0 %v1591, 12
      %v1605 = vpop.permute.xlu0 %1604
      %1606 = vrot.lane.b32.xlu0 %v1596, 12
      %v1607 = vpop.permute.xlu0 %1606
      %vm1611 = vcmask 130144
      %1612 = vst.msk [vmem:[#allocation2] sm:$0xff] %vm1611, %v1603
      %1613 = vst.msk [vmem:[#allocation2 + $0x8] sm:$0xff] %vm1611, %v1605
      %vm1614 = vcmask 122976
      %1615 = vst.msk [vmem:[#allocation2 + $0x10] sm:$0x1] %vm1614, %v1607
      %v1616 = vld [vmem:[#allocation2] sm:$0xff]
      %v1617 = vld [vmem:[#allocation2 + $0x8] sm:$0xff]
      %v1618 = vld [vmem:[#allocation2 + $0x10] sm:$0x1]
      %v1619 = vld [vmem:[%s5] sm:$0xff]
      %v1620 = vld [vmem:[%s5 + $0x8] sm:$0xff]
      %v1622 = vsel %vm446, %v1616, 0
      %v1625 = vsel %vm446, %v1617, 0
      %v1628 = vsel %vm446, %v1618, 0
      %1630 = vmatprep.subr.mxu0 0.0
      %1631 = vmatpush1.msra.mxu0 %v1619
      %1632 = vmatprep.subr.mxu0 0.0
      %1633 = vmatpush1.msra.mxu0 %v1620
      %1634 = vmatprep.subr.mxu0 0.0
      %1635 = vmatpush1.msra.mxu0 0.0
      %1636 = vmatprep.subr.mxu0 0.0
      %1637 = vmatpush1.msra.mxu0 0.0
      %1638 = vmatprep.subr.mxu0 0.0
      %1639 = vmatpush1.msra.mxu0 0.0
      %1640 = vmatprep.subr.mxu0 0.0
      %1641 = vmatpush1.msra.mxu0 0.0
      %1642 = vmatprep.subr.mxu0 0.0
      %1643 = vmatpush1.msra.mxu0 0.0
      %1644 = vmatprep.subr.mxu0 0.0
      %1645 = vmatpush1.msra.mxu0 0.0
      %1646 = vmatprep.subr.mxu0 0.0
      %1647 = vmatpush1.msra.mxu0 0.0
      %1648 = vmatprep.subr.mxu0 0.0
      %1649 = vmatpush1.msra.mxu0 0.0
      %1650 = vmatprep.subr.mxu0 0.0
      %1651 = vmatpush1.msra.mxu0 0.0
      %1652 = vmatprep.subr.mxu0 0.0
      %1653 = vmatpush1.msra.mxu0 0.0
      %1654 = vmatprep.subr.mxu0 0.0
      %1655 = vmatpush1.msra.mxu0 0.0
      %1656 = vmatprep.subr.mxu0 0.0
      %1657 = vmatpush1.msra.mxu0 0.0
      %1658 = vmatprep.subr.mxu0 0.0
      %1659 = vmatpush1.msra.mxu0 0.0
      %1660 = vmatprep.subr.mxu0 0.0
      %1661 = vmatpush1.msra.mxu0 0.0
      %1662 = vmatprep.subr.mxu0 0.0
      %1663 = vmatpush1.msra.mxu0 0.0
      %1664 = vmatprep.subr.mxu0 0.0
      %1665 = vmatpush1.msra.mxu0 0.0
      %1666 = vmatprep.subr.mxu0 0.0
      %1667 = vmatpush1.msra.mxu0 0.0
      %1668 = vmatprep.subr.mxu0 0.0
      %1669 = vmatpush1.msra.mxu0 0.0
      %1670 = vmatprep.subr.mxu0 0.0
      %1671 = vmatpush1.msra.mxu0 0.0
      %1672 = vmatprep.subr.mxu0 0.0
      %1673 = vmatpush1.msra.mxu0 0.0
      %1674 = vmatprep.subr.mxu0 0.0
      %1675 = vmatpush1.msra.mxu0 0.0
      %1676 = vmatprep.subr.mxu0 0.0
      %1677 = vmatpush1.msra.mxu0 0.0
      %1678 = vmatprep.subr.mxu0 0.0
      %1679 = vmatpush1.msra.mxu0 0.0
      %1680 = vmatprep.subr.mxu0 0.0
      %1681 = vmatpush1.msra.mxu0 0.0
      %1682 = vmatprep.subr.mxu0 0.0
      %1683 = vmatpush1.msra.mxu0 0.0
      %1684 = vmatprep.subr.mxu0 0.0
      %1685 = vmatpush1.msra.mxu0 0.0
      %1686 = vmatprep.subr.mxu0 0.0
      %1687 = vmatpush1.msra.mxu0 0.0
      %1688 = vmatprep.subr.mxu0 0.0
      %1689 = vmatpush1.msra.mxu0 0.0
      %1690 = vmatprep.subr.mxu0 0.0
      %1691 = vmatpush1.msra.mxu0 0.0
      %1692 = vmatprep.subr.mxu0 0.0
      %1693 = vmatpush1.msra.mxu0 0.0
      %1694 = vmatprep.mubr.f32.mxu0 0.0
      %1695 = vmatmul.mubr.f32.gmra.mrb[0].mxu0 %v1622
      %v1696 = vpop.f32.mrb[0].mxu0
      %v1697 = vadd.f32 0.0, %v1696
      %v1698 = vpop.f32.mrb[0].mxu0
      %1699 = vmatprep.mubr.f32.mxu0 0.0
      %1700 = vmatmul.mubr.f32.gmra.mrb[0].mxu0 %v1625
      %v1701 = vpop.f32.mrb[0].mxu0
      %v1702 = vadd.f32 0.0, %v1701
      %v1703 = vpop.f32.mrb[0].mxu0
      %1704 = vmatprep.mubr.f32.mxu0 0.0
      %1705 = vmatmul.mubr.f32.gmra.mrb[0].mxu0 %v1628
      %v1706 = vpop.f32.mrb[0].mxu0
      %v1707 = vadd.f32 0.0, %v1706
      %v1708 = vpop.f32.mrb[0].mxu0
      %1709 = vdwg.mxu0
      %v1710 = vadd.f32 %v441, %v1697
      %v1711 = vadd.f32 %v442, %v1702
      %v1712 = vadd.f32 %v443, %v1707
      %v1713 = vld [vmem:[%s6] sm:$0x1]
      %v1715 = vlaneseq
      %v1716 = vshrl.u32 %v1715, 7
      %v1717 = vsub.s32 0, %v1716
      %v1718 = vrot.slane %v1713, %v1717
      %v1720 = vadd.f32 %v1710, %v1718
      %v1721 = vadd.f32 %v1711, %v1718
      %v1722 = vadd.f32 %v1712, %v1718
      %v1723 = vld [vmem:[%s7] sm:$0x1]
      %v1724 = vld [vmem:[%s8] sm:$0x1]
      %v1725 = vsel %vm446, %v1720, 0.0
      %1726 = vadd.xlane.f32.xlu0 %v1725
      %v1727 = vpop.xlane.xlu0 %1726
      %v1728 = vsel %vm446, %v1721, 0.0
      %1729 = vadd.xlane.f32.xlu0 %v1728
      %v1730 = vpop.xlane.xlu0 %1729
      %v1731 = vsel %vm453, %v1722, 0.0
      %1732 = vadd.xlane.f32.xlu0 %v1731
      %v1733 = vpop.xlane.xlu0 %1732
      %v1734 = vmul.f32 %v1727, %v457
      %v1735 = vmul.f32 %v1730, %v457
      %v1736 = vmul.f32 %v1733, %v457
      %v1737 = vsub.f32 %v1720, %v1734
      %v1738 = vsub.f32 %v1721, %v1735
      %v1739 = vsub.f32 %v1722, %v1736
      %v1740 = vmul.f32 %v1737, %v1737
      %v1741 = vmul.f32 %v1738, %v1738
      %v1742 = vmul.f32 %v1739, %v1739
      %v1743 = vsel %vm446, %v1740, 0.0
      %1744 = vadd.xlane.f32.xlu0 %v1743
      %v1745 = vpop.xlane.xlu0 %1744
      %v1746 = vsel %vm446, %v1741, 0.0
      %1747 = vadd.xlane.f32.xlu0 %v1746
      %v1748 = vpop.xlane.xlu0 %1747
      %v1749 = vsel %vm453, %v1742, 0.0
      %1750 = vadd.xlane.f32.xlu0 %v1749
      %v1751 = vpop.xlane.xlu0 %1750
      %v1752 = vmul.f32 %v1745, %v457
      %v1753 = vmul.f32 %v1748, %v457
      %v1754 = vmul.f32 %v1751, %v457
      %v1755 = vadd.f32 %v1752, 1e-05
      %v1756 = vadd.f32 %v1753, 1e-05
      %v1757 = vadd.f32 %v1754, 1e-05
      %v1758 = vrsqrt.pop %v1755
      %v1759 = vrsqrt.pop %v1756
      %v1760 = vrsqrt.pop %v1757
      %v1761 = vmul.f32 %v1737, %v1758
      %v1762 = vmul.f32 %v1738, %v1759
      %v1763 = vmul.f32 %v1739, %v1760
      %v1765 = vlaneseq
      %v1766 = vshrl.u32 %v1765, 7
      %v1767 = vsub.s32 0, %v1766
      %v1768 = vrot.slane %v1723, %v1767
      %v1770 = vmul.f32 %v1761, %v1768
      %v1771 = vmul.f32 %v1762, %v1768
      %v1772 = vmul.f32 %v1763, %v1768
      %v1774 = vlaneseq
      %v1775 = vshrl.u32 %v1774, 7
      %v1776 = vsub.s32 0, %v1775
      %v1777 = vrot.slane %v1724, %v1776
      %v1779 = vadd.f32 %v1770, %v1777
      %v1780 = vadd.f32 %v1771, %v1777
      %v1781 = vadd.f32 %v1772, %v1777
      %v1782 = vld [vmem:[%s9] sm:$0xff]
      %v1783 = vld [vmem:[%s9 + $0x8] sm:$0xff]
      %v1784 = vld [vmem:[%s10] sm:$0x1]
      %v1786 = vlaneseq
      %v1787 = vshrl.u32 %v1786, 7
      %v1788 = vsub.s32 0, %v1787
      %v1789 = vrot.slane %v1784, %v1788
      %v1792 = vsel %vm446, %v1779, 0
      %v1795 = vsel %vm446, %v1780, 0
      %v1798 = vsel %vm446, %v1781, 0
      %1800 = vmatprep.subr.mxu0 0.0
      %1801 = vmatpush1.msra.mxu0 %v1782
      %1802 = vmatprep.subr.mxu0 0.0
      %1803 = vmatpush1.msra.mxu0 %v1783
      %1804 = vmatprep.subr.mxu0 0.0
      %1805 = vmatpush1.msra.mxu0 0.0
      %1806 = vmatprep.subr.mxu0 0.0
      %1807 = vmatpush1.msra.mxu0 0.0
      %1808 = vmatprep.subr.mxu0 0.0
      %1809 = vmatpush1.msra.mxu0 0.0
      %1810 = vmatprep.subr.mxu0 0.0
      %1811 = vmatpush1.msra.mxu0 0.0
      %1812 = vmatprep.subr.mxu0 0.0
      %1813 = vmatpush1.msra.mxu0 0.0
      %1814 = vmatprep.subr.mxu0 0.0
      %1815 = vmatpush1.msra.mxu0 0.0
      %1816 = vmatprep.subr.mxu0 0.0
      %1817 = vmatpush1.msra.mxu0 0.0
      %1818 = vmatprep.subr.mxu0 0.0
      %1819 = vmatpush1.msra.mxu0 0.0
      %1820 = vmatprep.subr.mxu0 0.0
      %1821 = vmatpush1.msra.mxu0 0.0
      %1822 = vmatprep.subr.mxu0 0.0
      %1823 = vmatpush1.msra.mxu0 0.0
      %1824 = vmatprep.subr.mxu0 0.0
      %1825 = vmatpush1.msra.mxu0 0.0
      %1826 = vmatprep.subr.mxu0 0.0
      %1827 = vmatpush1.msra.mxu0 0.0
      %1828 = vmatprep.subr.mxu0 0.0
      %1829 = vmatpush1.msra.mxu0 0.0
      %1830 = vmatprep.subr.mxu0 0.0
      %1831 = vmatpush1.msra.mxu0 0.0
      %1832 = vmatprep.subr.mxu0 0.0
      %1833 = vmatpush1.msra.mxu0 0.0
      %1834 = vmatprep.subr.mxu0 0.0
      %1835 = vmatpush1.msra.mxu0 0.0
      %1836 = vmatprep.subr.mxu0 0.0
      %1837 = vmatpush1.msra.mxu0 0.0
      %1838 = vmatprep.subr.mxu0 0.0
      %1839 = vmatpush1.msra.mxu0 0.0
      %1840 = vmatprep.subr.mxu0 0.0
      %1841 = vmatpush1.msra.mxu0 0.0
      %1842 = vmatprep.subr.mxu0 0.0
      %1843 = vmatpush1.msra.mxu0 0.0
      %1844 = vmatprep.subr.mxu0 0.0
      %1845 = vmatpush1.msra.mxu0 0.0
      %1846 = vmatprep.subr.mxu0 0.0
      %1847 = vmatpush1.msra.mxu0 0.0
      %1848 = vmatprep.subr.mxu0 0.0
      %1849 = vmatpush1.msra.mxu0 0.0
      %1850 = vmatprep.subr.mxu0 0.0
      %1851 = vmatpush1.msra.mxu0 0.0
      %1852 = vmatprep.subr.mxu0 0.0
      %1853 = vmatpush1.msra.mxu0 0.0
      %1854 = vmatprep.subr.mxu0 0.0
      %1855 = vmatpush1.msra.mxu0 0.0
      %1856 = vmatprep.subr.mxu0 0.0
      %1857 = vmatpush1.msra.mxu0 0.0
      %1858 = vmatprep.subr.mxu0 0.0
      %1859 = vmatpush1.msra.mxu0 0.0
      %1860 = vmatprep.subr.mxu0 0.0
      %1861 = vmatpush1.msra.mxu0 0.0
      %1862 = vmatprep.subr.mxu0 0.0
      %1863 = vmatpush1.msra.mxu0 0.0
      %1864 = vmatprep.mubr.f32.mxu0 0.0
      %1865 = vmatmul.mubr.f32.gmra.mrb[0].mxu0 %v1792
      %v1866 = vpop.f32.mrb[0].mxu0
      %v1867 = vadd.f32 %v1789, %v1866
      %v1868 = vpop.f32.mrb[0].mxu0
      %1869 = vmatprep.mubr.f32.mxu0 0.0
      %1870 = vmatmul.mubr.f32.gmra.mrb[0].mxu0 %v1795
      %v1871 = vpop.f32.mrb[0].mxu0
      %v1872 = vadd.f32 %v1789, %v1871
      %v1873 = vpop.f32.mrb[0].mxu0
      %1874 = vmatprep.mubr.f32.mxu0 0.0
      %1875 = vmatmul.mubr.f32.gmra.mrb[0].mxu0 %v1798
      %v1876 = vpop.f32.mrb[0].mxu0
      %v1877 = vadd.f32 %v1789, %v1876
      %v1878 = vpop.f32.mrb[0].mxu0
      %1879 = vdwg.mxu0
      %v1880 = vmul.f32 %v1867, 0.5
      %v1881 = vmul.f32 %v1872, 0.5
      %v1882 = vmul.f32 %v1877, 0.5
      %v1883 = vmul.f32 %v1867, 0.70710677
      %v1884 = vmul.f32 %v1872, 0.70710677
      %v1885 = vmul.f32 %v1877, 0.70710677
      %vm1886 = vcmp.ge.f32.partialorder %v1883, 0.0
      %vm1887 = vcmp.ge.f32.partialorder %v1884, 0.0
      %vm1888 = vcmp.ge.f32.partialorder %v1885, 0.0
      %v1889 = vsel %vm1886, 1.0, -1.0
      %v1890 = vsel %vm1887, 1.0, -1.0
      %v1891 = vsel %vm1888, 1.0, -1.0
      %v1892 = vand.u32 2147483647, %v1883
      %v1893 = vand.u32 2147483647, %v1884
      %v1894 = vand.u32 2147483647, %v1885
      %v1895 = vmul.f32 %v1892, 0.3275911
      %v1896 = vmul.f32 %v1893, 0.3275911
      %v1897 = vmul.f32 %v1894, 0.3275911
      %v1898 = vadd.f32 %v1895, 1.0
      %v1899 = vadd.f32 %v1896, 1.0
      %v1900 = vadd.f32 %v1897, 1.0
      %v1901 = vrcp.pop %v1898
      %v1902 = vmul.f32 1.0, %v1901
      %v1903 = vrcp.pop %v1899
      %v1904 = vmul.f32 1.0, %v1903
      %v1905 = vrcp.pop %v1900
      %v1906 = vmul.f32 1.0, %v1905
      %v1907 = vmul.f32 %v1902, 1.0614054
      %v1908 = vmul.f32 %v1904, 1.0614054
      %v1909 = vmul.f32 %v1906, 1.0614054
      %v1910 = vadd.f32 %v1907, -1.4531521
      %v1911 = vadd.f32 %v1908, -1.4531521
      %v1912 = vadd.f32 %v1909, -1.4531521
      %v1913 = vmul.f32 %v1910, %v1902
      %v1914 = vmul.f32 %v1911, %v1904
      %v1915 = vmul.f32 %v1912, %v1906
      %v1916 = vadd.f32 %v1913, 1.4214138
      %v1917 = vadd.f32 %v1914, 1.4214138
      %v1918 = vadd.f32 %v1915, 1.4214138
      %v1919 = vmul.f32 %v1916, %v1902
      %v1920 = vmul.f32 %v1917, %v1904
      %v1921 = vmul.f32 %v1918, %v1906
      %v1922 = vadd.f32 %v1919, -0.28449672
      %v1923 = vadd.f32 %v1920, -0.28449672
      %v1924 = vadd.f32 %v1921, -0.28449672
      %v1925 = vmul.f32 %v1922, %v1902
      %v1926 = vmul.f32 %v1923, %v1904
      %v1927 = vmul.f32 %v1924, %v1906
      %v1928 = vadd.f32 %v1925, 0.2548296
      %v1929 = vadd.f32 %v1926, 0.2548296
      %v1930 = vadd.f32 %v1927, 0.2548296
      %v1931 = vmul.f32 %v1928, %v1902
      %v1932 = vmul.f32 %v1929, %v1904
      %v1933 = vmul.f32 %v1930, %v1906
      %v1934 = vmul.f32 %v1892, %v1892
      %v1935 = vmul.f32 %v1893, %v1893
      %v1936 = vmul.f32 %v1894, %v1894
      %v1937 = vsub.f32 0.0, %v1934
      %v1938 = vsub.f32 0.0, %v1935
      %v1939 = vsub.f32 0.0, %v1936
      %v1940 = vmul.f32 %v1937, 1.442695
      %v1941 = vpow.pop %v1940
      %v1942 = vmul.f32 %v1938, 1.442695
      %v1943 = vpow.pop %v1942
      %v1944 = vmul.f32 %v1939, 1.442695
      %v1945 = vpow.pop %v1944
      %v1946 = vmul.f32 %v1931, %v1941
      %v1947 = vmul.f32 %v1932, %v1943
      %v1948 = vmul.f32 %v1933, %v1945
      %v1949 = vsub.f32 1.0, %v1946
      %v1950 = vsub.f32 1.0, %v1947
      %v1951 = vsub.f32 1.0, %v1948
      %v1952 = vmul.f32 %v1889, %v1949
      %v1953 = vmul.f32 %v1890, %v1950
      %v1954 = vmul.f32 %v1891, %v1951
      %v1955 = vadd.f32 %v1952, 1.0
      %v1956 = vadd.f32 %v1953, 1.0
      %v1957 = vadd.f32 %v1954, 1.0
      %v1958 = vmul.f32 %v1880, %v1955
      %v1959 = vmul.f32 %v1881, %v1956
      %v1960 = vmul.f32 %v1882, %v1957
      %v1961 = vld [vmem:[%s11] sm:$0xff]
      %v1962 = vld [vmem:[%s11 + $0x8] sm:$0xff]
      %v1963 = vld [vmem:[%s11 + $0x10] sm:$0xff]
      %v1964 = vld [vmem:[%s11 + $0x18] sm:$0xff]
      %v1965 = vld [vmem:[%s11 + $0x20] sm:$0xff]
      %v1966 = vld [vmem:[%s11 + $0x28] sm:$0xff]
      %v1967 = vld [vmem:[%s11 + $0x30] sm:$0xff]
      %v1968 = vld [vmem:[%s11 + $0x38] sm:$0xff]
      %vm1969 = vcmask 523264
      %v1971 = vsel %vm1969, %v1958, 0
      %v1974 = vsel %vm1969, %v1959, 0
      %v1977 = vsel %vm1969, %v1960, 0
      %1979 = vmatprep.subr.mxu0 0.0
      %1980 = vmatpush1.msra.mxu0 %v1961
      %1981 = vmatprep.subr.mxu0 0.0
      %1982 = vmatpush1.msra.mxu0 %v1962
      %1983 = vmatprep.subr.mxu0 0.0
      %1984 = vmatpush1.msra.mxu0 %v1963
      %1985 = vmatprep.subr.mxu0 0.0
      %1986 = vmatpush1.msra.mxu0 %v1964
      %1987 = vmatprep.subr.mxu0 0.0
      %1988 = vmatpush1.msra.mxu0 %v1965
      %1989 = vmatprep.subr.mxu0 0.0
      %1990 = vmatpush1.msra.mxu0 %v1966
      %1991 = vmatprep.subr.mxu0 0.0
      %1992 = vmatpush1.msra.mxu0 %v1967
      %1993 = vmatprep.subr.mxu0 0.0
      %1994 = vmatpush1.msra.mxu0 %v1968
      %1995 = vmatprep.subr.mxu0 0.0
      %1996 = vmatpush1.msra.mxu0 0.0
      %1997 = vmatprep.subr.mxu0 0.0
      %1998 = vmatpush1.msra.mxu0 0.0
      %1999 = vmatprep.subr.mxu0 0.0
      %2000 = vmatpush1.msra.mxu0 0.0
      %2001 = vmatprep.subr.mxu0 0.0
      %2002 = vmatpush1.msra.mxu0 0.0
      %2003 = vmatprep.subr.mxu0 0.0
      %2004 = vmatpush1.msra.mxu0 0.0
      %2005 = vmatprep.subr.mxu0 0.0
      %2006 = vmatpush1.msra.mxu0 0.0
      %2007 = vmatprep.subr.mxu0 0.0
      %2008 = vmatpush1.msra.mxu0 0.0
      %2009 = vmatprep.subr.mxu0 0.0
      %2010 = vmatpush1.msra.mxu0 0.0
      %2011 = vmatprep.subr.mxu0 0.0
      %2012 = vmatpush1.msra.mxu0 0.0
      %2013 = vmatprep.subr.mxu0 0.0
      %2014 = vmatpush1.msra.mxu0 0.0
      %2015 = vmatprep.subr.mxu0 0.0
      %2016 = vmatpush1.msra.mxu0 0.0
      %2017 = vmatprep.subr.mxu0 0.0
      %2018 = vmatpush1.msra.mxu0 0.0
      %2019 = vmatprep.subr.mxu0 0.0
      %2020 = vmatpush1.msra.mxu0 0.0
      %2021 = vmatprep.subr.mxu0 0.0
      %2022 = vmatpush1.msra.mxu0 0.0
      %2023 = vmatprep.subr.mxu0 0.0
      %2024 = vmatpush1.msra.mxu0 0.0
      %2025 = vmatprep.subr.mxu0 0.0
      %2026 = vmatpush1.msra.mxu0 0.0
      %2027 = vmatprep.subr.mxu0 0.0
      %2028 = vmatpush1.msra.mxu0 0.0
      %2029 = vmatprep.subr.mxu0 0.0
      %2030 = vmatpush1.msra.mxu0 0.0
      %2031 = vmatprep.subr.mxu0 0.0
      %2032 = vmatpush1.msra.mxu0 0.0
      %2033 = vmatprep.subr.mxu0 0.0
      %2034 = vmatpush1.msra.mxu0 0.0
      %2035 = vmatprep.subr.mxu0 0.0
      %2036 = vmatpush1.msra.mxu0 0.0
      %2037 = vmatprep.subr.mxu0 0.0
      %2038 = vmatpush1.msra.mxu0 0.0
      %2039 = vmatprep.subr.mxu0 0.0
      %2040 = vmatpush1.msra.mxu0 0.0
      %2041 = vmatprep.subr.mxu0 0.0
      %2042 = vmatpush1.msra.mxu0 0.0
      %2043 = vmatprep.mubr.f32.mxu0 0.0
      %2044 = vmatmul.mubr.f32.gmra.mrb[0].mxu0 %v1971
      %v2045 = vpop.f32.mrb[0].mxu0
      %v2046 = vadd.f32 0.0, %v2045
      %v2047 = vpop.f32.mrb[0].mxu0
      %2048 = vmatprep.mubr.f32.mxu0 0.0
      %2049 = vmatmul.mubr.f32.gmra.mrb[0].mxu0 %v1974
      %v2050 = vpop.f32.mrb[0].mxu0
      %v2051 = vadd.f32 0.0, %v2050
      %v2052 = vpop.f32.mrb[0].mxu0
      %2053 = vmatprep.mubr.f32.mxu0 0.0
      %2054 = vmatmul.mubr.f32.gmra.mrb[0].mxu0 %v1977
      %v2055 = vpop.f32.mrb[0].mxu0
      %v2056 = vadd.f32 0.0, %v2055
      %v2057 = vpop.f32.mrb[0].mxu0
      %2058 = vdwg.mxu0
      %v2059 = vadd.f32 %v1720, %v2046
      %v2060 = vadd.f32 %v1721, %v2051
      %v2061 = vadd.f32 %v1722, %v2056
      %v2062 = vld [vmem:[%s12] sm:$0x1]
      %v2064 = vlaneseq
      %v2065 = vshrl.u32 %v2064, 7
      %v2066 = vsub.s32 0, %v2065
      %v2067 = vrot.slane %v2062, %v2066
      %v2069 = vadd.f32 %v2059, %v2067
      %v2070 = vadd.f32 %v2060, %v2067
      %v2071 = vadd.f32 %v2061, %v2067
      %2072 = vst.msk [vmem:[%s440] sm:$0xff] %vm446, %v2069
      %2073 = vst.msk [vmem:[%s440 + $0x8] sm:$0xff] %vm446, %v2070
      %2074 = vst.msk [vmem:[%s440 + $0x10] sm:$0x1] %vm453, %v2071
      %p2075 = scmp.lt.s32.totalorder %s24, 1
      %s2076 = scalar_select %p2075, %s24, 1
      %s2077 = smul.addr %s2076, 3
      %s2078 = smul.addr %s2077, 8
      %s2079 = scalar_lea.vmem %s13, %s2078
      // Predicated region
      $region73: #{vicmae_forward.26} parent=71 // pred_check
        %p2080 = pneg %p320
      $region74: #{vicmae_forward.26} parent=71 // pred_check_branch
        %2082 = sbr.rel (%p2080) target = $region76
      $region75: #{vicmae_forward.26} parent=71 // pred_region
        _
      $region76: #{vicmae_forward.26} parent=71 // pred_fallthru
        _
    $region72: #{vicmae_forward.26} parent=5 // pred_fallthru
      _
    %p2083 = scmp.le.s32.totalorder 2, %s19
    // Predicated region
    $region77: #{vicmae_forward.26} parent=5 // pred_check
      %p2084 = pneg %p2083
    $region78: #{vicmae_forward.26} parent=5 // pred_check_branch
      %2086 = sbr.rel (%p2084) target = $region80
    $region79: #{vicmae_forward.26} parent=5 // pred_region
      %s2087 = ssub.s32 %s19, 2
      // Predicated region
      $region81: #{vicmae_forward.26} parent=79 // pred_check
        %p2088 = pneg %p326
      $region82: #{vicmae_forward.26} parent=79 // pred_check_branch
        %2090 = sbr.rel (%p2088) target = $region84
      $region83: #{vicmae_forward.26} parent=79 // pred_region
        %p2091 = scmp.lt.s32.totalorder %s25, 1
        %s2092 = scalar_select %p2091, %s25, 1
        %s2093 = smul.addr %s2092, 3
        %s2094 = smul.addr %s2093, 8
        %s2095 = scalar_lea.vmem %s13, %s2094
      $region84: #{vicmae_forward.26} parent=79 // pred_fallthru
        _
    $region80: #{vicmae_forward.26} parent=5 // pred_fallthru
      _
  $region6: #{vicmae_forward.26} parent=0 // loop_footer
    %s23 = sadd.s32 1, %s19
  $region7: #{vicmae_forward.26} parent=0 // loop_footer_branch
    %18 = sbr.rel target = $region3
  $region8: #{vicmae_forward.26} parent=0 // loop_exit
    _

</llo_original>
